<compile_context>
chip_gen: v7x
topology: tpu7x:2x2x1
jax: 0.10.0
libtpu: 0.0.40
codegen_flags: <defaults>
</compile_context>

<pallas_src>
import jax
import jax.numpy as jnp
from jax import lax
from jax.experimental import pallas as pl
from jax.experimental.pallas import tpu as pltpu

NUM_CLASSES = 4


# ----------------------------------------------------------------------------
# Single fused kernel: conv1+pool -> conv2+pool -> fc1+ReLU -> fc2
# ----------------------------------------------------------------------------
def fused_forward_kernel(x_ref, w1_ref, b1_ref, w2_ref, b2_ref,
                         wf1_ref, bf1_ref, wf2_ref, bf2_ref, o_ref):

    def conv3x3_relu_pool(x, w_ref, b_ref):
        # x: (B, H, W, Cin) f32 value.  Valid 3x3 conv -> bias -> ReLU ->
        # 2x2/2 max-pool (floor mode).  Conv is 9 per-tap MXU dots with the
        # batch and spatial dims folded into M.
        B, H, W, Cin = x.shape
        KH, KW, _, Cout = w_ref.shape
        OH, OW = H - KH + 1, W - KW + 1
        M = B * OH * OW

        # Hoist the weight load + bf16 cast out of the tap loop.
        wb = w_ref[...].astype(jnp.bfloat16)                 # (KH, KW, Cin, Cout)

        acc = jnp.zeros((M, Cout), jnp.float32)
        for kh in range(KH):
            for kw in range(KW):
                lhs = x[:, kh:kh + OH, kw:kw + OW, :].reshape(M, Cin)
                acc = acc + jnp.dot(lhs.astype(jnp.bfloat16), wb[kh, kw],
                                    preferred_element_type=jnp.float32)

        y = jnp.maximum(acc + b_ref[...], 0.0)               # bias + ReLU, (M, Cout)

        # Vectorized 2x2 max-pool (floor: drop odd trailing row/col).
        OHp, OWp = OH // 2, OW // 2
        y = y.reshape(B, OH, OW, Cout)[:, :2 * OHp, :2 * OWp, :]
        y = y.reshape(B, OHp, 2, 2 * OWp, Cout)              # split H pairs (leading dims only)
        y = jnp.maximum(y[:, :, 0, :, :], y[:, :, 1, :, :])  # (B, OHp, 2*OWp, Cout)
        y = y.reshape(B, OHp, OWp, 2, Cout)                  # split W pairs
        return jnp.maximum(y[:, :, :, 0, :], y[:, :, :, 1, :])   # (B, OHp, OWp, Cout)

    x = x_ref[...]                                           # (B, 16, 16, 3)
    p1 = conv3x3_relu_pool(x, w1_ref, b1_ref)                # (B, 7, 7, 32)
    p2 = conv3x3_relu_pool(p1, w2_ref, b2_ref)               # (B, 2, 2, 64)

    # fc1 over the flattened conv2 output, computed as Hp*Wp partial MXU dots
    # (one per pooled spatial position) -- no in-kernel flatten is needed.
    # wf1 rows were permuted in the wrapper to (h, w, c) order.
    B, Hp, Wp, C2 = p2.shape
    Dh = wf1_ref.shape[1]
    wf1 = wf1_ref[...].astype(jnp.bfloat16)                  # (Hp*Wp*C2, Dh)
    h = jnp.zeros((B, Dh), jnp.float32)
    for i in range(Hp):
        for j in range(Wp):
            k = i * Wp + j
            h = h + jnp.dot(p2[:, i, j, :].astype(jnp.bfloat16),
                            wf1[k * C2:(k + 1) * C2, :],
                            preferred_element_type=jnp.float32)
    h = jnp.maximum(h + bf1_ref[...], 0.0)                   # (B, Dh)

    # fc2 (classes padded to a full 128-lane register -> lane-dense store).
    logits = jnp.dot(h.astype(jnp.bfloat16), wf2_ref[...].astype(jnp.bfloat16),
                     preferred_element_type=jnp.float32) + bf2_ref[...]
    o_ref[...] = logits.astype(o_ref.dtype)                  # (B, Cpad)


# ----------------------------------------------------------------------------
# Wrapper: layout plumbing (NCHW->NHWC, fc1 row permutation, class padding)
# ----------------------------------------------------------------------------
def rnn_forward(x_nchw, p, num_classes=NUM_CLASSES):
    x = jnp.transpose(x_nchw, (0, 2, 3, 1)).astype(jnp.float32)   # NCHW -> NHWC
    N, H, W, Cin = x.shape
    C2 = p["w_conv2"].shape[-1]
    Hp1, Wp1 = (H - 2) // 2, (W - 2) // 2
    Hp2, Wp2 = (Hp1 - 2) // 2, (Wp1 - 2) // 2
    Dh = p["w_fc1"].shape[1]

    # fc1 weights: permute rows from PyTorch's NCHW-flatten order (c, h, w) to
    # the kernel's NHWC order (h, w, c) so the activations never get transposed.
    wf1 = (p["w_fc1"].reshape(C2, Hp2, Wp2, Dh)
           .transpose(1, 2, 0, 3).reshape(Hp2 * Wp2 * C2, Dh))

    # fc2: pad the class dim up to a multiple of 128 lanes (lane-dense output
    # store); the real logits are sliced back out below.
    Cpad = max(128, ((num_classes + 127) // 128) * 128)
    wf2 = jnp.pad(p["w_fc2"], ((0, 0), (0, Cpad - num_classes)))
    bf2 = jnp.pad(p["b_fc2"], (0, Cpad - num_classes)).reshape(1, Cpad)

    b1 = p["b_conv1"].reshape(1, -1)
    b2 = p["b_conv2"].reshape(1, -1)
    bf1 = p["b_fc1"].reshape(1, -1)

    # Batch tile: fold the whole (small) batch into one grid step; for larger
    # batches tile by 8 and shard the parallel grid axis across cores.
    bt = 8 if (N % 8 == 0) else N
    grid = (N // bt,)

    out = pl.pallas_call(
        fused_forward_kernel,
        out_shape=jax.ShapeDtypeStruct((N, Cpad), jnp.float32),
        grid=grid,
        in_specs=[
            pl.BlockSpec((bt, H, W, Cin), lambda b: (b, 0, 0, 0)),
            pl.BlockSpec(p["w_conv1"].shape, lambda b: (0, 0, 0, 0)),
            pl.BlockSpec((1, b1.shape[1]), lambda b: (0, 0)),
            pl.BlockSpec(p["w_conv2"].shape, lambda b: (0, 0, 0, 0)),
            pl.BlockSpec((1, b2.shape[1]), lambda b: (0, 0)),
            pl.BlockSpec(wf1.shape, lambda b: (0, 0)),
            pl.BlockSpec((1, Dh), lambda b: (0, 0)),
            pl.BlockSpec(wf2.shape, lambda b: (0, 0)),
            pl.BlockSpec((1, Cpad), lambda b: (0, 0)),
        ],
        out_specs=pl.BlockSpec((bt, Cpad), lambda b: (b, 0)),
        compiler_params=pltpu.CompilerParams(dimension_semantics=("parallel",)),
    )(x, p["w_conv1"], b1, p["w_conv2"], b2, wf1, bf1, wf2, bf2)

    return out[:, :num_classes]


# ----------------------------------------------------------------------------
# Deterministic parameter init (PyTorch-style uniform(-1/sqrt(fan_in), ...))
# ----------------------------------------------------------------------------
def init_params(key, num_classes=NUM_CLASSES, img=16):
    keys = jax.random.split(key, 8)

    def u(k, shape, fan_in):
        bound = float(fan_in) ** -0.5
        return jax.random.uniform(k, shape, jnp.float32, -bound, bound)

    h1 = (img - 2) // 2          # after conv1 (+pool)
    h2 = (h1 - 2) // 2           # after conv2 (+pool)
    flat = 64 * h2 * h2

    return dict(
        w_conv1=u(keys[0], (3, 3, 3, 32), 3 * 9),
        b_conv1=u(keys[1], (32,), 3 * 9),
        w_conv2=u(keys[2], (3, 3, 32, 64), 32 * 9),
        b_conv2=u(keys[3], (64,), 32 * 9),
        w_fc1=u(keys[4], (flat, 128), flat),
        b_fc1=u(keys[5], (128,), flat),
        w_fc2=u(keys[6], (128, num_classes), 128),
        b_fc2=u(keys[7], (num_classes,), 128),
    )


# ----------------------------------------------------------------------------
# Pure-JAX reference (f32) for correctness check
# ----------------------------------------------------------------------------
def ref_forward(x_nchw, p):
    x = jnp.transpose(x_nchw, (0, 2, 3, 1))

    def block(x, w, b):
        y = lax.conv_general_dilated(
            x, w, (1, 1), "VALID",
            dimension_numbers=("NHWC", "HWIO", "NHWC")) + b
        y = jnp.maximum(y, 0.0)
        return lax.reduce_window(y, -jnp.inf, lax.max,
                                 (1, 2, 2, 1), (1, 2, 2, 1), "VALID")

    x = block(x, p["w_conv1"], p["b_conv1"])
    x = block(x, p["w_conv2"], p["b_conv2"])
    N = x.shape[0]
    x = jnp.transpose(x, (0, 3, 1, 2)).reshape(N, -1)   # PyTorch NCHW flatten
    h = jnp.maximum(x @ p["w_fc1"] + p["b_fc1"], 0.0)
    return h @ p["w_fc2"] + p["b_fc2"]


if __name__ == "__main__":
    import numpy as np

    key = jax.random.PRNGKey(0)
    kx, kp = jax.random.split(key)

    # Small shapes consistent with the module's forward: NCHW input.
    x = jax.random.normal(kx, (2, 3, 16, 16), jnp.float32)
    params = init_params(kp, num_classes=NUM_CLASSES, img=16)

    forward = jax.jit(rnn_forward)
    out = jax.block_until_ready(forward(x, params))
    assert out.shape == (2, NUM_CLASSES), out.shape

    ref = ref_forward(x, params)
    np.testing.assert_allclose(np.asarray(out), np.asarray(ref),
                               rtol=2e-2, atol=2e-2)

    print("KERNEL_OK")
</pallas_src>

<mosaic_0001>
module attributes {stable_mosaic.version = 11 : i64} {
  func.func @fused_forward_kernel(%arg0: i32, %arg1: memref<2x16x16x3xf32, #tpu.memory_space<vmem>>, %arg2: memref<3x3x3x32xf32, #tpu.memory_space<vmem>>, %arg3: memref<1x32xf32, #tpu.memory_space<vmem>>, %arg4: memref<3x3x32x64xf32, #tpu.memory_space<vmem>>, %arg5: memref<1x64xf32, #tpu.memory_space<vmem>>, %arg6: memref<256x128xf32, #tpu.memory_space<vmem>>, %arg7: memref<1x128xf32, #tpu.memory_space<vmem>>, %arg8: memref<128x128xf32, #tpu.memory_space<vmem>>, %arg9: memref<1x128xf32, #tpu.memory_space<vmem>>, %arg10: memref<2x128xf32, #tpu.memory_space<vmem>>) attributes {dimension_semantics = [#tpu.dimension_semantics<parallel>], iteration_bounds = array<i64: 1>, scalar_prefetch = 0 : i64, scratch_operands = 0 : i64, tpu.core_type = #tpu.core_type<tc>, window_params = [{transform_indices = @transform_0, window_bounds = array<i64: 2, 16, 16, 3>}, {pipeline_mode = #tpu.pipeline_mode<synchronous>, transform_indices = @transform_1, window_bounds = array<i64: 3, 3, 3, 32>}, {pipeline_mode = #tpu.pipeline_mode<synchronous>, transform_indices = @transform_2, window_bounds = array<i64: 1, 32>}, {pipeline_mode = #tpu.pipeline_mode<synchronous>, transform_indices = @transform_3, window_bounds = array<i64: 3, 3, 32, 64>}, {pipeline_mode = #tpu.pipeline_mode<synchronous>, transform_indices = @transform_4, window_bounds = array<i64: 1, 64>}, {pipeline_mode = #tpu.pipeline_mode<synchronous>, transform_indices = @transform_5, window_bounds = array<i64: 256, 128>}, {pipeline_mode = #tpu.pipeline_mode<synchronous>, transform_indices = @transform_6, window_bounds = array<i64: 1, 128>}, {pipeline_mode = #tpu.pipeline_mode<synchronous>, transform_indices = @transform_7, window_bounds = array<i64: 128, 128>}, {pipeline_mode = #tpu.pipeline_mode<synchronous>, transform_indices = @transform_8, window_bounds = array<i64: 1, 128>}, {transform_indices = @transform_9, window_bounds = array<i64: 2, 128>}]} {
    %c0 = arith.constant 0 : index
    %c0_0 = arith.constant 0 : index
    %c0_1 = arith.constant 0 : index
    %c0_2 = arith.constant 0 : index
    %0 = vector.load %arg1[%c0, %c0_0, %c0_1, %c0_2] : memref<2x16x16x3xf32, #tpu.memory_space<vmem>>, vector<2x16x16x3xf32>
    %c0_3 = arith.constant 0 : index
    %c0_4 = arith.constant 0 : index
    %c0_5 = arith.constant 0 : index
    %c0_6 = arith.constant 0 : index
    %1 = vector.load %arg2[%c0_3, %c0_4, %c0_5, %c0_6] : memref<3x3x3x32xf32, #tpu.memory_space<vmem>>, vector<3x3x3x32xf32>
    %2 = arith.truncf %1 : vector<3x3x3x32xf32> to vector<3x3x3x32xbf16>
    %cst = arith.constant 0.000000e+00 : f32
    %3 = vector.broadcast %cst : f32 to vector<392x32xf32>
    %4 = vector.extract_strided_slice %0 {offsets = [0, 0, 0, 0], sizes = [2, 14, 14, 3], strides = [1, 1, 1, 1]} : vector<2x16x16x3xf32> to vector<2x14x14x3xf32>
    %5 = vector.shape_cast %4 : vector<2x14x14x3xf32> to vector<392x3xf32>
    %6 = arith.truncf %5 : vector<392x3xf32> to vector<392x3xbf16>
    %7 = vector.extract_strided_slice %2 {offsets = [0, 0, 0, 0], sizes = [1, 1, 3, 32], strides = [1, 1, 1, 1]} : vector<3x3x3x32xbf16> to vector<1x1x3x32xbf16>
    %8 = vector.shape_cast %7 : vector<1x1x3x32xbf16> to vector<3x32xbf16>
    %cst_7 = arith.constant dense<0.000000e+00> : vector<392x32xf32>
    %9 = tpu.matmul %6, %8, %cst_7 {dimension_numbers = #tpu.dot_dimension_numbers<[1], [0], [0], [1], [0, 0, 1, 1], [], []>} : vector<392x3xbf16>, vector<3x32xbf16>, vector<392x32xf32> -> vector<392x32xf32>
    %10 = arith.addf %3, %9 : vector<392x32xf32>
    %11 = vector.extract_strided_slice %0 {offsets = [0, 0, 1, 0], sizes = [2, 14, 14, 3], strides = [1, 1, 1, 1]} : vector<2x16x16x3xf32> to vector<2x14x14x3xf32>
    %12 = vector.shape_cast %11 : vector<2x14x14x3xf32> to vector<392x3xf32>
    %13 = arith.truncf %12 : vector<392x3xf32> to vector<392x3xbf16>
    %14 = vector.extract_strided_slice %2 {offsets = [0, 1, 0, 0], sizes = [1, 1, 3, 32], strides = [1, 1, 1, 1]} : vector<3x3x3x32xbf16> to vector<1x1x3x32xbf16>
    %15 = vector.shape_cast %14 : vector<1x1x3x32xbf16> to vector<3x32xbf16>
    %cst_8 = arith.constant dense<0.000000e+00> : vector<392x32xf32>
    %16 = tpu.matmul %13, %15, %cst_8 {dimension_numbers = #tpu.dot_dimension_numbers<[1], [0], [0], [1], [0, 0, 1, 1], [], []>} : vector<392x3xbf16>, vector<3x32xbf16>, vector<392x32xf32> -> vector<392x32xf32>
    %17 = arith.addf %10, %16 : vector<392x32xf32>
    %18 = vector.extract_strided_slice %0 {offsets = [0, 0, 2, 0], sizes = [2, 14, 14, 3], strides = [1, 1, 1, 1]} : vector<2x16x16x3xf32> to vector<2x14x14x3xf32>
    %19 = vector.shape_cast %18 : vector<2x14x14x3xf32> to vector<392x3xf32>
    %20 = arith.truncf %19 : vector<392x3xf32> to vector<392x3xbf16>
    %21 = vector.extract_strided_slice %2 {offsets = [0, 2, 0, 0], sizes = [1, 1, 3, 32], strides = [1, 1, 1, 1]} : vector<3x3x3x32xbf16> to vector<1x1x3x32xbf16>
    %22 = vector.shape_cast %21 : vector<1x1x3x32xbf16> to vector<3x32xbf16>
    %cst_9 = arith.constant dense<0.000000e+00> : vector<392x32xf32>
    %23 = tpu.matmul %20, %22, %cst_9 {dimension_numbers = #tpu.dot_dimension_numbers<[1], [0], [0], [1], [0, 0, 1, 1], [], []>} : vector<392x3xbf16>, vector<3x32xbf16>, vector<392x32xf32> -> vector<392x32xf32>
    %24 = arith.addf %17, %23 : vector<392x32xf32>
    %25 = vector.extract_strided_slice %0 {offsets = [0, 1, 0, 0], sizes = [2, 14, 14, 3], strides = [1, 1, 1, 1]} : vector<2x16x16x3xf32> to vector<2x14x14x3xf32>
    %26 = vector.shape_cast %25 : vector<2x14x14x3xf32> to vector<392x3xf32>
    %27 = arith.truncf %26 : vector<392x3xf32> to vector<392x3xbf16>
    %28 = vector.extract_strided_slice %2 {offsets = [1, 0, 0, 0], sizes = [1, 1, 3, 32], strides = [1, 1, 1, 1]} : vector<3x3x3x32xbf16> to vector<1x1x3x32xbf16>
    %29 = vector.shape_cast %28 : vector<1x1x3x32xbf16> to vector<3x32xbf16>
    %cst_10 = arith.constant dense<0.000000e+00> : vector<392x32xf32>
    %30 = tpu.matmul %27, %29, %cst_10 {dimension_numbers = #tpu.dot_dimension_numbers<[1], [0], [0], [1], [0, 0, 1, 1], [], []>} : vector<392x3xbf16>, vector<3x32xbf16>, vector<392x32xf32> -> vector<392x32xf32>
    %31 = arith.addf %24, %30 : vector<392x32xf32>
    %32 = vector.extract_strided_slice %0 {offsets = [0, 1, 1, 0], sizes = [2, 14, 14, 3], strides = [1, 1, 1, 1]} : vector<2x16x16x3xf32> to vector<2x14x14x3xf32>
    %33 = vector.shape_cast %32 : vector<2x14x14x3xf32> to vector<392x3xf32>
    %34 = arith.truncf %33 : vector<392x3xf32> to vector<392x3xbf16>
    %35 = vector.extract_strided_slice %2 {offsets = [1, 1, 0, 0], sizes = [1, 1, 3, 32], strides = [1, 1, 1, 1]} : vector<3x3x3x32xbf16> to vector<1x1x3x32xbf16>
    %36 = vector.shape_cast %35 : vector<1x1x3x32xbf16> to vector<3x32xbf16>
    %cst_11 = arith.constant dense<0.000000e+00> : vector<392x32xf32>
    %37 = tpu.matmul %34, %36, %cst_11 {dimension_numbers = #tpu.dot_dimension_numbers<[1], [0], [0], [1], [0, 0, 1, 1], [], []>} : vector<392x3xbf16>, vector<3x32xbf16>, vector<392x32xf32> -> vector<392x32xf32>
    %38 = arith.addf %31, %37 : vector<392x32xf32>
    %39 = vector.extract_strided_slice %0 {offsets = [0, 1, 2, 0], sizes = [2, 14, 14, 3], strides = [1, 1, 1, 1]} : vector<2x16x16x3xf32> to vector<2x14x14x3xf32>
    %40 = vector.shape_cast %39 : vector<2x14x14x3xf32> to vector<392x3xf32>
    %41 = arith.truncf %40 : vector<392x3xf32> to vector<392x3xbf16>
    %42 = vector.extract_strided_slice %2 {offsets = [1, 2, 0, 0], sizes = [1, 1, 3, 32], strides = [1, 1, 1, 1]} : vector<3x3x3x32xbf16> to vector<1x1x3x32xbf16>
    %43 = vector.shape_cast %42 : vector<1x1x3x32xbf16> to vector<3x32xbf16>
    %cst_12 = arith.constant dense<0.000000e+00> : vector<392x32xf32>
    %44 = tpu.matmul %41, %43, %cst_12 {dimension_numbers = #tpu.dot_dimension_numbers<[1], [0], [0], [1], [0, 0, 1, 1], [], []>} : vector<392x3xbf16>, vector<3x32xbf16>, vector<392x32xf32> -> vector<392x32xf32>
    %45 = arith.addf %38, %44 : vector<392x32xf32>
    %46 = vector.extract_strided_slice %0 {offsets = [0, 2, 0, 0], sizes = [2, 14, 14, 3], strides = [1, 1, 1, 1]} : vector<2x16x16x3xf32> to vector<2x14x14x3xf32>
    %47 = vector.shape_cast %46 : vector<2x14x14x3xf32> to vector<392x3xf32>
    %48 = arith.truncf %47 : vector<392x3xf32> to vector<392x3xbf16>
    %49 = vector.extract_strided_slice %2 {offsets = [2, 0, 0, 0], sizes = [1, 1, 3, 32], strides = [1, 1, 1, 1]} : vector<3x3x3x32xbf16> to vector<1x1x3x32xbf16>
    %50 = vector.shape_cast %49 : vector<1x1x3x32xbf16> to vector<3x32xbf16>
    %cst_13 = arith.constant dense<0.000000e+00> : vector<392x32xf32>
    %51 = tpu.matmul %48, %50, %cst_13 {dimension_numbers = #tpu.dot_dimension_numbers<[1], [0], [0], [1], [0, 0, 1, 1], [], []>} : vector<392x3xbf16>, vector<3x32xbf16>, vector<392x32xf32> -> vector<392x32xf32>
    %52 = arith.addf %45, %51 : vector<392x32xf32>
    %53 = vector.extract_strided_slice %0 {offsets = [0, 2, 1, 0], sizes = [2, 14, 14, 3], strides = [1, 1, 1, 1]} : vector<2x16x16x3xf32> to vector<2x14x14x3xf32>
    %54 = vector.shape_cast %53 : vector<2x14x14x3xf32> to vector<392x3xf32>
    %55 = arith.truncf %54 : vector<392x3xf32> to vector<392x3xbf16>
    %56 = vector.extract_strided_slice %2 {offsets = [2, 1, 0, 0], sizes = [1, 1, 3, 32], strides = [1, 1, 1, 1]} : vector<3x3x3x32xbf16> to vector<1x1x3x32xbf16>
    %57 = vector.shape_cast %56 : vector<1x1x3x32xbf16> to vector<3x32xbf16>
    %cst_14 = arith.constant dense<0.000000e+00> : vector<392x32xf32>
    %58 = tpu.matmul %55, %57, %cst_14 {dimension_numbers = #tpu.dot_dimension_numbers<[1], [0], [0], [1], [0, 0, 1, 1], [], []>} : vector<392x3xbf16>, vector<3x32xbf16>, vector<392x32xf32> -> vector<392x32xf32>
    %59 = arith.addf %52, %58 : vector<392x32xf32>
    %60 = vector.extract_strided_slice %0 {offsets = [0, 2, 2, 0], sizes = [2, 14, 14, 3], strides = [1, 1, 1, 1]} : vector<2x16x16x3xf32> to vector<2x14x14x3xf32>
    %61 = vector.shape_cast %60 : vector<2x14x14x3xf32> to vector<392x3xf32>
    %62 = arith.truncf %61 : vector<392x3xf32> to vector<392x3xbf16>
    %63 = vector.extract_strided_slice %2 {offsets = [2, 2, 0, 0], sizes = [1, 1, 3, 32], strides = [1, 1, 1, 1]} : vector<3x3x3x32xbf16> to vector<1x1x3x32xbf16>
    %64 = vector.shape_cast %63 : vector<1x1x3x32xbf16> to vector<3x32xbf16>
    %cst_15 = arith.constant dense<0.000000e+00> : vector<392x32xf32>
    %65 = tpu.matmul %62, %64, %cst_15 {dimension_numbers = #tpu.dot_dimension_numbers<[1], [0], [0], [1], [0, 0, 1, 1], [], []>} : vector<392x3xbf16>, vector<3x32xbf16>, vector<392x32xf32> -> vector<392x32xf32>
    %66 = arith.addf %59, %65 : vector<392x32xf32>
    %c0_16 = arith.constant 0 : index
    %c0_17 = arith.constant 0 : index
    %67 = vector.load %arg3[%c0_16, %c0_17] : memref<1x32xf32, #tpu.memory_space<vmem>>, vector<1x32xf32>
    %68 = vector.broadcast %67 : vector<1x32xf32> to vector<392x32xf32>
    %69 = arith.addf %66, %68 : vector<392x32xf32>
    %cst_18 = arith.constant 0.000000e+00 : f32
    %70 = vector.broadcast %cst_18 : f32 to vector<392x32xf32>
    %71 = arith.maximumf %69, %70 : vector<392x32xf32>
    %72 = vector.shape_cast %71 : vector<392x32xf32> to vector<2x14x14x32xf32>
    %73 = vector.shape_cast %72 : vector<2x14x14x32xf32> to vector<2x7x2x14x32xf32>
    %74 = vector.extract_strided_slice %73 {offsets = [0, 0, 0, 0, 0], sizes = [2, 7, 1, 14, 32], strides = [1, 1, 1, 1, 1]} : vector<2x7x2x14x32xf32> to vector<2x7x1x14x32xf32>
    %75 = vector.shape_cast %74 : vector<2x7x1x14x32xf32> to vector<2x7x14x32xf32>
    %76 = vector.extract_strided_slice %73 {offsets = [0, 0, 1, 0, 0], sizes = [2, 7, 1, 14, 32], strides = [1, 1, 1, 1, 1]} : vector<2x7x2x14x32xf32> to vector<2x7x1x14x32xf32>
    %77 = vector.shape_cast %76 : vector<2x7x1x14x32xf32> to vector<2x7x14x32xf32>
    %78 = arith.maximumf %75, %77 : vector<2x7x14x32xf32>
    %79 = vector.shape_cast %78 : vector<2x7x14x32xf32> to vector<2x7x7x2x32xf32>
    %80 = vector.extract_strided_slice %79 {offsets = [0, 0, 0, 0, 0], sizes = [2, 7, 7, 1, 32], strides = [1, 1, 1, 1, 1]} : vector<2x7x7x2x32xf32> to vector<2x7x7x1x32xf32>
    %81 = vector.shape_cast %80 : vector<2x7x7x1x32xf32> to vector<2x7x7x32xf32>
    %82 = vector.extract_strided_slice %79 {offsets = [0, 0, 0, 1, 0], sizes = [2, 7, 7, 1, 32], strides = [1, 1, 1, 1, 1]} : vector<2x7x7x2x32xf32> to vector<2x7x7x1x32xf32>
    %83 = vector.shape_cast %82 : vector<2x7x7x1x32xf32> to vector<2x7x7x32xf32>
    %84 = arith.maximumf %81, %83 : vector<2x7x7x32xf32>
    %c0_19 = arith.constant 0 : index
    %c0_20 = arith.constant 0 : index
    %c0_21 = arith.constant 0 : index
    %c0_22 = arith.constant 0 : index
    %85 = vector.load %arg4[%c0_19, %c0_20, %c0_21, %c0_22] : memref<3x3x32x64xf32, #tpu.memory_space<vmem>>, vector<3x3x32x64xf32>
    %86 = arith.truncf %85 : vector<3x3x32x64xf32> to vector<3x3x32x64xbf16>
    %cst_23 = arith.constant 0.000000e+00 : f32
    %87 = vector.broadcast %cst_23 : f32 to vector<50x64xf32>
    %88 = vector.extract_strided_slice %84 {offsets = [0, 0, 0, 0], sizes = [2, 5, 5, 32], strides = [1, 1, 1, 1]} : vector<2x7x7x32xf32> to vector<2x5x5x32xf32>
    %89 = vector.shape_cast %88 : vector<2x5x5x32xf32> to vector<50x32xf32>
    %90 = arith.truncf %89 : vector<50x32xf32> to vector<50x32xbf16>
    %91 = vector.extract_strided_slice %86 {offsets = [0, 0, 0, 0], sizes = [1, 1, 32, 64], strides = [1, 1, 1, 1]} : vector<3x3x32x64xbf16> to vector<1x1x32x64xbf16>
    %92 = vector.shape_cast %91 : vector<1x1x32x64xbf16> to vector<32x64xbf16>
    %cst_24 = arith.constant dense<0.000000e+00> : vector<50x64xf32>
    %93 = tpu.matmul %90, %92, %cst_24 {dimension_numbers = #tpu.dot_dimension_numbers<[1], [0], [0], [1], [0, 0, 1, 1], [], []>} : vector<50x32xbf16>, vector<32x64xbf16>, vector<50x64xf32> -> vector<50x64xf32>
    %94 = arith.addf %87, %93 : vector<50x64xf32>
    %95 = vector.extract_strided_slice %84 {offsets = [0, 0, 1, 0], sizes = [2, 5, 5, 32], strides = [1, 1, 1, 1]} : vector<2x7x7x32xf32> to vector<2x5x5x32xf32>
    %96 = vector.shape_cast %95 : vector<2x5x5x32xf32> to vector<50x32xf32>
    %97 = arith.truncf %96 : vector<50x32xf32> to vector<50x32xbf16>
    %98 = vector.extract_strided_slice %86 {offsets = [0, 1, 0, 0], sizes = [1, 1, 32, 64], strides = [1, 1, 1, 1]} : vector<3x3x32x64xbf16> to vector<1x1x32x64xbf16>
    %99 = vector.shape_cast %98 : vector<1x1x32x64xbf16> to vector<32x64xbf16>
    %cst_25 = arith.constant dense<0.000000e+00> : vector<50x64xf32>
    %100 = tpu.matmul %97, %99, %cst_25 {dimension_numbers = #tpu.dot_dimension_numbers<[1], [0], [0], [1], [0, 0, 1, 1], [], []>} : vector<50x32xbf16>, vector<32x64xbf16>, vector<50x64xf32> -> vector<50x64xf32>
    %101 = arith.addf %94, %100 : vector<50x64xf32>
    %102 = vector.extract_strided_slice %84 {offsets = [0, 0, 2, 0], sizes = [2, 5, 5, 32], strides = [1, 1, 1, 1]} : vector<2x7x7x32xf32> to vector<2x5x5x32xf32>
    %103 = vector.shape_cast %102 : vector<2x5x5x32xf32> to vector<50x32xf32>
    %104 = arith.truncf %103 : vector<50x32xf32> to vector<50x32xbf16>
    %105 = vector.extract_strided_slice %86 {offsets = [0, 2, 0, 0], sizes = [1, 1, 32, 64], strides = [1, 1, 1, 1]} : vector<3x3x32x64xbf16> to vector<1x1x32x64xbf16>
    %106 = vector.shape_cast %105 : vector<1x1x32x64xbf16> to vector<32x64xbf16>
    %cst_26 = arith.constant dense<0.000000e+00> : vector<50x64xf32>
    %107 = tpu.matmul %104, %106, %cst_26 {dimension_numbers = #tpu.dot_dimension_numbers<[1], [0], [0], [1], [0, 0, 1, 1], [], []>} : vector<50x32xbf16>, vector<32x64xbf16>, vector<50x64xf32> -> vector<50x64xf32>
    %108 = arith.addf %101, %107 : vector<50x64xf32>
    %109 = vector.extract_strided_slice %84 {offsets = [0, 1, 0, 0], sizes = [2, 5, 5, 32], strides = [1, 1, 1, 1]} : vector<2x7x7x32xf32> to vector<2x5x5x32xf32>
    %110 = vector.shape_cast %109 : vector<2x5x5x32xf32> to vector<50x32xf32>
    %111 = arith.truncf %110 : vector<50x32xf32> to vector<50x32xbf16>
    %112 = vector.extract_strided_slice %86 {offsets = [1, 0, 0, 0], sizes = [1, 1, 32, 64], strides = [1, 1, 1, 1]} : vector<3x3x32x64xbf16> to vector<1x1x32x64xbf16>
    %113 = vector.shape_cast %112 : vector<1x1x32x64xbf16> to vector<32x64xbf16>
    %cst_27 = arith.constant dense<0.000000e+00> : vector<50x64xf32>
    %114 = tpu.matmul %111, %113, %cst_27 {dimension_numbers = #tpu.dot_dimension_numbers<[1], [0], [0], [1], [0, 0, 1, 1], [], []>} : vector<50x32xbf16>, vector<32x64xbf16>, vector<50x64xf32> -> vector<50x64xf32>
    %115 = arith.addf %108, %114 : vector<50x64xf32>
    %116 = vector.extract_strided_slice %84 {offsets = [0, 1, 1, 0], sizes = [2, 5, 5, 32], strides = [1, 1, 1, 1]} : vector<2x7x7x32xf32> to vector<2x5x5x32xf32>
    %117 = vector.shape_cast %116 : vector<2x5x5x32xf32> to vector<50x32xf32>
    %118 = arith.truncf %117 : vector<50x32xf32> to vector<50x32xbf16>
    %119 = vector.extract_strided_slice %86 {offsets = [1, 1, 0, 0], sizes = [1, 1, 32, 64], strides = [1, 1, 1, 1]} : vector<3x3x32x64xbf16> to vector<1x1x32x64xbf16>
    %120 = vector.shape_cast %119 : vector<1x1x32x64xbf16> to vector<32x64xbf16>
    %cst_28 = arith.constant dense<0.000000e+00> : vector<50x64xf32>
    %121 = tpu.matmul %118, %120, %cst_28 {dimension_numbers = #tpu.dot_dimension_numbers<[1], [0], [0], [1], [0, 0, 1, 1], [], []>} : vector<50x32xbf16>, vector<32x64xbf16>, vector<50x64xf32> -> vector<50x64xf32>
    %122 = arith.addf %115, %121 : vector<50x64xf32>
    %123 = vector.extract_strided_slice %84 {offsets = [0, 1, 2, 0], sizes = [2, 5, 5, 32], strides = [1, 1, 1, 1]} : vector<2x7x7x32xf32> to vector<2x5x5x32xf32>
    %124 = vector.shape_cast %123 : vector<2x5x5x32xf32> to vector<50x32xf32>
    %125 = arith.truncf %124 : vector<50x32xf32> to vector<50x32xbf16>
    %126 = vector.extract_strided_slice %86 {offsets = [1, 2, 0, 0], sizes = [1, 1, 32, 64], strides = [1, 1, 1, 1]} : vector<3x3x32x64xbf16> to vector<1x1x32x64xbf16>
    %127 = vector.shape_cast %126 : vector<1x1x32x64xbf16> to vector<32x64xbf16>
    %cst_29 = arith.constant dense<0.000000e+00> : vector<50x64xf32>
    %128 = tpu.matmul %125, %127, %cst_29 {dimension_numbers = #tpu.dot_dimension_numbers<[1], [0], [0], [1], [0, 0, 1, 1], [], []>} : vector<50x32xbf16>, vector<32x64xbf16>, vector<50x64xf32> -> vector<50x64xf32>
    %129 = arith.addf %122, %128 : vector<50x64xf32>
    %130 = vector.extract_strided_slice %84 {offsets = [0, 2, 0, 0], sizes = [2, 5, 5, 32], strides = [1, 1, 1, 1]} : vector<2x7x7x32xf32> to vector<2x5x5x32xf32>
    %131 = vector.shape_cast %130 : vector<2x5x5x32xf32> to vector<50x32xf32>
    %132 = arith.truncf %131 : vector<50x32xf32> to vector<50x32xbf16>
    %133 = vector.extract_strided_slice %86 {offsets = [2, 0, 0, 0], sizes = [1, 1, 32, 64], strides = [1, 1, 1, 1]} : vector<3x3x32x64xbf16> to vector<1x1x32x64xbf16>
    %134 = vector.shape_cast %133 : vector<1x1x32x64xbf16> to vector<32x64xbf16>
    %cst_30 = arith.constant dense<0.000000e+00> : vector<50x64xf32>
    %135 = tpu.matmul %132, %134, %cst_30 {dimension_numbers = #tpu.dot_dimension_numbers<[1], [0], [0], [1], [0, 0, 1, 1], [], []>} : vector<50x32xbf16>, vector<32x64xbf16>, vector<50x64xf32> -> vector<50x64xf32>
    %136 = arith.addf %129, %135 : vector<50x64xf32>
    %137 = vector.extract_strided_slice %84 {offsets = [0, 2, 1, 0], sizes = [2, 5, 5, 32], strides = [1, 1, 1, 1]} : vector<2x7x7x32xf32> to vector<2x5x5x32xf32>
    %138 = vector.shape_cast %137 : vector<2x5x5x32xf32> to vector<50x32xf32>
    %139 = arith.truncf %138 : vector<50x32xf32> to vector<50x32xbf16>
    %140 = vector.extract_strided_slice %86 {offsets = [2, 1, 0, 0], sizes = [1, 1, 32, 64], strides = [1, 1, 1, 1]} : vector<3x3x32x64xbf16> to vector<1x1x32x64xbf16>
    %141 = vector.shape_cast %140 : vector<1x1x32x64xbf16> to vector<32x64xbf16>
    %cst_31 = arith.constant dense<0.000000e+00> : vector<50x64xf32>
    %142 = tpu.matmul %139, %141, %cst_31 {dimension_numbers = #tpu.dot_dimension_numbers<[1], [0], [0], [1], [0, 0, 1, 1], [], []>} : vector<50x32xbf16>, vector<32x64xbf16>, vector<50x64xf32> -> vector<50x64xf32>
    %143 = arith.addf %136, %142 : vector<50x64xf32>
    %144 = vector.extract_strided_slice %84 {offsets = [0, 2, 2, 0], sizes = [2, 5, 5, 32], strides = [1, 1, 1, 1]} : vector<2x7x7x32xf32> to vector<2x5x5x32xf32>
    %145 = vector.shape_cast %144 : vector<2x5x5x32xf32> to vector<50x32xf32>
    %146 = arith.truncf %145 : vector<50x32xf32> to vector<50x32xbf16>
    %147 = vector.extract_strided_slice %86 {offsets = [2, 2, 0, 0], sizes = [1, 1, 32, 64], strides = [1, 1, 1, 1]} : vector<3x3x32x64xbf16> to vector<1x1x32x64xbf16>
    %148 = vector.shape_cast %147 : vector<1x1x32x64xbf16> to vector<32x64xbf16>
    %cst_32 = arith.constant dense<0.000000e+00> : vector<50x64xf32>
    %149 = tpu.matmul %146, %148, %cst_32 {dimension_numbers = #tpu.dot_dimension_numbers<[1], [0], [0], [1], [0, 0, 1, 1], [], []>} : vector<50x32xbf16>, vector<32x64xbf16>, vector<50x64xf32> -> vector<50x64xf32>
    %150 = arith.addf %143, %149 : vector<50x64xf32>
    %c0_33 = arith.constant 0 : index
    %c0_34 = arith.constant 0 : index
    %151 = vector.load %arg5[%c0_33, %c0_34] : memref<1x64xf32, #tpu.memory_space<vmem>>, vector<1x64xf32>
    %152 = vector.broadcast %151 : vector<1x64xf32> to vector<50x64xf32>
    %153 = arith.addf %150, %152 : vector<50x64xf32>
    %cst_35 = arith.constant 0.000000e+00 : f32
    %154 = vector.broadcast %cst_35 : f32 to vector<50x64xf32>
    %155 = arith.maximumf %153, %154 : vector<50x64xf32>
    %156 = vector.shape_cast %155 : vector<50x64xf32> to vector<2x5x5x64xf32>
    %157 = vector.extract_strided_slice %156 {offsets = [0, 0, 0, 0], sizes = [2, 4, 4, 64], strides = [1, 1, 1, 1]} : vector<2x5x5x64xf32> to vector<2x4x4x64xf32>
    %158 = vector.shape_cast %157 : vector<2x4x4x64xf32> to vector<2x2x2x4x64xf32>
    %159 = vector.extract_strided_slice %158 {offsets = [0, 0, 0, 0, 0], sizes = [2, 2, 1, 4, 64], strides = [1, 1, 1, 1, 1]} : vector<2x2x2x4x64xf32> to vector<2x2x1x4x64xf32>
    %160 = vector.shape_cast %159 : vector<2x2x1x4x64xf32> to vector<2x2x4x64xf32>
    %161 = vector.extract_strided_slice %158 {offsets = [0, 0, 1, 0, 0], sizes = [2, 2, 1, 4, 64], strides = [1, 1, 1, 1, 1]} : vector<2x2x2x4x64xf32> to vector<2x2x1x4x64xf32>
    %162 = vector.shape_cast %161 : vector<2x2x1x4x64xf32> to vector<2x2x4x64xf32>
    %163 = arith.maximumf %160, %162 : vector<2x2x4x64xf32>
    %164 = vector.shape_cast %163 : vector<2x2x4x64xf32> to vector<2x2x2x2x64xf32>
    %165 = vector.extract_strided_slice %164 {offsets = [0, 0, 0, 0, 0], sizes = [2, 2, 2, 1, 64], strides = [1, 1, 1, 1, 1]} : vector<2x2x2x2x64xf32> to vector<2x2x2x1x64xf32>
    %166 = vector.shape_cast %165 : vector<2x2x2x1x64xf32> to vector<2x2x2x64xf32>
    %167 = vector.extract_strided_slice %164 {offsets = [0, 0, 0, 1, 0], sizes = [2, 2, 2, 1, 64], strides = [1, 1, 1, 1, 1]} : vector<2x2x2x2x64xf32> to vector<2x2x2x1x64xf32>
    %168 = vector.shape_cast %167 : vector<2x2x2x1x64xf32> to vector<2x2x2x64xf32>
    %169 = arith.maximumf %166, %168 : vector<2x2x2x64xf32>
    %c0_36 = arith.constant 0 : index
    %c0_37 = arith.constant 0 : index
    %170 = vector.load %arg6[%c0_36, %c0_37] : memref<256x128xf32, #tpu.memory_space<vmem>>, vector<256x128xf32>
    %171 = arith.truncf %170 : vector<256x128xf32> to vector<256x128xbf16>
    %cst_38 = arith.constant 0.000000e+00 : f32
    %172 = vector.broadcast %cst_38 : f32 to vector<2x128xf32>
    %173 = vector.extract_strided_slice %169 {offsets = [0, 0, 0, 0], sizes = [2, 1, 1, 64], strides = [1, 1, 1, 1]} : vector<2x2x2x64xf32> to vector<2x1x1x64xf32>
    %174 = vector.shape_cast %173 : vector<2x1x1x64xf32> to vector<2x64xf32>
    %175 = arith.truncf %174 : vector<2x64xf32> to vector<2x64xbf16>
    %176 = vector.extract_strided_slice %171 {offsets = [0, 0], sizes = [64, 128], strides = [1, 1]} : vector<256x128xbf16> to vector<64x128xbf16>
    %cst_39 = arith.constant dense<0.000000e+00> : vector<2x128xf32>
    %177 = tpu.matmul %175, %176, %cst_39 {dimension_numbers = #tpu.dot_dimension_numbers<[1], [0], [0], [1], [0, 0, 1, 1], [], []>} : vector<2x64xbf16>, vector<64x128xbf16>, vector<2x128xf32> -> vector<2x128xf32>
    %178 = arith.addf %172, %177 : vector<2x128xf32>
    %179 = vector.extract_strided_slice %169 {offsets = [0, 0, 1, 0], sizes = [2, 1, 1, 64], strides = [1, 1, 1, 1]} : vector<2x2x2x64xf32> to vector<2x1x1x64xf32>
    %180 = vector.shape_cast %179 : vector<2x1x1x64xf32> to vector<2x64xf32>
    %181 = arith.truncf %180 : vector<2x64xf32> to vector<2x64xbf16>
    %182 = vector.extract_strided_slice %171 {offsets = [64, 0], sizes = [64, 128], strides = [1, 1]} : vector<256x128xbf16> to vector<64x128xbf16>
    %cst_40 = arith.constant dense<0.000000e+00> : vector<2x128xf32>
    %183 = tpu.matmul %181, %182, %cst_40 {dimension_numbers = #tpu.dot_dimension_numbers<[1], [0], [0], [1], [0, 0, 1, 1], [], []>} : vector<2x64xbf16>, vector<64x128xbf16>, vector<2x128xf32> -> vector<2x128xf32>
    %184 = arith.addf %178, %183 : vector<2x128xf32>
    %185 = vector.extract_strided_slice %169 {offsets = [0, 1, 0, 0], sizes = [2, 1, 1, 64], strides = [1, 1, 1, 1]} : vector<2x2x2x64xf32> to vector<2x1x1x64xf32>
    %186 = vector.shape_cast %185 : vector<2x1x1x64xf32> to vector<2x64xf32>
    %187 = arith.truncf %186 : vector<2x64xf32> to vector<2x64xbf16>
    %188 = vector.extract_strided_slice %171 {offsets = [128, 0], sizes = [64, 128], strides = [1, 1]} : vector<256x128xbf16> to vector<64x128xbf16>
    %cst_41 = arith.constant dense<0.000000e+00> : vector<2x128xf32>
    %189 = tpu.matmul %187, %188, %cst_41 {dimension_numbers = #tpu.dot_dimension_numbers<[1], [0], [0], [1], [0, 0, 1, 1], [], []>} : vector<2x64xbf16>, vector<64x128xbf16>, vector<2x128xf32> -> vector<2x128xf32>
    %190 = arith.addf %184, %189 : vector<2x128xf32>
    %191 = vector.extract_strided_slice %169 {offsets = [0, 1, 1, 0], sizes = [2, 1, 1, 64], strides = [1, 1, 1, 1]} : vector<2x2x2x64xf32> to vector<2x1x1x64xf32>
    %192 = vector.shape_cast %191 : vector<2x1x1x64xf32> to vector<2x64xf32>
    %193 = arith.truncf %192 : vector<2x64xf32> to vector<2x64xbf16>
    %194 = vector.extract_strided_slice %171 {offsets = [192, 0], sizes = [64, 128], strides = [1, 1]} : vector<256x128xbf16> to vector<64x128xbf16>
    %cst_42 = arith.constant dense<0.000000e+00> : vector<2x128xf32>
    %195 = tpu.matmul %193, %194, %cst_42 {dimension_numbers = #tpu.dot_dimension_numbers<[1], [0], [0], [1], [0, 0, 1, 1], [], []>} : vector<2x64xbf16>, vector<64x128xbf16>, vector<2x128xf32> -> vector<2x128xf32>
    %196 = arith.addf %190, %195 : vector<2x128xf32>
    %c0_43 = arith.constant 0 : index
    %c0_44 = arith.constant 0 : index
    %197 = vector.load %arg7[%c0_43, %c0_44] : memref<1x128xf32, #tpu.memory_space<vmem>>, vector<1x128xf32>
    %198 = vector.broadcast %197 : vector<1x128xf32> to vector<2x128xf32>
    %199 = arith.addf %196, %198 : vector<2x128xf32>
    %cst_45 = arith.constant 0.000000e+00 : f32
    %200 = vector.broadcast %cst_45 : f32 to vector<2x128xf32>
    %201 = arith.maximumf %199, %200 : vector<2x128xf32>
    %202 = arith.truncf %201 : vector<2x128xf32> to vector<2x128xbf16>
    %c0_46 = arith.constant 0 : index
    %c0_47 = arith.constant 0 : index
    %203 = vector.load %arg8[%c0_46, %c0_47] : memref<128x128xf32, #tpu.memory_space<vmem>>, vector<128x128xf32>
    %204 = arith.truncf %203 : vector<128x128xf32> to vector<128x128xbf16>
    %cst_48 = arith.constant dense<0.000000e+00> : vector<2x128xf32>
    %205 = tpu.matmul %202, %204, %cst_48 {dimension_numbers = #tpu.dot_dimension_numbers<[1], [0], [0], [1], [0, 0, 1, 1], [], []>} : vector<2x128xbf16>, vector<128x128xbf16>, vector<2x128xf32> -> vector<2x128xf32>
    %c0_49 = arith.constant 0 : index
    %c0_50 = arith.constant 0 : index
    %206 = vector.load %arg9[%c0_49, %c0_50] : memref<1x128xf32, #tpu.memory_space<vmem>>, vector<1x128xf32>
    %207 = vector.broadcast %206 : vector<1x128xf32> to vector<2x128xf32>
    %208 = arith.addf %205, %207 : vector<2x128xf32>
    %c0_51 = arith.constant 0 : index
    %c0_52 = arith.constant 0 : index
    %209 = vector.load %arg10[%c0_51, %c0_52] : memref<2x128xf32, #tpu.memory_space<vmem>>, vector<2x128xf32>
    tpu.vector_store %arg10[%c0_51, %c0_52], %208 {strides = array<i32>} : memref<2x128xf32, #tpu.memory_space<vmem>>, vector<2x128xf32>,
    return
  }
  func.func @transform_0(%arg0: i32) -> (i32, i32, i32, i32) {
    %c0_i32 = arith.constant 0 : i32
    %c0_i32_0 = arith.constant 0 : i32
    %c0_i32_1 = arith.constant 0 : i32
    %c0_i32_2 = arith.constant 0 : i32
    return %arg0, %c0_i32, %c0_i32_0, %c0_i32_1 : i32, i32, i32, i32
  }
  func.func @transform_1(%arg0: i32) -> (i32, i32, i32, i32) {
    %c0_i32 = arith.constant 0 : i32
    %c0_i32_0 = arith.constant 0 : i32
    %c0_i32_1 = arith.constant 0 : i32
    %c0_i32_2 = arith.constant 0 : i32
    %c0_i32_3 = arith.constant 0 : i32
    return %c0_i32, %c0_i32_0, %c0_i32_1, %c0_i32_2 : i32, i32, i32, i32
  }
  func.func @transform_2(%arg0: i32) -> (i32, i32) {
    %c0_i32 = arith.constant 0 : i32
    %c0_i32_0 = arith.constant 0 : i32
    %c0_i32_1 = arith.constant 0 : i32
    return %c0_i32, %c0_i32_0 : i32, i32
  }
  func.func @transform_3(%arg0: i32) -> (i32, i32, i32, i32) {
    %c0_i32 = arith.constant 0 : i32
    %c0_i32_0 = arith.constant 0 : i32
    %c0_i32_1 = arith.constant 0 : i32
    %c0_i32_2 = arith.constant 0 : i32
    %c0_i32_3 = arith.constant 0 : i32
    return %c0_i32, %c0_i32_0, %c0_i32_1, %c0_i32_2 : i32, i32, i32, i32
  }
  func.func @transform_4(%arg0: i32) -> (i32, i32) {
    %c0_i32 = arith.constant 0 : i32
    %c0_i32_0 = arith.constant 0 : i32
    %c0_i32_1 = arith.constant 0 : i32
    return %c0_i32, %c0_i32_0 : i32, i32
  }
  func.func @transform_5(%arg0: i32) -> (i32, i32) {
    %c0_i32 = arith.constant 0 : i32
    %c0_i32_0 = arith.constant 0 : i32
    %c0_i32_1 = arith.constant 0 : i32
    return %c0_i32, %c0_i32_0 : i32, i32
  }
  func.func @transform_6(%arg0: i32) -> (i32, i32) {
    %c0_i32 = arith.constant 0 : i32
    %c0_i32_0 = arith.constant 0 : i32
    %c0_i32_1 = arith.constant 0 : i32
    return %c0_i32, %c0_i32_0 : i32, i32
  }
  func.func @transform_7(%arg0: i32) -> (i32, i32) {
    %c0_i32 = arith.constant 0 : i32
    %c0_i32_0 = arith.constant 0 : i32
    %c0_i32_1 = arith.constant 0 : i32
    return %c0_i32, %c0_i32_0 : i32, i32
  }
  func.func @transform_8(%arg0: i32) -> (i32, i32) {
    %c0_i32 = arith.constant 0 : i32
    %c0_i32_0 = arith.constant 0 : i32
    %c0_i32_1 = arith.constant 0 : i32
    return %c0_i32, %c0_i32_0 : i32, i32
  }
  func.func @transform_9(%arg0: i32) -> (i32, i32) {
    %c0_i32 = arith.constant 0 : i32
    %c0_i32_0 = arith.constant 0 : i32
    return %arg0, %c0_i32 : i32, i32
  }
}

</mosaic_0001>

<llo_original>
// kernel: rnn_forward.1
$region0: #{rnn_forward.1}
  #allocation0 [shape = 'u32[]', space=smem, size = 0x4, offset = 0x4, fixed_abs, tag = 'smem constant byte address 0x4 - core index']
  #allocation1 [shape = 'u32[144,128]{1,0:T(1,128)}', space=vmem, size = 0x12000, scoped, tag = 'internal scratch']
  %s0 = inlined_call_operand.vmem [shape: f32[2,16,16,3], index: 0, kind: input, shape index: {}]
  %s1 = inlined_call_operand.vmem [shape: f32[3,3,3,32], index: 1, kind: input, shape index: {}]
  %s2 = inlined_call_operand.vmem [shape: f32[1,32], index: 2, kind: input, shape index: {}]
  %s3 = inlined_call_operand.vmem [shape: f32[3,3,32,64], index: 3, kind: input, shape index: {}]
  %s4 = inlined_call_operand.vmem [shape: f32[1,64], index: 4, kind: input, shape index: {}]
  %s5 = inlined_call_operand.vmem [shape: f32[256,128], index: 5, kind: input, shape index: {}]
  %s6 = inlined_call_operand.vmem [shape: f32[1,128], index: 6, kind: input, shape index: {}]
  %s7 = inlined_call_operand.vmem [shape: f32[128,128], index: 7, kind: input, shape index: {}]
  %s8 = inlined_call_operand.vmem [shape: f32[1,128], index: 8, kind: input, shape index: {}]
  %s9 = inlined_call_operand.hbm [shape: f32[2,128], index: 9, kind: output, shape index: {}]
  %s10 = sld [smem:[#allocation0]]
  $region46: #{rnn_forward.1} parent=0
    _
  %s12 = ssub.s32 1, %s10
  %s13 = scalar_select 0, %s12, %s10
  $region1: #{rnn_forward.1} parent=0
    #allocation2 [shape = 'u8[1024]{0}', space=vmem, size = 0x400, scoped, tag = 'output window, operand 0, single buffered']
    #allocation3 [shape = 's32[1]{0}', space=sflag, size = 0x4, scoped, tag = 'scoped memory for rnn_forward.1']
    %14 = vsyncpa [#allocation3], 0
    // Predicated region
    $region2: #{rnn_forward.1} parent=1 // pred_check
      _
    $region3: #{rnn_forward.1} parent=1 // pred_check_branch
      %16 = sbr.rel (0) target = $region5
    $region4: #{rnn_forward.1} parent=1 // pred_region
      _
    $region5: #{rnn_forward.1} parent=1 // pred_fallthru
      _
    // Predicated region
    $region6: #{rnn_forward.1} parent=1 // pred_check
      _
    $region7: #{rnn_forward.1} parent=1 // pred_check_branch
      %18 = sbr.rel (0) target = $region9
    $region8: #{rnn_forward.1} parent=1 // pred_region
      _
    $region9: #{rnn_forward.1} parent=1 // pred_fallthru
      _
    // Predicated region
    $region10: #{rnn_forward.1} parent=1 // pred_check
      _
    $region11: #{rnn_forward.1} parent=1 // pred_check_branch
      %20 = sbr.rel (0) target = $region13
    $region12: #{rnn_forward.1} parent=1 // pred_region
      _
    $region13: #{rnn_forward.1} parent=1 // pred_fallthru
      _
    // Predicated region
    $region14: #{rnn_forward.1} parent=1 // pred_check
      _
    $region15: #{rnn_forward.1} parent=1 // pred_check_branch
      %22 = sbr.rel (0) target = $region17
    $region16: #{rnn_forward.1} parent=1 // pred_region
      _
    $region17: #{rnn_forward.1} parent=1 // pred_fallthru
      _
    // Predicated region
    $region18: #{rnn_forward.1} parent=1 // pred_check
      _
    $region19: #{rnn_forward.1} parent=1 // pred_check_branch
      %24 = sbr.rel (0) target = $region21
    $region20: #{rnn_forward.1} parent=1 // pred_region
      _
    $region21: #{rnn_forward.1} parent=1 // pred_fallthru
      _
    // Predicated region
    $region22: #{rnn_forward.1} parent=1 // pred_check
      _
    $region23: #{rnn_forward.1} parent=1 // pred_check_branch
      %26 = sbr.rel (0) target = $region25
    $region24: #{rnn_forward.1} parent=1 // pred_region
      _
    $region25: #{rnn_forward.1} parent=1 // pred_fallthru
      _
    // Predicated region
    $region26: #{rnn_forward.1} parent=1 // pred_check
      _
    $region27: #{rnn_forward.1} parent=1 // pred_check_branch
      %28 = sbr.rel (0) target = $region29
    $region28: #{rnn_forward.1} parent=1 // pred_region
      _
    $region29: #{rnn_forward.1} parent=1 // pred_fallthru
      _
    // Predicated region
    $region30: #{rnn_forward.1} parent=1 // pred_check
      _
    $region31: #{rnn_forward.1} parent=1 // pred_check_branch
      %30 = sbr.rel (0) target = $region33
    $region32: #{rnn_forward.1} parent=1 // pred_region
      _
    $region33: #{rnn_forward.1} parent=1 // pred_fallthru
      _
    // Predicated region
    $region34: #{rnn_forward.1} parent=1 // pred_check
      _
    $region35: #{rnn_forward.1} parent=1 // pred_check_branch
      %32 = sbr.rel (0) target = $region37
    $region36: #{rnn_forward.1} parent=1 // pred_region
      _
    $region37: #{rnn_forward.1} parent=1 // pred_fallthru
      _
    %v34 = vld [vmem:[%s0] sm:$0xff]
    %v35 = vld [vmem:[%s0 + $0x8] sm:$0xff]
    %v36 = vld [vmem:[%s0 + $0x10] sm:$0xff]
    %v37 = vld [vmem:[%s0 + $0x18] sm:$0xff]
    %v38 = vld [vmem:[%s0 + $0x20] sm:$0xff]
    %v39 = vld [vmem:[%s0 + $0x28] sm:$0xff]
    %v40 = vld [vmem:[%s0 + $0x30] sm:$0xff]
    %v41 = vld [vmem:[%s0 + $0x38] sm:$0xff]
    %v42 = vld [vmem:[%s0 + $0x40] sm:$0xff]
    %v43 = vld [vmem:[%s0 + $0x48] sm:$0xff]
    %v44 = vld [vmem:[%s0 + $0x50] sm:$0xff]
    %v45 = vld [vmem:[%s0 + $0x58] sm:$0xff]
    %v46 = vld [vmem:[%s0 + $0x60] sm:$0xff]
    %v47 = vld [vmem:[%s0 + $0x68] sm:$0xff]
    %v48 = vld [vmem:[%s0 + $0x70] sm:$0xff]
    %v49 = vld [vmem:[%s0 + $0x78] sm:$0xff]
    %v50 = vld [vmem:[%s0 + $0x80] sm:$0xff]
    %v51 = vld [vmem:[%s0 + $0x88] sm:$0xff]
    %v52 = vld [vmem:[%s0 + $0x90] sm:$0xff]
    %v53 = vld [vmem:[%s0 + $0x98] sm:$0xff]
    %v54 = vld [vmem:[%s0 + $0xa0] sm:$0xff]
    %v55 = vld [vmem:[%s0 + $0xa8] sm:$0xff]
    %v56 = vld [vmem:[%s0 + $0xb0] sm:$0xff]
    %v57 = vld [vmem:[%s0 + $0xb8] sm:$0xff]
    %v58 = vld [vmem:[%s0 + $0xc0] sm:$0xff]
    %v59 = vld [vmem:[%s0 + $0xc8] sm:$0xff]
    %v60 = vld [vmem:[%s0 + $0xd0] sm:$0xff]
    %v61 = vld [vmem:[%s0 + $0xd8] sm:$0xff]
    %v62 = vld [vmem:[%s0 + $0xe0] sm:$0xff]
    %v63 = vld [vmem:[%s0 + $0xe8] sm:$0xff]
    %v64 = vld [vmem:[%s0 + $0xf0] sm:$0xff]
    %v65 = vld [vmem:[%s0 + $0xf8] sm:$0xff]
    %v66 = vld [vmem:[%s0 + $0x100] sm:$0xff]
    %v67 = vld [vmem:[%s0 + $0x108] sm:$0xff]
    %v68 = vld [vmem:[%s0 + $0x110] sm:$0xff]
    %v69 = vld [vmem:[%s0 + $0x118] sm:$0xff]
    %v70 = vld [vmem:[%s0 + $0x120] sm:$0xff]
    %v71 = vld [vmem:[%s0 + $0x128] sm:$0xff]
    %v72 = vld [vmem:[%s0 + $0x130] sm:$0xff]
    %v73 = vld [vmem:[%s0 + $0x138] sm:$0xff]
    %v74 = vld [vmem:[%s0 + $0x140] sm:$0xff]
    %v75 = vld [vmem:[%s0 + $0x148] sm:$0xff]
    %v76 = vld [vmem:[%s0 + $0x150] sm:$0xff]
    %v77 = vld [vmem:[%s0 + $0x158] sm:$0xff]
    %v78 = vld [vmem:[%s0 + $0x160] sm:$0xff]
    %v79 = vld [vmem:[%s0 + $0x168] sm:$0xff]
    %v80 = vld [vmem:[%s0 + $0x170] sm:$0xff]
    %v81 = vld [vmem:[%s0 + $0x178] sm:$0xff]
    %v82 = vld [vmem:[%s0 + $0x180] sm:$0xff]
    %v83 = vld [vmem:[%s0 + $0x188] sm:$0xff]
    %v84 = vld [vmem:[%s0 + $0x190] sm:$0xff]
    %v85 = vld [vmem:[%s0 + $0x198] sm:$0xff]
    %v86 = vld [vmem:[%s0 + $0x1a0] sm:$0xff]
    %v87 = vld [vmem:[%s0 + $0x1a8] sm:$0xff]
    %v88 = vld [vmem:[%s0 + $0x1b0] sm:$0xff]
    %v89 = vld [vmem:[%s0 + $0x1b8] sm:$0xff]
    %v90 = vld [vmem:[%s0 + $0x1c0] sm:$0xff]
    %v91 = vld [vmem:[%s0 + $0x1c8] sm:$0xff]
    %v92 = vld [vmem:[%s0 + $0x1d0] sm:$0xff]
    %v93 = vld [vmem:[%s0 + $0x1d8] sm:$0xff]
    %v94 = vld [vmem:[%s0 + $0x1e0] sm:$0xff]
    %v95 = vld [vmem:[%s0 + $0x1e8] sm:$0xff]
    %v96 = vld [vmem:[%s0 + $0x1f0] sm:$0xff]
    %v97 = vld [vmem:[%s0 + $0x1f8] sm:$0xff]
    %v98 = vld [vmem:[%s1] sm:$0x7]
    %v99 = vld [vmem:[%s1 + $0x4] sm:$0x7]
    %v100 = vld [vmem:[%s1 + $0x8] sm:$0x7]
    %v101 = vld [vmem:[%s1 + $0xc] sm:$0x7]
    %v102 = vld [vmem:[%s1 + $0x10] sm:$0x7]
    %v103 = vld [vmem:[%s1 + $0x14] sm:$0x7]
    %v104 = vld [vmem:[%s1 + $0x18] sm:$0x7]
    %v105 = vld [vmem:[%s1 + $0x1c] sm:$0x7]
    %v106 = vld [vmem:[%s1 + $0x20] sm:$0x7]
    %v107 = vpack.c.bf16 %v98, %v98
    %v108 = vpack.c.bf16 %v99, %v99
    %v109 = vpack.c.bf16 %v100, %v100
    %v110 = vpack.c.bf16 %v101, %v101
    %v111 = vpack.c.bf16 %v102, %v102
    %v112 = vpack.c.bf16 %v103, %v103
    %v113 = vpack.c.bf16 %v104, %v104
    %v114 = vpack.c.bf16 %v105, %v105
    %v115 = vpack.c.bf16 %v106, %v106
    %v172 = vcombine.high %v34, %v34
    %v174 = vunpack.c.l.s4 1983009808
    %v175 = vunpack.c.0.s8 %v174
    %v176 = vlaneseq
    %v177 = vshrl.u32 %v176, 7
    %v178 = vsub.s32 %v175, %v177
    %v179 = vrot.slane %v34, %v178
    %v181 = vunpack.c.l.s4 1983009808
    %v182 = vunpack.c.0.s8 %v181
    %v183 = vlaneseq
    %v184 = vshrl.u32 %v183, 7
    %v185 = vsub.s32 %v182, %v184
    %v186 = vrot.slane %v172, %v185
    %v187 = vcombine.high %v179, %v179
    %v188 = vcombine.high %v186, %v186
    %v189 = vcombine.high %v35, %v35
    %v191 = vunpack.c.l.s4 1983009808
    %v192 = vunpack.c.0.s8 %v191
    %v193 = vlaneseq
    %v194 = vshrl.u32 %v193, 7
    %v195 = vsub.s32 %v192, %v194
    %v196 = vrot.slane %v35, %v195
    %v198 = vunpack.c.l.s4 1983009808
    %v199 = vunpack.c.0.s8 %v198
    %v200 = vlaneseq
    %v201 = vshrl.u32 %v200, 7
    %v202 = vsub.s32 %v199, %v201
    %v203 = vrot.slane %v189, %v202
    %v204 = vcombine.high %v196, %v196
    %v205 = vcombine.high %v36, %v36
    %v207 = vunpack.c.l.s4 1983009808
    %v208 = vunpack.c.0.s8 %v207
    %v209 = vlaneseq
    %v210 = vshrl.u32 %v209, 7
    %v211 = vsub.s32 %v208, %v210
    %v212 = vrot.slane %v36, %v211
    %v214 = vunpack.c.l.s4 1983009808
    %v215 = vunpack.c.0.s8 %v214
    %v216 = vlaneseq
    %v217 = vshrl.u32 %v216, 7
    %v218 = vsub.s32 %v215, %v217
    %v219 = vrot.slane %v205, %v218
    %v220 = vcombine.high %v212, %v212
    %v221 = vcombine.high %v219, %v219
    %v222 = vcombine.high %v37, %v37
    %v224 = vunpack.c.l.s4 1983009808
    %v225 = vunpack.c.0.s8 %v224
    %v226 = vlaneseq
    %v227 = vshrl.u32 %v226, 7
    %v228 = vsub.s32 %v225, %v227
    %v229 = vrot.slane %v37, %v228
    %v231 = vunpack.c.l.s4 1983009808
    %v232 = vunpack.c.0.s8 %v231
    %v233 = vlaneseq
    %v234 = vshrl.u32 %v233, 7
    %v235 = vsub.s32 %v232, %v234
    %v236 = vrot.slane %v222, %v235
    %v237 = vcombine.high %v229, %v229
    %v238 = vcombine.high %v38, %v38
    %v240 = vunpack.c.l.s4 1983009808
    %v241 = vunpack.c.0.s8 %v240
    %v242 = vlaneseq
    %v243 = vshrl.u32 %v242, 7
    %v244 = vsub.s32 %v241, %v243
    %v245 = vrot.slane %v38, %v244
    %v247 = vunpack.c.l.s4 1983009808
    %v248 = vunpack.c.0.s8 %v247
    %v249 = vlaneseq
    %v250 = vshrl.u32 %v249, 7
    %v251 = vsub.s32 %v248, %v250
    %v252 = vrot.slane %v238, %v251
    %v253 = vcombine.high %v245, %v245
    %v254 = vcombine.high %v252, %v252
    %v255 = vcombine.high %v39, %v39
    %v257 = vunpack.c.l.s4 1983009808
    %v258 = vunpack.c.0.s8 %v257
    %v259 = vlaneseq
    %v260 = vshrl.u32 %v259, 7
    %v261 = vsub.s32 %v258, %v260
    %v262 = vrot.slane %v39, %v261
    %v264 = vunpack.c.l.s4 1983009808
    %v265 = vunpack.c.0.s8 %v264
    %v266 = vlaneseq
    %v267 = vshrl.u32 %v266, 7
    %v268 = vsub.s32 %v265, %v267
    %v269 = vrot.slane %v255, %v268
    %v270 = vcombine.high %v262, %v262
    %v271 = vcombine.high %v40, %v40
    %v273 = vunpack.c.l.s4 1983009808
    %v274 = vunpack.c.0.s8 %v273
    %v275 = vlaneseq
    %v276 = vshrl.u32 %v275, 7
    %v277 = vsub.s32 %v274, %v276
    %v278 = vrot.slane %v40, %v277
    %v280 = vunpack.c.l.s4 1983009808
    %v281 = vunpack.c.0.s8 %v280
    %v282 = vlaneseq
    %v283 = vshrl.u32 %v282, 7
    %v284 = vsub.s32 %v281, %v283
    %v285 = vrot.slane %v271, %v284
    %v286 = vcombine.high %v278, %v278
    %v287 = vcombine.high %v285, %v285
    %v288 = vcombine.high %v41, %v41
    %v290 = vunpack.c.l.s4 1983009808
    %v291 = vunpack.c.0.s8 %v290
    %v292 = vlaneseq
    %v293 = vshrl.u32 %v292, 7
    %v294 = vsub.s32 %v291, %v293
    %v295 = vrot.slane %v41, %v294
    %v297 = vunpack.c.l.s4 1983009808
    %v298 = vunpack.c.0.s8 %v297
    %v299 = vlaneseq
    %v300 = vshrl.u32 %v299, 7
    %v301 = vsub.s32 %v298, %v300
    %v302 = vrot.slane %v288, %v301
    %v303 = vcombine.high %v295, %v295
    %v304 = vcombine.high %v42, %v42
    %v306 = vunpack.c.l.s4 1983009808
    %v307 = vunpack.c.0.s8 %v306
    %v308 = vlaneseq
    %v309 = vshrl.u32 %v308, 7
    %v310 = vsub.s32 %v307, %v309
    %v311 = vrot.slane %v42, %v310
    %v313 = vunpack.c.l.s4 1983009808
    %v314 = vunpack.c.0.s8 %v313
    %v315 = vlaneseq
    %v316 = vshrl.u32 %v315, 7
    %v317 = vsub.s32 %v314, %v316
    %v318 = vrot.slane %v304, %v317
    %v319 = vcombine.high %v311, %v311
    %v320 = vcombine.high %v318, %v318
    %v321 = vcombine.high %v43, %v43
    %v323 = vunpack.c.l.s4 1983009808
    %v324 = vunpack.c.0.s8 %v323
    %v325 = vlaneseq
    %v326 = vshrl.u32 %v325, 7
    %v327 = vsub.s32 %v324, %v326
    %v328 = vrot.slane %v43, %v327
    %v330 = vunpack.c.l.s4 1983009808
    %v331 = vunpack.c.0.s8 %v330
    %v332 = vlaneseq
    %v333 = vshrl.u32 %v332, 7
    %v334 = vsub.s32 %v331, %v333
    %v335 = vrot.slane %v321, %v334
    %v336 = vcombine.high %v328, %v328
    %v337 = vcombine.high %v44, %v44
    %v339 = vunpack.c.l.s4 1983009808
    %v340 = vunpack.c.0.s8 %v339
    %v341 = vlaneseq
    %v342 = vshrl.u32 %v341, 7
    %v343 = vsub.s32 %v340, %v342
    %v344 = vrot.slane %v44, %v343
    %v346 = vunpack.c.l.s4 1983009808
    %v347 = vunpack.c.0.s8 %v346
    %v348 = vlaneseq
    %v349 = vshrl.u32 %v348, 7
    %v350 = vsub.s32 %v347, %v349
    %v351 = vrot.slane %v337, %v350
    %v352 = vcombine.high %v344, %v344
    %v353 = vcombine.high %v351, %v351
    %v354 = vcombine.high %v45, %v45
    %v356 = vunpack.c.l.s4 1983009808
    %v357 = vunpack.c.0.s8 %v356
    %v358 = vlaneseq
    %v359 = vshrl.u32 %v358, 7
    %v360 = vsub.s32 %v357, %v359
    %v361 = vrot.slane %v45, %v360
    %v363 = vunpack.c.l.s4 1983009808
    %v364 = vunpack.c.0.s8 %v363
    %v365 = vlaneseq
    %v366 = vshrl.u32 %v365, 7
    %v367 = vsub.s32 %v364, %v366
    %v368 = vrot.slane %v354, %v367
    %v369 = vcombine.high %v361, %v361
    %v370 = vcombine.high %v46, %v46
    %v372 = vunpack.c.l.s4 1983009808
    %v373 = vunpack.c.0.s8 %v372
    %v374 = vlaneseq
    %v375 = vshrl.u32 %v374, 7
    %v376 = vsub.s32 %v373, %v375
    %v377 = vrot.slane %v46, %v376
    %v379 = vunpack.c.l.s4 1983009808
    %v380 = vunpack.c.0.s8 %v379
    %v381 = vlaneseq
    %v382 = vshrl.u32 %v381, 7
    %v383 = vsub.s32 %v380, %v382
    %v384 = vrot.slane %v370, %v383
    %v385 = vcombine.high %v377, %v377
    %v386 = vcombine.high %v384, %v384
    %v387 = vcombine.high %v47, %v47
    %v389 = vunpack.c.l.s4 1983009808
    %v390 = vunpack.c.0.s8 %v389
    %v391 = vlaneseq
    %v392 = vshrl.u32 %v391, 7
    %v393 = vsub.s32 %v390, %v392
    %v394 = vrot.slane %v47, %v393
    %v396 = vunpack.c.l.s4 1983009808
    %v397 = vunpack.c.0.s8 %v396
    %v398 = vlaneseq
    %v399 = vshrl.u32 %v398, 7
    %v400 = vsub.s32 %v397, %v399
    %v401 = vrot.slane %v387, %v400
    %v402 = vcombine.high %v394, %v394
    %v403 = vcombine.high %v48, %v48
    %v405 = vunpack.c.l.s4 1983009808
    %v406 = vunpack.c.0.s8 %v405
    %v407 = vlaneseq
    %v408 = vshrl.u32 %v407, 7
    %v409 = vsub.s32 %v406, %v408
    %v410 = vrot.slane %v48, %v409
    %v412 = vunpack.c.l.s4 1983009808
    %v413 = vunpack.c.0.s8 %v412
    %v414 = vlaneseq
    %v415 = vshrl.u32 %v414, 7
    %v416 = vsub.s32 %v413, %v415
    %v417 = vrot.slane %v403, %v416
    %v418 = vcombine.high %v410, %v410
    %v419 = vcombine.high %v417, %v417
    %v420 = vcombine.high %v49, %v49
    %v422 = vunpack.c.l.s4 1983009808
    %v423 = vunpack.c.0.s8 %v422
    %v424 = vlaneseq
    %v425 = vshrl.u32 %v424, 7
    %v426 = vsub.s32 %v423, %v425
    %v427 = vrot.slane %v49, %v426
    %v429 = vunpack.c.l.s4 1983009808
    %v430 = vunpack.c.0.s8 %v429
    %v431 = vlaneseq
    %v432 = vshrl.u32 %v431, 7
    %v433 = vsub.s32 %v430, %v432
    %v434 = vrot.slane %v420, %v433
    %v435 = vcombine.high %v427, %v427
    %v436 = vcombine.high %v50, %v50
    %v438 = vunpack.c.l.s4 1983009808
    %v439 = vunpack.c.0.s8 %v438
    %v440 = vlaneseq
    %v441 = vshrl.u32 %v440, 7
    %v442 = vsub.s32 %v439, %v441
    %v443 = vrot.slane %v50, %v442
    %v445 = vunpack.c.l.s4 1983009808
    %v446 = vunpack.c.0.s8 %v445
    %v447 = vlaneseq
    %v448 = vshrl.u32 %v447, 7
    %v449 = vsub.s32 %v446, %v448
    %v450 = vrot.slane %v436, %v449
    %v451 = vcombine.high %v443, %v443
    %v452 = vcombine.high %v450, %v450
    %v453 = vcombine.high %v51, %v51
    %v455 = vunpack.c.l.s4 1983009808
    %v456 = vunpack.c.0.s8 %v455
    %v457 = vlaneseq
    %v458 = vshrl.u32 %v457, 7
    %v459 = vsub.s32 %v456, %v458
    %v460 = vrot.slane %v51, %v459
    %v462 = vunpack.c.l.s4 1983009808
    %v463 = vunpack.c.0.s8 %v462
    %v464 = vlaneseq
    %v465 = vshrl.u32 %v464, 7
    %v466 = vsub.s32 %v463, %v465
    %v467 = vrot.slane %v453, %v466
    %v468 = vcombine.high %v460, %v460
    %v469 = vcombine.high %v52, %v52
    %v471 = vunpack.c.l.s4 1983009808
    %v472 = vunpack.c.0.s8 %v471
    %v473 = vlaneseq
    %v474 = vshrl.u32 %v473, 7
    %v475 = vsub.s32 %v472, %v474
    %v476 = vrot.slane %v52, %v475
    %v478 = vunpack.c.l.s4 1983009808
    %v479 = vunpack.c.0.s8 %v478
    %v480 = vlaneseq
    %v481 = vshrl.u32 %v480, 7
    %v482 = vsub.s32 %v479, %v481
    %v483 = vrot.slane %v469, %v482
    %v484 = vcombine.high %v476, %v476
    %v485 = vcombine.high %v483, %v483
    %v486 = vcombine.high %v53, %v53
    %v488 = vunpack.c.l.s4 1983009808
    %v489 = vunpack.c.0.s8 %v488
    %v490 = vlaneseq
    %v491 = vshrl.u32 %v490, 7
    %v492 = vsub.s32 %v489, %v491
    %v493 = vrot.slane %v53, %v492
    %v495 = vunpack.c.l.s4 1983009808
    %v496 = vunpack.c.0.s8 %v495
    %v497 = vlaneseq
    %v498 = vshrl.u32 %v497, 7
    %v499 = vsub.s32 %v496, %v498
    %v500 = vrot.slane %v486, %v499
    %v501 = vcombine.high %v493, %v493
    %v502 = vcombine.high %v54, %v54
    %v504 = vunpack.c.l.s4 1983009808
    %v505 = vunpack.c.0.s8 %v504
    %v506 = vlaneseq
    %v507 = vshrl.u32 %v506, 7
    %v508 = vsub.s32 %v505, %v507
    %v509 = vrot.slane %v54, %v508
    %v511 = vunpack.c.l.s4 1983009808
    %v512 = vunpack.c.0.s8 %v511
    %v513 = vlaneseq
    %v514 = vshrl.u32 %v513, 7
    %v515 = vsub.s32 %v512, %v514
    %v516 = vrot.slane %v502, %v515
    %v517 = vcombine.high %v509, %v509
    %v518 = vcombine.high %v516, %v516
    %v519 = vcombine.high %v55, %v55
    %v521 = vunpack.c.l.s4 1983009808
    %v522 = vunpack.c.0.s8 %v521
    %v523 = vlaneseq
    %v524 = vshrl.u32 %v523, 7
    %v525 = vsub.s32 %v522, %v524
    %v526 = vrot.slane %v55, %v525
    %v528 = vunpack.c.l.s4 1983009808
    %v529 = vunpack.c.0.s8 %v528
    %v530 = vlaneseq
    %v531 = vshrl.u32 %v530, 7
    %v532 = vsub.s32 %v529, %v531
    %v533 = vrot.slane %v519, %v532
    %v534 = vcombine.high %v526, %v526
    %v535 = vcombine.high %v56, %v56
    %v537 = vunpack.c.l.s4 1983009808
    %v538 = vunpack.c.0.s8 %v537
    %v539 = vlaneseq
    %v540 = vshrl.u32 %v539, 7
    %v541 = vsub.s32 %v538, %v540
    %v542 = vrot.slane %v56, %v541
    %v544 = vunpack.c.l.s4 1983009808
    %v545 = vunpack.c.0.s8 %v544
    %v546 = vlaneseq
    %v547 = vshrl.u32 %v546, 7
    %v548 = vsub.s32 %v545, %v547
    %v549 = vrot.slane %v535, %v548
    %v550 = vcombine.high %v542, %v542
    %v551 = vcombine.high %v549, %v549
    %v552 = vcombine.high %v57, %v57
    %v554 = vunpack.c.l.s4 1983009808
    %v555 = vunpack.c.0.s8 %v554
    %v556 = vlaneseq
    %v557 = vshrl.u32 %v556, 7
    %v558 = vsub.s32 %v555, %v557
    %v559 = vrot.slane %v57, %v558
    %v561 = vunpack.c.l.s4 1983009808
    %v562 = vunpack.c.0.s8 %v561
    %v563 = vlaneseq
    %v564 = vshrl.u32 %v563, 7
    %v565 = vsub.s32 %v562, %v564
    %v566 = vrot.slane %v552, %v565
    %v567 = vcombine.high %v559, %v559
    %v568 = vcombine.high %v58, %v58
    %v570 = vunpack.c.l.s4 1983009808
    %v571 = vunpack.c.0.s8 %v570
    %v572 = vlaneseq
    %v573 = vshrl.u32 %v572, 7
    %v574 = vsub.s32 %v571, %v573
    %v575 = vrot.slane %v58, %v574
    %v577 = vunpack.c.l.s4 1983009808
    %v578 = vunpack.c.0.s8 %v577
    %v579 = vlaneseq
    %v580 = vshrl.u32 %v579, 7
    %v581 = vsub.s32 %v578, %v580
    %v582 = vrot.slane %v568, %v581
    %v583 = vcombine.high %v575, %v575
    %v584 = vcombine.high %v582, %v582
    %v585 = vcombine.high %v59, %v59
    %v587 = vunpack.c.l.s4 1983009808
    %v588 = vunpack.c.0.s8 %v587
    %v589 = vlaneseq
    %v590 = vshrl.u32 %v589, 7
    %v591 = vsub.s32 %v588, %v590
    %v592 = vrot.slane %v59, %v591
    %v594 = vunpack.c.l.s4 1983009808
    %v595 = vunpack.c.0.s8 %v594
    %v596 = vlaneseq
    %v597 = vshrl.u32 %v596, 7
    %v598 = vsub.s32 %v595, %v597
    %v599 = vrot.slane %v585, %v598
    %v600 = vcombine.high %v592, %v592
    %v601 = vcombine.high %v60, %v60
    %v603 = vunpack.c.l.s4 1983009808
    %v604 = vunpack.c.0.s8 %v603
    %v605 = vlaneseq
    %v606 = vshrl.u32 %v605, 7
    %v607 = vsub.s32 %v604, %v606
    %v608 = vrot.slane %v60, %v607
    %v610 = vunpack.c.l.s4 1983009808
    %v611 = vunpack.c.0.s8 %v610
    %v612 = vlaneseq
    %v613 = vshrl.u32 %v612, 7
    %v614 = vsub.s32 %v611, %v613
    %v615 = vrot.slane %v601, %v614
    %v616 = vcombine.high %v608, %v608
    %v617 = vcombine.high %v615, %v615
    %v618 = vcombine.high %v61, %v61
    %v620 = vunpack.c.l.s4 1983009808
    %v621 = vunpack.c.0.s8 %v620
    %v622 = vlaneseq
    %v623 = vshrl.u32 %v622, 7
    %v624 = vsub.s32 %v621, %v623
    %v625 = vrot.slane %v61, %v624
    %v627 = vunpack.c.l.s4 1983009808
    %v628 = vunpack.c.0.s8 %v627
    %v629 = vlaneseq
    %v630 = vshrl.u32 %v629, 7
    %v631 = vsub.s32 %v628, %v630
    %v632 = vrot.slane %v618, %v631
    %v633 = vcombine.high %v625, %v625
    %v634 = vcombine.high %v66, %v66
    %v636 = vunpack.c.l.s4 1983009808
    %v637 = vunpack.c.0.s8 %v636
    %v638 = vlaneseq
    %v639 = vshrl.u32 %v638, 7
    %v640 = vsub.s32 %v637, %v639
    %v641 = vrot.slane %v66, %v640
    %v643 = vunpack.c.l.s4 1983009808
    %v644 = vunpack.c.0.s8 %v643
    %v645 = vlaneseq
    %v646 = vshrl.u32 %v645, 7
    %v647 = vsub.s32 %v644, %v646
    %v648 = vrot.slane %v634, %v647
    %v649 = vcombine.high %v641, %v641
    %v650 = vcombine.high %v648, %v648
    %v651 = vcombine.high %v67, %v67
    %v653 = vunpack.c.l.s4 1983009808
    %v654 = vunpack.c.0.s8 %v653
    %v655 = vlaneseq
    %v656 = vshrl.u32 %v655, 7
    %v657 = vsub.s32 %v654, %v656
    %v658 = vrot.slane %v67, %v657
    %v660 = vunpack.c.l.s4 1983009808
    %v661 = vunpack.c.0.s8 %v660
    %v662 = vlaneseq
    %v663 = vshrl.u32 %v662, 7
    %v664 = vsub.s32 %v661, %v663
    %v665 = vrot.slane %v651, %v664
    %v666 = vcombine.high %v658, %v658
    %v667 = vcombine.high %v68, %v68
    %v669 = vunpack.c.l.s4 1983009808
    %v670 = vunpack.c.0.s8 %v669
    %v671 = vlaneseq
    %v672 = vshrl.u32 %v671, 7
    %v673 = vsub.s32 %v670, %v672
    %v674 = vrot.slane %v68, %v673
    %v676 = vunpack.c.l.s4 1983009808
    %v677 = vunpack.c.0.s8 %v676
    %v678 = vlaneseq
    %v679 = vshrl.u32 %v678, 7
    %v680 = vsub.s32 %v677, %v679
    %v681 = vrot.slane %v667, %v680
    %v682 = vcombine.high %v674, %v674
    %v683 = vcombine.high %v681, %v681
    %v684 = vcombine.high %v69, %v69
    %v686 = vunpack.c.l.s4 1983009808
    %v687 = vunpack.c.0.s8 %v686
    %v688 = vlaneseq
    %v689 = vshrl.u32 %v688, 7
    %v690 = vsub.s32 %v687, %v689
    %v691 = vrot.slane %v69, %v690
    %v693 = vunpack.c.l.s4 1983009808
    %v694 = vunpack.c.0.s8 %v693
    %v695 = vlaneseq
    %v696 = vshrl.u32 %v695, 7
    %v697 = vsub.s32 %v694, %v696
    %v698 = vrot.slane %v684, %v697
    %v699 = vcombine.high %v691, %v691
    %v700 = vcombine.high %v70, %v70
    %v702 = vunpack.c.l.s4 1983009808
    %v703 = vunpack.c.0.s8 %v702
    %v704 = vlaneseq
    %v705 = vshrl.u32 %v704, 7
    %v706 = vsub.s32 %v703, %v705
    %v707 = vrot.slane %v70, %v706
    %v709 = vunpack.c.l.s4 1983009808
    %v710 = vunpack.c.0.s8 %v709
    %v711 = vlaneseq
    %v712 = vshrl.u32 %v711, 7
    %v713 = vsub.s32 %v710, %v712
    %v714 = vrot.slane %v700, %v713
    %v715 = vcombine.high %v707, %v707
    %v716 = vcombine.high %v714, %v714
    %v717 = vcombine.high %v71, %v71
    %v719 = vunpack.c.l.s4 1983009808
    %v720 = vunpack.c.0.s8 %v719
    %v721 = vlaneseq
    %v722 = vshrl.u32 %v721, 7
    %v723 = vsub.s32 %v720, %v722
    %v724 = vrot.slane %v71, %v723
    %v726 = vunpack.c.l.s4 1983009808
    %v727 = vunpack.c.0.s8 %v726
    %v728 = vlaneseq
    %v729 = vshrl.u32 %v728, 7
    %v730 = vsub.s32 %v727, %v729
    %v731 = vrot.slane %v717, %v730
    %v732 = vcombine.high %v724, %v724
    %v733 = vcombine.high %v72, %v72
    %v735 = vunpack.c.l.s4 1983009808
    %v736 = vunpack.c.0.s8 %v735
    %v737 = vlaneseq
    %v738 = vshrl.u32 %v737, 7
    %v739 = vsub.s32 %v736, %v738
    %v740 = vrot.slane %v72, %v739
    %v742 = vunpack.c.l.s4 1983009808
    %v743 = vunpack.c.0.s8 %v742
    %v744 = vlaneseq
    %v745 = vshrl.u32 %v744, 7
    %v746 = vsub.s32 %v743, %v745
    %v747 = vrot.slane %v733, %v746
    %v748 = vcombine.high %v740, %v740
    %v749 = vcombine.high %v747, %v747
    %v750 = vcombine.high %v73, %v73
    %v752 = vunpack.c.l.s4 1983009808
    %v753 = vunpack.c.0.s8 %v752
    %v754 = vlaneseq
    %v755 = vshrl.u32 %v754, 7
    %v756 = vsub.s32 %v753, %v755
    %v757 = vrot.slane %v73, %v756
    %v759 = vunpack.c.l.s4 1983009808
    %v760 = vunpack.c.0.s8 %v759
    %v761 = vlaneseq
    %v762 = vshrl.u32 %v761, 7
    %v763 = vsub.s32 %v760, %v762
    %v764 = vrot.slane %v750, %v763
    %v765 = vcombine.high %v757, %v757
    %v766 = vcombine.high %v74, %v74
    %v768 = vunpack.c.l.s4 1983009808
    %v769 = vunpack.c.0.s8 %v768
    %v770 = vlaneseq
    %v771 = vshrl.u32 %v770, 7
    %v772 = vsub.s32 %v769, %v771
    %v773 = vrot.slane %v74, %v772
    %v775 = vunpack.c.l.s4 1983009808
    %v776 = vunpack.c.0.s8 %v775
    %v777 = vlaneseq
    %v778 = vshrl.u32 %v777, 7
    %v779 = vsub.s32 %v776, %v778
    %v780 = vrot.slane %v766, %v779
    %v781 = vcombine.high %v773, %v773
    %v782 = vcombine.high %v780, %v780
    %v783 = vcombine.high %v75, %v75
    %v785 = vunpack.c.l.s4 1983009808
    %v786 = vunpack.c.0.s8 %v785
    %v787 = vlaneseq
    %v788 = vshrl.u32 %v787, 7
    %v789 = vsub.s32 %v786, %v788
    %v790 = vrot.slane %v75, %v789
    %v792 = vunpack.c.l.s4 1983009808
    %v793 = vunpack.c.0.s8 %v792
    %v794 = vlaneseq
    %v795 = vshrl.u32 %v794, 7
    %v796 = vsub.s32 %v793, %v795
    %v797 = vrot.slane %v783, %v796
    %v798 = vcombine.high %v790, %v790
    %v799 = vcombine.high %v76, %v76
    %v801 = vunpack.c.l.s4 1983009808
    %v802 = vunpack.c.0.s8 %v801
    %v803 = vlaneseq
    %v804 = vshrl.u32 %v803, 7
    %v805 = vsub.s32 %v802, %v804
    %v806 = vrot.slane %v76, %v805
    %v808 = vunpack.c.l.s4 1983009808
    %v809 = vunpack.c.0.s8 %v808
    %v810 = vlaneseq
    %v811 = vshrl.u32 %v810, 7
    %v812 = vsub.s32 %v809, %v811
    %v813 = vrot.slane %v799, %v812
    %v814 = vcombine.high %v806, %v806
    %v815 = vcombine.high %v813, %v813
    %v816 = vcombine.high %v77, %v77
    %v818 = vunpack.c.l.s4 1983009808
    %v819 = vunpack.c.0.s8 %v818
    %v820 = vlaneseq
    %v821 = vshrl.u32 %v820, 7
    %v822 = vsub.s32 %v819, %v821
    %v823 = vrot.slane %v77, %v822
    %v825 = vunpack.c.l.s4 1983009808
    %v826 = vunpack.c.0.s8 %v825
    %v827 = vlaneseq
    %v828 = vshrl.u32 %v827, 7
    %v829 = vsub.s32 %v826, %v828
    %v830 = vrot.slane %v816, %v829
    %v831 = vcombine.high %v823, %v823
    %v832 = vcombine.high %v78, %v78
    %v834 = vunpack.c.l.s4 1983009808
    %v835 = vunpack.c.0.s8 %v834
    %v836 = vlaneseq
    %v837 = vshrl.u32 %v836, 7
    %v838 = vsub.s32 %v835, %v837
    %v839 = vrot.slane %v78, %v838
    %v841 = vunpack.c.l.s4 1983009808
    %v842 = vunpack.c.0.s8 %v841
    %v843 = vlaneseq
    %v844 = vshrl.u32 %v843, 7
    %v845 = vsub.s32 %v842, %v844
    %v846 = vrot.slane %v832, %v845
    %v847 = vcombine.high %v839, %v839
    %v848 = vcombine.high %v846, %v846
    %v849 = vcombine.high %v79, %v79
    %v851 = vunpack.c.l.s4 1983009808
    %v852 = vunpack.c.0.s8 %v851
    %v853 = vlaneseq
    %v854 = vshrl.u32 %v853, 7
    %v855 = vsub.s32 %v852, %v854
    %v856 = vrot.slane %v79, %v855
    %v858 = vunpack.c.l.s4 1983009808
    %v859 = vunpack.c.0.s8 %v858
    %v860 = vlaneseq
    %v861 = vshrl.u32 %v860, 7
    %v862 = vsub.s32 %v859, %v861
    %v863 = vrot.slane %v849, %v862
    %v864 = vcombine.high %v856, %v856
    %v865 = vcombine.high %v80, %v80
    %v867 = vunpack.c.l.s4 1983009808
    %v868 = vunpack.c.0.s8 %v867
    %v869 = vlaneseq
    %v870 = vshrl.u32 %v869, 7
    %v871 = vsub.s32 %v868, %v870
    %v872 = vrot.slane %v80, %v871
    %v874 = vunpack.c.l.s4 1983009808
    %v875 = vunpack.c.0.s8 %v874
    %v876 = vlaneseq
    %v877 = vshrl.u32 %v876, 7
    %v878 = vsub.s32 %v875, %v877
    %v879 = vrot.slane %v865, %v878
    %v880 = vcombine.high %v872, %v872
    %v881 = vcombine.high %v879, %v879
    %v882 = vcombine.high %v81, %v81
    %v884 = vunpack.c.l.s4 1983009808
    %v885 = vunpack.c.0.s8 %v884
    %v886 = vlaneseq
    %v887 = vshrl.u32 %v886, 7
    %v888 = vsub.s32 %v885, %v887
    %v889 = vrot.slane %v81, %v888
    %v891 = vunpack.c.l.s4 1983009808
    %v892 = vunpack.c.0.s8 %v891
    %v893 = vlaneseq
    %v894 = vshrl.u32 %v893, 7
    %v895 = vsub.s32 %v892, %v894
    %v896 = vrot.slane %v882, %v895
    %v897 = vcombine.high %v889, %v889
    %v898 = vcombine.high %v82, %v82
    %v900 = vunpack.c.l.s4 1983009808
    %v901 = vunpack.c.0.s8 %v900
    %v902 = vlaneseq
    %v903 = vshrl.u32 %v902, 7
    %v904 = vsub.s32 %v901, %v903
    %v905 = vrot.slane %v82, %v904
    %v907 = vunpack.c.l.s4 1983009808
    %v908 = vunpack.c.0.s8 %v907
    %v909 = vlaneseq
    %v910 = vshrl.u32 %v909, 7
    %v911 = vsub.s32 %v908, %v910
    %v912 = vrot.slane %v898, %v911
    %v913 = vcombine.high %v905, %v905
    %v914 = vcombine.high %v912, %v912
    %v915 = vcombine.high %v83, %v83
    %v917 = vunpack.c.l.s4 1983009808
    %v918 = vunpack.c.0.s8 %v917
    %v919 = vlaneseq
    %v920 = vshrl.u32 %v919, 7
    %v921 = vsub.s32 %v918, %v920
    %v922 = vrot.slane %v83, %v921
    %v924 = vunpack.c.l.s4 1983009808
    %v925 = vunpack.c.0.s8 %v924
    %v926 = vlaneseq
    %v927 = vshrl.u32 %v926, 7
    %v928 = vsub.s32 %v925, %v927
    %v929 = vrot.slane %v915, %v928
    %v930 = vcombine.high %v922, %v922
    %v931 = vcombine.high %v84, %v84
    %v933 = vunpack.c.l.s4 1983009808
    %v934 = vunpack.c.0.s8 %v933
    %v935 = vlaneseq
    %v936 = vshrl.u32 %v935, 7
    %v937 = vsub.s32 %v934, %v936
    %v938 = vrot.slane %v84, %v937
    %v940 = vunpack.c.l.s4 1983009808
    %v941 = vunpack.c.0.s8 %v940
    %v942 = vlaneseq
    %v943 = vshrl.u32 %v942, 7
    %v944 = vsub.s32 %v941, %v943
    %v945 = vrot.slane %v931, %v944
    %v946 = vcombine.high %v938, %v938
    %v947 = vcombine.high %v945, %v945
    %v948 = vcombine.high %v85, %v85
    %v950 = vunpack.c.l.s4 1983009808
    %v951 = vunpack.c.0.s8 %v950
    %v952 = vlaneseq
    %v953 = vshrl.u32 %v952, 7
    %v954 = vsub.s32 %v951, %v953
    %v955 = vrot.slane %v85, %v954
    %v957 = vunpack.c.l.s4 1983009808
    %v958 = vunpack.c.0.s8 %v957
    %v959 = vlaneseq
    %v960 = vshrl.u32 %v959, 7
    %v961 = vsub.s32 %v958, %v960
    %v962 = vrot.slane %v948, %v961
    %v963 = vcombine.high %v955, %v955
    %v964 = vcombine.high %v86, %v86
    %v966 = vunpack.c.l.s4 1983009808
    %v967 = vunpack.c.0.s8 %v966
    %v968 = vlaneseq
    %v969 = vshrl.u32 %v968, 7
    %v970 = vsub.s32 %v967, %v969
    %v971 = vrot.slane %v86, %v970
    %v973 = vunpack.c.l.s4 1983009808
    %v974 = vunpack.c.0.s8 %v973
    %v975 = vlaneseq
    %v976 = vshrl.u32 %v975, 7
    %v977 = vsub.s32 %v974, %v976
    %v978 = vrot.slane %v964, %v977
    %v979 = vcombine.high %v971, %v971
    %v980 = vcombine.high %v978, %v978
    %v981 = vcombine.high %v87, %v87
    %v983 = vunpack.c.l.s4 1983009808
    %v984 = vunpack.c.0.s8 %v983
    %v985 = vlaneseq
    %v986 = vshrl.u32 %v985, 7
    %v987 = vsub.s32 %v984, %v986
    %v988 = vrot.slane %v87, %v987
    %v990 = vunpack.c.l.s4 1983009808
    %v991 = vunpack.c.0.s8 %v990
    %v992 = vlaneseq
    %v993 = vshrl.u32 %v992, 7
    %v994 = vsub.s32 %v991, %v993
    %v995 = vrot.slane %v981, %v994
    %v996 = vcombine.high %v988, %v988
    %v997 = vcombine.high %v88, %v88
    %v999 = vunpack.c.l.s4 1983009808
    %v1000 = vunpack.c.0.s8 %v999
    %v1001 = vlaneseq
    %v1002 = vshrl.u32 %v1001, 7
    %v1003 = vsub.s32 %v1000, %v1002
    %v1004 = vrot.slane %v88, %v1003
    %v1006 = vunpack.c.l.s4 1983009808
    %v1007 = vunpack.c.0.s8 %v1006
    %v1008 = vlaneseq
    %v1009 = vshrl.u32 %v1008, 7
    %v1010 = vsub.s32 %v1007, %v1009
    %v1011 = vrot.slane %v997, %v1010
    %v1012 = vcombine.high %v1004, %v1004
    %v1013 = vcombine.high %v1011, %v1011
    %v1014 = vcombine.high %v89, %v89
    %v1016 = vunpack.c.l.s4 1983009808
    %v1017 = vunpack.c.0.s8 %v1016
    %v1018 = vlaneseq
    %v1019 = vshrl.u32 %v1018, 7
    %v1020 = vsub.s32 %v1017, %v1019
    %v1021 = vrot.slane %v89, %v1020
    %v1023 = vunpack.c.l.s4 1983009808
    %v1024 = vunpack.c.0.s8 %v1023
    %v1025 = vlaneseq
    %v1026 = vshrl.u32 %v1025, 7
    %v1027 = vsub.s32 %v1024, %v1026
    %v1028 = vrot.slane %v1014, %v1027
    %v1029 = vcombine.high %v1021, %v1021
    %v1030 = vcombine.high %v90, %v90
    %v1032 = vunpack.c.l.s4 1983009808
    %v1033 = vunpack.c.0.s8 %v1032
    %v1034 = vlaneseq
    %v1035 = vshrl.u32 %v1034, 7
    %v1036 = vsub.s32 %v1033, %v1035
    %v1037 = vrot.slane %v90, %v1036
    %v1039 = vunpack.c.l.s4 1983009808
    %v1040 = vunpack.c.0.s8 %v1039
    %v1041 = vlaneseq
    %v1042 = vshrl.u32 %v1041, 7
    %v1043 = vsub.s32 %v1040, %v1042
    %v1044 = vrot.slane %v1030, %v1043
    %v1045 = vcombine.high %v1037, %v1037
    %v1046 = vcombine.high %v1044, %v1044
    %v1047 = vcombine.high %v91, %v91
    %v1049 = vunpack.c.l.s4 1983009808
    %v1050 = vunpack.c.0.s8 %v1049
    %v1051 = vlaneseq
    %v1052 = vshrl.u32 %v1051, 7
    %v1053 = vsub.s32 %v1050, %v1052
    %v1054 = vrot.slane %v91, %v1053
    %v1056 = vunpack.c.l.s4 1983009808
    %v1057 = vunpack.c.0.s8 %v1056
    %v1058 = vlaneseq
    %v1059 = vshrl.u32 %v1058, 7
    %v1060 = vsub.s32 %v1057, %v1059
    %v1061 = vrot.slane %v1047, %v1060
    %v1062 = vcombine.high %v1054, %v1054
    %v1063 = vcombine.high %v92, %v92
    %v1065 = vunpack.c.l.s4 1983009808
    %v1066 = vunpack.c.0.s8 %v1065
    %v1067 = vlaneseq
    %v1068 = vshrl.u32 %v1067, 7
    %v1069 = vsub.s32 %v1066, %v1068
    %v1070 = vrot.slane %v92, %v1069
    %v1072 = vunpack.c.l.s4 1983009808
    %v1073 = vunpack.c.0.s8 %v1072
    %v1074 = vlaneseq
    %v1075 = vshrl.u32 %v1074, 7
    %v1076 = vsub.s32 %v1073, %v1075
    %v1077 = vrot.slane %v1063, %v1076
    %v1078 = vcombine.high %v1070, %v1070
    %v1079 = vcombine.high %v1077, %v1077
    %v1080 = vcombine.high %v93, %v93
    %v1082 = vunpack.c.l.s4 1983009808
    %v1083 = vunpack.c.0.s8 %v1082
    %v1084 = vlaneseq
    %v1085 = vshrl.u32 %v1084, 7
    %v1086 = vsub.s32 %v1083, %v1085
    %v1087 = vrot.slane %v93, %v1086
    %v1089 = vunpack.c.l.s4 1983009808
    %v1090 = vunpack.c.0.s8 %v1089
    %v1091 = vlaneseq
    %v1092 = vshrl.u32 %v1091, 7
    %v1093 = vsub.s32 %v1090, %v1092
    %v1094 = vrot.slane %v1080, %v1093
    %v1095 = vcombine.high %v1087, %v1087
    %v1096 = vcombine.low %v179, %v187
    %v1097 = vcombine.low %v186, %v188
    %v1099 = vunpack.c.l.s4 1983009808
    %v1100 = vunpack.c.0.s8 %v1099
    %v1101 = vlaneseq
    %v1102 = vshrl.u32 %v1101, 7
    %v1103 = vsub.s32 %v1100, %v1102
    %v1104 = vrot.slane %v1096, %v1103
    %v1106 = vunpack.c.l.s4 1983009808
    %v1107 = vunpack.c.0.s8 %v1106
    %v1108 = vlaneseq
    %v1109 = vshrl.u32 %v1108, 7
    %v1110 = vsub.s32 %v1107, %v1109
    %v1111 = vrot.slane %v1097, %v1110
    %v1112 = vcombine.low %v1104, %v1111
    %v1113 = vcombine.low %v196, %v204
    %v1114 = vcombine.low %v203, %v212
    %v1116 = vunpack.c.l.s4 1983009808
    %v1117 = vunpack.c.0.s8 %v1116
    %v1118 = vlaneseq
    %v1119 = vshrl.u32 %v1118, 7
    %v1120 = vsub.s32 %v1117, %v1119
    %v1121 = vrot.slane %v1113, %v1120
    %v1123 = vunpack.c.l.s4 1983009808
    %v1124 = vunpack.c.0.s8 %v1123
    %v1125 = vlaneseq
    %v1126 = vshrl.u32 %v1125, 7
    %v1127 = vsub.s32 %v1124, %v1126
    %v1128 = vrot.slane %v1114, %v1127
    %v1129 = vcombine.low %v1121, %v1128
    %v1130 = vcombine.low %v220, %v219
    %v1131 = vcombine.low %v221, %v229
    %v1133 = vunpack.c.l.s4 1983009808
    %v1134 = vunpack.c.0.s8 %v1133
    %v1135 = vlaneseq
    %v1136 = vshrl.u32 %v1135, 7
    %v1137 = vsub.s32 %v1134, %v1136
    %v1138 = vrot.slane %v1130, %v1137
    %v1140 = vunpack.c.l.s4 1983009808
    %v1141 = vunpack.c.0.s8 %v1140
    %v1142 = vlaneseq
    %v1143 = vshrl.u32 %v1142, 7
    %v1144 = vsub.s32 %v1141, %v1143
    %v1145 = vrot.slane %v1131, %v1144
    %v1146 = vcombine.low %v1138, %v1145
    %v1147 = vcombine.low %v237, %v236
    %v1148 = vcombine.low %v245, %v253
    %v1150 = vunpack.c.l.s4 1983009808
    %v1151 = vunpack.c.0.s8 %v1150
    %v1152 = vlaneseq
    %v1153 = vshrl.u32 %v1152, 7
    %v1154 = vsub.s32 %v1151, %v1153
    %v1155 = vrot.slane %v1147, %v1154
    %v1157 = vunpack.c.l.s4 1983009808
    %v1158 = vunpack.c.0.s8 %v1157
    %v1159 = vlaneseq
    %v1160 = vshrl.u32 %v1159, 7
    %v1161 = vsub.s32 %v1158, %v1160
    %v1162 = vrot.slane %v1148, %v1161
    %v1163 = vcombine.low %v1155, %v1162
    %v1164 = vcombine.low %v252, %v254
    %v1165 = vcombine.low %v262, %v270
    %v1167 = vunpack.c.l.s4 1983009808
    %v1168 = vunpack.c.0.s8 %v1167
    %v1169 = vlaneseq
    %v1170 = vshrl.u32 %v1169, 7
    %v1171 = vsub.s32 %v1168, %v1170
    %v1172 = vrot.slane %v1164, %v1171
    %v1174 = vunpack.c.l.s4 1983009808
    %v1175 = vunpack.c.0.s8 %v1174
    %v1176 = vlaneseq
    %v1177 = vshrl.u32 %v1176, 7
    %v1178 = vsub.s32 %v1175, %v1177
    %v1179 = vrot.slane %v1165, %v1178
    %v1180 = vcombine.low %v1172, %v1179
    %v1181 = vcombine.low %v269, %v278
    %v1182 = vcombine.low %v286, %v285
    %v1184 = vunpack.c.l.s4 1983009808
    %v1185 = vunpack.c.0.s8 %v1184
    %v1186 = vlaneseq
    %v1187 = vshrl.u32 %v1186, 7
    %v1188 = vsub.s32 %v1185, %v1187
    %v1189 = vrot.slane %v1181, %v1188
    %v1191 = vunpack.c.l.s4 1983009808
    %v1192 = vunpack.c.0.s8 %v1191
    %v1193 = vlaneseq
    %v1194 = vshrl.u32 %v1193, 7
    %v1195 = vsub.s32 %v1192, %v1194
    %v1196 = vrot.slane %v1182, %v1195
    %v1197 = vcombine.low %v1189, %v1196
    %v1198 = vcombine.low %v287, %v295
    %v1199 = vcombine.low %v303, %v302
    %v1201 = vunpack.c.l.s4 1983009808
    %v1202 = vunpack.c.0.s8 %v1201
    %v1203 = vlaneseq
    %v1204 = vshrl.u32 %v1203, 7
    %v1205 = vsub.s32 %v1202, %v1204
    %v1206 = vrot.slane %v1198, %v1205
    %v1208 = vunpack.c.l.s4 1983009808
    %v1209 = vunpack.c.0.s8 %v1208
    %v1210 = vlaneseq
    %v1211 = vshrl.u32 %v1210, 7
    %v1212 = vsub.s32 %v1209, %v1211
    %v1213 = vrot.slane %v1199, %v1212
    %v1214 = vcombine.low %v1206, %v1213
    %v1215 = vcombine.low %v311, %v319
    %v1216 = vcombine.low %v318, %v320
    %v1218 = vunpack.c.l.s4 1983009808
    %v1219 = vunpack.c.0.s8 %v1218
    %v1220 = vlaneseq
    %v1221 = vshrl.u32 %v1220, 7
    %v1222 = vsub.s32 %v1219, %v1221
    %v1223 = vrot.slane %v1215, %v1222
    %v1225 = vunpack.c.l.s4 1983009808
    %v1226 = vunpack.c.0.s8 %v1225
    %v1227 = vlaneseq
    %v1228 = vshrl.u32 %v1227, 7
    %v1229 = vsub.s32 %v1226, %v1228
    %v1230 = vrot.slane %v1216, %v1229
    %v1231 = vcombine.low %v1223, %v1230
    %v1232 = vcombine.low %v328, %v336
    %v1233 = vcombine.low %v335, %v344
    %v1235 = vunpack.c.l.s4 1983009808
    %v1236 = vunpack.c.0.s8 %v1235
    %v1237 = vlaneseq
    %v1238 = vshrl.u32 %v1237, 7
    %v1239 = vsub.s32 %v1236, %v1238
    %v1240 = vrot.slane %v1232, %v1239
    %v1242 = vunpack.c.l.s4 1983009808
    %v1243 = vunpack.c.0.s8 %v1242
    %v1244 = vlaneseq
    %v1245 = vshrl.u32 %v1244, 7
    %v1246 = vsub.s32 %v1243, %v1245
    %v1247 = vrot.slane %v1233, %v1246
    %v1248 = vcombine.low %v1240, %v1247
    %v1249 = vcombine.low %v352, %v351
    %v1250 = vcombine.low %v353, %v361
    %v1252 = vunpack.c.l.s4 1983009808
    %v1253 = vunpack.c.0.s8 %v1252
    %v1254 = vlaneseq
    %v1255 = vshrl.u32 %v1254, 7
    %v1256 = vsub.s32 %v1253, %v1255
    %v1257 = vrot.slane %v1249, %v1256
    %v1259 = vunpack.c.l.s4 1983009808
    %v1260 = vunpack.c.0.s8 %v1259
    %v1261 = vlaneseq
    %v1262 = vshrl.u32 %v1261, 7
    %v1263 = vsub.s32 %v1260, %v1262
    %v1264 = vrot.slane %v1250, %v1263
    %v1265 = vcombine.low %v1257, %v1264
    %v1266 = vcombine.low %v369, %v368
    %v1267 = vcombine.low %v377, %v385
    %v1269 = vunpack.c.l.s4 1983009808
    %v1270 = vunpack.c.0.s8 %v1269
    %v1271 = vlaneseq
    %v1272 = vshrl.u32 %v1271, 7
    %v1273 = vsub.s32 %v1270, %v1272
    %v1274 = vrot.slane %v1266, %v1273
    %v1276 = vunpack.c.l.s4 1983009808
    %v1277 = vunpack.c.0.s8 %v1276
    %v1278 = vlaneseq
    %v1279 = vshrl.u32 %v1278, 7
    %v1280 = vsub.s32 %v1277, %v1279
    %v1281 = vrot.slane %v1267, %v1280
    %v1282 = vcombine.low %v1274, %v1281
    %v1283 = vcombine.low %v384, %v386
    %v1284 = vcombine.low %v394, %v402
    %v1286 = vunpack.c.l.s4 1983009808
    %v1287 = vunpack.c.0.s8 %v1286
    %v1288 = vlaneseq
    %v1289 = vshrl.u32 %v1288, 7
    %v1290 = vsub.s32 %v1287, %v1289
    %v1291 = vrot.slane %v1283, %v1290
    %v1293 = vunpack.c.l.s4 1983009808
    %v1294 = vunpack.c.0.s8 %v1293
    %v1295 = vlaneseq
    %v1296 = vshrl.u32 %v1295, 7
    %v1297 = vsub.s32 %v1294, %v1296
    %v1298 = vrot.slane %v1284, %v1297
    %v1299 = vcombine.low %v1291, %v1298
    %v1300 = vcombine.low %v401, %v410
    %v1301 = vcombine.low %v418, %v417
    %v1303 = vunpack.c.l.s4 1983009808
    %v1304 = vunpack.c.0.s8 %v1303
    %v1305 = vlaneseq
    %v1306 = vshrl.u32 %v1305, 7
    %v1307 = vsub.s32 %v1304, %v1306
    %v1308 = vrot.slane %v1300, %v1307
    %v1310 = vunpack.c.l.s4 1983009808
    %v1311 = vunpack.c.0.s8 %v1310
    %v1312 = vlaneseq
    %v1313 = vshrl.u32 %v1312, 7
    %v1314 = vsub.s32 %v1311, %v1313
    %v1315 = vrot.slane %v1301, %v1314
    %v1316 = vcombine.low %v1308, %v1315
    %v1317 = vcombine.low %v419, %v427
    %v1318 = vcombine.low %v435, %v434
    %v1320 = vunpack.c.l.s4 1983009808
    %v1321 = vunpack.c.0.s8 %v1320
    %v1322 = vlaneseq
    %v1323 = vshrl.u32 %v1322, 7
    %v1324 = vsub.s32 %v1321, %v1323
    %v1325 = vrot.slane %v1317, %v1324
    %v1327 = vunpack.c.l.s4 1983009808
    %v1328 = vunpack.c.0.s8 %v1327
    %v1329 = vlaneseq
    %v1330 = vshrl.u32 %v1329, 7
    %v1331 = vsub.s32 %v1328, %v1330
    %v1332 = vrot.slane %v1318, %v1331
    %v1333 = vcombine.low %v1325, %v1332
    %v1334 = vcombine.low %v443, %v451
    %v1335 = vcombine.low %v450, %v452
    %v1337 = vunpack.c.l.s4 1983009808
    %v1338 = vunpack.c.0.s8 %v1337
    %v1339 = vlaneseq
    %v1340 = vshrl.u32 %v1339, 7
    %v1341 = vsub.s32 %v1338, %v1340
    %v1342 = vrot.slane %v1334, %v1341
    %v1344 = vunpack.c.l.s4 1983009808
    %v1345 = vunpack.c.0.s8 %v1344
    %v1346 = vlaneseq
    %v1347 = vshrl.u32 %v1346, 7
    %v1348 = vsub.s32 %v1345, %v1347
    %v1349 = vrot.slane %v1335, %v1348
    %v1350 = vcombine.low %v1342, %v1349
    %v1351 = vcombine.low %v460, %v468
    %v1352 = vcombine.low %v467, %v476
    %v1354 = vunpack.c.l.s4 1983009808
    %v1355 = vunpack.c.0.s8 %v1354
    %v1356 = vlaneseq
    %v1357 = vshrl.u32 %v1356, 7
    %v1358 = vsub.s32 %v1355, %v1357
    %v1359 = vrot.slane %v1351, %v1358
    %v1361 = vunpack.c.l.s4 1983009808
    %v1362 = vunpack.c.0.s8 %v1361
    %v1363 = vlaneseq
    %v1364 = vshrl.u32 %v1363, 7
    %v1365 = vsub.s32 %v1362, %v1364
    %v1366 = vrot.slane %v1352, %v1365
    %v1367 = vcombine.low %v1359, %v1366
    %v1368 = vcombine.low %v484, %v483
    %v1369 = vcombine.low %v485, %v493
    %v1371 = vunpack.c.l.s4 1983009808
    %v1372 = vunpack.c.0.s8 %v1371
    %v1373 = vlaneseq
    %v1374 = vshrl.u32 %v1373, 7
    %v1375 = vsub.s32 %v1372, %v1374
    %v1376 = vrot.slane %v1368, %v1375
    %v1378 = vunpack.c.l.s4 1983009808
    %v1379 = vunpack.c.0.s8 %v1378
    %v1380 = vlaneseq
    %v1381 = vshrl.u32 %v1380, 7
    %v1382 = vsub.s32 %v1379, %v1381
    %v1383 = vrot.slane %v1369, %v1382
    %v1384 = vcombine.low %v1376, %v1383
    %v1385 = vcombine.low %v501, %v500
    %v1386 = vcombine.low %v509, %v517
    %v1388 = vunpack.c.l.s4 1983009808
    %v1389 = vunpack.c.0.s8 %v1388
    %v1390 = vlaneseq
    %v1391 = vshrl.u32 %v1390, 7
    %v1392 = vsub.s32 %v1389, %v1391
    %v1393 = vrot.slane %v1385, %v1392
    %v1395 = vunpack.c.l.s4 1983009808
    %v1396 = vunpack.c.0.s8 %v1395
    %v1397 = vlaneseq
    %v1398 = vshrl.u32 %v1397, 7
    %v1399 = vsub.s32 %v1396, %v1398
    %v1400 = vrot.slane %v1386, %v1399
    %v1401 = vcombine.low %v1393, %v1400
    %v1402 = vcombine.low %v516, %v518
    %v1403 = vcombine.low %v526, %v534
    %v1405 = vunpack.c.l.s4 1983009808
    %v1406 = vunpack.c.0.s8 %v1405
    %v1407 = vlaneseq
    %v1408 = vshrl.u32 %v1407, 7
    %v1409 = vsub.s32 %v1406, %v1408
    %v1410 = vrot.slane %v1402, %v1409
    %v1412 = vunpack.c.l.s4 1983009808
    %v1413 = vunpack.c.0.s8 %v1412
    %v1414 = vlaneseq
    %v1415 = vshrl.u32 %v1414, 7
    %v1416 = vsub.s32 %v1413, %v1415
    %v1417 = vrot.slane %v1403, %v1416
    %v1418 = vcombine.low %v1410, %v1417
    %v1419 = vcombine.low %v533, %v542
    %v1420 = vcombine.low %v550, %v549
    %v1422 = vunpack.c.l.s4 1983009808
    %v1423 = vunpack.c.0.s8 %v1422
    %v1424 = vlaneseq
    %v1425 = vshrl.u32 %v1424, 7
    %v1426 = vsub.s32 %v1423, %v1425
    %v1427 = vrot.slane %v1419, %v1426
    %v1429 = vunpack.c.l.s4 1983009808
    %v1430 = vunpack.c.0.s8 %v1429
    %v1431 = vlaneseq
    %v1432 = vshrl.u32 %v1431, 7
    %v1433 = vsub.s32 %v1430, %v1432
    %v1434 = vrot.slane %v1420, %v1433
    %v1435 = vcombine.low %v1427, %v1434
    %v1436 = vcombine.low %v551, %v559
    %v1437 = vcombine.low %v567, %v566
    %v1439 = vunpack.c.l.s4 1983009808
    %v1440 = vunpack.c.0.s8 %v1439
    %v1441 = vlaneseq
    %v1442 = vshrl.u32 %v1441, 7
    %v1443 = vsub.s32 %v1440, %v1442
    %v1444 = vrot.slane %v1436, %v1443
    %v1446 = vunpack.c.l.s4 1983009808
    %v1447 = vunpack.c.0.s8 %v1446
    %v1448 = vlaneseq
    %v1449 = vshrl.u32 %v1448, 7
    %v1450 = vsub.s32 %v1447, %v1449
    %v1451 = vrot.slane %v1437, %v1450
    %v1452 = vcombine.low %v1444, %v1451
    %v1453 = vcombine.low %v575, %v583
    %v1454 = vcombine.low %v582, %v584
    %v1456 = vunpack.c.l.s4 1983009808
    %v1457 = vunpack.c.0.s8 %v1456
    %v1458 = vlaneseq
    %v1459 = vshrl.u32 %v1458, 7
    %v1460 = vsub.s32 %v1457, %v1459
    %v1461 = vrot.slane %v1453, %v1460
    %v1463 = vunpack.c.l.s4 1983009808
    %v1464 = vunpack.c.0.s8 %v1463
    %v1465 = vlaneseq
    %v1466 = vshrl.u32 %v1465, 7
    %v1467 = vsub.s32 %v1464, %v1466
    %v1468 = vrot.slane %v1454, %v1467
    %v1469 = vcombine.low %v1461, %v1468
    %v1470 = vcombine.low %v592, %v600
    %v1471 = vcombine.low %v599, %v608
    %v1473 = vunpack.c.l.s4 1983009808
    %v1474 = vunpack.c.0.s8 %v1473
    %v1475 = vlaneseq
    %v1476 = vshrl.u32 %v1475, 7
    %v1477 = vsub.s32 %v1474, %v1476
    %v1478 = vrot.slane %v1470, %v1477
    %v1480 = vunpack.c.l.s4 1983009808
    %v1481 = vunpack.c.0.s8 %v1480
    %v1482 = vlaneseq
    %v1483 = vshrl.u32 %v1482, 7
    %v1484 = vsub.s32 %v1481, %v1483
    %v1485 = vrot.slane %v1471, %v1484
    %v1486 = vcombine.low %v1478, %v1485
    %v1487 = vcombine.low %v616, %v615
    %v1488 = vcombine.low %v617, %v625
    %v1490 = vunpack.c.l.s4 1983009808
    %v1491 = vunpack.c.0.s8 %v1490
    %v1492 = vlaneseq
    %v1493 = vshrl.u32 %v1492, 7
    %v1494 = vsub.s32 %v1491, %v1493
    %v1495 = vrot.slane %v1487, %v1494
    %v1497 = vunpack.c.l.s4 1983009808
    %v1498 = vunpack.c.0.s8 %v1497
    %v1499 = vlaneseq
    %v1500 = vshrl.u32 %v1499, 7
    %v1501 = vsub.s32 %v1498, %v1500
    %v1502 = vrot.slane %v1488, %v1501
    %v1503 = vcombine.low %v1495, %v1502
    %v1504 = vcombine.low %v633, %v632
    %v1505 = vcombine.low %v641, %v649
    %v1507 = vunpack.c.l.s4 1983009808
    %v1508 = vunpack.c.0.s8 %v1507
    %v1509 = vlaneseq
    %v1510 = vshrl.u32 %v1509, 7
    %v1511 = vsub.s32 %v1508, %v1510
    %v1512 = vrot.slane %v1504, %v1511
    %v1514 = vunpack.c.l.s4 1983009808
    %v1515 = vunpack.c.0.s8 %v1514
    %v1516 = vlaneseq
    %v1517 = vshrl.u32 %v1516, 7
    %v1518 = vsub.s32 %v1515, %v1517
    %v1519 = vrot.slane %v1505, %v1518
    %v1520 = vcombine.low %v1512, %v1519
    %v1521 = vcombine.low %v648, %v650
    %v1522 = vcombine.low %v658, %v666
    %v1524 = vunpack.c.l.s4 1983009808
    %v1525 = vunpack.c.0.s8 %v1524
    %v1526 = vlaneseq
    %v1527 = vshrl.u32 %v1526, 7
    %v1528 = vsub.s32 %v1525, %v1527
    %v1529 = vrot.slane %v1521, %v1528
    %v1531 = vunpack.c.l.s4 1983009808
    %v1532 = vunpack.c.0.s8 %v1531
    %v1533 = vlaneseq
    %v1534 = vshrl.u32 %v1533, 7
    %v1535 = vsub.s32 %v1532, %v1534
    %v1536 = vrot.slane %v1522, %v1535
    %v1537 = vcombine.low %v1529, %v1536
    %v1538 = vcombine.low %v665, %v674
    %v1539 = vcombine.low %v682, %v681
    %v1541 = vunpack.c.l.s4 1983009808
    %v1542 = vunpack.c.0.s8 %v1541
    %v1543 = vlaneseq
    %v1544 = vshrl.u32 %v1543, 7
    %v1545 = vsub.s32 %v1542, %v1544
    %v1546 = vrot.slane %v1538, %v1545
    %v1548 = vunpack.c.l.s4 1983009808
    %v1549 = vunpack.c.0.s8 %v1548
    %v1550 = vlaneseq
    %v1551 = vshrl.u32 %v1550, 7
    %v1552 = vsub.s32 %v1549, %v1551
    %v1553 = vrot.slane %v1539, %v1552
    %v1554 = vcombine.low %v1546, %v1553
    %v1555 = vcombine.low %v683, %v691
    %v1556 = vcombine.low %v699, %v698
    %v1558 = vunpack.c.l.s4 1983009808
    %v1559 = vunpack.c.0.s8 %v1558
    %v1560 = vlaneseq
    %v1561 = vshrl.u32 %v1560, 7
    %v1562 = vsub.s32 %v1559, %v1561
    %v1563 = vrot.slane %v1555, %v1562
    %v1565 = vunpack.c.l.s4 1983009808
    %v1566 = vunpack.c.0.s8 %v1565
    %v1567 = vlaneseq
    %v1568 = vshrl.u32 %v1567, 7
    %v1569 = vsub.s32 %v1566, %v1568
    %v1570 = vrot.slane %v1556, %v1569
    %v1571 = vcombine.low %v1563, %v1570
    %v1572 = vcombine.low %v707, %v715
    %v1573 = vcombine.low %v714, %v716
    %v1575 = vunpack.c.l.s4 1983009808
    %v1576 = vunpack.c.0.s8 %v1575
    %v1577 = vlaneseq
    %v1578 = vshrl.u32 %v1577, 7
    %v1579 = vsub.s32 %v1576, %v1578
    %v1580 = vrot.slane %v1572, %v1579
    %v1582 = vunpack.c.l.s4 1983009808
    %v1583 = vunpack.c.0.s8 %v1582
    %v1584 = vlaneseq
    %v1585 = vshrl.u32 %v1584, 7
    %v1586 = vsub.s32 %v1583, %v1585
    %v1587 = vrot.slane %v1573, %v1586
    %v1588 = vcombine.low %v1580, %v1587
    %v1589 = vcombine.low %v724, %v732
    %v1590 = vcombine.low %v731, %v740
    %v1592 = vunpack.c.l.s4 1983009808
    %v1593 = vunpack.c.0.s8 %v1592
    %v1594 = vlaneseq
    %v1595 = vshrl.u32 %v1594, 7
    %v1596 = vsub.s32 %v1593, %v1595
    %v1597 = vrot.slane %v1589, %v1596
    %v1599 = vunpack.c.l.s4 1983009808
    %v1600 = vunpack.c.0.s8 %v1599
    %v1601 = vlaneseq
    %v1602 = vshrl.u32 %v1601, 7
    %v1603 = vsub.s32 %v1600, %v1602
    %v1604 = vrot.slane %v1590, %v1603
    %v1605 = vcombine.low %v1597, %v1604
    %v1606 = vcombine.low %v748, %v747
    %v1607 = vcombine.low %v749, %v757
    %v1609 = vunpack.c.l.s4 1983009808
    %v1610 = vunpack.c.0.s8 %v1609
    %v1611 = vlaneseq
    %v1612 = vshrl.u32 %v1611, 7
    %v1613 = vsub.s32 %v1610, %v1612
    %v1614 = vrot.slane %v1606, %v1613
    %v1616 = vunpack.c.l.s4 1983009808
    %v1617 = vunpack.c.0.s8 %v1616
    %v1618 = vlaneseq
    %v1619 = vshrl.u32 %v1618, 7
    %v1620 = vsub.s32 %v1617, %v1619
    %v1621 = vrot.slane %v1607, %v1620
    %v1622 = vcombine.low %v1614, %v1621
    %v1623 = vcombine.low %v765, %v764
    %v1624 = vcombine.low %v773, %v781
    %v1626 = vunpack.c.l.s4 1983009808
    %v1627 = vunpack.c.0.s8 %v1626
    %v1628 = vlaneseq
    %v1629 = vshrl.u32 %v1628, 7
    %v1630 = vsub.s32 %v1627, %v1629
    %v1631 = vrot.slane %v1623, %v1630
    %v1633 = vunpack.c.l.s4 1983009808
    %v1634 = vunpack.c.0.s8 %v1633
    %v1635 = vlaneseq
    %v1636 = vshrl.u32 %v1635, 7
    %v1637 = vsub.s32 %v1634, %v1636
    %v1638 = vrot.slane %v1624, %v1637
    %v1639 = vcombine.low %v1631, %v1638
    %v1640 = vcombine.low %v780, %v782
    %v1641 = vcombine.low %v790, %v798
    %v1643 = vunpack.c.l.s4 1983009808
    %v1644 = vunpack.c.0.s8 %v1643
    %v1645 = vlaneseq
    %v1646 = vshrl.u32 %v1645, 7
    %v1647 = vsub.s32 %v1644, %v1646
    %v1648 = vrot.slane %v1640, %v1647
    %v1650 = vunpack.c.l.s4 1983009808
    %v1651 = vunpack.c.0.s8 %v1650
    %v1652 = vlaneseq
    %v1653 = vshrl.u32 %v1652, 7
    %v1654 = vsub.s32 %v1651, %v1653
    %v1655 = vrot.slane %v1641, %v1654
    %v1656 = vcombine.low %v1648, %v1655
    %v1657 = vcombine.low %v797, %v806
    %v1658 = vcombine.low %v814, %v813
    %v1660 = vunpack.c.l.s4 1983009808
    %v1661 = vunpack.c.0.s8 %v1660
    %v1662 = vlaneseq
    %v1663 = vshrl.u32 %v1662, 7
    %v1664 = vsub.s32 %v1661, %v1663
    %v1665 = vrot.slane %v1657, %v1664
    %v1667 = vunpack.c.l.s4 1983009808
    %v1668 = vunpack.c.0.s8 %v1667
    %v1669 = vlaneseq
    %v1670 = vshrl.u32 %v1669, 7
    %v1671 = vsub.s32 %v1668, %v1670
    %v1672 = vrot.slane %v1658, %v1671
    %v1673 = vcombine.low %v1665, %v1672
    %v1674 = vcombine.low %v815, %v823
    %v1675 = vcombine.low %v831, %v830
    %v1677 = vunpack.c.l.s4 1983009808
    %v1678 = vunpack.c.0.s8 %v1677
    %v1679 = vlaneseq
    %v1680 = vshrl.u32 %v1679, 7
    %v1681 = vsub.s32 %v1678, %v1680
    %v1682 = vrot.slane %v1674, %v1681
    %v1684 = vunpack.c.l.s4 1983009808
    %v1685 = vunpack.c.0.s8 %v1684
    %v1686 = vlaneseq
    %v1687 = vshrl.u32 %v1686, 7
    %v1688 = vsub.s32 %v1685, %v1687
    %v1689 = vrot.slane %v1675, %v1688
    %v1690 = vcombine.low %v1682, %v1689
    %v1691 = vcombine.low %v839, %v847
    %v1692 = vcombine.low %v846, %v848
    %v1694 = vunpack.c.l.s4 1983009808
    %v1695 = vunpack.c.0.s8 %v1694
    %v1696 = vlaneseq
    %v1697 = vshrl.u32 %v1696, 7
    %v1698 = vsub.s32 %v1695, %v1697
    %v1699 = vrot.slane %v1691, %v1698
    %v1701 = vunpack.c.l.s4 1983009808
    %v1702 = vunpack.c.0.s8 %v1701
    %v1703 = vlaneseq
    %v1704 = vshrl.u32 %v1703, 7
    %v1705 = vsub.s32 %v1702, %v1704
    %v1706 = vrot.slane %v1692, %v1705
    %v1707 = vcombine.low %v1699, %v1706
    %v1708 = vcombine.low %v856, %v864
    %v1709 = vcombine.low %v863, %v872
    %v1711 = vunpack.c.l.s4 1983009808
    %v1712 = vunpack.c.0.s8 %v1711
    %v1713 = vlaneseq
    %v1714 = vshrl.u32 %v1713, 7
    %v1715 = vsub.s32 %v1712, %v1714
    %v1716 = vrot.slane %v1708, %v1715
    %v1718 = vunpack.c.l.s4 1983009808
    %v1719 = vunpack.c.0.s8 %v1718
    %v1720 = vlaneseq
    %v1721 = vshrl.u32 %v1720, 7
    %v1722 = vsub.s32 %v1719, %v1721
    %v1723 = vrot.slane %v1709, %v1722
    %v1724 = vcombine.low %v1716, %v1723
    %v1725 = vcombine.low %v880, %v879
    %v1726 = vcombine.low %v881, %v889
    %v1728 = vunpack.c.l.s4 1983009808
    %v1729 = vunpack.c.0.s8 %v1728
    %v1730 = vlaneseq
    %v1731 = vshrl.u32 %v1730, 7
    %v1732 = vsub.s32 %v1729, %v1731
    %v1733 = vrot.slane %v1725, %v1732
    %v1735 = vunpack.c.l.s4 1983009808
    %v1736 = vunpack.c.0.s8 %v1735
    %v1737 = vlaneseq
    %v1738 = vshrl.u32 %v1737, 7
    %v1739 = vsub.s32 %v1736, %v1738
    %v1740 = vrot.slane %v1726, %v1739
    %v1741 = vcombine.low %v1733, %v1740
    %v1742 = vcombine.low %v897, %v896
    %v1743 = vcombine.low %v905, %v913
    %v1745 = vunpack.c.l.s4 1983009808
    %v1746 = vunpack.c.0.s8 %v1745
    %v1747 = vlaneseq
    %v1748 = vshrl.u32 %v1747, 7
    %v1749 = vsub.s32 %v1746, %v1748
    %v1750 = vrot.slane %v1742, %v1749
    %v1752 = vunpack.c.l.s4 1983009808
    %v1753 = vunpack.c.0.s8 %v1752
    %v1754 = vlaneseq
    %v1755 = vshrl.u32 %v1754, 7
    %v1756 = vsub.s32 %v1753, %v1755
    %v1757 = vrot.slane %v1743, %v1756
    %v1758 = vcombine.low %v1750, %v1757
    %v1759 = vcombine.low %v912, %v914
    %v1760 = vcombine.low %v922, %v930
    %v1762 = vunpack.c.l.s4 1983009808
    %v1763 = vunpack.c.0.s8 %v1762
    %v1764 = vlaneseq
    %v1765 = vshrl.u32 %v1764, 7
    %v1766 = vsub.s32 %v1763, %v1765
    %v1767 = vrot.slane %v1759, %v1766
    %v1769 = vunpack.c.l.s4 1983009808
    %v1770 = vunpack.c.0.s8 %v1769
    %v1771 = vlaneseq
    %v1772 = vshrl.u32 %v1771, 7
    %v1773 = vsub.s32 %v1770, %v1772
    %v1774 = vrot.slane %v1760, %v1773
    %v1775 = vcombine.low %v1767, %v1774
    %v1776 = vcombine.low %v929, %v938
    %v1777 = vcombine.low %v946, %v945
    %v1779 = vunpack.c.l.s4 1983009808
    %v1780 = vunpack.c.0.s8 %v1779
    %v1781 = vlaneseq
    %v1782 = vshrl.u32 %v1781, 7
    %v1783 = vsub.s32 %v1780, %v1782
    %v1784 = vrot.slane %v1776, %v1783
    %v1786 = vunpack.c.l.s4 1983009808
    %v1787 = vunpack.c.0.s8 %v1786
    %v1788 = vlaneseq
    %v1789 = vshrl.u32 %v1788, 7
    %v1790 = vsub.s32 %v1787, %v1789
    %v1791 = vrot.slane %v1777, %v1790
    %v1792 = vcombine.low %v1784, %v1791
    %v1793 = vcombine.low %v947, %v955
    %v1794 = vcombine.low %v963, %v962
    %v1796 = vunpack.c.l.s4 1983009808
    %v1797 = vunpack.c.0.s8 %v1796
    %v1798 = vlaneseq
    %v1799 = vshrl.u32 %v1798, 7
    %v1800 = vsub.s32 %v1797, %v1799
    %v1801 = vrot.slane %v1793, %v1800
    %v1803 = vunpack.c.l.s4 1983009808
    %v1804 = vunpack.c.0.s8 %v1803
    %v1805 = vlaneseq
    %v1806 = vshrl.u32 %v1805, 7
    %v1807 = vsub.s32 %v1804, %v1806
    %v1808 = vrot.slane %v1794, %v1807
    %v1809 = vcombine.low %v1801, %v1808
    %v1810 = vcombine.low %v971, %v979
    %v1811 = vcombine.low %v978, %v980
    %v1813 = vunpack.c.l.s4 1983009808
    %v1814 = vunpack.c.0.s8 %v1813
    %v1815 = vlaneseq
    %v1816 = vshrl.u32 %v1815, 7
    %v1817 = vsub.s32 %v1814, %v1816
    %v1818 = vrot.slane %v1810, %v1817
    %v1820 = vunpack.c.l.s4 1983009808
    %v1821 = vunpack.c.0.s8 %v1820
    %v1822 = vlaneseq
    %v1823 = vshrl.u32 %v1822, 7
    %v1824 = vsub.s32 %v1821, %v1823
    %v1825 = vrot.slane %v1811, %v1824
    %v1826 = vcombine.low %v1818, %v1825
    %v1827 = vcombine.low %v988, %v996
    %v1828 = vcombine.low %v995, %v1004
    %v1830 = vunpack.c.l.s4 1983009808
    %v1831 = vunpack.c.0.s8 %v1830
    %v1832 = vlaneseq
    %v1833 = vshrl.u32 %v1832, 7
    %v1834 = vsub.s32 %v1831, %v1833
    %v1835 = vrot.slane %v1827, %v1834
    %v1837 = vunpack.c.l.s4 1983009808
    %v1838 = vunpack.c.0.s8 %v1837
    %v1839 = vlaneseq
    %v1840 = vshrl.u32 %v1839, 7
    %v1841 = vsub.s32 %v1838, %v1840
    %v1842 = vrot.slane %v1828, %v1841
    %v1843 = vcombine.low %v1835, %v1842
    %v1844 = vcombine.low %v1012, %v1011
    %v1845 = vcombine.low %v1013, %v1021
    %v1847 = vunpack.c.l.s4 1983009808
    %v1848 = vunpack.c.0.s8 %v1847
    %v1849 = vlaneseq
    %v1850 = vshrl.u32 %v1849, 7
    %v1851 = vsub.s32 %v1848, %v1850
    %v1852 = vrot.slane %v1844, %v1851
    %v1854 = vunpack.c.l.s4 1983009808
    %v1855 = vunpack.c.0.s8 %v1854
    %v1856 = vlaneseq
    %v1857 = vshrl.u32 %v1856, 7
    %v1858 = vsub.s32 %v1855, %v1857
    %v1859 = vrot.slane %v1845, %v1858
    %v1860 = vcombine.low %v1852, %v1859
    %v1861 = vcombine.low %v1029, %v1028
    %v1862 = vcombine.low %v1037, %v1045
    %v1864 = vunpack.c.l.s4 1983009808
    %v1865 = vunpack.c.0.s8 %v1864
    %v1866 = vlaneseq
    %v1867 = vshrl.u32 %v1866, 7
    %v1868 = vsub.s32 %v1865, %v1867
    %v1869 = vrot.slane %v1861, %v1868
    %v1871 = vunpack.c.l.s4 1983009808
    %v1872 = vunpack.c.0.s8 %v1871
    %v1873 = vlaneseq
    %v1874 = vshrl.u32 %v1873, 7
    %v1875 = vsub.s32 %v1872, %v1874
    %v1876 = vrot.slane %v1862, %v1875
    %v1877 = vcombine.low %v1869, %v1876
    %v1878 = vcombine.low %v1044, %v1046
    %v1879 = vcombine.low %v1054, %v1062
    %v1881 = vunpack.c.l.s4 1983009808
    %v1882 = vunpack.c.0.s8 %v1881
    %v1883 = vlaneseq
    %v1884 = vshrl.u32 %v1883, 7
    %v1885 = vsub.s32 %v1882, %v1884
    %v1886 = vrot.slane %v1878, %v1885
    %v1888 = vunpack.c.l.s4 1983009808
    %v1889 = vunpack.c.0.s8 %v1888
    %v1890 = vlaneseq
    %v1891 = vshrl.u32 %v1890, 7
    %v1892 = vsub.s32 %v1889, %v1891
    %v1893 = vrot.slane %v1879, %v1892
    %v1894 = vcombine.low %v1886, %v1893
    %v1895 = vcombine.low %v1061, %v1070
    %v1896 = vcombine.low %v1078, %v1077
    %v1898 = vunpack.c.l.s4 1983009808
    %v1899 = vunpack.c.0.s8 %v1898
    %v1900 = vlaneseq
    %v1901 = vshrl.u32 %v1900, 7
    %v1902 = vsub.s32 %v1899, %v1901
    %v1903 = vrot.slane %v1895, %v1902
    %v1905 = vunpack.c.l.s4 1983009808
    %v1906 = vunpack.c.0.s8 %v1905
    %v1907 = vlaneseq
    %v1908 = vshrl.u32 %v1907, 7
    %v1909 = vsub.s32 %v1906, %v1908
    %v1910 = vrot.slane %v1896, %v1909
    %v1911 = vcombine.low %v1903, %v1910
    %v1912 = vcombine.low %v1079, %v1087
    %v1913 = vcombine.low %v1095, %v1094
    %v1915 = vunpack.c.l.s4 1983009808
    %v1916 = vunpack.c.0.s8 %v1915
    %v1917 = vlaneseq
    %v1918 = vshrl.u32 %v1917, 7
    %v1919 = vsub.s32 %v1916, %v1918
    %v1920 = vrot.slane %v1912, %v1919
    %v1922 = vunpack.c.l.s4 1983009808
    %v1923 = vunpack.c.0.s8 %v1922
    %v1924 = vlaneseq
    %v1925 = vshrl.u32 %v1924, 7
    %v1926 = vsub.s32 %v1923, %v1925
    %v1927 = vrot.slane %v1913, %v1926
    %v1928 = vcombine.low %v1920, %v1927
    %v1978 = vpack.c.bf16 %v1129, %v1112
    %v1979 = vpack.c.bf16 %v1163, %v1146
    %v1980 = vpack.c.bf16 %v1197, %v1180
    %v1981 = vpack.c.bf16 %v1231, %v1214
    %v1982 = vpack.c.bf16 %v1265, %v1248
    %v1983 = vpack.c.bf16 %v1299, %v1282
    %v1984 = vpack.c.bf16 %v1333, %v1316
    %v1985 = vpack.c.bf16 %v1367, %v1350
    %v1986 = vpack.c.bf16 %v1401, %v1384
    %v1987 = vpack.c.bf16 %v1435, %v1418
    %v1988 = vpack.c.bf16 %v1469, %v1452
    %v1989 = vpack.c.bf16 %v1503, %v1486
    %v1990 = vpack.c.bf16 %v1537, %v1520
    %v1991 = vpack.c.bf16 %v1571, %v1554
    %v1992 = vpack.c.bf16 %v1605, %v1588
    %v1993 = vpack.c.bf16 %v1639, %v1622
    %v1994 = vpack.c.bf16 %v1673, %v1656
    %v1995 = vpack.c.bf16 %v1707, %v1690
    %v1996 = vpack.c.bf16 %v1741, %v1724
    %v1997 = vpack.c.bf16 %v1775, %v1758
    %v1998 = vpack.c.bf16 %v1809, %v1792
    %v1999 = vpack.c.bf16 %v1843, %v1826
    %v2000 = vpack.c.bf16 %v1877, %v1860
    %v2001 = vpack.c.bf16 %v1911, %v1894
    %v2002 = vpack.c.bf16 %v1928, %v1928
    %v2003 = vcombine.high %v203, %v203
    %v2004 = vcombine.high %v236, %v236
    %v2005 = vcombine.high %v269, %v269
    %v2006 = vcombine.high %v302, %v302
    %v2007 = vcombine.high %v335, %v335
    %v2008 = vcombine.high %v368, %v368
    %v2009 = vcombine.high %v401, %v401
    %v2010 = vcombine.high %v434, %v434
    %v2011 = vcombine.high %v467, %v467
    %v2012 = vcombine.high %v500, %v500
    %v2013 = vcombine.high %v533, %v533
    %v2014 = vcombine.high %v566, %v566
    %v2015 = vcombine.high %v599, %v599
    %v2016 = vcombine.high %v632, %v632
    %v2017 = vcombine.high %v665, %v665
    %v2018 = vcombine.high %v698, %v698
    %v2019 = vcombine.high %v731, %v731
    %v2020 = vcombine.high %v764, %v764
    %v2021 = vcombine.high %v797, %v797
    %v2022 = vcombine.high %v830, %v830
    %v2023 = vcombine.high %v863, %v863
    %v2024 = vcombine.high %v896, %v896
    %v2025 = vcombine.high %v929, %v929
    %v2026 = vcombine.high %v962, %v962
    %v2027 = vcombine.high %v995, %v995
    %v2028 = vcombine.high %v1028, %v1028
    %v2029 = vcombine.high %v1061, %v1061
    %v2030 = vcombine.high %v1094, %v1094
    %vm2031 = vcmask 1040384
    %vm2032 = vcmask 1042434
    %vm2033 = vmor %vm2031, %vm2032
    %vm2034 = vcmask 1044484
    %vm2035 = vmor %vm2033, %vm2034
    %vm2036 = vcmask 1046534
    %vm2037 = vmor %vm2035, %vm2036
    %v2038 = vrot.slane %v179, 7
    %v2039 = vrot.slane %v2038, 2
    %v2040 = vrot.slane %v187, 7
    %v2041 = vsel %vm2037, %v2039, %v2040
    %v2042 = vrot.slane %v2040, 2
    %v2043 = vrot.slane %v186, 7
    %v2044 = vsel %vm2037, %v2042, %v2043
    %v2045 = vrot.slane %v2043, 2
    %v2046 = vrot.slane %v188, 7
    %v2047 = vsel %vm2037, %v2045, %v2046
    %v2048 = vrot.slane %v2046, 2
    %v2049 = vrot.slane %v196, 7
    %v2050 = vsel %vm2037, %v2048, %v2049
    %v2051 = vrot.slane %v2049, 2
    %v2052 = vrot.slane %v204, 7
    %v2053 = vsel %vm2037, %v2051, %v2052
    %v2054 = vrot.slane %v2052, 2
    %v2055 = vrot.slane %v203, 7
    %v2056 = vsel %vm2037, %v2054, %v2055
    %v2057 = vrot.slane %v2055, 2
    %v2058 = vrot.slane %v2003, 7
    %v2059 = vsel %vm2037, %v2057, %v2058
    %v2060 = vrot.slane %v212, 7
    %v2061 = vrot.slane %v2060, 2
    %v2062 = vrot.slane %v220, 7
    %v2063 = vsel %vm2037, %v2061, %v2062
    %v2064 = vrot.slane %v2062, 2
    %v2065 = vrot.slane %v219, 7
    %v2066 = vsel %vm2037, %v2064, %v2065
    %v2067 = vrot.slane %v2065, 2
    %v2068 = vrot.slane %v221, 7
    %v2069 = vsel %vm2037, %v2067, %v2068
    %v2070 = vrot.slane %v2068, 2
    %v2071 = vrot.slane %v229, 7
    %v2072 = vsel %vm2037, %v2070, %v2071
    %v2073 = vrot.slane %v2071, 2
    %v2074 = vrot.slane %v237, 7
    %v2075 = vsel %vm2037, %v2073, %v2074
    %v2076 = vrot.slane %v2074, 2
    %v2077 = vrot.slane %v236, 7
    %v2078 = vsel %vm2037, %v2076, %v2077
    %v2079 = vrot.slane %v2077, 2
    %v2080 = vrot.slane %v2004, 7
    %v2081 = vsel %vm2037, %v2079, %v2080
    %v2082 = vrot.slane %v245, 7
    %v2083 = vrot.slane %v2082, 2
    %v2084 = vrot.slane %v253, 7
    %v2085 = vsel %vm2037, %v2083, %v2084
    %v2086 = vrot.slane %v2084, 2
    %v2087 = vrot.slane %v252, 7
    %v2088 = vsel %vm2037, %v2086, %v2087
    %v2089 = vrot.slane %v2087, 2
    %v2090 = vrot.slane %v254, 7
    %v2091 = vsel %vm2037, %v2089, %v2090
    %v2092 = vrot.slane %v2090, 2
    %v2093 = vrot.slane %v262, 7
    %v2094 = vsel %vm2037, %v2092, %v2093
    %v2095 = vrot.slane %v2093, 2
    %v2096 = vrot.slane %v270, 7
    %v2097 = vsel %vm2037, %v2095, %v2096
    %v2098 = vrot.slane %v2096, 2
    %v2099 = vrot.slane %v269, 7
    %v2100 = vsel %vm2037, %v2098, %v2099
    %v2101 = vrot.slane %v2099, 2
    %v2102 = vrot.slane %v2005, 7
    %v2103 = vsel %vm2037, %v2101, %v2102
    %v2104 = vrot.slane %v278, 7
    %v2105 = vrot.slane %v2104, 2
    %v2106 = vrot.slane %v286, 7
    %v2107 = vsel %vm2037, %v2105, %v2106
    %v2108 = vrot.slane %v2106, 2
    %v2109 = vrot.slane %v285, 7
    %v2110 = vsel %vm2037, %v2108, %v2109
    %v2111 = vrot.slane %v2109, 2
    %v2112 = vrot.slane %v287, 7
    %v2113 = vsel %vm2037, %v2111, %v2112
    %v2114 = vrot.slane %v2112, 2
    %v2115 = vrot.slane %v295, 7
    %v2116 = vsel %vm2037, %v2114, %v2115
    %v2117 = vrot.slane %v2115, 2
    %v2118 = vrot.slane %v303, 7
    %v2119 = vsel %vm2037, %v2117, %v2118
    %v2120 = vrot.slane %v2118, 2
    %v2121 = vrot.slane %v302, 7
    %v2122 = vsel %vm2037, %v2120, %v2121
    %v2123 = vrot.slane %v2121, 2
    %v2124 = vrot.slane %v2006, 7
    %v2125 = vsel %vm2037, %v2123, %v2124
    %v2126 = vrot.slane %v311, 7
    %v2127 = vrot.slane %v2126, 2
    %v2128 = vrot.slane %v319, 7
    %v2129 = vsel %vm2037, %v2127, %v2128
    %v2130 = vrot.slane %v2128, 2
    %v2131 = vrot.slane %v318, 7
    %v2132 = vsel %vm2037, %v2130, %v2131
    %v2133 = vrot.slane %v2131, 2
    %v2134 = vrot.slane %v320, 7
    %v2135 = vsel %vm2037, %v2133, %v2134
    %v2136 = vrot.slane %v2134, 2
    %v2137 = vrot.slane %v328, 7
    %v2138 = vsel %vm2037, %v2136, %v2137
    %v2139 = vrot.slane %v2137, 2
    %v2140 = vrot.slane %v336, 7
    %v2141 = vsel %vm2037, %v2139, %v2140
    %v2142 = vrot.slane %v2140, 2
    %v2143 = vrot.slane %v335, 7
    %v2144 = vsel %vm2037, %v2142, %v2143
    %v2145 = vrot.slane %v2143, 2
    %v2146 = vrot.slane %v2007, 7
    %v2147 = vsel %vm2037, %v2145, %v2146
    %v2148 = vrot.slane %v344, 7
    %v2149 = vrot.slane %v2148, 2
    %v2150 = vrot.slane %v352, 7
    %v2151 = vsel %vm2037, %v2149, %v2150
    %v2152 = vrot.slane %v2150, 2
    %v2153 = vrot.slane %v351, 7
    %v2154 = vsel %vm2037, %v2152, %v2153
    %v2155 = vrot.slane %v2153, 2
    %v2156 = vrot.slane %v353, 7
    %v2157 = vsel %vm2037, %v2155, %v2156
    %v2158 = vrot.slane %v2156, 2
    %v2159 = vrot.slane %v361, 7
    %v2160 = vsel %vm2037, %v2158, %v2159
    %v2161 = vrot.slane %v2159, 2
    %v2162 = vrot.slane %v369, 7
    %v2163 = vsel %vm2037, %v2161, %v2162
    %v2164 = vrot.slane %v2162, 2
    %v2165 = vrot.slane %v368, 7
    %v2166 = vsel %vm2037, %v2164, %v2165
    %v2167 = vrot.slane %v2165, 2
    %v2168 = vrot.slane %v2008, 7
    %v2169 = vsel %vm2037, %v2167, %v2168
    %v2170 = vrot.slane %v377, 7
    %v2171 = vrot.slane %v2170, 2
    %v2172 = vrot.slane %v385, 7
    %v2173 = vsel %vm2037, %v2171, %v2172
    %v2174 = vrot.slane %v2172, 2
    %v2175 = vrot.slane %v384, 7
    %v2176 = vsel %vm2037, %v2174, %v2175
    %v2177 = vrot.slane %v2175, 2
    %v2178 = vrot.slane %v386, 7
    %v2179 = vsel %vm2037, %v2177, %v2178
    %v2180 = vrot.slane %v2178, 2
    %v2181 = vrot.slane %v394, 7
    %v2182 = vsel %vm2037, %v2180, %v2181
    %v2183 = vrot.slane %v2181, 2
    %v2184 = vrot.slane %v402, 7
    %v2185 = vsel %vm2037, %v2183, %v2184
    %v2186 = vrot.slane %v2184, 2
    %v2187 = vrot.slane %v401, 7
    %v2188 = vsel %vm2037, %v2186, %v2187
    %v2189 = vrot.slane %v2187, 2
    %v2190 = vrot.slane %v2009, 7
    %v2191 = vsel %vm2037, %v2189, %v2190
    %v2192 = vrot.slane %v410, 7
    %v2193 = vrot.slane %v2192, 2
    %v2194 = vrot.slane %v418, 7
    %v2195 = vsel %vm2037, %v2193, %v2194
    %v2196 = vrot.slane %v2194, 2
    %v2197 = vrot.slane %v417, 7
    %v2198 = vsel %vm2037, %v2196, %v2197
    %v2199 = vrot.slane %v2197, 2
    %v2200 = vrot.slane %v419, 7
    %v2201 = vsel %vm2037, %v2199, %v2200
    %v2202 = vrot.slane %v2200, 2
    %v2203 = vrot.slane %v427, 7
    %v2204 = vsel %vm2037, %v2202, %v2203
    %v2205 = vrot.slane %v2203, 2
    %v2206 = vrot.slane %v435, 7
    %v2207 = vsel %vm2037, %v2205, %v2206
    %v2208 = vrot.slane %v2206, 2
    %v2209 = vrot.slane %v434, 7
    %v2210 = vsel %vm2037, %v2208, %v2209
    %v2211 = vrot.slane %v2209, 2
    %v2212 = vrot.slane %v2010, 7
    %v2213 = vsel %vm2037, %v2211, %v2212
    %v2214 = vrot.slane %v443, 7
    %v2215 = vrot.slane %v2214, 2
    %v2216 = vrot.slane %v451, 7
    %v2217 = vsel %vm2037, %v2215, %v2216
    %v2218 = vrot.slane %v2216, 2
    %v2219 = vrot.slane %v450, 7
    %v2220 = vsel %vm2037, %v2218, %v2219
    %v2221 = vrot.slane %v2219, 2
    %v2222 = vrot.slane %v452, 7
    %v2223 = vsel %vm2037, %v2221, %v2222
    %v2224 = vrot.slane %v2222, 2
    %v2225 = vrot.slane %v460, 7
    %v2226 = vsel %vm2037, %v2224, %v2225
    %v2227 = vrot.slane %v2225, 2
    %v2228 = vrot.slane %v468, 7
    %v2229 = vsel %vm2037, %v2227, %v2228
    %v2230 = vrot.slane %v2228, 2
    %v2231 = vrot.slane %v467, 7
    %v2232 = vsel %vm2037, %v2230, %v2231
    %v2233 = vrot.slane %v2231, 2
    %v2234 = vrot.slane %v2011, 7
    %v2235 = vsel %vm2037, %v2233, %v2234
    %v2236 = vrot.slane %v476, 7
    %v2237 = vrot.slane %v2236, 2
    %v2238 = vrot.slane %v484, 7
    %v2239 = vsel %vm2037, %v2237, %v2238
    %v2240 = vrot.slane %v2238, 2
    %v2241 = vrot.slane %v483, 7
    %v2242 = vsel %vm2037, %v2240, %v2241
    %v2243 = vrot.slane %v2241, 2
    %v2244 = vrot.slane %v485, 7
    %v2245 = vsel %vm2037, %v2243, %v2244
    %v2246 = vrot.slane %v2244, 2
    %v2247 = vrot.slane %v493, 7
    %v2248 = vsel %vm2037, %v2246, %v2247
    %v2249 = vrot.slane %v2247, 2
    %v2250 = vrot.slane %v501, 7
    %v2251 = vsel %vm2037, %v2249, %v2250
    %v2252 = vrot.slane %v2250, 2
    %v2253 = vrot.slane %v500, 7
    %v2254 = vsel %vm2037, %v2252, %v2253
    %v2255 = vrot.slane %v2253, 2
    %v2256 = vrot.slane %v2012, 7
    %v2257 = vsel %vm2037, %v2255, %v2256
    %v2258 = vrot.slane %v509, 7
    %v2259 = vrot.slane %v2258, 2
    %v2260 = vrot.slane %v517, 7
    %v2261 = vsel %vm2037, %v2259, %v2260
    %v2262 = vrot.slane %v2260, 2
    %v2263 = vrot.slane %v516, 7
    %v2264 = vsel %vm2037, %v2262, %v2263
    %v2265 = vrot.slane %v2263, 2
    %v2266 = vrot.slane %v518, 7
    %v2267 = vsel %vm2037, %v2265, %v2266
    %v2268 = vrot.slane %v2266, 2
    %v2269 = vrot.slane %v526, 7
    %v2270 = vsel %vm2037, %v2268, %v2269
    %v2271 = vrot.slane %v2269, 2
    %v2272 = vrot.slane %v534, 7
    %v2273 = vsel %vm2037, %v2271, %v2272
    %v2274 = vrot.slane %v2272, 2
    %v2275 = vrot.slane %v533, 7
    %v2276 = vsel %vm2037, %v2274, %v2275
    %v2277 = vrot.slane %v2275, 2
    %v2278 = vrot.slane %v2013, 7
    %v2279 = vsel %vm2037, %v2277, %v2278
    %v2280 = vrot.slane %v542, 7
    %v2281 = vrot.slane %v2280, 2
    %v2282 = vrot.slane %v550, 7
    %v2283 = vsel %vm2037, %v2281, %v2282
    %v2284 = vrot.slane %v2282, 2
    %v2285 = vrot.slane %v549, 7
    %v2286 = vsel %vm2037, %v2284, %v2285
    %v2287 = vrot.slane %v2285, 2
    %v2288 = vrot.slane %v551, 7
    %v2289 = vsel %vm2037, %v2287, %v2288
    %v2290 = vrot.slane %v2288, 2
    %v2291 = vrot.slane %v559, 7
    %v2292 = vsel %vm2037, %v2290, %v2291
    %v2293 = vrot.slane %v2291, 2
    %v2294 = vrot.slane %v567, 7
    %v2295 = vsel %vm2037, %v2293, %v2294
    %v2296 = vrot.slane %v2294, 2
    %v2297 = vrot.slane %v566, 7
    %v2298 = vsel %vm2037, %v2296, %v2297
    %v2299 = vrot.slane %v2297, 2
    %v2300 = vrot.slane %v2014, 7
    %v2301 = vsel %vm2037, %v2299, %v2300
    %v2302 = vrot.slane %v575, 7
    %v2303 = vrot.slane %v2302, 2
    %v2304 = vrot.slane %v583, 7
    %v2305 = vsel %vm2037, %v2303, %v2304
    %v2306 = vrot.slane %v2304, 2
    %v2307 = vrot.slane %v582, 7
    %v2308 = vsel %vm2037, %v2306, %v2307
    %v2309 = vrot.slane %v2307, 2
    %v2310 = vrot.slane %v584, 7
    %v2311 = vsel %vm2037, %v2309, %v2310
    %v2312 = vrot.slane %v2310, 2
    %v2313 = vrot.slane %v592, 7
    %v2314 = vsel %vm2037, %v2312, %v2313
    %v2315 = vrot.slane %v2313, 2
    %v2316 = vrot.slane %v600, 7
    %v2317 = vsel %vm2037, %v2315, %v2316
    %v2318 = vrot.slane %v2316, 2
    %v2319 = vrot.slane %v599, 7
    %v2320 = vsel %vm2037, %v2318, %v2319
    %v2321 = vrot.slane %v2319, 2
    %v2322 = vrot.slane %v2015, 7
    %v2323 = vsel %vm2037, %v2321, %v2322
    %v2324 = vrot.slane %v608, 7
    %v2325 = vrot.slane %v2324, 2
    %v2326 = vrot.slane %v616, 7
    %v2327 = vsel %vm2037, %v2325, %v2326
    %v2328 = vrot.slane %v2326, 2
    %v2329 = vrot.slane %v615, 7
    %v2330 = vsel %vm2037, %v2328, %v2329
    %v2331 = vrot.slane %v2329, 2
    %v2332 = vrot.slane %v617, 7
    %v2333 = vsel %vm2037, %v2331, %v2332
    %v2334 = vrot.slane %v2332, 2
    %v2335 = vrot.slane %v625, 7
    %v2336 = vsel %vm2037, %v2334, %v2335
    %v2337 = vrot.slane %v2335, 2
    %v2338 = vrot.slane %v633, 7
    %v2339 = vsel %vm2037, %v2337, %v2338
    %v2340 = vrot.slane %v2338, 2
    %v2341 = vrot.slane %v632, 7
    %v2342 = vsel %vm2037, %v2340, %v2341
    %v2343 = vrot.slane %v2341, 2
    %v2344 = vrot.slane %v2016, 7
    %v2345 = vsel %vm2037, %v2343, %v2344
    %v2346 = vrot.slane %v641, 7
    %v2347 = vrot.slane %v2346, 2
    %v2348 = vrot.slane %v649, 7
    %v2349 = vsel %vm2037, %v2347, %v2348
    %v2350 = vrot.slane %v2348, 2
    %v2351 = vrot.slane %v648, 7
    %v2352 = vsel %vm2037, %v2350, %v2351
    %v2353 = vrot.slane %v2351, 2
    %v2354 = vrot.slane %v650, 7
    %v2355 = vsel %vm2037, %v2353, %v2354
    %v2356 = vrot.slane %v2354, 2
    %v2357 = vrot.slane %v658, 7
    %v2358 = vsel %vm2037, %v2356, %v2357
    %v2359 = vrot.slane %v2357, 2
    %v2360 = vrot.slane %v666, 7
    %v2361 = vsel %vm2037, %v2359, %v2360
    %v2362 = vrot.slane %v2360, 2
    %v2363 = vrot.slane %v665, 7
    %v2364 = vsel %vm2037, %v2362, %v2363
    %v2365 = vrot.slane %v2363, 2
    %v2366 = vrot.slane %v2017, 7
    %v2367 = vsel %vm2037, %v2365, %v2366
    %v2368 = vrot.slane %v674, 7
    %v2369 = vrot.slane %v2368, 2
    %v2370 = vrot.slane %v682, 7
    %v2371 = vsel %vm2037, %v2369, %v2370
    %v2372 = vrot.slane %v2370, 2
    %v2373 = vrot.slane %v681, 7
    %v2374 = vsel %vm2037, %v2372, %v2373
    %v2375 = vrot.slane %v2373, 2
    %v2376 = vrot.slane %v683, 7
    %v2377 = vsel %vm2037, %v2375, %v2376
    %v2378 = vrot.slane %v2376, 2
    %v2379 = vrot.slane %v691, 7
    %v2380 = vsel %vm2037, %v2378, %v2379
    %v2381 = vrot.slane %v2379, 2
    %v2382 = vrot.slane %v699, 7
    %v2383 = vsel %vm2037, %v2381, %v2382
    %v2384 = vrot.slane %v2382, 2
    %v2385 = vrot.slane %v698, 7
    %v2386 = vsel %vm2037, %v2384, %v2385
    %v2387 = vrot.slane %v2385, 2
    %v2388 = vrot.slane %v2018, 7
    %v2389 = vsel %vm2037, %v2387, %v2388
    %v2390 = vrot.slane %v707, 7
    %v2391 = vrot.slane %v2390, 2
    %v2392 = vrot.slane %v715, 7
    %v2393 = vsel %vm2037, %v2391, %v2392
    %v2394 = vrot.slane %v2392, 2
    %v2395 = vrot.slane %v714, 7
    %v2396 = vsel %vm2037, %v2394, %v2395
    %v2397 = vrot.slane %v2395, 2
    %v2398 = vrot.slane %v716, 7
    %v2399 = vsel %vm2037, %v2397, %v2398
    %v2400 = vrot.slane %v2398, 2
    %v2401 = vrot.slane %v724, 7
    %v2402 = vsel %vm2037, %v2400, %v2401
    %v2403 = vrot.slane %v2401, 2
    %v2404 = vrot.slane %v732, 7
    %v2405 = vsel %vm2037, %v2403, %v2404
    %v2406 = vrot.slane %v2404, 2
    %v2407 = vrot.slane %v731, 7
    %v2408 = vsel %vm2037, %v2406, %v2407
    %v2409 = vrot.slane %v2407, 2
    %v2410 = vrot.slane %v2019, 7
    %v2411 = vsel %vm2037, %v2409, %v2410
    %v2412 = vrot.slane %v740, 7
    %v2413 = vrot.slane %v2412, 2
    %v2414 = vrot.slane %v748, 7
    %v2415 = vsel %vm2037, %v2413, %v2414
    %v2416 = vrot.slane %v2414, 2
    %v2417 = vrot.slane %v747, 7
    %v2418 = vsel %vm2037, %v2416, %v2417
    %v2419 = vrot.slane %v2417, 2
    %v2420 = vrot.slane %v749, 7
    %v2421 = vsel %vm2037, %v2419, %v2420
    %v2422 = vrot.slane %v2420, 2
    %v2423 = vrot.slane %v757, 7
    %v2424 = vsel %vm2037, %v2422, %v2423
    %v2425 = vrot.slane %v2423, 2
    %v2426 = vrot.slane %v765, 7
    %v2427 = vsel %vm2037, %v2425, %v2426
    %v2428 = vrot.slane %v2426, 2
    %v2429 = vrot.slane %v764, 7
    %v2430 = vsel %vm2037, %v2428, %v2429
    %v2431 = vrot.slane %v2429, 2
    %v2432 = vrot.slane %v2020, 7
    %v2433 = vsel %vm2037, %v2431, %v2432
    %v2434 = vrot.slane %v773, 7
    %v2435 = vrot.slane %v2434, 2
    %v2436 = vrot.slane %v781, 7
    %v2437 = vsel %vm2037, %v2435, %v2436
    %v2438 = vrot.slane %v2436, 2
    %v2439 = vrot.slane %v780, 7
    %v2440 = vsel %vm2037, %v2438, %v2439
    %v2441 = vrot.slane %v2439, 2
    %v2442 = vrot.slane %v782, 7
    %v2443 = vsel %vm2037, %v2441, %v2442
    %v2444 = vrot.slane %v2442, 2
    %v2445 = vrot.slane %v790, 7
    %v2446 = vsel %vm2037, %v2444, %v2445
    %v2447 = vrot.slane %v2445, 2
    %v2448 = vrot.slane %v798, 7
    %v2449 = vsel %vm2037, %v2447, %v2448
    %v2450 = vrot.slane %v2448, 2
    %v2451 = vrot.slane %v797, 7
    %v2452 = vsel %vm2037, %v2450, %v2451
    %v2453 = vrot.slane %v2451, 2
    %v2454 = vrot.slane %v2021, 7
    %v2455 = vsel %vm2037, %v2453, %v2454
    %v2456 = vrot.slane %v806, 7
    %v2457 = vrot.slane %v2456, 2
    %v2458 = vrot.slane %v814, 7
    %v2459 = vsel %vm2037, %v2457, %v2458
    %v2460 = vrot.slane %v2458, 2
    %v2461 = vrot.slane %v813, 7
    %v2462 = vsel %vm2037, %v2460, %v2461
    %v2463 = vrot.slane %v2461, 2
    %v2464 = vrot.slane %v815, 7
    %v2465 = vsel %vm2037, %v2463, %v2464
    %v2466 = vrot.slane %v2464, 2
    %v2467 = vrot.slane %v823, 7
    %v2468 = vsel %vm2037, %v2466, %v2467
    %v2469 = vrot.slane %v2467, 2
    %v2470 = vrot.slane %v831, 7
    %v2471 = vsel %vm2037, %v2469, %v2470
    %v2472 = vrot.slane %v2470, 2
    %v2473 = vrot.slane %v830, 7
    %v2474 = vsel %vm2037, %v2472, %v2473
    %v2475 = vrot.slane %v2473, 2
    %v2476 = vrot.slane %v2022, 7
    %v2477 = vsel %vm2037, %v2475, %v2476
    %v2478 = vrot.slane %v839, 7
    %v2479 = vrot.slane %v2478, 2
    %v2480 = vrot.slane %v847, 7
    %v2481 = vsel %vm2037, %v2479, %v2480
    %v2482 = vrot.slane %v2480, 2
    %v2483 = vrot.slane %v846, 7
    %v2484 = vsel %vm2037, %v2482, %v2483
    %v2485 = vrot.slane %v2483, 2
    %v2486 = vrot.slane %v848, 7
    %v2487 = vsel %vm2037, %v2485, %v2486
    %v2488 = vrot.slane %v2486, 2
    %v2489 = vrot.slane %v856, 7
    %v2490 = vsel %vm2037, %v2488, %v2489
    %v2491 = vrot.slane %v2489, 2
    %v2492 = vrot.slane %v864, 7
    %v2493 = vsel %vm2037, %v2491, %v2492
    %v2494 = vrot.slane %v2492, 2
    %v2495 = vrot.slane %v863, 7
    %v2496 = vsel %vm2037, %v2494, %v2495
    %v2497 = vrot.slane %v2495, 2
    %v2498 = vrot.slane %v2023, 7
    %v2499 = vsel %vm2037, %v2497, %v2498
    %v2500 = vrot.slane %v872, 7
    %v2501 = vrot.slane %v2500, 2
    %v2502 = vrot.slane %v880, 7
    %v2503 = vsel %vm2037, %v2501, %v2502
    %v2504 = vrot.slane %v2502, 2
    %v2505 = vrot.slane %v879, 7
    %v2506 = vsel %vm2037, %v2504, %v2505
    %v2507 = vrot.slane %v2505, 2
    %v2508 = vrot.slane %v881, 7
    %v2509 = vsel %vm2037, %v2507, %v2508
    %v2510 = vrot.slane %v2508, 2
    %v2511 = vrot.slane %v889, 7
    %v2512 = vsel %vm2037, %v2510, %v2511
    %v2513 = vrot.slane %v2511, 2
    %v2514 = vrot.slane %v897, 7
    %v2515 = vsel %vm2037, %v2513, %v2514
    %v2516 = vrot.slane %v2514, 2
    %v2517 = vrot.slane %v896, 7
    %v2518 = vsel %vm2037, %v2516, %v2517
    %v2519 = vrot.slane %v2517, 2
    %v2520 = vrot.slane %v2024, 7
    %v2521 = vsel %vm2037, %v2519, %v2520
    %v2522 = vrot.slane %v905, 7
    %v2523 = vrot.slane %v2522, 2
    %v2524 = vrot.slane %v913, 7
    %v2525 = vsel %vm2037, %v2523, %v2524
    %v2526 = vrot.slane %v2524, 2
    %v2527 = vrot.slane %v912, 7
    %v2528 = vsel %vm2037, %v2526, %v2527
    %v2529 = vrot.slane %v2527, 2
    %v2530 = vrot.slane %v914, 7
    %v2531 = vsel %vm2037, %v2529, %v2530
    %v2532 = vrot.slane %v2530, 2
    %v2533 = vrot.slane %v922, 7
    %v2534 = vsel %vm2037, %v2532, %v2533
    %v2535 = vrot.slane %v2533, 2
    %v2536 = vrot.slane %v930, 7
    %v2537 = vsel %vm2037, %v2535, %v2536
    %v2538 = vrot.slane %v2536, 2
    %v2539 = vrot.slane %v929, 7
    %v2540 = vsel %vm2037, %v2538, %v2539
    %v2541 = vrot.slane %v2539, 2
    %v2542 = vrot.slane %v2025, 7
    %v2543 = vsel %vm2037, %v2541, %v2542
    %v2544 = vrot.slane %v938, 7
    %v2545 = vrot.slane %v2544, 2
    %v2546 = vrot.slane %v946, 7
    %v2547 = vsel %vm2037, %v2545, %v2546
    %v2548 = vrot.slane %v2546, 2
    %v2549 = vrot.slane %v945, 7
    %v2550 = vsel %vm2037, %v2548, %v2549
    %v2551 = vrot.slane %v2549, 2
    %v2552 = vrot.slane %v947, 7
    %v2553 = vsel %vm2037, %v2551, %v2552
    %v2554 = vrot.slane %v2552, 2
    %v2555 = vrot.slane %v955, 7
    %v2556 = vsel %vm2037, %v2554, %v2555
    %v2557 = vrot.slane %v2555, 2
    %v2558 = vrot.slane %v963, 7
    %v2559 = vsel %vm2037, %v2557, %v2558
    %v2560 = vrot.slane %v2558, 2
    %v2561 = vrot.slane %v962, 7
    %v2562 = vsel %vm2037, %v2560, %v2561
    %v2563 = vrot.slane %v2561, 2
    %v2564 = vrot.slane %v2026, 7
    %v2565 = vsel %vm2037, %v2563, %v2564
    %v2566 = vrot.slane %v971, 7
    %v2567 = vrot.slane %v2566, 2
    %v2568 = vrot.slane %v979, 7
    %v2569 = vsel %vm2037, %v2567, %v2568
    %v2570 = vrot.slane %v2568, 2
    %v2571 = vrot.slane %v978, 7
    %v2572 = vsel %vm2037, %v2570, %v2571
    %v2573 = vrot.slane %v2571, 2
    %v2574 = vrot.slane %v980, 7
    %v2575 = vsel %vm2037, %v2573, %v2574
    %v2576 = vrot.slane %v2574, 2
    %v2577 = vrot.slane %v988, 7
    %v2578 = vsel %vm2037, %v2576, %v2577
    %v2579 = vrot.slane %v2577, 2
    %v2580 = vrot.slane %v996, 7
    %v2581 = vsel %vm2037, %v2579, %v2580
    %v2582 = vrot.slane %v2580, 2
    %v2583 = vrot.slane %v995, 7
    %v2584 = vsel %vm2037, %v2582, %v2583
    %v2585 = vrot.slane %v2583, 2
    %v2586 = vrot.slane %v2027, 7
    %v2587 = vsel %vm2037, %v2585, %v2586
    %v2588 = vrot.slane %v1004, 7
    %v2589 = vrot.slane %v2588, 2
    %v2590 = vrot.slane %v1012, 7
    %v2591 = vsel %vm2037, %v2589, %v2590
    %v2592 = vrot.slane %v2590, 2
    %v2593 = vrot.slane %v1011, 7
    %v2594 = vsel %vm2037, %v2592, %v2593
    %v2595 = vrot.slane %v2593, 2
    %v2596 = vrot.slane %v1013, 7
    %v2597 = vsel %vm2037, %v2595, %v2596
    %v2598 = vrot.slane %v2596, 2
    %v2599 = vrot.slane %v1021, 7
    %v2600 = vsel %vm2037, %v2598, %v2599
    %v2601 = vrot.slane %v2599, 2
    %v2602 = vrot.slane %v1029, 7
    %v2603 = vsel %vm2037, %v2601, %v2602
    %v2604 = vrot.slane %v2602, 2
    %v2605 = vrot.slane %v1028, 7
    %v2606 = vsel %vm2037, %v2604, %v2605
    %v2607 = vrot.slane %v2605, 2
    %v2608 = vrot.slane %v2028, 7
    %v2609 = vsel %vm2037, %v2607, %v2608
    %v2610 = vrot.slane %v1037, 7
    %v2611 = vrot.slane %v2610, 2
    %v2612 = vrot.slane %v1045, 7
    %v2613 = vsel %vm2037, %v2611, %v2612
    %v2614 = vrot.slane %v2612, 2
    %v2615 = vrot.slane %v1044, 7
    %v2616 = vsel %vm2037, %v2614, %v2615
    %v2617 = vrot.slane %v2615, 2
    %v2618 = vrot.slane %v1046, 7
    %v2619 = vsel %vm2037, %v2617, %v2618
    %v2620 = vrot.slane %v2618, 2
    %v2621 = vrot.slane %v1054, 7
    %v2622 = vsel %vm2037, %v2620, %v2621
    %v2623 = vrot.slane %v2621, 2
    %v2624 = vrot.slane %v1062, 7
    %v2625 = vsel %vm2037, %v2623, %v2624
    %v2626 = vrot.slane %v2624, 2
    %v2627 = vrot.slane %v1061, 7
    %v2628 = vsel %vm2037, %v2626, %v2627
    %v2629 = vrot.slane %v2627, 2
    %v2630 = vrot.slane %v2029, 7
    %v2631 = vsel %vm2037, %v2629, %v2630
    %v2632 = vrot.slane %v1070, 7
    %v2633 = vrot.slane %v2632, 2
    %v2634 = vrot.slane %v1078, 7
    %v2635 = vsel %vm2037, %v2633, %v2634
    %v2636 = vrot.slane %v2634, 2
    %v2637 = vrot.slane %v1077, 7
    %v2638 = vsel %vm2037, %v2636, %v2637
    %v2639 = vrot.slane %v2637, 2
    %v2640 = vrot.slane %v1079, 7
    %v2641 = vsel %vm2037, %v2639, %v2640
    %v2642 = vrot.slane %v2640, 2
    %v2643 = vrot.slane %v1087, 7
    %v2644 = vsel %vm2037, %v2642, %v2643
    %v2645 = vrot.slane %v2643, 2
    %v2646 = vrot.slane %v1095, 7
    %v2647 = vsel %vm2037, %v2645, %v2646
    %v2648 = vrot.slane %v2646, 2
    %v2649 = vrot.slane %v1094, 7
    %v2650 = vsel %vm2037, %v2648, %v2649
    %v2651 = vrot.slane %v2649, 2
    %v2652 = vrot.slane %v2030, 7
    %v2653 = vsel %vm2037, %v2651, %v2652
    %v2654 = vcombine.low %v2041, %v2044
    %v2655 = vcombine.low %v2047, %v2050
    %v2657 = vunpack.c.l.s4 1983009808
    %v2658 = vunpack.c.0.s8 %v2657
    %v2659 = vlaneseq
    %v2660 = vshrl.u32 %v2659, 7
    %v2661 = vsub.s32 %v2658, %v2660
    %v2662 = vrot.slane %v2654, %v2661
    %v2664 = vunpack.c.l.s4 1983009808
    %v2665 = vunpack.c.0.s8 %v2664
    %v2666 = vlaneseq
    %v2667 = vshrl.u32 %v2666, 7
    %v2668 = vsub.s32 %v2665, %v2667
    %v2669 = vrot.slane %v2655, %v2668
    %v2670 = vcombine.low %v2662, %v2669
    %v2671 = vcombine.low %v2053, %v2056
    %v2672 = vcombine.low %v2059, %v2063
    %v2674 = vunpack.c.l.s4 1983009808
    %v2675 = vunpack.c.0.s8 %v2674
    %v2676 = vlaneseq
    %v2677 = vshrl.u32 %v2676, 7
    %v2678 = vsub.s32 %v2675, %v2677
    %v2679 = vrot.slane %v2671, %v2678
    %v2681 = vunpack.c.l.s4 1983009808
    %v2682 = vunpack.c.0.s8 %v2681
    %v2683 = vlaneseq
    %v2684 = vshrl.u32 %v2683, 7
    %v2685 = vsub.s32 %v2682, %v2684
    %v2686 = vrot.slane %v2672, %v2685
    %v2687 = vcombine.low %v2679, %v2686
    %v2688 = vcombine.low %v2066, %v2069
    %v2689 = vcombine.low %v2072, %v2075
    %v2691 = vunpack.c.l.s4 1983009808
    %v2692 = vunpack.c.0.s8 %v2691
    %v2693 = vlaneseq
    %v2694 = vshrl.u32 %v2693, 7
    %v2695 = vsub.s32 %v2692, %v2694
    %v2696 = vrot.slane %v2688, %v2695
    %v2698 = vunpack.c.l.s4 1983009808
    %v2699 = vunpack.c.0.s8 %v2698
    %v2700 = vlaneseq
    %v2701 = vshrl.u32 %v2700, 7
    %v2702 = vsub.s32 %v2699, %v2701
    %v2703 = vrot.slane %v2689, %v2702
    %v2704 = vcombine.low %v2696, %v2703
    %v2705 = vcombine.low %v2078, %v2081
    %v2706 = vcombine.low %v2085, %v2088
    %v2708 = vunpack.c.l.s4 1983009808
    %v2709 = vunpack.c.0.s8 %v2708
    %v2710 = vlaneseq
    %v2711 = vshrl.u32 %v2710, 7
    %v2712 = vsub.s32 %v2709, %v2711
    %v2713 = vrot.slane %v2705, %v2712
    %v2715 = vunpack.c.l.s4 1983009808
    %v2716 = vunpack.c.0.s8 %v2715
    %v2717 = vlaneseq
    %v2718 = vshrl.u32 %v2717, 7
    %v2719 = vsub.s32 %v2716, %v2718
    %v2720 = vrot.slane %v2706, %v2719
    %v2721 = vcombine.low %v2713, %v2720
    %v2722 = vcombine.low %v2091, %v2094
    %v2723 = vcombine.low %v2097, %v2100
    %v2725 = vunpack.c.l.s4 1983009808
    %v2726 = vunpack.c.0.s8 %v2725
    %v2727 = vlaneseq
    %v2728 = vshrl.u32 %v2727, 7
    %v2729 = vsub.s32 %v2726, %v2728
    %v2730 = vrot.slane %v2722, %v2729
    %v2732 = vunpack.c.l.s4 1983009808
    %v2733 = vunpack.c.0.s8 %v2732
    %v2734 = vlaneseq
    %v2735 = vshrl.u32 %v2734, 7
    %v2736 = vsub.s32 %v2733, %v2735
    %v2737 = vrot.slane %v2723, %v2736
    %v2738 = vcombine.low %v2730, %v2737
    %v2739 = vcombine.low %v2103, %v2107
    %v2740 = vcombine.low %v2110, %v2113
    %v2742 = vunpack.c.l.s4 1983009808
    %v2743 = vunpack.c.0.s8 %v2742
    %v2744 = vlaneseq
    %v2745 = vshrl.u32 %v2744, 7
    %v2746 = vsub.s32 %v2743, %v2745
    %v2747 = vrot.slane %v2739, %v2746
    %v2749 = vunpack.c.l.s4 1983009808
    %v2750 = vunpack.c.0.s8 %v2749
    %v2751 = vlaneseq
    %v2752 = vshrl.u32 %v2751, 7
    %v2753 = vsub.s32 %v2750, %v2752
    %v2754 = vrot.slane %v2740, %v2753
    %v2755 = vcombine.low %v2747, %v2754
    %v2756 = vcombine.low %v2116, %v2119
    %v2757 = vcombine.low %v2122, %v2125
    %v2759 = vunpack.c.l.s4 1983009808
    %v2760 = vunpack.c.0.s8 %v2759
    %v2761 = vlaneseq
    %v2762 = vshrl.u32 %v2761, 7
    %v2763 = vsub.s32 %v2760, %v2762
    %v2764 = vrot.slane %v2756, %v2763
    %v2766 = vunpack.c.l.s4 1983009808
    %v2767 = vunpack.c.0.s8 %v2766
    %v2768 = vlaneseq
    %v2769 = vshrl.u32 %v2768, 7
    %v2770 = vsub.s32 %v2767, %v2769
    %v2771 = vrot.slane %v2757, %v2770
    %v2772 = vcombine.low %v2764, %v2771
    %v2773 = vcombine.low %v2129, %v2132
    %v2774 = vcombine.low %v2135, %v2138
    %v2776 = vunpack.c.l.s4 1983009808
    %v2777 = vunpack.c.0.s8 %v2776
    %v2778 = vlaneseq
    %v2779 = vshrl.u32 %v2778, 7
    %v2780 = vsub.s32 %v2777, %v2779
    %v2781 = vrot.slane %v2773, %v2780
    %v2783 = vunpack.c.l.s4 1983009808
    %v2784 = vunpack.c.0.s8 %v2783
    %v2785 = vlaneseq
    %v2786 = vshrl.u32 %v2785, 7
    %v2787 = vsub.s32 %v2784, %v2786
    %v2788 = vrot.slane %v2774, %v2787
    %v2789 = vcombine.low %v2781, %v2788
    %v2790 = vcombine.low %v2141, %v2144
    %v2791 = vcombine.low %v2147, %v2151
    %v2793 = vunpack.c.l.s4 1983009808
    %v2794 = vunpack.c.0.s8 %v2793
    %v2795 = vlaneseq
    %v2796 = vshrl.u32 %v2795, 7
    %v2797 = vsub.s32 %v2794, %v2796
    %v2798 = vrot.slane %v2790, %v2797
    %v2800 = vunpack.c.l.s4 1983009808
    %v2801 = vunpack.c.0.s8 %v2800
    %v2802 = vlaneseq
    %v2803 = vshrl.u32 %v2802, 7
    %v2804 = vsub.s32 %v2801, %v2803
    %v2805 = vrot.slane %v2791, %v2804
    %v2806 = vcombine.low %v2798, %v2805
    %v2807 = vcombine.low %v2154, %v2157
    %v2808 = vcombine.low %v2160, %v2163
    %v2810 = vunpack.c.l.s4 1983009808
    %v2811 = vunpack.c.0.s8 %v2810
    %v2812 = vlaneseq
    %v2813 = vshrl.u32 %v2812, 7
    %v2814 = vsub.s32 %v2811, %v2813
    %v2815 = vrot.slane %v2807, %v2814
    %v2817 = vunpack.c.l.s4 1983009808
    %v2818 = vunpack.c.0.s8 %v2817
    %v2819 = vlaneseq
    %v2820 = vshrl.u32 %v2819, 7
    %v2821 = vsub.s32 %v2818, %v2820
    %v2822 = vrot.slane %v2808, %v2821
    %v2823 = vcombine.low %v2815, %v2822
    %v2824 = vcombine.low %v2166, %v2169
    %v2825 = vcombine.low %v2173, %v2176
    %v2827 = vunpack.c.l.s4 1983009808
    %v2828 = vunpack.c.0.s8 %v2827
    %v2829 = vlaneseq
    %v2830 = vshrl.u32 %v2829, 7
    %v2831 = vsub.s32 %v2828, %v2830
    %v2832 = vrot.slane %v2824, %v2831
    %v2834 = vunpack.c.l.s4 1983009808
    %v2835 = vunpack.c.0.s8 %v2834
    %v2836 = vlaneseq
    %v2837 = vshrl.u32 %v2836, 7
    %v2838 = vsub.s32 %v2835, %v2837
    %v2839 = vrot.slane %v2825, %v2838
    %v2840 = vcombine.low %v2832, %v2839
    %v2841 = vcombine.low %v2179, %v2182
    %v2842 = vcombine.low %v2185, %v2188
    %v2844 = vunpack.c.l.s4 1983009808
    %v2845 = vunpack.c.0.s8 %v2844
    %v2846 = vlaneseq
    %v2847 = vshrl.u32 %v2846, 7
    %v2848 = vsub.s32 %v2845, %v2847
    %v2849 = vrot.slane %v2841, %v2848
    %v2851 = vunpack.c.l.s4 1983009808
    %v2852 = vunpack.c.0.s8 %v2851
    %v2853 = vlaneseq
    %v2854 = vshrl.u32 %v2853, 7
    %v2855 = vsub.s32 %v2852, %v2854
    %v2856 = vrot.slane %v2842, %v2855
    %v2857 = vcombine.low %v2849, %v2856
    %v2858 = vcombine.low %v2191, %v2195
    %v2859 = vcombine.low %v2198, %v2201
    %v2861 = vunpack.c.l.s4 1983009808
    %v2862 = vunpack.c.0.s8 %v2861
    %v2863 = vlaneseq
    %v2864 = vshrl.u32 %v2863, 7
    %v2865 = vsub.s32 %v2862, %v2864
    %v2866 = vrot.slane %v2858, %v2865
    %v2868 = vunpack.c.l.s4 1983009808
    %v2869 = vunpack.c.0.s8 %v2868
    %v2870 = vlaneseq
    %v2871 = vshrl.u32 %v2870, 7
    %v2872 = vsub.s32 %v2869, %v2871
    %v2873 = vrot.slane %v2859, %v2872
    %v2874 = vcombine.low %v2866, %v2873
    %v2875 = vcombine.low %v2204, %v2207
    %v2876 = vcombine.low %v2210, %v2213
    %v2878 = vunpack.c.l.s4 1983009808
    %v2879 = vunpack.c.0.s8 %v2878
    %v2880 = vlaneseq
    %v2881 = vshrl.u32 %v2880, 7
    %v2882 = vsub.s32 %v2879, %v2881
    %v2883 = vrot.slane %v2875, %v2882
    %v2885 = vunpack.c.l.s4 1983009808
    %v2886 = vunpack.c.0.s8 %v2885
    %v2887 = vlaneseq
    %v2888 = vshrl.u32 %v2887, 7
    %v2889 = vsub.s32 %v2886, %v2888
    %v2890 = vrot.slane %v2876, %v2889
    %v2891 = vcombine.low %v2883, %v2890
    %v2892 = vcombine.low %v2217, %v2220
    %v2893 = vcombine.low %v2223, %v2226
    %v2895 = vunpack.c.l.s4 1983009808
    %v2896 = vunpack.c.0.s8 %v2895
    %v2897 = vlaneseq
    %v2898 = vshrl.u32 %v2897, 7
    %v2899 = vsub.s32 %v2896, %v2898
    %v2900 = vrot.slane %v2892, %v2899
    %v2902 = vunpack.c.l.s4 1983009808
    %v2903 = vunpack.c.0.s8 %v2902
    %v2904 = vlaneseq
    %v2905 = vshrl.u32 %v2904, 7
    %v2906 = vsub.s32 %v2903, %v2905
    %v2907 = vrot.slane %v2893, %v2906
    %v2908 = vcombine.low %v2900, %v2907
    %v2909 = vcombine.low %v2229, %v2232
    %v2910 = vcombine.low %v2235, %v2239
    %v2912 = vunpack.c.l.s4 1983009808
    %v2913 = vunpack.c.0.s8 %v2912
    %v2914 = vlaneseq
    %v2915 = vshrl.u32 %v2914, 7
    %v2916 = vsub.s32 %v2913, %v2915
    %v2917 = vrot.slane %v2909, %v2916
    %v2919 = vunpack.c.l.s4 1983009808
    %v2920 = vunpack.c.0.s8 %v2919
    %v2921 = vlaneseq
    %v2922 = vshrl.u32 %v2921, 7
    %v2923 = vsub.s32 %v2920, %v2922
    %v2924 = vrot.slane %v2910, %v2923
    %v2925 = vcombine.low %v2917, %v2924
    %v2926 = vcombine.low %v2242, %v2245
    %v2927 = vcombine.low %v2248, %v2251
    %v2929 = vunpack.c.l.s4 1983009808
    %v2930 = vunpack.c.0.s8 %v2929
    %v2931 = vlaneseq
    %v2932 = vshrl.u32 %v2931, 7
    %v2933 = vsub.s32 %v2930, %v2932
    %v2934 = vrot.slane %v2926, %v2933
    %v2936 = vunpack.c.l.s4 1983009808
    %v2937 = vunpack.c.0.s8 %v2936
    %v2938 = vlaneseq
    %v2939 = vshrl.u32 %v2938, 7
    %v2940 = vsub.s32 %v2937, %v2939
    %v2941 = vrot.slane %v2927, %v2940
    %v2942 = vcombine.low %v2934, %v2941
    %v2943 = vcombine.low %v2254, %v2257
    %v2944 = vcombine.low %v2261, %v2264
    %v2946 = vunpack.c.l.s4 1983009808
    %v2947 = vunpack.c.0.s8 %v2946
    %v2948 = vlaneseq
    %v2949 = vshrl.u32 %v2948, 7
    %v2950 = vsub.s32 %v2947, %v2949
    %v2951 = vrot.slane %v2943, %v2950
    %v2953 = vunpack.c.l.s4 1983009808
    %v2954 = vunpack.c.0.s8 %v2953
    %v2955 = vlaneseq
    %v2956 = vshrl.u32 %v2955, 7
    %v2957 = vsub.s32 %v2954, %v2956
    %v2958 = vrot.slane %v2944, %v2957
    %v2959 = vcombine.low %v2951, %v2958
    %v2960 = vcombine.low %v2267, %v2270
    %v2961 = vcombine.low %v2273, %v2276
    %v2963 = vunpack.c.l.s4 1983009808
    %v2964 = vunpack.c.0.s8 %v2963
    %v2965 = vlaneseq
    %v2966 = vshrl.u32 %v2965, 7
    %v2967 = vsub.s32 %v2964, %v2966
    %v2968 = vrot.slane %v2960, %v2967
    %v2970 = vunpack.c.l.s4 1983009808
    %v2971 = vunpack.c.0.s8 %v2970
    %v2972 = vlaneseq
    %v2973 = vshrl.u32 %v2972, 7
    %v2974 = vsub.s32 %v2971, %v2973
    %v2975 = vrot.slane %v2961, %v2974
    %v2976 = vcombine.low %v2968, %v2975
    %v2977 = vcombine.low %v2279, %v2283
    %v2978 = vcombine.low %v2286, %v2289
    %v2980 = vunpack.c.l.s4 1983009808
    %v2981 = vunpack.c.0.s8 %v2980
    %v2982 = vlaneseq
    %v2983 = vshrl.u32 %v2982, 7
    %v2984 = vsub.s32 %v2981, %v2983
    %v2985 = vrot.slane %v2977, %v2984
    %v2987 = vunpack.c.l.s4 1983009808
    %v2988 = vunpack.c.0.s8 %v2987
    %v2989 = vlaneseq
    %v2990 = vshrl.u32 %v2989, 7
    %v2991 = vsub.s32 %v2988, %v2990
    %v2992 = vrot.slane %v2978, %v2991
    %v2993 = vcombine.low %v2985, %v2992
    %v2994 = vcombine.low %v2292, %v2295
    %v2995 = vcombine.low %v2298, %v2301
    %v2997 = vunpack.c.l.s4 1983009808
    %v2998 = vunpack.c.0.s8 %v2997
    %v2999 = vlaneseq
    %v3000 = vshrl.u32 %v2999, 7
    %v3001 = vsub.s32 %v2998, %v3000
    %v3002 = vrot.slane %v2994, %v3001
    %v3004 = vunpack.c.l.s4 1983009808
    %v3005 = vunpack.c.0.s8 %v3004
    %v3006 = vlaneseq
    %v3007 = vshrl.u32 %v3006, 7
    %v3008 = vsub.s32 %v3005, %v3007
    %v3009 = vrot.slane %v2995, %v3008
    %v3010 = vcombine.low %v3002, %v3009
    %v3011 = vcombine.low %v2305, %v2308
    %v3012 = vcombine.low %v2311, %v2314
    %v3014 = vunpack.c.l.s4 1983009808
    %v3015 = vunpack.c.0.s8 %v3014
    %v3016 = vlaneseq
    %v3017 = vshrl.u32 %v3016, 7
    %v3018 = vsub.s32 %v3015, %v3017
    %v3019 = vrot.slane %v3011, %v3018
    %v3021 = vunpack.c.l.s4 1983009808
    %v3022 = vunpack.c.0.s8 %v3021
    %v3023 = vlaneseq
    %v3024 = vshrl.u32 %v3023, 7
    %v3025 = vsub.s32 %v3022, %v3024
    %v3026 = vrot.slane %v3012, %v3025
    %v3027 = vcombine.low %v3019, %v3026
    %v3028 = vcombine.low %v2317, %v2320
    %v3029 = vcombine.low %v2323, %v2327
    %v3031 = vunpack.c.l.s4 1983009808
    %v3032 = vunpack.c.0.s8 %v3031
    %v3033 = vlaneseq
    %v3034 = vshrl.u32 %v3033, 7
    %v3035 = vsub.s32 %v3032, %v3034
    %v3036 = vrot.slane %v3028, %v3035
    %v3038 = vunpack.c.l.s4 1983009808
    %v3039 = vunpack.c.0.s8 %v3038
    %v3040 = vlaneseq
    %v3041 = vshrl.u32 %v3040, 7
    %v3042 = vsub.s32 %v3039, %v3041
    %v3043 = vrot.slane %v3029, %v3042
    %v3044 = vcombine.low %v3036, %v3043
    %v3045 = vcombine.low %v2330, %v2333
    %v3046 = vcombine.low %v2336, %v2339
    %v3048 = vunpack.c.l.s4 1983009808
    %v3049 = vunpack.c.0.s8 %v3048
    %v3050 = vlaneseq
    %v3051 = vshrl.u32 %v3050, 7
    %v3052 = vsub.s32 %v3049, %v3051
    %v3053 = vrot.slane %v3045, %v3052
    %v3055 = vunpack.c.l.s4 1983009808
    %v3056 = vunpack.c.0.s8 %v3055
    %v3057 = vlaneseq
    %v3058 = vshrl.u32 %v3057, 7
    %v3059 = vsub.s32 %v3056, %v3058
    %v3060 = vrot.slane %v3046, %v3059
    %v3061 = vcombine.low %v3053, %v3060
    %v3062 = vcombine.low %v2342, %v2345
    %v3063 = vcombine.low %v2349, %v2352
    %v3065 = vunpack.c.l.s4 1983009808
    %v3066 = vunpack.c.0.s8 %v3065
    %v3067 = vlaneseq
    %v3068 = vshrl.u32 %v3067, 7
    %v3069 = vsub.s32 %v3066, %v3068
    %v3070 = vrot.slane %v3062, %v3069
    %v3072 = vunpack.c.l.s4 1983009808
    %v3073 = vunpack.c.0.s8 %v3072
    %v3074 = vlaneseq
    %v3075 = vshrl.u32 %v3074, 7
    %v3076 = vsub.s32 %v3073, %v3075
    %v3077 = vrot.slane %v3063, %v3076
    %v3078 = vcombine.low %v3070, %v3077
    %v3079 = vcombine.low %v2355, %v2358
    %v3080 = vcombine.low %v2361, %v2364
    %v3082 = vunpack.c.l.s4 1983009808
    %v3083 = vunpack.c.0.s8 %v3082
    %v3084 = vlaneseq
    %v3085 = vshrl.u32 %v3084, 7
    %v3086 = vsub.s32 %v3083, %v3085
    %v3087 = vrot.slane %v3079, %v3086
    %v3089 = vunpack.c.l.s4 1983009808
    %v3090 = vunpack.c.0.s8 %v3089
    %v3091 = vlaneseq
    %v3092 = vshrl.u32 %v3091, 7
    %v3093 = vsub.s32 %v3090, %v3092
    %v3094 = vrot.slane %v3080, %v3093
    %v3095 = vcombine.low %v3087, %v3094
    %v3096 = vcombine.low %v2367, %v2371
    %v3097 = vcombine.low %v2374, %v2377
    %v3099 = vunpack.c.l.s4 1983009808
    %v3100 = vunpack.c.0.s8 %v3099
    %v3101 = vlaneseq
    %v3102 = vshrl.u32 %v3101, 7
    %v3103 = vsub.s32 %v3100, %v3102
    %v3104 = vrot.slane %v3096, %v3103
    %v3106 = vunpack.c.l.s4 1983009808
    %v3107 = vunpack.c.0.s8 %v3106
    %v3108 = vlaneseq
    %v3109 = vshrl.u32 %v3108, 7
    %v3110 = vsub.s32 %v3107, %v3109
    %v3111 = vrot.slane %v3097, %v3110
    %v3112 = vcombine.low %v3104, %v3111
    %v3113 = vcombine.low %v2380, %v2383
    %v3114 = vcombine.low %v2386, %v2389
    %v3116 = vunpack.c.l.s4 1983009808
    %v3117 = vunpack.c.0.s8 %v3116
    %v3118 = vlaneseq
    %v3119 = vshrl.u32 %v3118, 7
    %v3120 = vsub.s32 %v3117, %v3119
    %v3121 = vrot.slane %v3113, %v3120
    %v3123 = vunpack.c.l.s4 1983009808
    %v3124 = vunpack.c.0.s8 %v3123
    %v3125 = vlaneseq
    %v3126 = vshrl.u32 %v3125, 7
    %v3127 = vsub.s32 %v3124, %v3126
    %v3128 = vrot.slane %v3114, %v3127
    %v3129 = vcombine.low %v3121, %v3128
    %v3130 = vcombine.low %v2393, %v2396
    %v3131 = vcombine.low %v2399, %v2402
    %v3133 = vunpack.c.l.s4 1983009808
    %v3134 = vunpack.c.0.s8 %v3133
    %v3135 = vlaneseq
    %v3136 = vshrl.u32 %v3135, 7
    %v3137 = vsub.s32 %v3134, %v3136
    %v3138 = vrot.slane %v3130, %v3137
    %v3140 = vunpack.c.l.s4 1983009808
    %v3141 = vunpack.c.0.s8 %v3140
    %v3142 = vlaneseq
    %v3143 = vshrl.u32 %v3142, 7
    %v3144 = vsub.s32 %v3141, %v3143
    %v3145 = vrot.slane %v3131, %v3144
    %v3146 = vcombine.low %v3138, %v3145
    %v3147 = vcombine.low %v2405, %v2408
    %v3148 = vcombine.low %v2411, %v2415
    %v3150 = vunpack.c.l.s4 1983009808
    %v3151 = vunpack.c.0.s8 %v3150
    %v3152 = vlaneseq
    %v3153 = vshrl.u32 %v3152, 7
    %v3154 = vsub.s32 %v3151, %v3153
    %v3155 = vrot.slane %v3147, %v3154
    %v3157 = vunpack.c.l.s4 1983009808
    %v3158 = vunpack.c.0.s8 %v3157
    %v3159 = vlaneseq
    %v3160 = vshrl.u32 %v3159, 7
    %v3161 = vsub.s32 %v3158, %v3160
    %v3162 = vrot.slane %v3148, %v3161
    %v3163 = vcombine.low %v3155, %v3162
    %v3164 = vcombine.low %v2418, %v2421
    %v3165 = vcombine.low %v2424, %v2427
    %v3167 = vunpack.c.l.s4 1983009808
    %v3168 = vunpack.c.0.s8 %v3167
    %v3169 = vlaneseq
    %v3170 = vshrl.u32 %v3169, 7
    %v3171 = vsub.s32 %v3168, %v3170
    %v3172 = vrot.slane %v3164, %v3171
    %v3174 = vunpack.c.l.s4 1983009808
    %v3175 = vunpack.c.0.s8 %v3174
    %v3176 = vlaneseq
    %v3177 = vshrl.u32 %v3176, 7
    %v3178 = vsub.s32 %v3175, %v3177
    %v3179 = vrot.slane %v3165, %v3178
    %v3180 = vcombine.low %v3172, %v3179
    %v3181 = vcombine.low %v2430, %v2433
    %v3182 = vcombine.low %v2437, %v2440
    %v3184 = vunpack.c.l.s4 1983009808
    %v3185 = vunpack.c.0.s8 %v3184
    %v3186 = vlaneseq
    %v3187 = vshrl.u32 %v3186, 7
    %v3188 = vsub.s32 %v3185, %v3187
    %v3189 = vrot.slane %v3181, %v3188
    %v3191 = vunpack.c.l.s4 1983009808
    %v3192 = vunpack.c.0.s8 %v3191
    %v3193 = vlaneseq
    %v3194 = vshrl.u32 %v3193, 7
    %v3195 = vsub.s32 %v3192, %v3194
    %v3196 = vrot.slane %v3182, %v3195
    %v3197 = vcombine.low %v3189, %v3196
    %v3198 = vcombine.low %v2443, %v2446
    %v3199 = vcombine.low %v2449, %v2452
    %v3201 = vunpack.c.l.s4 1983009808
    %v3202 = vunpack.c.0.s8 %v3201
    %v3203 = vlaneseq
    %v3204 = vshrl.u32 %v3203, 7
    %v3205 = vsub.s32 %v3202, %v3204
    %v3206 = vrot.slane %v3198, %v3205
    %v3208 = vunpack.c.l.s4 1983009808
    %v3209 = vunpack.c.0.s8 %v3208
    %v3210 = vlaneseq
    %v3211 = vshrl.u32 %v3210, 7
    %v3212 = vsub.s32 %v3209, %v3211
    %v3213 = vrot.slane %v3199, %v3212
    %v3214 = vcombine.low %v3206, %v3213
    %v3215 = vcombine.low %v2455, %v2459
    %v3216 = vcombine.low %v2462, %v2465
    %v3218 = vunpack.c.l.s4 1983009808
    %v3219 = vunpack.c.0.s8 %v3218
    %v3220 = vlaneseq
    %v3221 = vshrl.u32 %v3220, 7
    %v3222 = vsub.s32 %v3219, %v3221
    %v3223 = vrot.slane %v3215, %v3222
    %v3225 = vunpack.c.l.s4 1983009808
    %v3226 = vunpack.c.0.s8 %v3225
    %v3227 = vlaneseq
    %v3228 = vshrl.u32 %v3227, 7
    %v3229 = vsub.s32 %v3226, %v3228
    %v3230 = vrot.slane %v3216, %v3229
    %v3231 = vcombine.low %v3223, %v3230
    %v3232 = vcombine.low %v2468, %v2471
    %v3233 = vcombine.low %v2474, %v2477
    %v3235 = vunpack.c.l.s4 1983009808
    %v3236 = vunpack.c.0.s8 %v3235
    %v3237 = vlaneseq
    %v3238 = vshrl.u32 %v3237, 7
    %v3239 = vsub.s32 %v3236, %v3238
    %v3240 = vrot.slane %v3232, %v3239
    %v3242 = vunpack.c.l.s4 1983009808
    %v3243 = vunpack.c.0.s8 %v3242
    %v3244 = vlaneseq
    %v3245 = vshrl.u32 %v3244, 7
    %v3246 = vsub.s32 %v3243, %v3245
    %v3247 = vrot.slane %v3233, %v3246
    %v3248 = vcombine.low %v3240, %v3247
    %v3249 = vcombine.low %v2481, %v2484
    %v3250 = vcombine.low %v2487, %v2490
    %v3252 = vunpack.c.l.s4 1983009808
    %v3253 = vunpack.c.0.s8 %v3252
    %v3254 = vlaneseq
    %v3255 = vshrl.u32 %v3254, 7
    %v3256 = vsub.s32 %v3253, %v3255
    %v3257 = vrot.slane %v3249, %v3256
    %v3259 = vunpack.c.l.s4 1983009808
    %v3260 = vunpack.c.0.s8 %v3259
    %v3261 = vlaneseq
    %v3262 = vshrl.u32 %v3261, 7
    %v3263 = vsub.s32 %v3260, %v3262
    %v3264 = vrot.slane %v3250, %v3263
    %v3265 = vcombine.low %v3257, %v3264
    %v3266 = vcombine.low %v2493, %v2496
    %v3267 = vcombine.low %v2499, %v2503
    %v3269 = vunpack.c.l.s4 1983009808
    %v3270 = vunpack.c.0.s8 %v3269
    %v3271 = vlaneseq
    %v3272 = vshrl.u32 %v3271, 7
    %v3273 = vsub.s32 %v3270, %v3272
    %v3274 = vrot.slane %v3266, %v3273
    %v3276 = vunpack.c.l.s4 1983009808
    %v3277 = vunpack.c.0.s8 %v3276
    %v3278 = vlaneseq
    %v3279 = vshrl.u32 %v3278, 7
    %v3280 = vsub.s32 %v3277, %v3279
    %v3281 = vrot.slane %v3267, %v3280
    %v3282 = vcombine.low %v3274, %v3281
    %v3283 = vcombine.low %v2506, %v2509
    %v3284 = vcombine.low %v2512, %v2515
    %v3286 = vunpack.c.l.s4 1983009808
    %v3287 = vunpack.c.0.s8 %v3286
    %v3288 = vlaneseq
    %v3289 = vshrl.u32 %v3288, 7
    %v3290 = vsub.s32 %v3287, %v3289
    %v3291 = vrot.slane %v3283, %v3290
    %v3293 = vunpack.c.l.s4 1983009808
    %v3294 = vunpack.c.0.s8 %v3293
    %v3295 = vlaneseq
    %v3296 = vshrl.u32 %v3295, 7
    %v3297 = vsub.s32 %v3294, %v3296
    %v3298 = vrot.slane %v3284, %v3297
    %v3299 = vcombine.low %v3291, %v3298
    %v3300 = vcombine.low %v2518, %v2521
    %v3301 = vcombine.low %v2525, %v2528
    %v3303 = vunpack.c.l.s4 1983009808
    %v3304 = vunpack.c.0.s8 %v3303
    %v3305 = vlaneseq
    %v3306 = vshrl.u32 %v3305, 7
    %v3307 = vsub.s32 %v3304, %v3306
    %v3308 = vrot.slane %v3300, %v3307
    %v3310 = vunpack.c.l.s4 1983009808
    %v3311 = vunpack.c.0.s8 %v3310
    %v3312 = vlaneseq
    %v3313 = vshrl.u32 %v3312, 7
    %v3314 = vsub.s32 %v3311, %v3313
    %v3315 = vrot.slane %v3301, %v3314
    %v3316 = vcombine.low %v3308, %v3315
    %v3317 = vcombine.low %v2531, %v2534
    %v3318 = vcombine.low %v2537, %v2540
    %v3320 = vunpack.c.l.s4 1983009808
    %v3321 = vunpack.c.0.s8 %v3320
    %v3322 = vlaneseq
    %v3323 = vshrl.u32 %v3322, 7
    %v3324 = vsub.s32 %v3321, %v3323
    %v3325 = vrot.slane %v3317, %v3324
    %v3327 = vunpack.c.l.s4 1983009808
    %v3328 = vunpack.c.0.s8 %v3327
    %v3329 = vlaneseq
    %v3330 = vshrl.u32 %v3329, 7
    %v3331 = vsub.s32 %v3328, %v3330
    %v3332 = vrot.slane %v3318, %v3331
    %v3333 = vcombine.low %v3325, %v3332
    %v3334 = vcombine.low %v2543, %v2547
    %v3335 = vcombine.low %v2550, %v2553
    %v3337 = vunpack.c.l.s4 1983009808
    %v3338 = vunpack.c.0.s8 %v3337
    %v3339 = vlaneseq
    %v3340 = vshrl.u32 %v3339, 7
    %v3341 = vsub.s32 %v3338, %v3340
    %v3342 = vrot.slane %v3334, %v3341
    %v3344 = vunpack.c.l.s4 1983009808
    %v3345 = vunpack.c.0.s8 %v3344
    %v3346 = vlaneseq
    %v3347 = vshrl.u32 %v3346, 7
    %v3348 = vsub.s32 %v3345, %v3347
    %v3349 = vrot.slane %v3335, %v3348
    %v3350 = vcombine.low %v3342, %v3349
    %v3351 = vcombine.low %v2556, %v2559
    %v3352 = vcombine.low %v2562, %v2565
    %v3354 = vunpack.c.l.s4 1983009808
    %v3355 = vunpack.c.0.s8 %v3354
    %v3356 = vlaneseq
    %v3357 = vshrl.u32 %v3356, 7
    %v3358 = vsub.s32 %v3355, %v3357
    %v3359 = vrot.slane %v3351, %v3358
    %v3361 = vunpack.c.l.s4 1983009808
    %v3362 = vunpack.c.0.s8 %v3361
    %v3363 = vlaneseq
    %v3364 = vshrl.u32 %v3363, 7
    %v3365 = vsub.s32 %v3362, %v3364
    %v3366 = vrot.slane %v3352, %v3365
    %v3367 = vcombine.low %v3359, %v3366
    %v3368 = vcombine.low %v2569, %v2572
    %v3369 = vcombine.low %v2575, %v2578
    %v3371 = vunpack.c.l.s4 1983009808
    %v3372 = vunpack.c.0.s8 %v3371
    %v3373 = vlaneseq
    %v3374 = vshrl.u32 %v3373, 7
    %v3375 = vsub.s32 %v3372, %v3374
    %v3376 = vrot.slane %v3368, %v3375
    %v3378 = vunpack.c.l.s4 1983009808
    %v3379 = vunpack.c.0.s8 %v3378
    %v3380 = vlaneseq
    %v3381 = vshrl.u32 %v3380, 7
    %v3382 = vsub.s32 %v3379, %v3381
    %v3383 = vrot.slane %v3369, %v3382
    %v3384 = vcombine.low %v3376, %v3383
    %v3385 = vcombine.low %v2581, %v2584
    %v3386 = vcombine.low %v2587, %v2591
    %v3388 = vunpack.c.l.s4 1983009808
    %v3389 = vunpack.c.0.s8 %v3388
    %v3390 = vlaneseq
    %v3391 = vshrl.u32 %v3390, 7
    %v3392 = vsub.s32 %v3389, %v3391
    %v3393 = vrot.slane %v3385, %v3392
    %v3395 = vunpack.c.l.s4 1983009808
    %v3396 = vunpack.c.0.s8 %v3395
    %v3397 = vlaneseq
    %v3398 = vshrl.u32 %v3397, 7
    %v3399 = vsub.s32 %v3396, %v3398
    %v3400 = vrot.slane %v3386, %v3399
    %v3401 = vcombine.low %v3393, %v3400
    %v3402 = vcombine.low %v2594, %v2597
    %v3403 = vcombine.low %v2600, %v2603
    %v3405 = vunpack.c.l.s4 1983009808
    %v3406 = vunpack.c.0.s8 %v3405
    %v3407 = vlaneseq
    %v3408 = vshrl.u32 %v3407, 7
    %v3409 = vsub.s32 %v3406, %v3408
    %v3410 = vrot.slane %v3402, %v3409
    %v3412 = vunpack.c.l.s4 1983009808
    %v3413 = vunpack.c.0.s8 %v3412
    %v3414 = vlaneseq
    %v3415 = vshrl.u32 %v3414, 7
    %v3416 = vsub.s32 %v3413, %v3415
    %v3417 = vrot.slane %v3403, %v3416
    %v3418 = vcombine.low %v3410, %v3417
    %v3419 = vcombine.low %v2606, %v2609
    %v3420 = vcombine.low %v2613, %v2616
    %v3422 = vunpack.c.l.s4 1983009808
    %v3423 = vunpack.c.0.s8 %v3422
    %v3424 = vlaneseq
    %v3425 = vshrl.u32 %v3424, 7
    %v3426 = vsub.s32 %v3423, %v3425
    %v3427 = vrot.slane %v3419, %v3426
    %v3429 = vunpack.c.l.s4 1983009808
    %v3430 = vunpack.c.0.s8 %v3429
    %v3431 = vlaneseq
    %v3432 = vshrl.u32 %v3431, 7
    %v3433 = vsub.s32 %v3430, %v3432
    %v3434 = vrot.slane %v3420, %v3433
    %v3435 = vcombine.low %v3427, %v3434
    %v3436 = vcombine.low %v2619, %v2622
    %v3437 = vcombine.low %v2625, %v2628
    %v3439 = vunpack.c.l.s4 1983009808
    %v3440 = vunpack.c.0.s8 %v3439
    %v3441 = vlaneseq
    %v3442 = vshrl.u32 %v3441, 7
    %v3443 = vsub.s32 %v3440, %v3442
    %v3444 = vrot.slane %v3436, %v3443
    %v3446 = vunpack.c.l.s4 1983009808
    %v3447 = vunpack.c.0.s8 %v3446
    %v3448 = vlaneseq
    %v3449 = vshrl.u32 %v3448, 7
    %v3450 = vsub.s32 %v3447, %v3449
    %v3451 = vrot.slane %v3437, %v3450
    %v3452 = vcombine.low %v3444, %v3451
    %v3453 = vcombine.low %v2631, %v2635
    %v3454 = vcombine.low %v2638, %v2641
    %v3456 = vunpack.c.l.s4 1983009808
    %v3457 = vunpack.c.0.s8 %v3456
    %v3458 = vlaneseq
    %v3459 = vshrl.u32 %v3458, 7
    %v3460 = vsub.s32 %v3457, %v3459
    %v3461 = vrot.slane %v3453, %v3460
    %v3463 = vunpack.c.l.s4 1983009808
    %v3464 = vunpack.c.0.s8 %v3463
    %v3465 = vlaneseq
    %v3466 = vshrl.u32 %v3465, 7
    %v3467 = vsub.s32 %v3464, %v3466
    %v3468 = vrot.slane %v3454, %v3467
    %v3469 = vcombine.low %v3461, %v3468
    %v3470 = vcombine.low %v2644, %v2647
    %v3471 = vcombine.low %v2650, %v2653
    %v3473 = vunpack.c.l.s4 1983009808
    %v3474 = vunpack.c.0.s8 %v3473
    %v3475 = vlaneseq
    %v3476 = vshrl.u32 %v3475, 7
    %v3477 = vsub.s32 %v3474, %v3476
    %v3478 = vrot.slane %v3470, %v3477
    %v3480 = vunpack.c.l.s4 1983009808
    %v3481 = vunpack.c.0.s8 %v3480
    %v3482 = vlaneseq
    %v3483 = vshrl.u32 %v3482, 7
    %v3484 = vsub.s32 %v3481, %v3483
    %v3485 = vrot.slane %v3471, %v3484
    %v3486 = vcombine.low %v3478, %v3485
    %v3536 = vpack.c.bf16 %v2687, %v2670
    %v3537 = vpack.c.bf16 %v2721, %v2704
    %v3538 = vpack.c.bf16 %v2755, %v2738
    %v3539 = vpack.c.bf16 %v2789, %v2772
    %v3540 = vpack.c.bf16 %v2823, %v2806
    %v3541 = vpack.c.bf16 %v2857, %v2840
    %v3542 = vpack.c.bf16 %v2891, %v2874
    %v3543 = vpack.c.bf16 %v2925, %v2908
    %v3544 = vpack.c.bf16 %v2959, %v2942
    %v3545 = vpack.c.bf16 %v2993, %v2976
    %v3546 = vpack.c.bf16 %v3027, %v3010
    %v3547 = vpack.c.bf16 %v3061, %v3044
    %v3548 = vpack.c.bf16 %v3095, %v3078
    %v3549 = vpack.c.bf16 %v3129, %v3112
    %v3550 = vpack.c.bf16 %v3163, %v3146
    %v3551 = vpack.c.bf16 %v3197, %v3180
    %v3552 = vpack.c.bf16 %v3231, %v3214
    %v3553 = vpack.c.bf16 %v3265, %v3248
    %v3554 = vpack.c.bf16 %v3299, %v3282
    %v3555 = vpack.c.bf16 %v3333, %v3316
    %v3556 = vpack.c.bf16 %v3367, %v3350
    %v3557 = vpack.c.bf16 %v3401, %v3384
    %v3558 = vpack.c.bf16 %v3435, %v3418
    %v3559 = vpack.c.bf16 %v3469, %v3452
    %v3560 = vpack.c.bf16 %v3486, %v3486
    %vm3561 = vcmask 23552
    %v3563 = vsel %vm3561, %v3536, 0
    %v3566 = vsel %vm3561, %v3537, 0
    %v3569 = vsel %vm3561, %v3538, 0
    %v3572 = vsel %vm3561, %v3539, 0
    %v3575 = vsel %vm3561, %v3540, 0
    %v3578 = vsel %vm3561, %v3541, 0
    %v3581 = vsel %vm3561, %v3542, 0
    %v3584 = vsel %vm3561, %v3543, 0
    %v3587 = vsel %vm3561, %v3544, 0
    %v3590 = vsel %vm3561, %v3545, 0
    %v3593 = vsel %vm3561, %v3546, 0
    %v3596 = vsel %vm3561, %v3547, 0
    %v3599 = vsel %vm3561, %v3548, 0
    %v3602 = vsel %vm3561, %v3549, 0
    %v3605 = vsel %vm3561, %v3550, 0
    %v3608 = vsel %vm3561, %v3551, 0
    %v3611 = vsel %vm3561, %v3552, 0
    %v3614 = vsel %vm3561, %v3553, 0
    %v3617 = vsel %vm3561, %v3554, 0
    %v3620 = vsel %vm3561, %v3555, 0
    %v3623 = vsel %vm3561, %v3556, 0
    %v3626 = vsel %vm3561, %v3557, 0
    %v3629 = vsel %vm3561, %v3558, 0
    %v3632 = vsel %vm3561, %v3559, 0
    %v3635 = vsel %vm3561, %v3560, 0
    %vm3637 = vcmask 1041408
    %v3638 = vsel %vm2031, 4294967295, 65535
    %v3639 = vsel %vm3637, %v3638, 0
    %v3641 = vand.u32 %v108, %v3639
    %3643 = vmatprep.subr.bf16.mxu0 0
    %3644 = vmatpush1.bf16.msra.mxu0 %v3641
    %3645 = vmatprep.subr.bf16.mxu0 0
    %3646 = vmatpush1.bf16.msra.mxu0 0
    %3647 = vmatprep.subr.bf16.mxu0 0
    %3648 = vmatpush1.bf16.msra.mxu0 0
    %3649 = vmatprep.subr.bf16.mxu0 0
    %3650 = vmatpush1.bf16.msra.mxu0 0
    %3651 = vmatprep.subr.bf16.mxu0 0
    %3652 = vmatpush1.bf16.msra.mxu0 0
    %3653 = vmatprep.subr.bf16.mxu0 0
    %3654 = vmatpush1.bf16.msra.mxu0 0
    %3655 = vmatprep.subr.bf16.mxu0 0
    %3656 = vmatpush1.bf16.msra.mxu0 0
    %3657 = vmatprep.subr.bf16.mxu0 0
    %3658 = vmatpush1.bf16.msra.mxu0 0
    %3659 = vmatprep.subr.bf16.mxu0 0
    %3660 = vmatpush1.bf16.msra.mxu0 0
    %3661 = vmatprep.subr.bf16.mxu0 0
    %3662 = vmatpush1.bf16.msra.mxu0 0
    %3663 = vmatprep.subr.bf16.mxu0 0
    %3664 = vmatpush1.bf16.msra.mxu0 0
    %3665 = vmatprep.subr.bf16.mxu0 0
    %3666 = vmatpush1.bf16.msra.mxu0 0
    %3667 = vmatprep.subr.bf16.mxu0 0
    %3668 = vmatpush1.bf16.msra.mxu0 0
    %3669 = vmatprep.subr.bf16.mxu0 0
    %3670 = vmatpush1.bf16.msra.mxu0 0
    %3671 = vmatprep.subr.bf16.mxu0 0
    %3672 = vmatpush1.bf16.msra.mxu0 0
    %3673 = vmatprep.subr.bf16.mxu0 0
    %3674 = vmatpush1.bf16.msra.mxu0 0
    %3675 = vmatprep.mubr.bf16.mxu0 0
    %3676 = vmatmul.mubr.bf16.gmra.mrb[0].mxu0 %v3563
    %v3677 = vpop.f32.mrb[0].mxu0
    %v3678 = vadd.f32 0.0, %v3677
    %v3679 = vpop.f32.mrb[0].mxu0
    %v3680 = vpop.f32.mrb[0].mxu0
    %v3681 = vadd.f32 0.0, %v3680
    %v3682 = vpop.f32.mrb[0].mxu0
    %3683 = vmatprep.mubr.bf16.mxu0 0
    %3684 = vmatmul.mubr.bf16.gmra.mrb[0].mxu0 %v3566
    %v3685 = vpop.f32.mrb[0].mxu0
    %v3686 = vadd.f32 0.0, %v3685
    %v3687 = vpop.f32.mrb[0].mxu0
    %v3688 = vpop.f32.mrb[0].mxu0
    %v3689 = vadd.f32 0.0, %v3688
    %v3690 = vpop.f32.mrb[0].mxu0
    %3691 = vmatprep.mubr.bf16.mxu0 0
    %3692 = vmatmul.mubr.bf16.gmra.mrb[0].mxu0 %v3569
    %v3693 = vpop.f32.mrb[0].mxu0
    %v3694 = vadd.f32 0.0, %v3693
    %v3695 = vpop.f32.mrb[0].mxu0
    %v3696 = vpop.f32.mrb[0].mxu0
    %v3697 = vadd.f32 0.0, %v3696
    %v3698 = vpop.f32.mrb[0].mxu0
    %3699 = vmatprep.mubr.bf16.mxu0 0
    %3700 = vmatmul.mubr.bf16.gmra.mrb[0].mxu0 %v3572
    %v3701 = vpop.f32.mrb[0].mxu0
    %v3702 = vadd.f32 0.0, %v3701
    %v3703 = vpop.f32.mrb[0].mxu0
    %v3704 = vpop.f32.mrb[0].mxu0
    %v3705 = vadd.f32 0.0, %v3704
    %v3706 = vpop.f32.mrb[0].mxu0
    %3707 = vmatprep.mubr.bf16.mxu0 0
    %3708 = vmatmul.mubr.bf16.gmra.mrb[0].mxu0 %v3575
    %v3709 = vpop.f32.mrb[0].mxu0
    %v3710 = vadd.f32 0.0, %v3709
    %v3711 = vpop.f32.mrb[0].mxu0
    %v3712 = vpop.f32.mrb[0].mxu0
    %v3713 = vadd.f32 0.0, %v3712
    %v3714 = vpop.f32.mrb[0].mxu0
    %3715 = vmatprep.mubr.bf16.mxu0 0
    %3716 = vmatmul.mubr.bf16.gmra.mrb[0].mxu0 %v3578
    %v3717 = vpop.f32.mrb[0].mxu0
    %v3718 = vadd.f32 0.0, %v3717
    %v3719 = vpop.f32.mrb[0].mxu0
    %v3720 = vpop.f32.mrb[0].mxu0
    %v3721 = vadd.f32 0.0, %v3720
    %v3722 = vpop.f32.mrb[0].mxu0
    %3723 = vmatprep.mubr.bf16.mxu0 0
    %3724 = vmatmul.mubr.bf16.gmra.mrb[0].mxu0 %v3581
    %v3725 = vpop.f32.mrb[0].mxu0
    %v3726 = vadd.f32 0.0, %v3725
    %v3727 = vpop.f32.mrb[0].mxu0
    %v3728 = vpop.f32.mrb[0].mxu0
    %v3729 = vadd.f32 0.0, %v3728
    %v3730 = vpop.f32.mrb[0].mxu0
    %3731 = vmatprep.mubr.bf16.mxu0 0
    %3732 = vmatmul.mubr.bf16.gmra.mrb[0].mxu0 %v3584
    %v3733 = vpop.f32.mrb[0].mxu0
    %v3734 = vadd.f32 0.0, %v3733
    %v3735 = vpop.f32.mrb[0].mxu0
    %v3736 = vpop.f32.mrb[0].mxu0
    %v3737 = vadd.f32 0.0, %v3736
    %v3738 = vpop.f32.mrb[0].mxu0
    %3739 = vmatprep.mubr.bf16.mxu0 0
    %3740 = vmatmul.mubr.bf16.gmra.mrb[0].mxu0 %v3587
    %v3741 = vpop.f32.mrb[0].mxu0
    %v3742 = vadd.f32 0.0, %v3741
    %v3743 = vpop.f32.mrb[0].mxu0
    %v3744 = vpop.f32.mrb[0].mxu0
    %v3745 = vadd.f32 0.0, %v3744
    %v3746 = vpop.f32.mrb[0].mxu0
    %3747 = vmatprep.mubr.bf16.mxu0 0
    %3748 = vmatmul.mubr.bf16.gmra.mrb[0].mxu0 %v3590
    %v3749 = vpop.f32.mrb[0].mxu0
    %v3750 = vadd.f32 0.0, %v3749
    %v3751 = vpop.f32.mrb[0].mxu0
    %v3752 = vpop.f32.mrb[0].mxu0
    %v3753 = vadd.f32 0.0, %v3752
    %v3754 = vpop.f32.mrb[0].mxu0
    %3755 = vmatprep.mubr.bf16.mxu0 0
    %3756 = vmatmul.mubr.bf16.gmra.mrb[0].mxu0 %v3593
    %v3757 = vpop.f32.mrb[0].mxu0
    %v3758 = vadd.f32 0.0, %v3757
    %v3759 = vpop.f32.mrb[0].mxu0
    %v3760 = vpop.f32.mrb[0].mxu0
    %v3761 = vadd.f32 0.0, %v3760
    %v3762 = vpop.f32.mrb[0].mxu0
    %3763 = vmatprep.mubr.bf16.mxu0 0
    %3764 = vmatmul.mubr.bf16.gmra.mrb[0].mxu0 %v3596
    %v3765 = vpop.f32.mrb[0].mxu0
    %v3766 = vadd.f32 0.0, %v3765
    %v3767 = vpop.f32.mrb[0].mxu0
    %v3768 = vpop.f32.mrb[0].mxu0
    %v3769 = vadd.f32 0.0, %v3768
    %v3770 = vpop.f32.mrb[0].mxu0
    %3771 = vmatprep.mubr.bf16.mxu0 0
    %3772 = vmatmul.mubr.bf16.gmra.mrb[0].mxu0 %v3599
    %v3773 = vpop.f32.mrb[0].mxu0
    %v3774 = vadd.f32 0.0, %v3773
    %v3775 = vpop.f32.mrb[0].mxu0
    %v3776 = vpop.f32.mrb[0].mxu0
    %v3777 = vadd.f32 0.0, %v3776
    %v3778 = vpop.f32.mrb[0].mxu0
    %3779 = vmatprep.mubr.bf16.mxu0 0
    %3780 = vmatmul.mubr.bf16.gmra.mrb[0].mxu0 %v3602
    %v3781 = vpop.f32.mrb[0].mxu0
    %v3782 = vadd.f32 0.0, %v3781
    %v3783 = vpop.f32.mrb[0].mxu0
    %v3784 = vpop.f32.mrb[0].mxu0
    %v3785 = vadd.f32 0.0, %v3784
    %v3786 = vpop.f32.mrb[0].mxu0
    %3787 = vmatprep.mubr.bf16.mxu0 0
    %3788 = vmatmul.mubr.bf16.gmra.mrb[0].mxu0 %v3605
    %v3789 = vpop.f32.mrb[0].mxu0
    %v3790 = vadd.f32 0.0, %v3789
    %v3791 = vpop.f32.mrb[0].mxu0
    %v3792 = vpop.f32.mrb[0].mxu0
    %v3793 = vadd.f32 0.0, %v3792
    %v3794 = vpop.f32.mrb[0].mxu0
    %3795 = vmatprep.mubr.bf16.mxu0 0
    %3796 = vmatmul.mubr.bf16.gmra.mrb[0].mxu0 %v3608
    %v3797 = vpop.f32.mrb[0].mxu0
    %v3798 = vadd.f32 0.0, %v3797
    %v3799 = vpop.f32.mrb[0].mxu0
    %v3800 = vpop.f32.mrb[0].mxu0
    %v3801 = vadd.f32 0.0, %v3800
    %v3802 = vpop.f32.mrb[0].mxu0
    %3803 = vmatprep.mubr.bf16.mxu0 0
    %3804 = vmatmul.mubr.bf16.gmra.mrb[0].mxu0 %v3611
    %v3805 = vpop.f32.mrb[0].mxu0
    %v3806 = vadd.f32 0.0, %v3805
    %v3807 = vpop.f32.mrb[0].mxu0
    %v3808 = vpop.f32.mrb[0].mxu0
    %v3809 = vadd.f32 0.0, %v3808
    %v3810 = vpop.f32.mrb[0].mxu0
    %3811 = vmatprep.mubr.bf16.mxu0 0
    %3812 = vmatmul.mubr.bf16.gmra.mrb[0].mxu0 %v3614
    %v3813 = vpop.f32.mrb[0].mxu0
    %v3814 = vadd.f32 0.0, %v3813
    %v3815 = vpop.f32.mrb[0].mxu0
    %v3816 = vpop.f32.mrb[0].mxu0
    %v3817 = vadd.f32 0.0, %v3816
    %v3818 = vpop.f32.mrb[0].mxu0
    %3819 = vmatprep.mubr.bf16.mxu0 0
    %3820 = vmatmul.mubr.bf16.gmra.mrb[0].mxu0 %v3617
    %v3821 = vpop.f32.mrb[0].mxu0
    %v3822 = vadd.f32 0.0, %v3821
    %v3823 = vpop.f32.mrb[0].mxu0
    %v3824 = vpop.f32.mrb[0].mxu0
    %v3825 = vadd.f32 0.0, %v3824
    %v3826 = vpop.f32.mrb[0].mxu0
    %3827 = vmatprep.mubr.bf16.mxu0 0
    %3828 = vmatmul.mubr.bf16.gmra.mrb[0].mxu0 %v3620
    %v3829 = vpop.f32.mrb[0].mxu0
    %v3830 = vadd.f32 0.0, %v3829
    %v3831 = vpop.f32.mrb[0].mxu0
    %v3832 = vpop.f32.mrb[0].mxu0
    %v3833 = vadd.f32 0.0, %v3832
    %v3834 = vpop.f32.mrb[0].mxu0
    %3835 = vmatprep.mubr.bf16.mxu0 0
    %3836 = vmatmul.mubr.bf16.gmra.mrb[0].mxu0 %v3623
    %v3837 = vpop.f32.mrb[0].mxu0
    %v3838 = vadd.f32 0.0, %v3837
    %v3839 = vpop.f32.mrb[0].mxu0
    %v3840 = vpop.f32.mrb[0].mxu0
    %v3841 = vadd.f32 0.0, %v3840
    %v3842 = vpop.f32.mrb[0].mxu0
    %3843 = vmatprep.mubr.bf16.mxu0 0
    %3844 = vmatmul.mubr.bf16.gmra.mrb[0].mxu0 %v3626
    %v3845 = vpop.f32.mrb[0].mxu0
    %v3846 = vadd.f32 0.0, %v3845
    %v3847 = vpop.f32.mrb[0].mxu0
    %v3848 = vpop.f32.mrb[0].mxu0
    %v3849 = vadd.f32 0.0, %v3848
    %v3850 = vpop.f32.mrb[0].mxu0
    %3851 = vmatprep.mubr.bf16.mxu0 0
    %3852 = vmatmul.mubr.bf16.gmra.mrb[0].mxu0 %v3629
    %v3853 = vpop.f32.mrb[0].mxu0
    %v3854 = vadd.f32 0.0, %v3853
    %v3855 = vpop.f32.mrb[0].mxu0
    %v3856 = vpop.f32.mrb[0].mxu0
    %v3857 = vadd.f32 0.0, %v3856
    %v3858 = vpop.f32.mrb[0].mxu0
    %3859 = vmatprep.mubr.bf16.mxu0 0
    %3860 = vmatmul.mubr.bf16.gmra.mrb[0].mxu0 %v3632
    %v3861 = vpop.f32.mrb[0].mxu0
    %v3862 = vadd.f32 0.0, %v3861
    %v3863 = vpop.f32.mrb[0].mxu0
    %v3864 = vpop.f32.mrb[0].mxu0
    %v3865 = vadd.f32 0.0, %v3864
    %v3866 = vpop.f32.mrb[0].mxu0
    %3867 = vmatprep.mubr.bf16.mxu0 0
    %3868 = vmatmul.mubr.bf16.gmra.mrb[0].mxu0 %v3635
    %v3869 = vpop.f32.mrb[0].mxu0
    %v3870 = vadd.f32 0.0, %v3869
    %v3871 = vpop.f32.mrb[0].mxu0
    %v3872 = vpop.f32.mrb[0].mxu0
    %v3873 = vpop.f32.mrb[0].mxu0
    %3874 = vdwg.mxu0
    %v3876 = vsel %vm3561, %v1978, 0
    %v3879 = vsel %vm3561, %v1979, 0
    %v3882 = vsel %vm3561, %v1980, 0
    %v3885 = vsel %vm3561, %v1981, 0
    %v3888 = vsel %vm3561, %v1982, 0
    %v3891 = vsel %vm3561, %v1983, 0
    %v3894 = vsel %vm3561, %v1984, 0
    %v3897 = vsel %vm3561, %v1985, 0
    %v3900 = vsel %vm3561, %v1986, 0
    %v3903 = vsel %vm3561, %v1987, 0
    %v3906 = vsel %vm3561, %v1988, 0
    %v3909 = vsel %vm3561, %v1989, 0
    %v3912 = vsel %vm3561, %v1990, 0
    %v3915 = vsel %vm3561, %v1991, 0
    %v3918 = vsel %vm3561, %v1992, 0
    %v3921 = vsel %vm3561, %v1993, 0
    %v3924 = vsel %vm3561, %v1994, 0
    %v3927 = vsel %vm3561, %v1995, 0
    %v3930 = vsel %vm3561, %v1996, 0
    %v3933 = vsel %vm3561, %v1997, 0
    %v3936 = vsel %vm3561, %v1998, 0
    %v3939 = vsel %vm3561, %v1999, 0
    %v3942 = vsel %vm3561, %v2000, 0
    %v3945 = vsel %vm3561, %v2001, 0
    %v3948 = vsel %vm3561, %v2002, 0
    %v3951 = vand.u32 %v107, %v3639
    %3953 = vmatprep.subr.bf16.mxu0 0
    %3954 = vmatpush1.bf16.msra.mxu0 %v3951
    %3955 = vmatprep.subr.bf16.mxu0 0
    %3956 = vmatpush1.bf16.msra.mxu0 0
    %3957 = vmatprep.subr.bf16.mxu0 0
    %3958 = vmatpush1.bf16.msra.mxu0 0
    %3959 = vmatprep.subr.bf16.mxu0 0
    %3960 = vmatpush1.bf16.msra.mxu0 0
    %3961 = vmatprep.subr.bf16.mxu0 0
    %3962 = vmatpush1.bf16.msra.mxu0 0
    %3963 = vmatprep.subr.bf16.mxu0 0
    %3964 = vmatpush1.bf16.msra.mxu0 0
    %3965 = vmatprep.subr.bf16.mxu0 0
    %3966 = vmatpush1.bf16.msra.mxu0 0
    %3967 = vmatprep.subr.bf16.mxu0 0
    %3968 = vmatpush1.bf16.msra.mxu0 0
    %3969 = vmatprep.subr.bf16.mxu0 0
    %3970 = vmatpush1.bf16.msra.mxu0 0
    %3971 = vmatprep.subr.bf16.mxu0 0
    %3972 = vmatpush1.bf16.msra.mxu0 0
    %3973 = vmatprep.subr.bf16.mxu0 0
    %3974 = vmatpush1.bf16.msra.mxu0 0
    %3975 = vmatprep.subr.bf16.mxu0 0
    %3976 = vmatpush1.bf16.msra.mxu0 0
    %3977 = vmatprep.subr.bf16.mxu0 0
    %3978 = vmatpush1.bf16.msra.mxu0 0
    %3979 = vmatprep.subr.bf16.mxu0 0
    %3980 = vmatpush1.bf16.msra.mxu0 0
    %3981 = vmatprep.subr.bf16.mxu0 0
    %3982 = vmatpush1.bf16.msra.mxu0 0
    %3983 = vmatprep.subr.bf16.mxu0 0
    %3984 = vmatpush1.bf16.msra.mxu0 0
    %3985 = vmatprep.mubr.bf16.mxu0 0
    %3986 = vmatmul.mubr.bf16.gmra.mrb[0].mxu0 %v3876
    %v3987 = vpop.f32.mrb[0].mxu0
    %v3988 = vadd.f32 %v3678, %v3987
    %v3989 = vpop.f32.mrb[0].mxu0
    %v3990 = vpop.f32.mrb[0].mxu0
    %v3991 = vadd.f32 %v3681, %v3990
    %v3992 = vpop.f32.mrb[0].mxu0
    %3993 = vmatprep.mubr.bf16.mxu0 0
    %3994 = vmatmul.mubr.bf16.gmra.mrb[0].mxu0 %v3879
    %v3995 = vpop.f32.mrb[0].mxu0
    %v3996 = vadd.f32 %v3686, %v3995
    %v3997 = vpop.f32.mrb[0].mxu0
    %v3998 = vpop.f32.mrb[0].mxu0
    %v3999 = vadd.f32 %v3689, %v3998
    %v4000 = vpop.f32.mrb[0].mxu0
    %4001 = vmatprep.mubr.bf16.mxu0 0
    %4002 = vmatmul.mubr.bf16.gmra.mrb[0].mxu0 %v3882
    %v4003 = vpop.f32.mrb[0].mxu0
    %v4004 = vadd.f32 %v3694, %v4003
    %v4005 = vpop.f32.mrb[0].mxu0
    %v4006 = vpop.f32.mrb[0].mxu0
    %v4007 = vadd.f32 %v3697, %v4006
    %v4008 = vpop.f32.mrb[0].mxu0
    %4009 = vmatprep.mubr.bf16.mxu0 0
    %4010 = vmatmul.mubr.bf16.gmra.mrb[0].mxu0 %v3885
    %v4011 = vpop.f32.mrb[0].mxu0
    %v4012 = vadd.f32 %v3702, %v4011
    %v4013 = vpop.f32.mrb[0].mxu0
    %v4014 = vpop.f32.mrb[0].mxu0
    %v4015 = vadd.f32 %v3705, %v4014
    %v4016 = vpop.f32.mrb[0].mxu0
    %4017 = vmatprep.mubr.bf16.mxu0 0
    %4018 = vmatmul.mubr.bf16.gmra.mrb[0].mxu0 %v3888
    %v4019 = vpop.f32.mrb[0].mxu0
    %v4020 = vadd.f32 %v3710, %v4019
    %v4021 = vpop.f32.mrb[0].mxu0
    %v4022 = vpop.f32.mrb[0].mxu0
    %v4023 = vadd.f32 %v3713, %v4022
    %v4024 = vpop.f32.mrb[0].mxu0
    %4025 = vmatprep.mubr.bf16.mxu0 0
    %4026 = vmatmul.mubr.bf16.gmra.mrb[0].mxu0 %v3891
    %v4027 = vpop.f32.mrb[0].mxu0
    %v4028 = vadd.f32 %v3718, %v4027
    %v4029 = vpop.f32.mrb[0].mxu0
    %v4030 = vpop.f32.mrb[0].mxu0
    %v4031 = vadd.f32 %v3721, %v4030
    %v4032 = vpop.f32.mrb[0].mxu0
    %4033 = vmatprep.mubr.bf16.mxu0 0
    %4034 = vmatmul.mubr.bf16.gmra.mrb[0].mxu0 %v3894
    %v4035 = vpop.f32.mrb[0].mxu0
    %v4036 = vadd.f32 %v3726, %v4035
    %v4037 = vpop.f32.mrb[0].mxu0
    %v4038 = vpop.f32.mrb[0].mxu0
    %v4039 = vadd.f32 %v3729, %v4038
    %v4040 = vpop.f32.mrb[0].mxu0
    %4041 = vmatprep.mubr.bf16.mxu0 0
    %4042 = vmatmul.mubr.bf16.gmra.mrb[0].mxu0 %v3897
    %v4043 = vpop.f32.mrb[0].mxu0
    %v4044 = vadd.f32 %v3734, %v4043
    %v4045 = vpop.f32.mrb[0].mxu0
    %v4046 = vpop.f32.mrb[0].mxu0
    %v4047 = vadd.f32 %v3737, %v4046
    %v4048 = vpop.f32.mrb[0].mxu0
    %4049 = vmatprep.mubr.bf16.mxu0 0
    %4050 = vmatmul.mubr.bf16.gmra.mrb[0].mxu0 %v3900
    %v4051 = vpop.f32.mrb[0].mxu0
    %v4052 = vadd.f32 %v3742, %v4051
    %v4053 = vpop.f32.mrb[0].mxu0
    %v4054 = vpop.f32.mrb[0].mxu0
    %v4055 = vadd.f32 %v3745, %v4054
    %v4056 = vpop.f32.mrb[0].mxu0
    %4057 = vmatprep.mubr.bf16.mxu0 0
    %4058 = vmatmul.mubr.bf16.gmra.mrb[0].mxu0 %v3903
    %v4059 = vpop.f32.mrb[0].mxu0
    %v4060 = vadd.f32 %v3750, %v4059
    %v4061 = vpop.f32.mrb[0].mxu0
    %v4062 = vpop.f32.mrb[0].mxu0
    %v4063 = vadd.f32 %v3753, %v4062
    %v4064 = vpop.f32.mrb[0].mxu0
    %4065 = vmatprep.mubr.bf16.mxu0 0
    %4066 = vmatmul.mubr.bf16.gmra.mrb[0].mxu0 %v3906
    %v4067 = vpop.f32.mrb[0].mxu0
    %v4068 = vadd.f32 %v3758, %v4067
    %v4069 = vpop.f32.mrb[0].mxu0
    %v4070 = vpop.f32.mrb[0].mxu0
    %v4071 = vadd.f32 %v3761, %v4070
    %v4072 = vpop.f32.mrb[0].mxu0
    %4073 = vmatprep.mubr.bf16.mxu0 0
    %4074 = vmatmul.mubr.bf16.gmra.mrb[0].mxu0 %v3909
    %v4075 = vpop.f32.mrb[0].mxu0
    %v4076 = vadd.f32 %v3766, %v4075
    %v4077 = vpop.f32.mrb[0].mxu0
    %v4078 = vpop.f32.mrb[0].mxu0
    %v4079 = vadd.f32 %v3769, %v4078
    %v4080 = vpop.f32.mrb[0].mxu0
    %4081 = vmatprep.mubr.bf16.mxu0 0
    %4082 = vmatmul.mubr.bf16.gmra.mrb[0].mxu0 %v3912
    %v4083 = vpop.f32.mrb[0].mxu0
    %v4084 = vadd.f32 %v3774, %v4083
    %v4085 = vpop.f32.mrb[0].mxu0
    %v4086 = vpop.f32.mrb[0].mxu0
    %v4087 = vadd.f32 %v3777, %v4086
    %v4088 = vpop.f32.mrb[0].mxu0
    %4089 = vmatprep.mubr.bf16.mxu0 0
    %4090 = vmatmul.mubr.bf16.gmra.mrb[0].mxu0 %v3915
    %v4091 = vpop.f32.mrb[0].mxu0
    %v4092 = vadd.f32 %v3782, %v4091
    %v4093 = vpop.f32.mrb[0].mxu0
    %v4094 = vpop.f32.mrb[0].mxu0
    %v4095 = vadd.f32 %v3785, %v4094
    %v4096 = vpop.f32.mrb[0].mxu0
    %4097 = vmatprep.mubr.bf16.mxu0 0
    %4098 = vmatmul.mubr.bf16.gmra.mrb[0].mxu0 %v3918
    %v4099 = vpop.f32.mrb[0].mxu0
    %v4100 = vadd.f32 %v3790, %v4099
    %v4101 = vpop.f32.mrb[0].mxu0
    %v4102 = vpop.f32.mrb[0].mxu0
    %v4103 = vadd.f32 %v3793, %v4102
    %v4104 = vpop.f32.mrb[0].mxu0
    %4105 = vmatprep.mubr.bf16.mxu0 0
    %4106 = vmatmul.mubr.bf16.gmra.mrb[0].mxu0 %v3921
    %v4107 = vpop.f32.mrb[0].mxu0
    %v4108 = vadd.f32 %v3798, %v4107
    %v4109 = vpop.f32.mrb[0].mxu0
    %v4110 = vpop.f32.mrb[0].mxu0
    %v4111 = vadd.f32 %v3801, %v4110
    %v4112 = vpop.f32.mrb[0].mxu0
    %4113 = vmatprep.mubr.bf16.mxu0 0
    %4114 = vmatmul.mubr.bf16.gmra.mrb[0].mxu0 %v3924
    %v4115 = vpop.f32.mrb[0].mxu0
    %v4116 = vadd.f32 %v3806, %v4115
    %v4117 = vpop.f32.mrb[0].mxu0
    %v4118 = vpop.f32.mrb[0].mxu0
    %v4119 = vadd.f32 %v3809, %v4118
    %v4120 = vpop.f32.mrb[0].mxu0
    %4121 = vmatprep.mubr.bf16.mxu0 0
    %4122 = vmatmul.mubr.bf16.gmra.mrb[0].mxu0 %v3927
    %v4123 = vpop.f32.mrb[0].mxu0
    %v4124 = vadd.f32 %v3814, %v4123
    %v4125 = vpop.f32.mrb[0].mxu0
    %v4126 = vpop.f32.mrb[0].mxu0
    %v4127 = vadd.f32 %v3817, %v4126
    %v4128 = vpop.f32.mrb[0].mxu0
    %4129 = vmatprep.mubr.bf16.mxu0 0
    %4130 = vmatmul.mubr.bf16.gmra.mrb[0].mxu0 %v3930
    %v4131 = vpop.f32.mrb[0].mxu0
    %v4132 = vadd.f32 %v3822, %v4131
    %v4133 = vpop.f32.mrb[0].mxu0
    %v4134 = vpop.f32.mrb[0].mxu0
    %v4135 = vadd.f32 %v3825, %v4134
    %v4136 = vpop.f32.mrb[0].mxu0
    %4137 = vmatprep.mubr.bf16.mxu0 0
    %4138 = vmatmul.mubr.bf16.gmra.mrb[0].mxu0 %v3933
    %v4139 = vpop.f32.mrb[0].mxu0
    %v4140 = vadd.f32 %v3830, %v4139
    %v4141 = vpop.f32.mrb[0].mxu0
    %v4142 = vpop.f32.mrb[0].mxu0
    %v4143 = vadd.f32 %v3833, %v4142
    %v4144 = vpop.f32.mrb[0].mxu0
    %4145 = vmatprep.mubr.bf16.mxu0 0
    %4146 = vmatmul.mubr.bf16.gmra.mrb[0].mxu0 %v3936
    %v4147 = vpop.f32.mrb[0].mxu0
    %v4148 = vadd.f32 %v3838, %v4147
    %v4149 = vpop.f32.mrb[0].mxu0
    %v4150 = vpop.f32.mrb[0].mxu0
    %v4151 = vadd.f32 %v3841, %v4150
    %v4152 = vpop.f32.mrb[0].mxu0
    %4153 = vmatprep.mubr.bf16.mxu0 0
    %4154 = vmatmul.mubr.bf16.gmra.mrb[0].mxu0 %v3939
    %v4155 = vpop.f32.mrb[0].mxu0
    %v4156 = vadd.f32 %v3846, %v4155
    %v4157 = vpop.f32.mrb[0].mxu0
    %v4158 = vpop.f32.mrb[0].mxu0
    %v4159 = vadd.f32 %v3849, %v4158
    %v4160 = vpop.f32.mrb[0].mxu0
    %4161 = vmatprep.mubr.bf16.mxu0 0
    %4162 = vmatmul.mubr.bf16.gmra.mrb[0].mxu0 %v3942
    %v4163 = vpop.f32.mrb[0].mxu0
    %v4164 = vadd.f32 %v3854, %v4163
    %v4165 = vpop.f32.mrb[0].mxu0
    %v4166 = vpop.f32.mrb[0].mxu0
    %v4167 = vadd.f32 %v3857, %v4166
    %v4168 = vpop.f32.mrb[0].mxu0
    %4169 = vmatprep.mubr.bf16.mxu0 0
    %4170 = vmatmul.mubr.bf16.gmra.mrb[0].mxu0 %v3945
    %v4171 = vpop.f32.mrb[0].mxu0
    %v4172 = vadd.f32 %v3862, %v4171
    %v4173 = vpop.f32.mrb[0].mxu0
    %v4174 = vpop.f32.mrb[0].mxu0
    %v4175 = vadd.f32 %v3865, %v4174
    %v4176 = vpop.f32.mrb[0].mxu0
    %4177 = vmatprep.mubr.bf16.mxu0 0
    %4178 = vmatmul.mubr.bf16.gmra.mrb[0].mxu0 %v3948
    %v4179 = vpop.f32.mrb[0].mxu0
    %v4180 = vadd.f32 %v3870, %v4179
    %v4181 = vpop.f32.mrb[0].mxu0
    %v4182 = vpop.f32.mrb[0].mxu0
    %v4183 = vpop.f32.mrb[0].mxu0
    %4184 = vdwg.mxu0
    %v4185 = vcombine.low %v187, %v186
    %v4186 = vcombine.low %v188, %v196
    %v4188 = vunpack.c.l.s4 1983009808
    %v4189 = vunpack.c.0.s8 %v4188
    %v4190 = vlaneseq
    %v4191 = vshrl.u32 %v4190, 7
    %v4192 = vsub.s32 %v4189, %v4191
    %v4193 = vrot.slane %v4185, %v4192
    %v4195 = vunpack.c.l.s4 1983009808
    %v4196 = vunpack.c.0.s8 %v4195
    %v4197 = vlaneseq
    %v4198 = vshrl.u32 %v4197, 7
    %v4199 = vsub.s32 %v4196, %v4198
    %v4200 = vrot.slane %v4186, %v4199
    %v4201 = vcombine.low %v4193, %v4200
    %v4202 = vcombine.low %v204, %v203
    %v4203 = vcombine.low %v2003, %v220
    %v4205 = vunpack.c.l.s4 1983009808
    %v4206 = vunpack.c.0.s8 %v4205
    %v4207 = vlaneseq
    %v4208 = vshrl.u32 %v4207, 7
    %v4209 = vsub.s32 %v4206, %v4208
    %v4210 = vrot.slane %v4202, %v4209
    %v4212 = vunpack.c.l.s4 1983009808
    %v4213 = vunpack.c.0.s8 %v4212
    %v4214 = vlaneseq
    %v4215 = vshrl.u32 %v4214, 7
    %v4216 = vsub.s32 %v4213, %v4215
    %v4217 = vrot.slane %v4203, %v4216
    %v4218 = vcombine.low %v4210, %v4217
    %v4219 = vcombine.low %v219, %v221
    %v4220 = vcombine.low %v229, %v237
    %v4222 = vunpack.c.l.s4 1983009808
    %v4223 = vunpack.c.0.s8 %v4222
    %v4224 = vlaneseq
    %v4225 = vshrl.u32 %v4224, 7
    %v4226 = vsub.s32 %v4223, %v4225
    %v4227 = vrot.slane %v4219, %v4226
    %v4229 = vunpack.c.l.s4 1983009808
    %v4230 = vunpack.c.0.s8 %v4229
    %v4231 = vlaneseq
    %v4232 = vshrl.u32 %v4231, 7
    %v4233 = vsub.s32 %v4230, %v4232
    %v4234 = vrot.slane %v4220, %v4233
    %v4235 = vcombine.low %v4227, %v4234
    %v4236 = vcombine.low %v236, %v2004
    %v4237 = vcombine.low %v253, %v252
    %v4239 = vunpack.c.l.s4 1983009808
    %v4240 = vunpack.c.0.s8 %v4239
    %v4241 = vlaneseq
    %v4242 = vshrl.u32 %v4241, 7
    %v4243 = vsub.s32 %v4240, %v4242
    %v4244 = vrot.slane %v4236, %v4243
    %v4246 = vunpack.c.l.s4 1983009808
    %v4247 = vunpack.c.0.s8 %v4246
    %v4248 = vlaneseq
    %v4249 = vshrl.u32 %v4248, 7
    %v4250 = vsub.s32 %v4247, %v4249
    %v4251 = vrot.slane %v4237, %v4250
    %v4252 = vcombine.low %v4244, %v4251
    %v4253 = vcombine.low %v254, %v262
    %v4254 = vcombine.low %v270, %v269
    %v4256 = vunpack.c.l.s4 1983009808
    %v4257 = vunpack.c.0.s8 %v4256
    %v4258 = vlaneseq
    %v4259 = vshrl.u32 %v4258, 7
    %v4260 = vsub.s32 %v4257, %v4259
    %v4261 = vrot.slane %v4253, %v4260
    %v4263 = vunpack.c.l.s4 1983009808
    %v4264 = vunpack.c.0.s8 %v4263
    %v4265 = vlaneseq
    %v4266 = vshrl.u32 %v4265, 7
    %v4267 = vsub.s32 %v4264, %v4266
    %v4268 = vrot.slane %v4254, %v4267
    %v4269 = vcombine.low %v4261, %v4268
    %v4270 = vcombine.low %v2005, %v286
    %v4271 = vcombine.low %v285, %v287
    %v4273 = vunpack.c.l.s4 1983009808
    %v4274 = vunpack.c.0.s8 %v4273
    %v4275 = vlaneseq
    %v4276 = vshrl.u32 %v4275, 7
    %v4277 = vsub.s32 %v4274, %v4276
    %v4278 = vrot.slane %v4270, %v4277
    %v4280 = vunpack.c.l.s4 1983009808
    %v4281 = vunpack.c.0.s8 %v4280
    %v4282 = vlaneseq
    %v4283 = vshrl.u32 %v4282, 7
    %v4284 = vsub.s32 %v4281, %v4283
    %v4285 = vrot.slane %v4271, %v4284
    %v4286 = vcombine.low %v4278, %v4285
    %v4287 = vcombine.low %v295, %v303
    %v4288 = vcombine.low %v302, %v2006
    %v4290 = vunpack.c.l.s4 1983009808
    %v4291 = vunpack.c.0.s8 %v4290
    %v4292 = vlaneseq
    %v4293 = vshrl.u32 %v4292, 7
    %v4294 = vsub.s32 %v4291, %v4293
    %v4295 = vrot.slane %v4287, %v4294
    %v4297 = vunpack.c.l.s4 1983009808
    %v4298 = vunpack.c.0.s8 %v4297
    %v4299 = vlaneseq
    %v4300 = vshrl.u32 %v4299, 7
    %v4301 = vsub.s32 %v4298, %v4300
    %v4302 = vrot.slane %v4288, %v4301
    %v4303 = vcombine.low %v4295, %v4302
    %v4304 = vcombine.low %v319, %v318
    %v4305 = vcombine.low %v320, %v328
    %v4307 = vunpack.c.l.s4 1983009808
    %v4308 = vunpack.c.0.s8 %v4307
    %v4309 = vlaneseq
    %v4310 = vshrl.u32 %v4309, 7
    %v4311 = vsub.s32 %v4308, %v4310
    %v4312 = vrot.slane %v4304, %v4311
    %v4314 = vunpack.c.l.s4 1983009808
    %v4315 = vunpack.c.0.s8 %v4314
    %v4316 = vlaneseq
    %v4317 = vshrl.u32 %v4316, 7
    %v4318 = vsub.s32 %v4315, %v4317
    %v4319 = vrot.slane %v4305, %v4318
    %v4320 = vcombine.low %v4312, %v4319
    %v4321 = vcombine.low %v336, %v335
    %v4322 = vcombine.low %v2007, %v352
    %v4324 = vunpack.c.l.s4 1983009808
    %v4325 = vunpack.c.0.s8 %v4324
    %v4326 = vlaneseq
    %v4327 = vshrl.u32 %v4326, 7
    %v4328 = vsub.s32 %v4325, %v4327
    %v4329 = vrot.slane %v4321, %v4328
    %v4331 = vunpack.c.l.s4 1983009808
    %v4332 = vunpack.c.0.s8 %v4331
    %v4333 = vlaneseq
    %v4334 = vshrl.u32 %v4333, 7
    %v4335 = vsub.s32 %v4332, %v4334
    %v4336 = vrot.slane %v4322, %v4335
    %v4337 = vcombine.low %v4329, %v4336
    %v4338 = vcombine.low %v351, %v353
    %v4339 = vcombine.low %v361, %v369
    %v4341 = vunpack.c.l.s4 1983009808
    %v4342 = vunpack.c.0.s8 %v4341
    %v4343 = vlaneseq
    %v4344 = vshrl.u32 %v4343, 7
    %v4345 = vsub.s32 %v4342, %v4344
    %v4346 = vrot.slane %v4338, %v4345
    %v4348 = vunpack.c.l.s4 1983009808
    %v4349 = vunpack.c.0.s8 %v4348
    %v4350 = vlaneseq
    %v4351 = vshrl.u32 %v4350, 7
    %v4352 = vsub.s32 %v4349, %v4351
    %v4353 = vrot.slane %v4339, %v4352
    %v4354 = vcombine.low %v4346, %v4353
    %v4355 = vcombine.low %v368, %v2008
    %v4356 = vcombine.low %v385, %v384
    %v4358 = vunpack.c.l.s4 1983009808
    %v4359 = vunpack.c.0.s8 %v4358
    %v4360 = vlaneseq
    %v4361 = vshrl.u32 %v4360, 7
    %v4362 = vsub.s32 %v4359, %v4361
    %v4363 = vrot.slane %v4355, %v4362
    %v4365 = vunpack.c.l.s4 1983009808
    %v4366 = vunpack.c.0.s8 %v4365
    %v4367 = vlaneseq
    %v4368 = vshrl.u32 %v4367, 7
    %v4369 = vsub.s32 %v4366, %v4368
    %v4370 = vrot.slane %v4356, %v4369
    %v4371 = vcombine.low %v4363, %v4370
    %v4372 = vcombine.low %v386, %v394
    %v4373 = vcombine.low %v402, %v401
    %v4375 = vunpack.c.l.s4 1983009808
    %v4376 = vunpack.c.0.s8 %v4375
    %v4377 = vlaneseq
    %v4378 = vshrl.u32 %v4377, 7
    %v4379 = vsub.s32 %v4376, %v4378
    %v4380 = vrot.slane %v4372, %v4379
    %v4382 = vunpack.c.l.s4 1983009808
    %v4383 = vunpack.c.0.s8 %v4382
    %v4384 = vlaneseq
    %v4385 = vshrl.u32 %v4384, 7
    %v4386 = vsub.s32 %v4383, %v4385
    %v4387 = vrot.slane %v4373, %v4386
    %v4388 = vcombine.low %v4380, %v4387
    %v4389 = vcombine.low %v2009, %v418
    %v4390 = vcombine.low %v417, %v419
    %v4392 = vunpack.c.l.s4 1983009808
    %v4393 = vunpack.c.0.s8 %v4392
    %v4394 = vlaneseq
    %v4395 = vshrl.u32 %v4394, 7
    %v4396 = vsub.s32 %v4393, %v4395
    %v4397 = vrot.slane %v4389, %v4396
    %v4399 = vunpack.c.l.s4 1983009808
    %v4400 = vunpack.c.0.s8 %v4399
    %v4401 = vlaneseq
    %v4402 = vshrl.u32 %v4401, 7
    %v4403 = vsub.s32 %v4400, %v4402
    %v4404 = vrot.slane %v4390, %v4403
    %v4405 = vcombine.low %v4397, %v4404
    %v4406 = vcombine.low %v427, %v435
    %v4407 = vcombine.low %v434, %v2010
    %v4409 = vunpack.c.l.s4 1983009808
    %v4410 = vunpack.c.0.s8 %v4409
    %v4411 = vlaneseq
    %v4412 = vshrl.u32 %v4411, 7
    %v4413 = vsub.s32 %v4410, %v4412
    %v4414 = vrot.slane %v4406, %v4413
    %v4416 = vunpack.c.l.s4 1983009808
    %v4417 = vunpack.c.0.s8 %v4416
    %v4418 = vlaneseq
    %v4419 = vshrl.u32 %v4418, 7
    %v4420 = vsub.s32 %v4417, %v4419
    %v4421 = vrot.slane %v4407, %v4420
    %v4422 = vcombine.low %v4414, %v4421
    %v4423 = vcombine.low %v451, %v450
    %v4424 = vcombine.low %v452, %v460
    %v4426 = vunpack.c.l.s4 1983009808
    %v4427 = vunpack.c.0.s8 %v4426
    %v4428 = vlaneseq
    %v4429 = vshrl.u32 %v4428, 7
    %v4430 = vsub.s32 %v4427, %v4429
    %v4431 = vrot.slane %v4423, %v4430
    %v4433 = vunpack.c.l.s4 1983009808
    %v4434 = vunpack.c.0.s8 %v4433
    %v4435 = vlaneseq
    %v4436 = vshrl.u32 %v4435, 7
    %v4437 = vsub.s32 %v4434, %v4436
    %v4438 = vrot.slane %v4424, %v4437
    %v4439 = vcombine.low %v4431, %v4438
    %v4440 = vcombine.low %v468, %v467
    %v4441 = vcombine.low %v2011, %v484
    %v4443 = vunpack.c.l.s4 1983009808
    %v4444 = vunpack.c.0.s8 %v4443
    %v4445 = vlaneseq
    %v4446 = vshrl.u32 %v4445, 7
    %v4447 = vsub.s32 %v4444, %v4446
    %v4448 = vrot.slane %v4440, %v4447
    %v4450 = vunpack.c.l.s4 1983009808
    %v4451 = vunpack.c.0.s8 %v4450
    %v4452 = vlaneseq
    %v4453 = vshrl.u32 %v4452, 7
    %v4454 = vsub.s32 %v4451, %v4453
    %v4455 = vrot.slane %v4441, %v4454
    %v4456 = vcombine.low %v4448, %v4455
    %v4457 = vcombine.low %v483, %v485
    %v4458 = vcombine.low %v493, %v501
    %v4460 = vunpack.c.l.s4 1983009808
    %v4461 = vunpack.c.0.s8 %v4460
    %v4462 = vlaneseq
    %v4463 = vshrl.u32 %v4462, 7
    %v4464 = vsub.s32 %v4461, %v4463
    %v4465 = vrot.slane %v4457, %v4464
    %v4467 = vunpack.c.l.s4 1983009808
    %v4468 = vunpack.c.0.s8 %v4467
    %v4469 = vlaneseq
    %v4470 = vshrl.u32 %v4469, 7
    %v4471 = vsub.s32 %v4468, %v4470
    %v4472 = vrot.slane %v4458, %v4471
    %v4473 = vcombine.low %v4465, %v4472
    %v4474 = vcombine.low %v500, %v2012
    %v4475 = vcombine.low %v517, %v516
    %v4477 = vunpack.c.l.s4 1983009808
    %v4478 = vunpack.c.0.s8 %v4477
    %v4479 = vlaneseq
    %v4480 = vshrl.u32 %v4479, 7
    %v4481 = vsub.s32 %v4478, %v4480
    %v4482 = vrot.slane %v4474, %v4481
    %v4484 = vunpack.c.l.s4 1983009808
    %v4485 = vunpack.c.0.s8 %v4484
    %v4486 = vlaneseq
    %v4487 = vshrl.u32 %v4486, 7
    %v4488 = vsub.s32 %v4485, %v4487
    %v4489 = vrot.slane %v4475, %v4488
    %v4490 = vcombine.low %v4482, %v4489
    %v4491 = vcombine.low %v518, %v526
    %v4492 = vcombine.low %v534, %v533
    %v4494 = vunpack.c.l.s4 1983009808
    %v4495 = vunpack.c.0.s8 %v4494
    %v4496 = vlaneseq
    %v4497 = vshrl.u32 %v4496, 7
    %v4498 = vsub.s32 %v4495, %v4497
    %v4499 = vrot.slane %v4491, %v4498
    %v4501 = vunpack.c.l.s4 1983009808
    %v4502 = vunpack.c.0.s8 %v4501
    %v4503 = vlaneseq
    %v4504 = vshrl.u32 %v4503, 7
    %v4505 = vsub.s32 %v4502, %v4504
    %v4506 = vrot.slane %v4492, %v4505
    %v4507 = vcombine.low %v4499, %v4506
    %v4508 = vcombine.low %v2013, %v550
    %v4509 = vcombine.low %v549, %v551
    %v4511 = vunpack.c.l.s4 1983009808
    %v4512 = vunpack.c.0.s8 %v4511
    %v4513 = vlaneseq
    %v4514 = vshrl.u32 %v4513, 7
    %v4515 = vsub.s32 %v4512, %v4514
    %v4516 = vrot.slane %v4508, %v4515
    %v4518 = vunpack.c.l.s4 1983009808
    %v4519 = vunpack.c.0.s8 %v4518
    %v4520 = vlaneseq
    %v4521 = vshrl.u32 %v4520, 7
    %v4522 = vsub.s32 %v4519, %v4521
    %v4523 = vrot.slane %v4509, %v4522
    %v4524 = vcombine.low %v4516, %v4523
    %v4525 = vcombine.low %v559, %v567
    %v4526 = vcombine.low %v566, %v2014
    %v4528 = vunpack.c.l.s4 1983009808
    %v4529 = vunpack.c.0.s8 %v4528
    %v4530 = vlaneseq
    %v4531 = vshrl.u32 %v4530, 7
    %v4532 = vsub.s32 %v4529, %v4531
    %v4533 = vrot.slane %v4525, %v4532
    %v4535 = vunpack.c.l.s4 1983009808
    %v4536 = vunpack.c.0.s8 %v4535
    %v4537 = vlaneseq
    %v4538 = vshrl.u32 %v4537, 7
    %v4539 = vsub.s32 %v4536, %v4538
    %v4540 = vrot.slane %v4526, %v4539
    %v4541 = vcombine.low %v4533, %v4540
    %v4542 = vcombine.low %v583, %v582
    %v4543 = vcombine.low %v584, %v592
    %v4545 = vunpack.c.l.s4 1983009808
    %v4546 = vunpack.c.0.s8 %v4545
    %v4547 = vlaneseq
    %v4548 = vshrl.u32 %v4547, 7
    %v4549 = vsub.s32 %v4546, %v4548
    %v4550 = vrot.slane %v4542, %v4549
    %v4552 = vunpack.c.l.s4 1983009808
    %v4553 = vunpack.c.0.s8 %v4552
    %v4554 = vlaneseq
    %v4555 = vshrl.u32 %v4554, 7
    %v4556 = vsub.s32 %v4553, %v4555
    %v4557 = vrot.slane %v4543, %v4556
    %v4558 = vcombine.low %v4550, %v4557
    %v4559 = vcombine.low %v600, %v599
    %v4560 = vcombine.low %v2015, %v616
    %v4562 = vunpack.c.l.s4 1983009808
    %v4563 = vunpack.c.0.s8 %v4562
    %v4564 = vlaneseq
    %v4565 = vshrl.u32 %v4564, 7
    %v4566 = vsub.s32 %v4563, %v4565
    %v4567 = vrot.slane %v4559, %v4566
    %v4569 = vunpack.c.l.s4 1983009808
    %v4570 = vunpack.c.0.s8 %v4569
    %v4571 = vlaneseq
    %v4572 = vshrl.u32 %v4571, 7
    %v4573 = vsub.s32 %v4570, %v4572
    %v4574 = vrot.slane %v4560, %v4573
    %v4575 = vcombine.low %v4567, %v4574
    %v4576 = vcombine.low %v615, %v617
    %v4577 = vcombine.low %v625, %v633
    %v4579 = vunpack.c.l.s4 1983009808
    %v4580 = vunpack.c.0.s8 %v4579
    %v4581 = vlaneseq
    %v4582 = vshrl.u32 %v4581, 7
    %v4583 = vsub.s32 %v4580, %v4582
    %v4584 = vrot.slane %v4576, %v4583
    %v4586 = vunpack.c.l.s4 1983009808
    %v4587 = vunpack.c.0.s8 %v4586
    %v4588 = vlaneseq
    %v4589 = vshrl.u32 %v4588, 7
    %v4590 = vsub.s32 %v4587, %v4589
    %v4591 = vrot.slane %v4577, %v4590
    %v4592 = vcombine.low %v4584, %v4591
    %v4593 = vcombine.low %v632, %v2016
    %v4594 = vcombine.low %v649, %v648
    %v4596 = vunpack.c.l.s4 1983009808
    %v4597 = vunpack.c.0.s8 %v4596
    %v4598 = vlaneseq
    %v4599 = vshrl.u32 %v4598, 7
    %v4600 = vsub.s32 %v4597, %v4599
    %v4601 = vrot.slane %v4593, %v4600
    %v4603 = vunpack.c.l.s4 1983009808
    %v4604 = vunpack.c.0.s8 %v4603
    %v4605 = vlaneseq
    %v4606 = vshrl.u32 %v4605, 7
    %v4607 = vsub.s32 %v4604, %v4606
    %v4608 = vrot.slane %v4594, %v4607
    %v4609 = vcombine.low %v4601, %v4608
    %v4610 = vcombine.low %v650, %v658
    %v4611 = vcombine.low %v666, %v665
    %v4613 = vunpack.c.l.s4 1983009808
    %v4614 = vunpack.c.0.s8 %v4613
    %v4615 = vlaneseq
    %v4616 = vshrl.u32 %v4615, 7
    %v4617 = vsub.s32 %v4614, %v4616
    %v4618 = vrot.slane %v4610, %v4617
    %v4620 = vunpack.c.l.s4 1983009808
    %v4621 = vunpack.c.0.s8 %v4620
    %v4622 = vlaneseq
    %v4623 = vshrl.u32 %v4622, 7
    %v4624 = vsub.s32 %v4621, %v4623
    %v4625 = vrot.slane %v4611, %v4624
    %v4626 = vcombine.low %v4618, %v4625
    %v4627 = vcombine.low %v2017, %v682
    %v4628 = vcombine.low %v681, %v683
    %v4630 = vunpack.c.l.s4 1983009808
    %v4631 = vunpack.c.0.s8 %v4630
    %v4632 = vlaneseq
    %v4633 = vshrl.u32 %v4632, 7
    %v4634 = vsub.s32 %v4631, %v4633
    %v4635 = vrot.slane %v4627, %v4634
    %v4637 = vunpack.c.l.s4 1983009808
    %v4638 = vunpack.c.0.s8 %v4637
    %v4639 = vlaneseq
    %v4640 = vshrl.u32 %v4639, 7
    %v4641 = vsub.s32 %v4638, %v4640
    %v4642 = vrot.slane %v4628, %v4641
    %v4643 = vcombine.low %v4635, %v4642
    %v4644 = vcombine.low %v691, %v699
    %v4645 = vcombine.low %v698, %v2018
    %v4647 = vunpack.c.l.s4 1983009808
    %v4648 = vunpack.c.0.s8 %v4647
    %v4649 = vlaneseq
    %v4650 = vshrl.u32 %v4649, 7
    %v4651 = vsub.s32 %v4648, %v4650
    %v4652 = vrot.slane %v4644, %v4651
    %v4654 = vunpack.c.l.s4 1983009808
    %v4655 = vunpack.c.0.s8 %v4654
    %v4656 = vlaneseq
    %v4657 = vshrl.u32 %v4656, 7
    %v4658 = vsub.s32 %v4655, %v4657
    %v4659 = vrot.slane %v4645, %v4658
    %v4660 = vcombine.low %v4652, %v4659
    %v4661 = vcombine.low %v715, %v714
    %v4662 = vcombine.low %v716, %v724
    %v4664 = vunpack.c.l.s4 1983009808
    %v4665 = vunpack.c.0.s8 %v4664
    %v4666 = vlaneseq
    %v4667 = vshrl.u32 %v4666, 7
    %v4668 = vsub.s32 %v4665, %v4667
    %v4669 = vrot.slane %v4661, %v4668
    %v4671 = vunpack.c.l.s4 1983009808
    %v4672 = vunpack.c.0.s8 %v4671
    %v4673 = vlaneseq
    %v4674 = vshrl.u32 %v4673, 7
    %v4675 = vsub.s32 %v4672, %v4674
    %v4676 = vrot.slane %v4662, %v4675
    %v4677 = vcombine.low %v4669, %v4676
    %v4678 = vcombine.low %v732, %v731
    %v4679 = vcombine.low %v2019, %v748
    %v4681 = vunpack.c.l.s4 1983009808
    %v4682 = vunpack.c.0.s8 %v4681
    %v4683 = vlaneseq
    %v4684 = vshrl.u32 %v4683, 7
    %v4685 = vsub.s32 %v4682, %v4684
    %v4686 = vrot.slane %v4678, %v4685
    %v4688 = vunpack.c.l.s4 1983009808
    %v4689 = vunpack.c.0.s8 %v4688
    %v4690 = vlaneseq
    %v4691 = vshrl.u32 %v4690, 7
    %v4692 = vsub.s32 %v4689, %v4691
    %v4693 = vrot.slane %v4679, %v4692
    %v4694 = vcombine.low %v4686, %v4693
    %v4695 = vcombine.low %v747, %v749
    %v4696 = vcombine.low %v757, %v765
    %v4698 = vunpack.c.l.s4 1983009808
    %v4699 = vunpack.c.0.s8 %v4698
    %v4700 = vlaneseq
    %v4701 = vshrl.u32 %v4700, 7
    %v4702 = vsub.s32 %v4699, %v4701
    %v4703 = vrot.slane %v4695, %v4702
    %v4705 = vunpack.c.l.s4 1983009808
    %v4706 = vunpack.c.0.s8 %v4705
    %v4707 = vlaneseq
    %v4708 = vshrl.u32 %v4707, 7
    %v4709 = vsub.s32 %v4706, %v4708
    %v4710 = vrot.slane %v4696, %v4709
    %v4711 = vcombine.low %v4703, %v4710
    %v4712 = vcombine.low %v764, %v2020
    %v4713 = vcombine.low %v781, %v780
    %v4715 = vunpack.c.l.s4 1983009808
    %v4716 = vunpack.c.0.s8 %v4715
    %v4717 = vlaneseq
    %v4718 = vshrl.u32 %v4717, 7
    %v4719 = vsub.s32 %v4716, %v4718
    %v4720 = vrot.slane %v4712, %v4719
    %v4722 = vunpack.c.l.s4 1983009808
    %v4723 = vunpack.c.0.s8 %v4722
    %v4724 = vlaneseq
    %v4725 = vshrl.u32 %v4724, 7
    %v4726 = vsub.s32 %v4723, %v4725
    %v4727 = vrot.slane %v4713, %v4726
    %v4728 = vcombine.low %v4720, %v4727
    %v4729 = vcombine.low %v782, %v790
    %v4730 = vcombine.low %v798, %v797
    %v4732 = vunpack.c.l.s4 1983009808
    %v4733 = vunpack.c.0.s8 %v4732
    %v4734 = vlaneseq
    %v4735 = vshrl.u32 %v4734, 7
    %v4736 = vsub.s32 %v4733, %v4735
    %v4737 = vrot.slane %v4729, %v4736
    %v4739 = vunpack.c.l.s4 1983009808
    %v4740 = vunpack.c.0.s8 %v4739
    %v4741 = vlaneseq
    %v4742 = vshrl.u32 %v4741, 7
    %v4743 = vsub.s32 %v4740, %v4742
    %v4744 = vrot.slane %v4730, %v4743
    %v4745 = vcombine.low %v4737, %v4744
    %v4746 = vcombine.low %v2021, %v814
    %v4747 = vcombine.low %v813, %v815
    %v4749 = vunpack.c.l.s4 1983009808
    %v4750 = vunpack.c.0.s8 %v4749
    %v4751 = vlaneseq
    %v4752 = vshrl.u32 %v4751, 7
    %v4753 = vsub.s32 %v4750, %v4752
    %v4754 = vrot.slane %v4746, %v4753
    %v4756 = vunpack.c.l.s4 1983009808
    %v4757 = vunpack.c.0.s8 %v4756
    %v4758 = vlaneseq
    %v4759 = vshrl.u32 %v4758, 7
    %v4760 = vsub.s32 %v4757, %v4759
    %v4761 = vrot.slane %v4747, %v4760
    %v4762 = vcombine.low %v4754, %v4761
    %v4763 = vcombine.low %v823, %v831
    %v4764 = vcombine.low %v830, %v2022
    %v4766 = vunpack.c.l.s4 1983009808
    %v4767 = vunpack.c.0.s8 %v4766
    %v4768 = vlaneseq
    %v4769 = vshrl.u32 %v4768, 7
    %v4770 = vsub.s32 %v4767, %v4769
    %v4771 = vrot.slane %v4763, %v4770
    %v4773 = vunpack.c.l.s4 1983009808
    %v4774 = vunpack.c.0.s8 %v4773
    %v4775 = vlaneseq
    %v4776 = vshrl.u32 %v4775, 7
    %v4777 = vsub.s32 %v4774, %v4776
    %v4778 = vrot.slane %v4764, %v4777
    %v4779 = vcombine.low %v4771, %v4778
    %v4780 = vcombine.low %v847, %v846
    %v4781 = vcombine.low %v848, %v856
    %v4783 = vunpack.c.l.s4 1983009808
    %v4784 = vunpack.c.0.s8 %v4783
    %v4785 = vlaneseq
    %v4786 = vshrl.u32 %v4785, 7
    %v4787 = vsub.s32 %v4784, %v4786
    %v4788 = vrot.slane %v4780, %v4787
    %v4790 = vunpack.c.l.s4 1983009808
    %v4791 = vunpack.c.0.s8 %v4790
    %v4792 = vlaneseq
    %v4793 = vshrl.u32 %v4792, 7
    %v4794 = vsub.s32 %v4791, %v4793
    %v4795 = vrot.slane %v4781, %v4794
    %v4796 = vcombine.low %v4788, %v4795
    %v4797 = vcombine.low %v864, %v863
    %v4798 = vcombine.low %v2023, %v880
    %v4800 = vunpack.c.l.s4 1983009808
    %v4801 = vunpack.c.0.s8 %v4800
    %v4802 = vlaneseq
    %v4803 = vshrl.u32 %v4802, 7
    %v4804 = vsub.s32 %v4801, %v4803
    %v4805 = vrot.slane %v4797, %v4804
    %v4807 = vunpack.c.l.s4 1983009808
    %v4808 = vunpack.c.0.s8 %v4807
    %v4809 = vlaneseq
    %v4810 = vshrl.u32 %v4809, 7
    %v4811 = vsub.s32 %v4808, %v4810
    %v4812 = vrot.slane %v4798, %v4811
    %v4813 = vcombine.low %v4805, %v4812
    %v4814 = vcombine.low %v879, %v881
    %v4815 = vcombine.low %v889, %v897
    %v4817 = vunpack.c.l.s4 1983009808
    %v4818 = vunpack.c.0.s8 %v4817
    %v4819 = vlaneseq
    %v4820 = vshrl.u32 %v4819, 7
    %v4821 = vsub.s32 %v4818, %v4820
    %v4822 = vrot.slane %v4814, %v4821
    %v4824 = vunpack.c.l.s4 1983009808
    %v4825 = vunpack.c.0.s8 %v4824
    %v4826 = vlaneseq
    %v4827 = vshrl.u32 %v4826, 7
    %v4828 = vsub.s32 %v4825, %v4827
    %v4829 = vrot.slane %v4815, %v4828
    %v4830 = vcombine.low %v4822, %v4829
    %v4831 = vcombine.low %v896, %v2024
    %v4832 = vcombine.low %v913, %v912
    %v4834 = vunpack.c.l.s4 1983009808
    %v4835 = vunpack.c.0.s8 %v4834
    %v4836 = vlaneseq
    %v4837 = vshrl.u32 %v4836, 7
    %v4838 = vsub.s32 %v4835, %v4837
    %v4839 = vrot.slane %v4831, %v4838
    %v4841 = vunpack.c.l.s4 1983009808
    %v4842 = vunpack.c.0.s8 %v4841
    %v4843 = vlaneseq
    %v4844 = vshrl.u32 %v4843, 7
    %v4845 = vsub.s32 %v4842, %v4844
    %v4846 = vrot.slane %v4832, %v4845
    %v4847 = vcombine.low %v4839, %v4846
    %v4848 = vcombine.low %v914, %v922
    %v4849 = vcombine.low %v930, %v929
    %v4851 = vunpack.c.l.s4 1983009808
    %v4852 = vunpack.c.0.s8 %v4851
    %v4853 = vlaneseq
    %v4854 = vshrl.u32 %v4853, 7
    %v4855 = vsub.s32 %v4852, %v4854
    %v4856 = vrot.slane %v4848, %v4855
    %v4858 = vunpack.c.l.s4 1983009808
    %v4859 = vunpack.c.0.s8 %v4858
    %v4860 = vlaneseq
    %v4861 = vshrl.u32 %v4860, 7
    %v4862 = vsub.s32 %v4859, %v4861
    %v4863 = vrot.slane %v4849, %v4862
    %v4864 = vcombine.low %v4856, %v4863
    %v4865 = vcombine.low %v2025, %v946
    %v4866 = vcombine.low %v945, %v947
    %v4868 = vunpack.c.l.s4 1983009808
    %v4869 = vunpack.c.0.s8 %v4868
    %v4870 = vlaneseq
    %v4871 = vshrl.u32 %v4870, 7
    %v4872 = vsub.s32 %v4869, %v4871
    %v4873 = vrot.slane %v4865, %v4872
    %v4875 = vunpack.c.l.s4 1983009808
    %v4876 = vunpack.c.0.s8 %v4875
    %v4877 = vlaneseq
    %v4878 = vshrl.u32 %v4877, 7
    %v4879 = vsub.s32 %v4876, %v4878
    %v4880 = vrot.slane %v4866, %v4879
    %v4881 = vcombine.low %v4873, %v4880
    %v4882 = vcombine.low %v955, %v963
    %v4883 = vcombine.low %v962, %v2026
    %v4885 = vunpack.c.l.s4 1983009808
    %v4886 = vunpack.c.0.s8 %v4885
    %v4887 = vlaneseq
    %v4888 = vshrl.u32 %v4887, 7
    %v4889 = vsub.s32 %v4886, %v4888
    %v4890 = vrot.slane %v4882, %v4889
    %v4892 = vunpack.c.l.s4 1983009808
    %v4893 = vunpack.c.0.s8 %v4892
    %v4894 = vlaneseq
    %v4895 = vshrl.u32 %v4894, 7
    %v4896 = vsub.s32 %v4893, %v4895
    %v4897 = vrot.slane %v4883, %v4896
    %v4898 = vcombine.low %v4890, %v4897
    %v4899 = vcombine.low %v979, %v978
    %v4900 = vcombine.low %v980, %v988
    %v4902 = vunpack.c.l.s4 1983009808
    %v4903 = vunpack.c.0.s8 %v4902
    %v4904 = vlaneseq
    %v4905 = vshrl.u32 %v4904, 7
    %v4906 = vsub.s32 %v4903, %v4905
    %v4907 = vrot.slane %v4899, %v4906
    %v4909 = vunpack.c.l.s4 1983009808
    %v4910 = vunpack.c.0.s8 %v4909
    %v4911 = vlaneseq
    %v4912 = vshrl.u32 %v4911, 7
    %v4913 = vsub.s32 %v4910, %v4912
    %v4914 = vrot.slane %v4900, %v4913
    %v4915 = vcombine.low %v4907, %v4914
    %v4916 = vcombine.low %v996, %v995
    %v4917 = vcombine.low %v2027, %v1012
    %v4919 = vunpack.c.l.s4 1983009808
    %v4920 = vunpack.c.0.s8 %v4919
    %v4921 = vlaneseq
    %v4922 = vshrl.u32 %v4921, 7
    %v4923 = vsub.s32 %v4920, %v4922
    %v4924 = vrot.slane %v4916, %v4923
    %v4926 = vunpack.c.l.s4 1983009808
    %v4927 = vunpack.c.0.s8 %v4926
    %v4928 = vlaneseq
    %v4929 = vshrl.u32 %v4928, 7
    %v4930 = vsub.s32 %v4927, %v4929
    %v4931 = vrot.slane %v4917, %v4930
    %v4932 = vcombine.low %v4924, %v4931
    %v4933 = vcombine.low %v1011, %v1013
    %v4934 = vcombine.low %v1021, %v1029
    %v4936 = vunpack.c.l.s4 1983009808
    %v4937 = vunpack.c.0.s8 %v4936
    %v4938 = vlaneseq
    %v4939 = vshrl.u32 %v4938, 7
    %v4940 = vsub.s32 %v4937, %v4939
    %v4941 = vrot.slane %v4933, %v4940
    %v4943 = vunpack.c.l.s4 1983009808
    %v4944 = vunpack.c.0.s8 %v4943
    %v4945 = vlaneseq
    %v4946 = vshrl.u32 %v4945, 7
    %v4947 = vsub.s32 %v4944, %v4946
    %v4948 = vrot.slane %v4934, %v4947
    %v4949 = vcombine.low %v4941, %v4948
    %v4950 = vcombine.low %v1028, %v2028
    %v4951 = vcombine.low %v1045, %v1044
    %v4953 = vunpack.c.l.s4 1983009808
    %v4954 = vunpack.c.0.s8 %v4953
    %v4955 = vlaneseq
    %v4956 = vshrl.u32 %v4955, 7
    %v4957 = vsub.s32 %v4954, %v4956
    %v4958 = vrot.slane %v4950, %v4957
    %v4960 = vunpack.c.l.s4 1983009808
    %v4961 = vunpack.c.0.s8 %v4960
    %v4962 = vlaneseq
    %v4963 = vshrl.u32 %v4962, 7
    %v4964 = vsub.s32 %v4961, %v4963
    %v4965 = vrot.slane %v4951, %v4964
    %v4966 = vcombine.low %v4958, %v4965
    %v4967 = vcombine.low %v1046, %v1054
    %v4968 = vcombine.low %v1062, %v1061
    %v4970 = vunpack.c.l.s4 1983009808
    %v4971 = vunpack.c.0.s8 %v4970
    %v4972 = vlaneseq
    %v4973 = vshrl.u32 %v4972, 7
    %v4974 = vsub.s32 %v4971, %v4973
    %v4975 = vrot.slane %v4967, %v4974
    %v4977 = vunpack.c.l.s4 1983009808
    %v4978 = vunpack.c.0.s8 %v4977
    %v4979 = vlaneseq
    %v4980 = vshrl.u32 %v4979, 7
    %v4981 = vsub.s32 %v4978, %v4980
    %v4982 = vrot.slane %v4968, %v4981
    %v4983 = vcombine.low %v4975, %v4982
    %v4984 = vcombine.low %v2029, %v1078
    %v4985 = vcombine.low %v1077, %v1079
    %v4987 = vunpack.c.l.s4 1983009808
    %v4988 = vunpack.c.0.s8 %v4987
    %v4989 = vlaneseq
    %v4990 = vshrl.u32 %v4989, 7
    %v4991 = vsub.s32 %v4988, %v4990
    %v4992 = vrot.slane %v4984, %v4991
    %v4994 = vunpack.c.l.s4 1983009808
    %v4995 = vunpack.c.0.s8 %v4994
    %v4996 = vlaneseq
    %v4997 = vshrl.u32 %v4996, 7
    %v4998 = vsub.s32 %v4995, %v4997
    %v4999 = vrot.slane %v4985, %v4998
    %v5000 = vcombine.low %v4992, %v4999
    %v5001 = vcombine.low %v1087, %v1095
    %v5002 = vcombine.low %v1094, %v2030
    %v5004 = vunpack.c.l.s4 1983009808
    %v5005 = vunpack.c.0.s8 %v5004
    %v5006 = vlaneseq
    %v5007 = vshrl.u32 %v5006, 7
    %v5008 = vsub.s32 %v5005, %v5007
    %v5009 = vrot.slane %v5001, %v5008
    %v5011 = vunpack.c.l.s4 1983009808
    %v5012 = vunpack.c.0.s8 %v5011
    %v5013 = vlaneseq
    %v5014 = vshrl.u32 %v5013, 7
    %v5015 = vsub.s32 %v5012, %v5014
    %v5016 = vrot.slane %v5002, %v5015
    %v5017 = vcombine.low %v5009, %v5016
    %v5067 = vpack.c.bf16 %v4218, %v4201
    %v5068 = vpack.c.bf16 %v4252, %v4235
    %v5069 = vpack.c.bf16 %v4286, %v4269
    %v5070 = vpack.c.bf16 %v4320, %v4303
    %v5071 = vpack.c.bf16 %v4354, %v4337
    %v5072 = vpack.c.bf16 %v4388, %v4371
    %v5073 = vpack.c.bf16 %v4422, %v4405
    %v5074 = vpack.c.bf16 %v4456, %v4439
    %v5075 = vpack.c.bf16 %v4490, %v4473
    %v5076 = vpack.c.bf16 %v4524, %v4507
    %v5077 = vpack.c.bf16 %v4558, %v4541
    %v5078 = vpack.c.bf16 %v4592, %v4575
    %v5079 = vpack.c.bf16 %v4626, %v4609
    %v5080 = vpack.c.bf16 %v4660, %v4643
    %v5081 = vpack.c.bf16 %v4694, %v4677
    %v5082 = vpack.c.bf16 %v4728, %v4711
    %v5083 = vpack.c.bf16 %v4762, %v4745
    %v5084 = vpack.c.bf16 %v4796, %v4779
    %v5085 = vpack.c.bf16 %v4830, %v4813
    %v5086 = vpack.c.bf16 %v4864, %v4847
    %v5087 = vpack.c.bf16 %v4898, %v4881
    %v5088 = vpack.c.bf16 %v4932, %v4915
    %v5089 = vpack.c.bf16 %v4966, %v4949
    %v5090 = vpack.c.bf16 %v5000, %v4983
    %v5091 = vpack.c.bf16 %v5017, %v5017
    %v5093 = vsel %vm3561, %v5067, 0
    %v5096 = vsel %vm3561, %v5068, 0
    %v5099 = vsel %vm3561, %v5069, 0
    %v5102 = vsel %vm3561, %v5070, 0
    %v5105 = vsel %vm3561, %v5071, 0
    %v5108 = vsel %vm3561, %v5072, 0
    %v5111 = vsel %vm3561, %v5073, 0
    %v5114 = vsel %vm3561, %v5074, 0
    %v5117 = vsel %vm3561, %v5075, 0
    %v5120 = vsel %vm3561, %v5076, 0
    %v5123 = vsel %vm3561, %v5077, 0
    %v5126 = vsel %vm3561, %v5078, 0
    %v5129 = vsel %vm3561, %v5079, 0
    %v5132 = vsel %vm3561, %v5080, 0
    %v5135 = vsel %vm3561, %v5081, 0
    %v5138 = vsel %vm3561, %v5082, 0
    %v5141 = vsel %vm3561, %v5083, 0
    %v5144 = vsel %vm3561, %v5084, 0
    %v5147 = vsel %vm3561, %v5085, 0
    %v5150 = vsel %vm3561, %v5086, 0
    %v5153 = vsel %vm3561, %v5087, 0
    %v5156 = vsel %vm3561, %v5088, 0
    %v5159 = vsel %vm3561, %v5089, 0
    %v5162 = vsel %vm3561, %v5090, 0
    %v5165 = vsel %vm3561, %v5091, 0
    %v5168 = vand.u32 %v109, %v3639
    %5170 = vmatprep.subr.bf16.mxu0 0
    %5171 = vmatpush1.bf16.msra.mxu0 %v5168
    %5172 = vmatprep.subr.bf16.mxu0 0
    %5173 = vmatpush1.bf16.msra.mxu0 0
    %5174 = vmatprep.subr.bf16.mxu0 0
    %5175 = vmatpush1.bf16.msra.mxu0 0
    %5176 = vmatprep.subr.bf16.mxu0 0
    %5177 = vmatpush1.bf16.msra.mxu0 0
    %5178 = vmatprep.subr.bf16.mxu0 0
    %5179 = vmatpush1.bf16.msra.mxu0 0
    %5180 = vmatprep.subr.bf16.mxu0 0
    %5181 = vmatpush1.bf16.msra.mxu0 0
    %5182 = vmatprep.subr.bf16.mxu0 0
    %5183 = vmatpush1.bf16.msra.mxu0 0
    %5184 = vmatprep.subr.bf16.mxu0 0
    %5185 = vmatpush1.bf16.msra.mxu0 0
    %5186 = vmatprep.subr.bf16.mxu0 0
    %5187 = vmatpush1.bf16.msra.mxu0 0
    %5188 = vmatprep.subr.bf16.mxu0 0
    %5189 = vmatpush1.bf16.msra.mxu0 0
    %5190 = vmatprep.subr.bf16.mxu0 0
    %5191 = vmatpush1.bf16.msra.mxu0 0
    %5192 = vmatprep.subr.bf16.mxu0 0
    %5193 = vmatpush1.bf16.msra.mxu0 0
    %5194 = vmatprep.subr.bf16.mxu0 0
    %5195 = vmatpush1.bf16.msra.mxu0 0
    %5196 = vmatprep.subr.bf16.mxu0 0
    %5197 = vmatpush1.bf16.msra.mxu0 0
    %5198 = vmatprep.subr.bf16.mxu0 0
    %5199 = vmatpush1.bf16.msra.mxu0 0
    %5200 = vmatprep.subr.bf16.mxu0 0
    %5201 = vmatpush1.bf16.msra.mxu0 0
    %5202 = vmatprep.mubr.bf16.mxu0 0
    %5203 = vmatmul.mubr.bf16.gmra.mrb[0].mxu0 %v5093
    %v5204 = vpop.f32.mrb[0].mxu0
    %v5205 = vadd.f32 0.0, %v5204
    %v5206 = vpop.f32.mrb[0].mxu0
    %v5207 = vpop.f32.mrb[0].mxu0
    %v5208 = vadd.f32 0.0, %v5207
    %v5209 = vpop.f32.mrb[0].mxu0
    %5210 = vmatprep.mubr.bf16.mxu0 0
    %5211 = vmatmul.mubr.bf16.gmra.mrb[0].mxu0 %v5096
    %v5212 = vpop.f32.mrb[0].mxu0
    %v5213 = vadd.f32 0.0, %v5212
    %v5214 = vpop.f32.mrb[0].mxu0
    %v5215 = vpop.f32.mrb[0].mxu0
    %v5216 = vadd.f32 0.0, %v5215
    %v5217 = vpop.f32.mrb[0].mxu0
    %5218 = vmatprep.mubr.bf16.mxu0 0
    %5219 = vmatmul.mubr.bf16.gmra.mrb[0].mxu0 %v5099
    %v5220 = vpop.f32.mrb[0].mxu0
    %v5221 = vadd.f32 0.0, %v5220
    %v5222 = vpop.f32.mrb[0].mxu0
    %v5223 = vpop.f32.mrb[0].mxu0
    %v5224 = vadd.f32 0.0, %v5223
    %v5225 = vpop.f32.mrb[0].mxu0
    %5226 = vmatprep.mubr.bf16.mxu0 0
    %5227 = vmatmul.mubr.bf16.gmra.mrb[0].mxu0 %v5102
    %v5228 = vpop.f32.mrb[0].mxu0
    %v5229 = vadd.f32 0.0, %v5228
    %v5230 = vpop.f32.mrb[0].mxu0
    %v5231 = vpop.f32.mrb[0].mxu0
    %v5232 = vadd.f32 0.0, %v5231
    %v5233 = vpop.f32.mrb[0].mxu0
    %5234 = vmatprep.mubr.bf16.mxu0 0
    %5235 = vmatmul.mubr.bf16.gmra.mrb[0].mxu0 %v5105
    %v5236 = vpop.f32.mrb[0].mxu0
    %v5237 = vadd.f32 0.0, %v5236
    %v5238 = vpop.f32.mrb[0].mxu0
    %v5239 = vpop.f32.mrb[0].mxu0
    %v5240 = vadd.f32 0.0, %v5239
    %v5241 = vpop.f32.mrb[0].mxu0
    %5242 = vmatprep.mubr.bf16.mxu0 0
    %5243 = vmatmul.mubr.bf16.gmra.mrb[0].mxu0 %v5108
    %v5244 = vpop.f32.mrb[0].mxu0
    %v5245 = vadd.f32 0.0, %v5244
    %v5246 = vpop.f32.mrb[0].mxu0
    %v5247 = vpop.f32.mrb[0].mxu0
    %v5248 = vadd.f32 0.0, %v5247
    %v5249 = vpop.f32.mrb[0].mxu0
    %5250 = vmatprep.mubr.bf16.mxu0 0
    %5251 = vmatmul.mubr.bf16.gmra.mrb[0].mxu0 %v5111
    %v5252 = vpop.f32.mrb[0].mxu0
    %v5253 = vadd.f32 0.0, %v5252
    %v5254 = vpop.f32.mrb[0].mxu0
    %v5255 = vpop.f32.mrb[0].mxu0
    %v5256 = vadd.f32 0.0, %v5255
    %v5257 = vpop.f32.mrb[0].mxu0
    %5258 = vmatprep.mubr.bf16.mxu0 0
    %5259 = vmatmul.mubr.bf16.gmra.mrb[0].mxu0 %v5114
    %v5260 = vpop.f32.mrb[0].mxu0
    %v5261 = vadd.f32 0.0, %v5260
    %v5262 = vpop.f32.mrb[0].mxu0
    %v5263 = vpop.f32.mrb[0].mxu0
    %v5264 = vadd.f32 0.0, %v5263
    %v5265 = vpop.f32.mrb[0].mxu0
    %5266 = vmatprep.mubr.bf16.mxu0 0
    %5267 = vmatmul.mubr.bf16.gmra.mrb[0].mxu0 %v5117
    %v5268 = vpop.f32.mrb[0].mxu0
    %v5269 = vadd.f32 0.0, %v5268
    %v5270 = vpop.f32.mrb[0].mxu0
    %v5271 = vpop.f32.mrb[0].mxu0
    %v5272 = vadd.f32 0.0, %v5271
    %v5273 = vpop.f32.mrb[0].mxu0
    %5274 = vmatprep.mubr.bf16.mxu0 0
    %5275 = vmatmul.mubr.bf16.gmra.mrb[0].mxu0 %v5120
    %v5276 = vpop.f32.mrb[0].mxu0
    %v5277 = vadd.f32 0.0, %v5276
    %v5278 = vpop.f32.mrb[0].mxu0
    %v5279 = vpop.f32.mrb[0].mxu0
    %v5280 = vadd.f32 0.0, %v5279
    %v5281 = vpop.f32.mrb[0].mxu0
    %5282 = vmatprep.mubr.bf16.mxu0 0
    %5283 = vmatmul.mubr.bf16.gmra.mrb[0].mxu0 %v5123
    %v5284 = vpop.f32.mrb[0].mxu0
    %v5285 = vadd.f32 0.0, %v5284
    %v5286 = vpop.f32.mrb[0].mxu0
    %v5287 = vpop.f32.mrb[0].mxu0
    %v5288 = vadd.f32 0.0, %v5287
    %v5289 = vpop.f32.mrb[0].mxu0
    %5290 = vmatprep.mubr.bf16.mxu0 0
    %5291 = vmatmul.mubr.bf16.gmra.mrb[0].mxu0 %v5126
    %v5292 = vpop.f32.mrb[0].mxu0
    %v5293 = vadd.f32 0.0, %v5292
    %v5294 = vpop.f32.mrb[0].mxu0
    %v5295 = vpop.f32.mrb[0].mxu0
    %v5296 = vadd.f32 0.0, %v5295
    %v5297 = vpop.f32.mrb[0].mxu0
    %5298 = vmatprep.mubr.bf16.mxu0 0
    %5299 = vmatmul.mubr.bf16.gmra.mrb[0].mxu0 %v5129
    %v5300 = vpop.f32.mrb[0].mxu0
    %v5301 = vadd.f32 0.0, %v5300
    %v5302 = vpop.f32.mrb[0].mxu0
    %v5303 = vpop.f32.mrb[0].mxu0
    %v5304 = vadd.f32 0.0, %v5303
    %v5305 = vpop.f32.mrb[0].mxu0
    %5306 = vmatprep.mubr.bf16.mxu0 0
    %5307 = vmatmul.mubr.bf16.gmra.mrb[0].mxu0 %v5132
    %v5308 = vpop.f32.mrb[0].mxu0
    %v5309 = vadd.f32 0.0, %v5308
    %v5310 = vpop.f32.mrb[0].mxu0
    %v5311 = vpop.f32.mrb[0].mxu0
    %v5312 = vadd.f32 0.0, %v5311
    %v5313 = vpop.f32.mrb[0].mxu0
    %5314 = vmatprep.mubr.bf16.mxu0 0
    %5315 = vmatmul.mubr.bf16.gmra.mrb[0].mxu0 %v5135
    %v5316 = vpop.f32.mrb[0].mxu0
    %v5317 = vadd.f32 0.0, %v5316
    %v5318 = vpop.f32.mrb[0].mxu0
    %v5319 = vpop.f32.mrb[0].mxu0
    %v5320 = vadd.f32 0.0, %v5319
    %v5321 = vpop.f32.mrb[0].mxu0
    %5322 = vmatprep.mubr.bf16.mxu0 0
    %5323 = vmatmul.mubr.bf16.gmra.mrb[0].mxu0 %v5138
    %v5324 = vpop.f32.mrb[0].mxu0
    %v5325 = vadd.f32 0.0, %v5324
    %v5326 = vpop.f32.mrb[0].mxu0
    %v5327 = vpop.f32.mrb[0].mxu0
    %v5328 = vadd.f32 0.0, %v5327
    %v5329 = vpop.f32.mrb[0].mxu0
    %5330 = vmatprep.mubr.bf16.mxu0 0
    %5331 = vmatmul.mubr.bf16.gmra.mrb[0].mxu0 %v5141
    %v5332 = vpop.f32.mrb[0].mxu0
    %v5333 = vadd.f32 0.0, %v5332
    %v5334 = vpop.f32.mrb[0].mxu0
    %v5335 = vpop.f32.mrb[0].mxu0
    %v5336 = vadd.f32 0.0, %v5335
    %v5337 = vpop.f32.mrb[0].mxu0
    %5338 = vmatprep.mubr.bf16.mxu0 0
    %5339 = vmatmul.mubr.bf16.gmra.mrb[0].mxu0 %v5144
    %v5340 = vpop.f32.mrb[0].mxu0
    %v5341 = vadd.f32 0.0, %v5340
    %v5342 = vpop.f32.mrb[0].mxu0
    %v5343 = vpop.f32.mrb[0].mxu0
    %v5344 = vadd.f32 0.0, %v5343
    %v5345 = vpop.f32.mrb[0].mxu0
    %5346 = vmatprep.mubr.bf16.mxu0 0
    %5347 = vmatmul.mubr.bf16.gmra.mrb[0].mxu0 %v5147
    %v5348 = vpop.f32.mrb[0].mxu0
    %v5349 = vadd.f32 0.0, %v5348
    %v5350 = vpop.f32.mrb[0].mxu0
    %v5351 = vpop.f32.mrb[0].mxu0
    %v5352 = vadd.f32 0.0, %v5351
    %v5353 = vpop.f32.mrb[0].mxu0
    %5354 = vmatprep.mubr.bf16.mxu0 0
    %5355 = vmatmul.mubr.bf16.gmra.mrb[0].mxu0 %v5150
    %v5356 = vpop.f32.mrb[0].mxu0
    %v5357 = vadd.f32 0.0, %v5356
    %v5358 = vpop.f32.mrb[0].mxu0
    %v5359 = vpop.f32.mrb[0].mxu0
    %v5360 = vadd.f32 0.0, %v5359
    %v5361 = vpop.f32.mrb[0].mxu0
    %5362 = vmatprep.mubr.bf16.mxu0 0
    %5363 = vmatmul.mubr.bf16.gmra.mrb[0].mxu0 %v5153
    %v5364 = vpop.f32.mrb[0].mxu0
    %v5365 = vadd.f32 0.0, %v5364
    %v5366 = vpop.f32.mrb[0].mxu0
    %v5367 = vpop.f32.mrb[0].mxu0
    %v5368 = vadd.f32 0.0, %v5367
    %v5369 = vpop.f32.mrb[0].mxu0
    %5370 = vmatprep.mubr.bf16.mxu0 0
    %5371 = vmatmul.mubr.bf16.gmra.mrb[0].mxu0 %v5156
    %v5372 = vpop.f32.mrb[0].mxu0
    %v5373 = vadd.f32 0.0, %v5372
    %v5374 = vpop.f32.mrb[0].mxu0
    %v5375 = vpop.f32.mrb[0].mxu0
    %v5376 = vadd.f32 0.0, %v5375
    %v5377 = vpop.f32.mrb[0].mxu0
    %5378 = vmatprep.mubr.bf16.mxu0 0
    %5379 = vmatmul.mubr.bf16.gmra.mrb[0].mxu0 %v5159
    %v5380 = vpop.f32.mrb[0].mxu0
    %v5381 = vadd.f32 0.0, %v5380
    %v5382 = vpop.f32.mrb[0].mxu0
    %v5383 = vpop.f32.mrb[0].mxu0
    %v5384 = vadd.f32 0.0, %v5383
    %v5385 = vpop.f32.mrb[0].mxu0
    %5386 = vmatprep.mubr.bf16.mxu0 0
    %5387 = vmatmul.mubr.bf16.gmra.mrb[0].mxu0 %v5162
    %v5388 = vpop.f32.mrb[0].mxu0
    %v5389 = vadd.f32 0.0, %v5388
    %v5390 = vpop.f32.mrb[0].mxu0
    %v5391 = vpop.f32.mrb[0].mxu0
    %v5392 = vadd.f32 0.0, %v5391
    %v5393 = vpop.f32.mrb[0].mxu0
    %5394 = vmatprep.mubr.bf16.mxu0 0
    %5395 = vmatmul.mubr.bf16.gmra.mrb[0].mxu0 %v5165
    %v5396 = vpop.f32.mrb[0].mxu0
    %v5397 = vadd.f32 0.0, %v5396
    %v5398 = vpop.f32.mrb[0].mxu0
    %v5399 = vpop.f32.mrb[0].mxu0
    %v5400 = vpop.f32.mrb[0].mxu0
    %5401 = vdwg.mxu0
    %v5402 = vadd.f32 %v3988, %v5205
    %v5403 = vadd.f32 %v3991, %v5208
    %v5404 = vadd.f32 %v3996, %v5213
    %v5405 = vadd.f32 %v3999, %v5216
    %v5406 = vadd.f32 %v4004, %v5221
    %v5407 = vadd.f32 %v4007, %v5224
    %v5408 = vadd.f32 %v4012, %v5229
    %v5409 = vadd.f32 %v4015, %v5232
    %v5410 = vadd.f32 %v4020, %v5237
    %v5411 = vadd.f32 %v4023, %v5240
    %v5412 = vadd.f32 %v4028, %v5245
    %v5413 = vadd.f32 %v4031, %v5248
    %v5414 = vadd.f32 %v4036, %v5253
    %v5415 = vadd.f32 %v4039, %v5256
    %v5416 = vadd.f32 %v4044, %v5261
    %v5417 = vadd.f32 %v4047, %v5264
    %v5418 = vadd.f32 %v4052, %v5269
    %v5419 = vadd.f32 %v4055, %v5272
    %v5420 = vadd.f32 %v4060, %v5277
    %v5421 = vadd.f32 %v4063, %v5280
    %v5422 = vadd.f32 %v4068, %v5285
    %v5423 = vadd.f32 %v4071, %v5288
    %v5424 = vadd.f32 %v4076, %v5293
    %v5425 = vadd.f32 %v4079, %v5296
    %v5426 = vadd.f32 %v4084, %v5301
    %v5427 = vadd.f32 %v4087, %v5304
    %v5428 = vadd.f32 %v4092, %v5309
    %v5429 = vadd.f32 %v4095, %v5312
    %v5430 = vadd.f32 %v4100, %v5317
    %v5431 = vadd.f32 %v4103, %v5320
    %v5432 = vadd.f32 %v4108, %v5325
    %v5433 = vadd.f32 %v4111, %v5328
    %v5434 = vadd.f32 %v4116, %v5333
    %v5435 = vadd.f32 %v4119, %v5336
    %v5436 = vadd.f32 %v4124, %v5341
    %v5437 = vadd.f32 %v4127, %v5344
    %v5438 = vadd.f32 %v4132, %v5349
    %v5439 = vadd.f32 %v4135, %v5352
    %v5440 = vadd.f32 %v4140, %v5357
    %v5441 = vadd.f32 %v4143, %v5360
    %v5442 = vadd.f32 %v4148, %v5365
    %v5443 = vadd.f32 %v4151, %v5368
    %v5444 = vadd.f32 %v4156, %v5373
    %v5445 = vadd.f32 %v4159, %v5376
    %v5446 = vadd.f32 %v4164, %v5381
    %v5447 = vadd.f32 %v4167, %v5384
    %v5448 = vadd.f32 %v4172, %v5389
    %v5449 = vadd.f32 %v4175, %v5392
    %v5450 = vadd.f32 %v4180, %v5397
    %v5455 = vcombine.high %v62, %v62
    %v5457 = vunpack.c.l.s4 1983009808
    %v5458 = vunpack.c.0.s8 %v5457
    %v5459 = vlaneseq
    %v5460 = vshrl.u32 %v5459, 7
    %v5461 = vsub.s32 %v5458, %v5460
    %v5462 = vrot.slane %v62, %v5461
    %v5464 = vunpack.c.l.s4 1983009808
    %v5465 = vunpack.c.0.s8 %v5464
    %v5466 = vlaneseq
    %v5467 = vshrl.u32 %v5466, 7
    %v5468 = vsub.s32 %v5465, %v5467
    %v5469 = vrot.slane %v5455, %v5468
    %v5470 = vcombine.high %v5462, %v5462
    %v5471 = vcombine.high %v5469, %v5469
    %v5472 = vcombine.high %v63, %v63
    %v5474 = vunpack.c.l.s4 1983009808
    %v5475 = vunpack.c.0.s8 %v5474
    %v5476 = vlaneseq
    %v5477 = vshrl.u32 %v5476, 7
    %v5478 = vsub.s32 %v5475, %v5477
    %v5479 = vrot.slane %v63, %v5478
    %v5481 = vunpack.c.l.s4 1983009808
    %v5482 = vunpack.c.0.s8 %v5481
    %v5483 = vlaneseq
    %v5484 = vshrl.u32 %v5483, 7
    %v5485 = vsub.s32 %v5482, %v5484
    %v5486 = vrot.slane %v5472, %v5485
    %v5487 = vcombine.high %v5479, %v5479
    %v5488 = vcombine.high %v94, %v94
    %v5490 = vunpack.c.l.s4 1983009808
    %v5491 = vunpack.c.0.s8 %v5490
    %v5492 = vlaneseq
    %v5493 = vshrl.u32 %v5492, 7
    %v5494 = vsub.s32 %v5491, %v5493
    %v5495 = vrot.slane %v94, %v5494
    %v5497 = vunpack.c.l.s4 1983009808
    %v5498 = vunpack.c.0.s8 %v5497
    %v5499 = vlaneseq
    %v5500 = vshrl.u32 %v5499, 7
    %v5501 = vsub.s32 %v5498, %v5500
    %v5502 = vrot.slane %v5488, %v5501
    %v5503 = vcombine.high %v5495, %v5495
    %v5504 = vcombine.high %v5502, %v5502
    %v5505 = vcombine.high %v95, %v95
    %v5507 = vunpack.c.l.s4 1983009808
    %v5508 = vunpack.c.0.s8 %v5507
    %v5509 = vlaneseq
    %v5510 = vshrl.u32 %v5509, 7
    %v5511 = vsub.s32 %v5508, %v5510
    %v5512 = vrot.slane %v95, %v5511
    %v5514 = vunpack.c.l.s4 1983009808
    %v5515 = vunpack.c.0.s8 %v5514
    %v5516 = vlaneseq
    %v5517 = vshrl.u32 %v5516, 7
    %v5518 = vsub.s32 %v5515, %v5517
    %v5519 = vrot.slane %v5505, %v5518
    %v5520 = vcombine.high %v5512, %v5512
    %v5521 = vcombine.low %v212, %v220
    %v5523 = vunpack.c.l.s4 1983009808
    %v5524 = vunpack.c.0.s8 %v5523
    %v5525 = vlaneseq
    %v5526 = vshrl.u32 %v5525, 7
    %v5527 = vsub.s32 %v5524, %v5526
    %v5528 = vrot.slane %v5521, %v5527
    %v5529 = vcombine.low %v5528, %v4227
    %v5530 = vcombine.low %v236, %v245
    %v5532 = vunpack.c.l.s4 1983009808
    %v5533 = vunpack.c.0.s8 %v5532
    %v5534 = vlaneseq
    %v5535 = vshrl.u32 %v5534, 7
    %v5536 = vsub.s32 %v5533, %v5535
    %v5537 = vrot.slane %v5530, %v5536
    %v5538 = vcombine.low %v4234, %v5537
    %v5539 = vcombine.low %v4251, %v4261
    %v5540 = vcombine.low %v278, %v286
    %v5542 = vunpack.c.l.s4 1983009808
    %v5543 = vunpack.c.0.s8 %v5542
    %v5544 = vlaneseq
    %v5545 = vshrl.u32 %v5544, 7
    %v5546 = vsub.s32 %v5543, %v5545
    %v5547 = vrot.slane %v5540, %v5546
    %v5548 = vcombine.low %v4268, %v5547
    %v5549 = vcombine.low %v4285, %v4295
    %v5550 = vcombine.low %v302, %v311
    %v5552 = vunpack.c.l.s4 1983009808
    %v5553 = vunpack.c.0.s8 %v5552
    %v5554 = vlaneseq
    %v5555 = vshrl.u32 %v5554, 7
    %v5556 = vsub.s32 %v5553, %v5555
    %v5557 = vrot.slane %v5550, %v5556
    %v5558 = vcombine.low %v5557, %v4312
    %v5559 = vcombine.low %v4319, %v4329
    %v5560 = vcombine.low %v344, %v352
    %v5562 = vunpack.c.l.s4 1983009808
    %v5563 = vunpack.c.0.s8 %v5562
    %v5564 = vlaneseq
    %v5565 = vshrl.u32 %v5564, 7
    %v5566 = vsub.s32 %v5563, %v5565
    %v5567 = vrot.slane %v5560, %v5566
    %v5568 = vcombine.low %v5567, %v4346
    %v5569 = vcombine.low %v368, %v377
    %v5571 = vunpack.c.l.s4 1983009808
    %v5572 = vunpack.c.0.s8 %v5571
    %v5573 = vlaneseq
    %v5574 = vshrl.u32 %v5573, 7
    %v5575 = vsub.s32 %v5572, %v5574
    %v5576 = vrot.slane %v5569, %v5575
    %v5577 = vcombine.low %v4353, %v5576
    %v5578 = vcombine.low %v4370, %v4380
    %v5579 = vcombine.low %v410, %v418
    %v5581 = vunpack.c.l.s4 1983009808
    %v5582 = vunpack.c.0.s8 %v5581
    %v5583 = vlaneseq
    %v5584 = vshrl.u32 %v5583, 7
    %v5585 = vsub.s32 %v5582, %v5584
    %v5586 = vrot.slane %v5579, %v5585
    %v5587 = vcombine.low %v4387, %v5586
    %v5588 = vcombine.low %v4404, %v4414
    %v5589 = vcombine.low %v434, %v443
    %v5591 = vunpack.c.l.s4 1983009808
    %v5592 = vunpack.c.0.s8 %v5591
    %v5593 = vlaneseq
    %v5594 = vshrl.u32 %v5593, 7
    %v5595 = vsub.s32 %v5592, %v5594
    %v5596 = vrot.slane %v5589, %v5595
    %v5597 = vcombine.low %v5596, %v4431
    %v5598 = vcombine.low %v4438, %v4448
    %v5599 = vcombine.low %v476, %v484
    %v5601 = vunpack.c.l.s4 1983009808
    %v5602 = vunpack.c.0.s8 %v5601
    %v5603 = vlaneseq
    %v5604 = vshrl.u32 %v5603, 7
    %v5605 = vsub.s32 %v5602, %v5604
    %v5606 = vrot.slane %v5599, %v5605
    %v5607 = vcombine.low %v5606, %v4465
    %v5608 = vcombine.low %v500, %v509
    %v5610 = vunpack.c.l.s4 1983009808
    %v5611 = vunpack.c.0.s8 %v5610
    %v5612 = vlaneseq
    %v5613 = vshrl.u32 %v5612, 7
    %v5614 = vsub.s32 %v5611, %v5613
    %v5615 = vrot.slane %v5608, %v5614
    %v5616 = vcombine.low %v4472, %v5615
    %v5617 = vcombine.low %v4489, %v4499
    %v5618 = vcombine.low %v542, %v550
    %v5620 = vunpack.c.l.s4 1983009808
    %v5621 = vunpack.c.0.s8 %v5620
    %v5622 = vlaneseq
    %v5623 = vshrl.u32 %v5622, 7
    %v5624 = vsub.s32 %v5621, %v5623
    %v5625 = vrot.slane %v5618, %v5624
    %v5626 = vcombine.low %v4506, %v5625
    %v5627 = vcombine.low %v4523, %v4533
    %v5628 = vcombine.low %v566, %v575
    %v5630 = vunpack.c.l.s4 1983009808
    %v5631 = vunpack.c.0.s8 %v5630
    %v5632 = vlaneseq
    %v5633 = vshrl.u32 %v5632, 7
    %v5634 = vsub.s32 %v5631, %v5633
    %v5635 = vrot.slane %v5628, %v5634
    %v5636 = vcombine.low %v5635, %v4550
    %v5637 = vcombine.low %v4557, %v4567
    %v5638 = vcombine.low %v608, %v616
    %v5640 = vunpack.c.l.s4 1983009808
    %v5641 = vunpack.c.0.s8 %v5640
    %v5642 = vlaneseq
    %v5643 = vshrl.u32 %v5642, 7
    %v5644 = vsub.s32 %v5641, %v5643
    %v5645 = vrot.slane %v5638, %v5644
    %v5646 = vcombine.low %v5645, %v4584
    %v5647 = vcombine.low %v632, %v5462
    %v5649 = vunpack.c.l.s4 1983009808
    %v5650 = vunpack.c.0.s8 %v5649
    %v5651 = vlaneseq
    %v5652 = vshrl.u32 %v5651, 7
    %v5653 = vsub.s32 %v5650, %v5652
    %v5654 = vrot.slane %v5647, %v5653
    %v5655 = vcombine.low %v4591, %v5654
    %v5656 = vcombine.low %v5470, %v5469
    %v5657 = vcombine.low %v5471, %v5479
    %v5659 = vunpack.c.l.s4 1983009808
    %v5660 = vunpack.c.0.s8 %v5659
    %v5661 = vlaneseq
    %v5662 = vshrl.u32 %v5661, 7
    %v5663 = vsub.s32 %v5660, %v5662
    %v5664 = vrot.slane %v5656, %v5663
    %v5666 = vunpack.c.l.s4 1983009808
    %v5667 = vunpack.c.0.s8 %v5666
    %v5668 = vlaneseq
    %v5669 = vshrl.u32 %v5668, 7
    %v5670 = vsub.s32 %v5667, %v5669
    %v5671 = vrot.slane %v5657, %v5670
    %v5672 = vcombine.low %v5664, %v5671
    %v5673 = vcombine.low %v5487, %v5486
    %v5674 = vcombine.low %v674, %v682
    %v5676 = vunpack.c.l.s4 1983009808
    %v5677 = vunpack.c.0.s8 %v5676
    %v5678 = vlaneseq
    %v5679 = vshrl.u32 %v5678, 7
    %v5680 = vsub.s32 %v5677, %v5679
    %v5681 = vrot.slane %v5673, %v5680
    %v5683 = vunpack.c.l.s4 1983009808
    %v5684 = vunpack.c.0.s8 %v5683
    %v5685 = vlaneseq
    %v5686 = vshrl.u32 %v5685, 7
    %v5687 = vsub.s32 %v5684, %v5686
    %v5688 = vrot.slane %v5674, %v5687
    %v5689 = vcombine.low %v5681, %v5688
    %v5690 = vcombine.low %v4642, %v4652
    %v5691 = vcombine.low %v698, %v707
    %v5693 = vunpack.c.l.s4 1983009808
    %v5694 = vunpack.c.0.s8 %v5693
    %v5695 = vlaneseq
    %v5696 = vshrl.u32 %v5695, 7
    %v5697 = vsub.s32 %v5694, %v5696
    %v5698 = vrot.slane %v5691, %v5697
    %v5699 = vcombine.low %v5698, %v4669
    %v5700 = vcombine.low %v4676, %v4686
    %v5701 = vcombine.low %v740, %v748
    %v5703 = vunpack.c.l.s4 1983009808
    %v5704 = vunpack.c.0.s8 %v5703
    %v5705 = vlaneseq
    %v5706 = vshrl.u32 %v5705, 7
    %v5707 = vsub.s32 %v5704, %v5706
    %v5708 = vrot.slane %v5701, %v5707
    %v5709 = vcombine.low %v5708, %v4703
    %v5710 = vcombine.low %v764, %v773
    %v5712 = vunpack.c.l.s4 1983009808
    %v5713 = vunpack.c.0.s8 %v5712
    %v5714 = vlaneseq
    %v5715 = vshrl.u32 %v5714, 7
    %v5716 = vsub.s32 %v5713, %v5715
    %v5717 = vrot.slane %v5710, %v5716
    %v5718 = vcombine.low %v4710, %v5717
    %v5719 = vcombine.low %v4727, %v4737
    %v5720 = vcombine.low %v806, %v814
    %v5722 = vunpack.c.l.s4 1983009808
    %v5723 = vunpack.c.0.s8 %v5722
    %v5724 = vlaneseq
    %v5725 = vshrl.u32 %v5724, 7
    %v5726 = vsub.s32 %v5723, %v5725
    %v5727 = vrot.slane %v5720, %v5726
    %v5728 = vcombine.low %v4744, %v5727
    %v5729 = vcombine.low %v4761, %v4771
    %v5730 = vcombine.low %v830, %v839
    %v5732 = vunpack.c.l.s4 1983009808
    %v5733 = vunpack.c.0.s8 %v5732
    %v5734 = vlaneseq
    %v5735 = vshrl.u32 %v5734, 7
    %v5736 = vsub.s32 %v5733, %v5735
    %v5737 = vrot.slane %v5730, %v5736
    %v5738 = vcombine.low %v5737, %v4788
    %v5739 = vcombine.low %v4795, %v4805
    %v5740 = vcombine.low %v872, %v880
    %v5742 = vunpack.c.l.s4 1983009808
    %v5743 = vunpack.c.0.s8 %v5742
    %v5744 = vlaneseq
    %v5745 = vshrl.u32 %v5744, 7
    %v5746 = vsub.s32 %v5743, %v5745
    %v5747 = vrot.slane %v5740, %v5746
    %v5748 = vcombine.low %v5747, %v4822
    %v5749 = vcombine.low %v896, %v905
    %v5751 = vunpack.c.l.s4 1983009808
    %v5752 = vunpack.c.0.s8 %v5751
    %v5753 = vlaneseq
    %v5754 = vshrl.u32 %v5753, 7
    %v5755 = vsub.s32 %v5752, %v5754
    %v5756 = vrot.slane %v5749, %v5755
    %v5757 = vcombine.low %v4829, %v5756
    %v5758 = vcombine.low %v4846, %v4856
    %v5759 = vcombine.low %v938, %v946
    %v5761 = vunpack.c.l.s4 1983009808
    %v5762 = vunpack.c.0.s8 %v5761
    %v5763 = vlaneseq
    %v5764 = vshrl.u32 %v5763, 7
    %v5765 = vsub.s32 %v5762, %v5764
    %v5766 = vrot.slane %v5759, %v5765
    %v5767 = vcombine.low %v4863, %v5766
    %v5768 = vcombine.low %v4880, %v4890
    %v5769 = vcombine.low %v962, %v971
    %v5771 = vunpack.c.l.s4 1983009808
    %v5772 = vunpack.c.0.s8 %v5771
    %v5773 = vlaneseq
    %v5774 = vshrl.u32 %v5773, 7
    %v5775 = vsub.s32 %v5772, %v5774
    %v5776 = vrot.slane %v5769, %v5775
    %v5777 = vcombine.low %v5776, %v4907
    %v5778 = vcombine.low %v4914, %v4924
    %v5779 = vcombine.low %v1004, %v1012
    %v5781 = vunpack.c.l.s4 1983009808
    %v5782 = vunpack.c.0.s8 %v5781
    %v5783 = vlaneseq
    %v5784 = vshrl.u32 %v5783, 7
    %v5785 = vsub.s32 %v5782, %v5784
    %v5786 = vrot.slane %v5779, %v5785
    %v5787 = vcombine.low %v5786, %v4941
    %v5788 = vcombine.low %v1028, %v1037
    %v5790 = vunpack.c.l.s4 1983009808
    %v5791 = vunpack.c.0.s8 %v5790
    %v5792 = vlaneseq
    %v5793 = vshrl.u32 %v5792, 7
    %v5794 = vsub.s32 %v5791, %v5793
    %v5795 = vrot.slane %v5788, %v5794
    %v5796 = vcombine.low %v4948, %v5795
    %v5797 = vcombine.low %v4965, %v4975
    %v5798 = vcombine.low %v1070, %v1078
    %v5800 = vunpack.c.l.s4 1983009808
    %v5801 = vunpack.c.0.s8 %v5800
    %v5802 = vlaneseq
    %v5803 = vshrl.u32 %v5802, 7
    %v5804 = vsub.s32 %v5801, %v5803
    %v5805 = vrot.slane %v5798, %v5804
    %v5806 = vcombine.low %v4982, %v5805
    %v5807 = vcombine.low %v4999, %v5009
    %v5808 = vcombine.low %v1094, %v5495
    %v5809 = vcombine.low %v5503, %v5502
    %v5811 = vunpack.c.l.s4 1983009808
    %v5812 = vunpack.c.0.s8 %v5811
    %v5813 = vlaneseq
    %v5814 = vshrl.u32 %v5813, 7
    %v5815 = vsub.s32 %v5812, %v5814
    %v5816 = vrot.slane %v5808, %v5815
    %v5818 = vunpack.c.l.s4 1983009808
    %v5819 = vunpack.c.0.s8 %v5818
    %v5820 = vlaneseq
    %v5821 = vshrl.u32 %v5820, 7
    %v5822 = vsub.s32 %v5819, %v5821
    %v5823 = vrot.slane %v5809, %v5822
    %v5824 = vcombine.low %v5816, %v5823
    %v5825 = vcombine.low %v5504, %v5512
    %v5826 = vcombine.low %v5520, %v5519
    %v5828 = vunpack.c.l.s4 1983009808
    %v5829 = vunpack.c.0.s8 %v5828
    %v5830 = vlaneseq
    %v5831 = vshrl.u32 %v5830, 7
    %v5832 = vsub.s32 %v5829, %v5831
    %v5833 = vrot.slane %v5825, %v5832
    %v5835 = vunpack.c.l.s4 1983009808
    %v5836 = vunpack.c.0.s8 %v5835
    %v5837 = vlaneseq
    %v5838 = vshrl.u32 %v5837, 7
    %v5839 = vsub.s32 %v5836, %v5838
    %v5840 = vrot.slane %v5826, %v5839
    %v5841 = vcombine.low %v5833, %v5840
    %v5891 = vpack.c.bf16 %v5538, %v5529
    %v5892 = vpack.c.bf16 %v5548, %v5539
    %v5893 = vpack.c.bf16 %v5558, %v5549
    %v5894 = vpack.c.bf16 %v5568, %v5559
    %v5895 = vpack.c.bf16 %v5578, %v5577
    %v5896 = vpack.c.bf16 %v5588, %v5587
    %v5897 = vpack.c.bf16 %v5598, %v5597
    %v5898 = vpack.c.bf16 %v5616, %v5607
    %v5899 = vpack.c.bf16 %v5626, %v5617
    %v5900 = vpack.c.bf16 %v5636, %v5627
    %v5901 = vpack.c.bf16 %v5646, %v5637
    %v5902 = vpack.c.bf16 %v5672, %v5655
    %v5903 = vpack.c.bf16 %v5690, %v5689
    %v5904 = vpack.c.bf16 %v5700, %v5699
    %v5905 = vpack.c.bf16 %v5718, %v5709
    %v5906 = vpack.c.bf16 %v5728, %v5719
    %v5907 = vpack.c.bf16 %v5738, %v5729
    %v5908 = vpack.c.bf16 %v5748, %v5739
    %v5909 = vpack.c.bf16 %v5758, %v5757
    %v5910 = vpack.c.bf16 %v5768, %v5767
    %v5911 = vpack.c.bf16 %v5778, %v5777
    %v5912 = vpack.c.bf16 %v5796, %v5787
    %v5913 = vpack.c.bf16 %v5806, %v5797
    %v5914 = vpack.c.bf16 %v5824, %v5807
    %v5915 = vpack.c.bf16 %v5841, %v5841
    %v5917 = vsel %vm3561, %v5891, 0
    %v5920 = vsel %vm3561, %v5892, 0
    %v5923 = vsel %vm3561, %v5893, 0
    %v5926 = vsel %vm3561, %v5894, 0
    %v5929 = vsel %vm3561, %v5895, 0
    %v5932 = vsel %vm3561, %v5896, 0
    %v5935 = vsel %vm3561, %v5897, 0
    %v5938 = vsel %vm3561, %v5898, 0
    %v5941 = vsel %vm3561, %v5899, 0
    %v5944 = vsel %vm3561, %v5900, 0
    %v5947 = vsel %vm3561, %v5901, 0
    %v5950 = vsel %vm3561, %v5902, 0
    %v5953 = vsel %vm3561, %v5903, 0
    %v5956 = vsel %vm3561, %v5904, 0
    %v5959 = vsel %vm3561, %v5905, 0
    %v5962 = vsel %vm3561, %v5906, 0
    %v5965 = vsel %vm3561, %v5907, 0
    %v5968 = vsel %vm3561, %v5908, 0
    %v5971 = vsel %vm3561, %v5909, 0
    %v5974 = vsel %vm3561, %v5910, 0
    %v5977 = vsel %vm3561, %v5911, 0
    %v5980 = vsel %vm3561, %v5912, 0
    %v5983 = vsel %vm3561, %v5913, 0
    %v5986 = vsel %vm3561, %v5914, 0
    %v5989 = vsel %vm3561, %v5915, 0
    %v5992 = vand.u32 %v110, %v3639
    %5994 = vmatprep.subr.bf16.mxu0 0
    %5995 = vmatpush1.bf16.msra.mxu0 %v5992
    %5996 = vmatprep.subr.bf16.mxu0 0
    %5997 = vmatpush1.bf16.msra.mxu0 0
    %5998 = vmatprep.subr.bf16.mxu0 0
    %5999 = vmatpush1.bf16.msra.mxu0 0
    %6000 = vmatprep.subr.bf16.mxu0 0
    %6001 = vmatpush1.bf16.msra.mxu0 0
    %6002 = vmatprep.subr.bf16.mxu0 0
    %6003 = vmatpush1.bf16.msra.mxu0 0
    %6004 = vmatprep.subr.bf16.mxu0 0
    %6005 = vmatpush1.bf16.msra.mxu0 0
    %6006 = vmatprep.subr.bf16.mxu0 0
    %6007 = vmatpush1.bf16.msra.mxu0 0
    %6008 = vmatprep.subr.bf16.mxu0 0
    %6009 = vmatpush1.bf16.msra.mxu0 0
    %6010 = vmatprep.subr.bf16.mxu0 0
    %6011 = vmatpush1.bf16.msra.mxu0 0
    %6012 = vmatprep.subr.bf16.mxu0 0
    %6013 = vmatpush1.bf16.msra.mxu0 0
    %6014 = vmatprep.subr.bf16.mxu0 0
    %6015 = vmatpush1.bf16.msra.mxu0 0
    %6016 = vmatprep.subr.bf16.mxu0 0
    %6017 = vmatpush1.bf16.msra.mxu0 0
    %6018 = vmatprep.subr.bf16.mxu0 0
    %6019 = vmatpush1.bf16.msra.mxu0 0
    %6020 = vmatprep.subr.bf16.mxu0 0
    %6021 = vmatpush1.bf16.msra.mxu0 0
    %6022 = vmatprep.subr.bf16.mxu0 0
    %6023 = vmatpush1.bf16.msra.mxu0 0
    %6024 = vmatprep.subr.bf16.mxu0 0
    %6025 = vmatpush1.bf16.msra.mxu0 0
    %6026 = vmatprep.mubr.bf16.mxu0 0
    %6027 = vmatmul.mubr.bf16.gmra.mrb[0].mxu0 %v5917
    %v6028 = vpop.f32.mrb[0].mxu0
    %v6029 = vadd.f32 0.0, %v6028
    %v6030 = vpop.f32.mrb[0].mxu0
    %v6031 = vpop.f32.mrb[0].mxu0
    %v6032 = vadd.f32 0.0, %v6031
    %v6033 = vpop.f32.mrb[0].mxu0
    %6034 = vmatprep.mubr.bf16.mxu0 0
    %6035 = vmatmul.mubr.bf16.gmra.mrb[0].mxu0 %v5920
    %v6036 = vpop.f32.mrb[0].mxu0
    %v6037 = vadd.f32 0.0, %v6036
    %v6038 = vpop.f32.mrb[0].mxu0
    %v6039 = vpop.f32.mrb[0].mxu0
    %v6040 = vadd.f32 0.0, %v6039
    %v6041 = vpop.f32.mrb[0].mxu0
    %6042 = vmatprep.mubr.bf16.mxu0 0
    %6043 = vmatmul.mubr.bf16.gmra.mrb[0].mxu0 %v5923
    %v6044 = vpop.f32.mrb[0].mxu0
    %v6045 = vadd.f32 0.0, %v6044
    %v6046 = vpop.f32.mrb[0].mxu0
    %v6047 = vpop.f32.mrb[0].mxu0
    %v6048 = vadd.f32 0.0, %v6047
    %v6049 = vpop.f32.mrb[0].mxu0
    %6050 = vmatprep.mubr.bf16.mxu0 0
    %6051 = vmatmul.mubr.bf16.gmra.mrb[0].mxu0 %v5926
    %v6052 = vpop.f32.mrb[0].mxu0
    %v6053 = vadd.f32 0.0, %v6052
    %v6054 = vpop.f32.mrb[0].mxu0
    %v6055 = vpop.f32.mrb[0].mxu0
    %v6056 = vadd.f32 0.0, %v6055
    %v6057 = vpop.f32.mrb[0].mxu0
    %6058 = vmatprep.mubr.bf16.mxu0 0
    %6059 = vmatmul.mubr.bf16.gmra.mrb[0].mxu0 %v5929
    %v6060 = vpop.f32.mrb[0].mxu0
    %v6061 = vadd.f32 0.0, %v6060
    %v6062 = vpop.f32.mrb[0].mxu0
    %v6063 = vpop.f32.mrb[0].mxu0
    %v6064 = vadd.f32 0.0, %v6063
    %v6065 = vpop.f32.mrb[0].mxu0
    %6066 = vmatprep.mubr.bf16.mxu0 0
    %6067 = vmatmul.mubr.bf16.gmra.mrb[0].mxu0 %v5932
    %v6068 = vpop.f32.mrb[0].mxu0
    %v6069 = vadd.f32 0.0, %v6068
    %v6070 = vpop.f32.mrb[0].mxu0
    %v6071 = vpop.f32.mrb[0].mxu0
    %v6072 = vadd.f32 0.0, %v6071
    %v6073 = vpop.f32.mrb[0].mxu0
    %6074 = vmatprep.mubr.bf16.mxu0 0
    %6075 = vmatmul.mubr.bf16.gmra.mrb[0].mxu0 %v5935
    %v6076 = vpop.f32.mrb[0].mxu0
    %v6077 = vadd.f32 0.0, %v6076
    %v6078 = vpop.f32.mrb[0].mxu0
    %v6079 = vpop.f32.mrb[0].mxu0
    %v6080 = vadd.f32 0.0, %v6079
    %v6081 = vpop.f32.mrb[0].mxu0
    %6082 = vmatprep.mubr.bf16.mxu0 0
    %6083 = vmatmul.mubr.bf16.gmra.mrb[0].mxu0 %v5938
    %v6084 = vpop.f32.mrb[0].mxu0
    %v6085 = vadd.f32 0.0, %v6084
    %v6086 = vpop.f32.mrb[0].mxu0
    %v6087 = vpop.f32.mrb[0].mxu0
    %v6088 = vadd.f32 0.0, %v6087
    %v6089 = vpop.f32.mrb[0].mxu0
    %6090 = vmatprep.mubr.bf16.mxu0 0
    %6091 = vmatmul.mubr.bf16.gmra.mrb[0].mxu0 %v5941
    %v6092 = vpop.f32.mrb[0].mxu0
    %v6093 = vadd.f32 0.0, %v6092
    %v6094 = vpop.f32.mrb[0].mxu0
    %v6095 = vpop.f32.mrb[0].mxu0
    %v6096 = vadd.f32 0.0, %v6095
    %v6097 = vpop.f32.mrb[0].mxu0
    %6098 = vmatprep.mubr.bf16.mxu0 0
    %6099 = vmatmul.mubr.bf16.gmra.mrb[0].mxu0 %v5944
    %v6100 = vpop.f32.mrb[0].mxu0
    %v6101 = vadd.f32 0.0, %v6100
    %v6102 = vpop.f32.mrb[0].mxu0
    %v6103 = vpop.f32.mrb[0].mxu0
    %v6104 = vadd.f32 0.0, %v6103
    %v6105 = vpop.f32.mrb[0].mxu0
    %6106 = vmatprep.mubr.bf16.mxu0 0
    %6107 = vmatmul.mubr.bf16.gmra.mrb[0].mxu0 %v5947
    %v6108 = vpop.f32.mrb[0].mxu0
    %v6109 = vadd.f32 0.0, %v6108
    %v6110 = vpop.f32.mrb[0].mxu0
    %v6111 = vpop.f32.mrb[0].mxu0
    %v6112 = vadd.f32 0.0, %v6111
    %v6113 = vpop.f32.mrb[0].mxu0
    %6114 = vmatprep.mubr.bf16.mxu0 0
    %6115 = vmatmul.mubr.bf16.gmra.mrb[0].mxu0 %v5950
    %v6116 = vpop.f32.mrb[0].mxu0
    %v6117 = vadd.f32 0.0, %v6116
    %v6118 = vpop.f32.mrb[0].mxu0
    %v6119 = vpop.f32.mrb[0].mxu0
    %v6120 = vadd.f32 0.0, %v6119
    %v6121 = vpop.f32.mrb[0].mxu0
    %6122 = vmatprep.mubr.bf16.mxu0 0
    %6123 = vmatmul.mubr.bf16.gmra.mrb[0].mxu0 %v5953
    %v6124 = vpop.f32.mrb[0].mxu0
    %v6125 = vadd.f32 0.0, %v6124
    %v6126 = vpop.f32.mrb[0].mxu0
    %v6127 = vpop.f32.mrb[0].mxu0
    %v6128 = vadd.f32 0.0, %v6127
    %v6129 = vpop.f32.mrb[0].mxu0
    %6130 = vmatprep.mubr.bf16.mxu0 0
    %6131 = vmatmul.mubr.bf16.gmra.mrb[0].mxu0 %v5956
    %v6132 = vpop.f32.mrb[0].mxu0
    %v6133 = vadd.f32 0.0, %v6132
    %v6134 = vpop.f32.mrb[0].mxu0
    %v6135 = vpop.f32.mrb[0].mxu0
    %v6136 = vadd.f32 0.0, %v6135
    %v6137 = vpop.f32.mrb[0].mxu0
    %6138 = vmatprep.mubr.bf16.mxu0 0
    %6139 = vmatmul.mubr.bf16.gmra.mrb[0].mxu0 %v5959
    %v6140 = vpop.f32.mrb[0].mxu0
    %v6141 = vadd.f32 0.0, %v6140
    %v6142 = vpop.f32.mrb[0].mxu0
    %v6143 = vpop.f32.mrb[0].mxu0
    %v6144 = vadd.f32 0.0, %v6143
    %v6145 = vpop.f32.mrb[0].mxu0
    %6146 = vmatprep.mubr.bf16.mxu0 0
    %6147 = vmatmul.mubr.bf16.gmra.mrb[0].mxu0 %v5962
    %v6148 = vpop.f32.mrb[0].mxu0
    %v6149 = vadd.f32 0.0, %v6148
    %v6150 = vpop.f32.mrb[0].mxu0
    %v6151 = vpop.f32.mrb[0].mxu0
    %v6152 = vadd.f32 0.0, %v6151
    %v6153 = vpop.f32.mrb[0].mxu0
    %6154 = vmatprep.mubr.bf16.mxu0 0
    %6155 = vmatmul.mubr.bf16.gmra.mrb[0].mxu0 %v5965
    %v6156 = vpop.f32.mrb[0].mxu0
    %v6157 = vadd.f32 0.0, %v6156
    %v6158 = vpop.f32.mrb[0].mxu0
    %v6159 = vpop.f32.mrb[0].mxu0
    %v6160 = vadd.f32 0.0, %v6159
    %v6161 = vpop.f32.mrb[0].mxu0
    %6162 = vmatprep.mubr.bf16.mxu0 0
    %6163 = vmatmul.mubr.bf16.gmra.mrb[0].mxu0 %v5968
    %v6164 = vpop.f32.mrb[0].mxu0
    %v6165 = vadd.f32 0.0, %v6164
    %v6166 = vpop.f32.mrb[0].mxu0
    %v6167 = vpop.f32.mrb[0].mxu0
    %v6168 = vadd.f32 0.0, %v6167
    %v6169 = vpop.f32.mrb[0].mxu0
    %6170 = vmatprep.mubr.bf16.mxu0 0
    %6171 = vmatmul.mubr.bf16.gmra.mrb[0].mxu0 %v5971
    %v6172 = vpop.f32.mrb[0].mxu0
    %v6173 = vadd.f32 0.0, %v6172
    %v6174 = vpop.f32.mrb[0].mxu0
    %v6175 = vpop.f32.mrb[0].mxu0
    %v6176 = vadd.f32 0.0, %v6175
    %v6177 = vpop.f32.mrb[0].mxu0
    %6178 = vmatprep.mubr.bf16.mxu0 0
    %6179 = vmatmul.mubr.bf16.gmra.mrb[0].mxu0 %v5974
    %v6180 = vpop.f32.mrb[0].mxu0
    %v6181 = vadd.f32 0.0, %v6180
    %v6182 = vpop.f32.mrb[0].mxu0
    %v6183 = vpop.f32.mrb[0].mxu0
    %v6184 = vadd.f32 0.0, %v6183
    %v6185 = vpop.f32.mrb[0].mxu0
    %6186 = vmatprep.mubr.bf16.mxu0 0
    %6187 = vmatmul.mubr.bf16.gmra.mrb[0].mxu0 %v5977
    %v6188 = vpop.f32.mrb[0].mxu0
    %v6189 = vadd.f32 0.0, %v6188
    %v6190 = vpop.f32.mrb[0].mxu0
    %v6191 = vpop.f32.mrb[0].mxu0
    %v6192 = vadd.f32 0.0, %v6191
    %v6193 = vpop.f32.mrb[0].mxu0
    %6194 = vmatprep.mubr.bf16.mxu0 0
    %6195 = vmatmul.mubr.bf16.gmra.mrb[0].mxu0 %v5980
    %v6196 = vpop.f32.mrb[0].mxu0
    %v6197 = vadd.f32 0.0, %v6196
    %v6198 = vpop.f32.mrb[0].mxu0
    %v6199 = vpop.f32.mrb[0].mxu0
    %v6200 = vadd.f32 0.0, %v6199
    %v6201 = vpop.f32.mrb[0].mxu0
    %6202 = vmatprep.mubr.bf16.mxu0 0
    %6203 = vmatmul.mubr.bf16.gmra.mrb[0].mxu0 %v5983
    %v6204 = vpop.f32.mrb[0].mxu0
    %v6205 = vadd.f32 0.0, %v6204
    %v6206 = vpop.f32.mrb[0].mxu0
    %v6207 = vpop.f32.mrb[0].mxu0
    %v6208 = vadd.f32 0.0, %v6207
    %v6209 = vpop.f32.mrb[0].mxu0
    %6210 = vmatprep.mubr.bf16.mxu0 0
    %6211 = vmatmul.mubr.bf16.gmra.mrb[0].mxu0 %v5986
    %v6212 = vpop.f32.mrb[0].mxu0
    %v6213 = vadd.f32 0.0, %v6212
    %v6214 = vpop.f32.mrb[0].mxu0
    %v6215 = vpop.f32.mrb[0].mxu0
    %v6216 = vadd.f32 0.0, %v6215
    %v6217 = vpop.f32.mrb[0].mxu0
    %6218 = vmatprep.mubr.bf16.mxu0 0
    %6219 = vmatmul.mubr.bf16.gmra.mrb[0].mxu0 %v5989
    %v6220 = vpop.f32.mrb[0].mxu0
    %v6221 = vadd.f32 0.0, %v6220
    %v6222 = vpop.f32.mrb[0].mxu0
    %v6223 = vpop.f32.mrb[0].mxu0
    %v6224 = vpop.f32.mrb[0].mxu0
    %6225 = vdwg.mxu0
    %v6226 = vadd.f32 %v5402, %v6029
    %v6227 = vadd.f32 %v5403, %v6032
    %v6228 = vadd.f32 %v5404, %v6037
    %v6229 = vadd.f32 %v5405, %v6040
    %v6230 = vadd.f32 %v5406, %v6045
    %v6231 = vadd.f32 %v5407, %v6048
    %v6232 = vadd.f32 %v5408, %v6053
    %v6233 = vadd.f32 %v5409, %v6056
    %v6234 = vadd.f32 %v5410, %v6061
    %v6235 = vadd.f32 %v5411, %v6064
    %v6236 = vadd.f32 %v5412, %v6069
    %v6237 = vadd.f32 %v5413, %v6072
    %v6238 = vadd.f32 %v5414, %v6077
    %v6239 = vadd.f32 %v5415, %v6080
    %v6240 = vadd.f32 %v5416, %v6085
    %v6241 = vadd.f32 %v5417, %v6088
    %v6242 = vadd.f32 %v5418, %v6093
    %v6243 = vadd.f32 %v5419, %v6096
    %v6244 = vadd.f32 %v5420, %v6101
    %v6245 = vadd.f32 %v5421, %v6104
    %v6246 = vadd.f32 %v5422, %v6109
    %v6247 = vadd.f32 %v5423, %v6112
    %v6248 = vadd.f32 %v5424, %v6117
    %v6249 = vadd.f32 %v5425, %v6120
    %v6250 = vadd.f32 %v5426, %v6125
    %v6251 = vadd.f32 %v5427, %v6128
    %v6252 = vadd.f32 %v5428, %v6133
    %v6253 = vadd.f32 %v5429, %v6136
    %v6254 = vadd.f32 %v5430, %v6141
    %v6255 = vadd.f32 %v5431, %v6144
    %v6256 = vadd.f32 %v5432, %v6149
    %v6257 = vadd.f32 %v5433, %v6152
    %v6258 = vadd.f32 %v5434, %v6157
    %v6259 = vadd.f32 %v5435, %v6160
    %v6260 = vadd.f32 %v5436, %v6165
    %v6261 = vadd.f32 %v5437, %v6168
    %v6262 = vadd.f32 %v5438, %v6173
    %v6263 = vadd.f32 %v5439, %v6176
    %v6264 = vadd.f32 %v5440, %v6181
    %v6265 = vadd.f32 %v5441, %v6184
    %v6266 = vadd.f32 %v5442, %v6189
    %v6267 = vadd.f32 %v5443, %v6192
    %v6268 = vadd.f32 %v5444, %v6197
    %v6269 = vadd.f32 %v5445, %v6200
    %v6270 = vadd.f32 %v5446, %v6205
    %v6271 = vadd.f32 %v5447, %v6208
    %v6272 = vadd.f32 %v5448, %v6213
    %v6273 = vadd.f32 %v5449, %v6216
    %v6274 = vadd.f32 %v5450, %v6221
    %v6275 = vcombine.high %v5486, %v5486
    %v6276 = vcombine.high %v5519, %v5519
    %v6277 = vrot.slane %v5462, 7
    %v6278 = vrot.slane %v6277, 2
    %v6279 = vrot.slane %v5470, 7
    %v6280 = vsel %vm2037, %v6278, %v6279
    %v6281 = vrot.slane %v6279, 2
    %v6282 = vrot.slane %v5469, 7
    %v6283 = vsel %vm2037, %v6281, %v6282
    %v6284 = vrot.slane %v6282, 2
    %v6285 = vrot.slane %v5471, 7
    %v6286 = vsel %vm2037, %v6284, %v6285
    %v6287 = vrot.slane %v6285, 2
    %v6288 = vrot.slane %v5479, 7
    %v6289 = vsel %vm2037, %v6287, %v6288
    %v6290 = vrot.slane %v6288, 2
    %v6291 = vrot.slane %v5487, 7
    %v6292 = vsel %vm2037, %v6290, %v6291
    %v6293 = vrot.slane %v6291, 2
    %v6294 = vrot.slane %v5486, 7
    %v6295 = vsel %vm2037, %v6293, %v6294
    %v6296 = vrot.slane %v6294, 2
    %v6297 = vrot.slane %v6275, 7
    %v6298 = vsel %vm2037, %v6296, %v6297
    %v6299 = vrot.slane %v5495, 7
    %v6300 = vrot.slane %v6299, 2
    %v6301 = vrot.slane %v5503, 7
    %v6302 = vsel %vm2037, %v6300, %v6301
    %v6303 = vrot.slane %v6301, 2
    %v6304 = vrot.slane %v5502, 7
    %v6305 = vsel %vm2037, %v6303, %v6304
    %v6306 = vrot.slane %v6304, 2
    %v6307 = vrot.slane %v5504, 7
    %v6308 = vsel %vm2037, %v6306, %v6307
    %v6309 = vrot.slane %v6307, 2
    %v6310 = vrot.slane %v5512, 7
    %v6311 = vsel %vm2037, %v6309, %v6310
    %v6312 = vrot.slane %v6310, 2
    %v6313 = vrot.slane %v5520, 7
    %v6314 = vsel %vm2037, %v6312, %v6313
    %v6315 = vrot.slane %v6313, 2
    %v6316 = vrot.slane %v5519, 7
    %v6317 = vsel %vm2037, %v6315, %v6316
    %v6318 = vrot.slane %v6316, 2
    %v6319 = vrot.slane %v6276, 7
    %v6320 = vsel %vm2037, %v6318, %v6319
    %v6321 = vcombine.low %v2063, %v2066
    %v6322 = vcombine.low %v2069, %v2072
    %v6324 = vunpack.c.l.s4 1983009808
    %v6325 = vunpack.c.0.s8 %v6324
    %v6326 = vlaneseq
    %v6327 = vshrl.u32 %v6326, 7
    %v6328 = vsub.s32 %v6325, %v6327
    %v6329 = vrot.slane %v6321, %v6328
    %v6331 = vunpack.c.l.s4 1983009808
    %v6332 = vunpack.c.0.s8 %v6331
    %v6333 = vlaneseq
    %v6334 = vshrl.u32 %v6333, 7
    %v6335 = vsub.s32 %v6332, %v6334
    %v6336 = vrot.slane %v6322, %v6335
    %v6337 = vcombine.low %v6329, %v6336
    %v6338 = vcombine.low %v2075, %v2078
    %v6339 = vcombine.low %v2081, %v2085
    %v6341 = vunpack.c.l.s4 1983009808
    %v6342 = vunpack.c.0.s8 %v6341
    %v6343 = vlaneseq
    %v6344 = vshrl.u32 %v6343, 7
    %v6345 = vsub.s32 %v6342, %v6344
    %v6346 = vrot.slane %v6338, %v6345
    %v6348 = vunpack.c.l.s4 1983009808
    %v6349 = vunpack.c.0.s8 %v6348
    %v6350 = vlaneseq
    %v6351 = vshrl.u32 %v6350, 7
    %v6352 = vsub.s32 %v6349, %v6351
    %v6353 = vrot.slane %v6339, %v6352
    %v6354 = vcombine.low %v6346, %v6353
    %v6355 = vcombine.low %v2088, %v2091
    %v6356 = vcombine.low %v2094, %v2097
    %v6358 = vunpack.c.l.s4 1983009808
    %v6359 = vunpack.c.0.s8 %v6358
    %v6360 = vlaneseq
    %v6361 = vshrl.u32 %v6360, 7
    %v6362 = vsub.s32 %v6359, %v6361
    %v6363 = vrot.slane %v6355, %v6362
    %v6365 = vunpack.c.l.s4 1983009808
    %v6366 = vunpack.c.0.s8 %v6365
    %v6367 = vlaneseq
    %v6368 = vshrl.u32 %v6367, 7
    %v6369 = vsub.s32 %v6366, %v6368
    %v6370 = vrot.slane %v6356, %v6369
    %v6371 = vcombine.low %v6363, %v6370
    %v6372 = vcombine.low %v2100, %v2103
    %v6373 = vcombine.low %v2107, %v2110
    %v6375 = vunpack.c.l.s4 1983009808
    %v6376 = vunpack.c.0.s8 %v6375
    %v6377 = vlaneseq
    %v6378 = vshrl.u32 %v6377, 7
    %v6379 = vsub.s32 %v6376, %v6378
    %v6380 = vrot.slane %v6372, %v6379
    %v6382 = vunpack.c.l.s4 1983009808
    %v6383 = vunpack.c.0.s8 %v6382
    %v6384 = vlaneseq
    %v6385 = vshrl.u32 %v6384, 7
    %v6386 = vsub.s32 %v6383, %v6385
    %v6387 = vrot.slane %v6373, %v6386
    %v6388 = vcombine.low %v6380, %v6387
    %v6389 = vcombine.low %v2113, %v2116
    %v6390 = vcombine.low %v2119, %v2122
    %v6392 = vunpack.c.l.s4 1983009808
    %v6393 = vunpack.c.0.s8 %v6392
    %v6394 = vlaneseq
    %v6395 = vshrl.u32 %v6394, 7
    %v6396 = vsub.s32 %v6393, %v6395
    %v6397 = vrot.slane %v6389, %v6396
    %v6399 = vunpack.c.l.s4 1983009808
    %v6400 = vunpack.c.0.s8 %v6399
    %v6401 = vlaneseq
    %v6402 = vshrl.u32 %v6401, 7
    %v6403 = vsub.s32 %v6400, %v6402
    %v6404 = vrot.slane %v6390, %v6403
    %v6405 = vcombine.low %v6397, %v6404
    %v6406 = vcombine.low %v2125, %v2129
    %v6407 = vcombine.low %v2132, %v2135
    %v6409 = vunpack.c.l.s4 1983009808
    %v6410 = vunpack.c.0.s8 %v6409
    %v6411 = vlaneseq
    %v6412 = vshrl.u32 %v6411, 7
    %v6413 = vsub.s32 %v6410, %v6412
    %v6414 = vrot.slane %v6406, %v6413
    %v6416 = vunpack.c.l.s4 1983009808
    %v6417 = vunpack.c.0.s8 %v6416
    %v6418 = vlaneseq
    %v6419 = vshrl.u32 %v6418, 7
    %v6420 = vsub.s32 %v6417, %v6419
    %v6421 = vrot.slane %v6407, %v6420
    %v6422 = vcombine.low %v6414, %v6421
    %v6423 = vcombine.low %v2138, %v2141
    %v6424 = vcombine.low %v2144, %v2147
    %v6426 = vunpack.c.l.s4 1983009808
    %v6427 = vunpack.c.0.s8 %v6426
    %v6428 = vlaneseq
    %v6429 = vshrl.u32 %v6428, 7
    %v6430 = vsub.s32 %v6427, %v6429
    %v6431 = vrot.slane %v6423, %v6430
    %v6433 = vunpack.c.l.s4 1983009808
    %v6434 = vunpack.c.0.s8 %v6433
    %v6435 = vlaneseq
    %v6436 = vshrl.u32 %v6435, 7
    %v6437 = vsub.s32 %v6434, %v6436
    %v6438 = vrot.slane %v6424, %v6437
    %v6439 = vcombine.low %v6431, %v6438
    %v6440 = vcombine.low %v2151, %v2154
    %v6441 = vcombine.low %v2157, %v2160
    %v6443 = vunpack.c.l.s4 1983009808
    %v6444 = vunpack.c.0.s8 %v6443
    %v6445 = vlaneseq
    %v6446 = vshrl.u32 %v6445, 7
    %v6447 = vsub.s32 %v6444, %v6446
    %v6448 = vrot.slane %v6440, %v6447
    %v6450 = vunpack.c.l.s4 1983009808
    %v6451 = vunpack.c.0.s8 %v6450
    %v6452 = vlaneseq
    %v6453 = vshrl.u32 %v6452, 7
    %v6454 = vsub.s32 %v6451, %v6453
    %v6455 = vrot.slane %v6441, %v6454
    %v6456 = vcombine.low %v6448, %v6455
    %v6457 = vcombine.low %v2163, %v2166
    %v6458 = vcombine.low %v2169, %v2173
    %v6460 = vunpack.c.l.s4 1983009808
    %v6461 = vunpack.c.0.s8 %v6460
    %v6462 = vlaneseq
    %v6463 = vshrl.u32 %v6462, 7
    %v6464 = vsub.s32 %v6461, %v6463
    %v6465 = vrot.slane %v6457, %v6464
    %v6467 = vunpack.c.l.s4 1983009808
    %v6468 = vunpack.c.0.s8 %v6467
    %v6469 = vlaneseq
    %v6470 = vshrl.u32 %v6469, 7
    %v6471 = vsub.s32 %v6468, %v6470
    %v6472 = vrot.slane %v6458, %v6471
    %v6473 = vcombine.low %v6465, %v6472
    %v6474 = vcombine.low %v2176, %v2179
    %v6475 = vcombine.low %v2182, %v2185
    %v6477 = vunpack.c.l.s4 1983009808
    %v6478 = vunpack.c.0.s8 %v6477
    %v6479 = vlaneseq
    %v6480 = vshrl.u32 %v6479, 7
    %v6481 = vsub.s32 %v6478, %v6480
    %v6482 = vrot.slane %v6474, %v6481
    %v6484 = vunpack.c.l.s4 1983009808
    %v6485 = vunpack.c.0.s8 %v6484
    %v6486 = vlaneseq
    %v6487 = vshrl.u32 %v6486, 7
    %v6488 = vsub.s32 %v6485, %v6487
    %v6489 = vrot.slane %v6475, %v6488
    %v6490 = vcombine.low %v6482, %v6489
    %v6491 = vcombine.low %v2188, %v2191
    %v6492 = vcombine.low %v2195, %v2198
    %v6494 = vunpack.c.l.s4 1983009808
    %v6495 = vunpack.c.0.s8 %v6494
    %v6496 = vlaneseq
    %v6497 = vshrl.u32 %v6496, 7
    %v6498 = vsub.s32 %v6495, %v6497
    %v6499 = vrot.slane %v6491, %v6498
    %v6501 = vunpack.c.l.s4 1983009808
    %v6502 = vunpack.c.0.s8 %v6501
    %v6503 = vlaneseq
    %v6504 = vshrl.u32 %v6503, 7
    %v6505 = vsub.s32 %v6502, %v6504
    %v6506 = vrot.slane %v6492, %v6505
    %v6507 = vcombine.low %v6499, %v6506
    %v6508 = vcombine.low %v2201, %v2204
    %v6509 = vcombine.low %v2207, %v2210
    %v6511 = vunpack.c.l.s4 1983009808
    %v6512 = vunpack.c.0.s8 %v6511
    %v6513 = vlaneseq
    %v6514 = vshrl.u32 %v6513, 7
    %v6515 = vsub.s32 %v6512, %v6514
    %v6516 = vrot.slane %v6508, %v6515
    %v6518 = vunpack.c.l.s4 1983009808
    %v6519 = vunpack.c.0.s8 %v6518
    %v6520 = vlaneseq
    %v6521 = vshrl.u32 %v6520, 7
    %v6522 = vsub.s32 %v6519, %v6521
    %v6523 = vrot.slane %v6509, %v6522
    %v6524 = vcombine.low %v6516, %v6523
    %v6525 = vcombine.low %v2213, %v2217
    %v6526 = vcombine.low %v2220, %v2223
    %v6528 = vunpack.c.l.s4 1983009808
    %v6529 = vunpack.c.0.s8 %v6528
    %v6530 = vlaneseq
    %v6531 = vshrl.u32 %v6530, 7
    %v6532 = vsub.s32 %v6529, %v6531
    %v6533 = vrot.slane %v6525, %v6532
    %v6535 = vunpack.c.l.s4 1983009808
    %v6536 = vunpack.c.0.s8 %v6535
    %v6537 = vlaneseq
    %v6538 = vshrl.u32 %v6537, 7
    %v6539 = vsub.s32 %v6536, %v6538
    %v6540 = vrot.slane %v6526, %v6539
    %v6541 = vcombine.low %v6533, %v6540
    %v6542 = vcombine.low %v2226, %v2229
    %v6543 = vcombine.low %v2232, %v2235
    %v6545 = vunpack.c.l.s4 1983009808
    %v6546 = vunpack.c.0.s8 %v6545
    %v6547 = vlaneseq
    %v6548 = vshrl.u32 %v6547, 7
    %v6549 = vsub.s32 %v6546, %v6548
    %v6550 = vrot.slane %v6542, %v6549
    %v6552 = vunpack.c.l.s4 1983009808
    %v6553 = vunpack.c.0.s8 %v6552
    %v6554 = vlaneseq
    %v6555 = vshrl.u32 %v6554, 7
    %v6556 = vsub.s32 %v6553, %v6555
    %v6557 = vrot.slane %v6543, %v6556
    %v6558 = vcombine.low %v6550, %v6557
    %v6559 = vcombine.low %v2239, %v2242
    %v6560 = vcombine.low %v2245, %v2248
    %v6562 = vunpack.c.l.s4 1983009808
    %v6563 = vunpack.c.0.s8 %v6562
    %v6564 = vlaneseq
    %v6565 = vshrl.u32 %v6564, 7
    %v6566 = vsub.s32 %v6563, %v6565
    %v6567 = vrot.slane %v6559, %v6566
    %v6569 = vunpack.c.l.s4 1983009808
    %v6570 = vunpack.c.0.s8 %v6569
    %v6571 = vlaneseq
    %v6572 = vshrl.u32 %v6571, 7
    %v6573 = vsub.s32 %v6570, %v6572
    %v6574 = vrot.slane %v6560, %v6573
    %v6575 = vcombine.low %v6567, %v6574
    %v6576 = vcombine.low %v2251, %v2254
    %v6577 = vcombine.low %v2257, %v2261
    %v6579 = vunpack.c.l.s4 1983009808
    %v6580 = vunpack.c.0.s8 %v6579
    %v6581 = vlaneseq
    %v6582 = vshrl.u32 %v6581, 7
    %v6583 = vsub.s32 %v6580, %v6582
    %v6584 = vrot.slane %v6576, %v6583
    %v6586 = vunpack.c.l.s4 1983009808
    %v6587 = vunpack.c.0.s8 %v6586
    %v6588 = vlaneseq
    %v6589 = vshrl.u32 %v6588, 7
    %v6590 = vsub.s32 %v6587, %v6589
    %v6591 = vrot.slane %v6577, %v6590
    %v6592 = vcombine.low %v6584, %v6591
    %v6593 = vcombine.low %v2264, %v2267
    %v6594 = vcombine.low %v2270, %v2273
    %v6596 = vunpack.c.l.s4 1983009808
    %v6597 = vunpack.c.0.s8 %v6596
    %v6598 = vlaneseq
    %v6599 = vshrl.u32 %v6598, 7
    %v6600 = vsub.s32 %v6597, %v6599
    %v6601 = vrot.slane %v6593, %v6600
    %v6603 = vunpack.c.l.s4 1983009808
    %v6604 = vunpack.c.0.s8 %v6603
    %v6605 = vlaneseq
    %v6606 = vshrl.u32 %v6605, 7
    %v6607 = vsub.s32 %v6604, %v6606
    %v6608 = vrot.slane %v6594, %v6607
    %v6609 = vcombine.low %v6601, %v6608
    %v6610 = vcombine.low %v2276, %v2279
    %v6611 = vcombine.low %v2283, %v2286
    %v6613 = vunpack.c.l.s4 1983009808
    %v6614 = vunpack.c.0.s8 %v6613
    %v6615 = vlaneseq
    %v6616 = vshrl.u32 %v6615, 7
    %v6617 = vsub.s32 %v6614, %v6616
    %v6618 = vrot.slane %v6610, %v6617
    %v6620 = vunpack.c.l.s4 1983009808
    %v6621 = vunpack.c.0.s8 %v6620
    %v6622 = vlaneseq
    %v6623 = vshrl.u32 %v6622, 7
    %v6624 = vsub.s32 %v6621, %v6623
    %v6625 = vrot.slane %v6611, %v6624
    %v6626 = vcombine.low %v6618, %v6625
    %v6627 = vcombine.low %v2289, %v2292
    %v6628 = vcombine.low %v2295, %v2298
    %v6630 = vunpack.c.l.s4 1983009808
    %v6631 = vunpack.c.0.s8 %v6630
    %v6632 = vlaneseq
    %v6633 = vshrl.u32 %v6632, 7
    %v6634 = vsub.s32 %v6631, %v6633
    %v6635 = vrot.slane %v6627, %v6634
    %v6637 = vunpack.c.l.s4 1983009808
    %v6638 = vunpack.c.0.s8 %v6637
    %v6639 = vlaneseq
    %v6640 = vshrl.u32 %v6639, 7
    %v6641 = vsub.s32 %v6638, %v6640
    %v6642 = vrot.slane %v6628, %v6641
    %v6643 = vcombine.low %v6635, %v6642
    %v6644 = vcombine.low %v2301, %v2305
    %v6645 = vcombine.low %v2308, %v2311
    %v6647 = vunpack.c.l.s4 1983009808
    %v6648 = vunpack.c.0.s8 %v6647
    %v6649 = vlaneseq
    %v6650 = vshrl.u32 %v6649, 7
    %v6651 = vsub.s32 %v6648, %v6650
    %v6652 = vrot.slane %v6644, %v6651
    %v6654 = vunpack.c.l.s4 1983009808
    %v6655 = vunpack.c.0.s8 %v6654
    %v6656 = vlaneseq
    %v6657 = vshrl.u32 %v6656, 7
    %v6658 = vsub.s32 %v6655, %v6657
    %v6659 = vrot.slane %v6645, %v6658
    %v6660 = vcombine.low %v6652, %v6659
    %v6661 = vcombine.low %v2314, %v2317
    %v6662 = vcombine.low %v2320, %v2323
    %v6664 = vunpack.c.l.s4 1983009808
    %v6665 = vunpack.c.0.s8 %v6664
    %v6666 = vlaneseq
    %v6667 = vshrl.u32 %v6666, 7
    %v6668 = vsub.s32 %v6665, %v6667
    %v6669 = vrot.slane %v6661, %v6668
    %v6671 = vunpack.c.l.s4 1983009808
    %v6672 = vunpack.c.0.s8 %v6671
    %v6673 = vlaneseq
    %v6674 = vshrl.u32 %v6673, 7
    %v6675 = vsub.s32 %v6672, %v6674
    %v6676 = vrot.slane %v6662, %v6675
    %v6677 = vcombine.low %v6669, %v6676
    %v6678 = vcombine.low %v2327, %v2330
    %v6679 = vcombine.low %v2333, %v2336
    %v6681 = vunpack.c.l.s4 1983009808
    %v6682 = vunpack.c.0.s8 %v6681
    %v6683 = vlaneseq
    %v6684 = vshrl.u32 %v6683, 7
    %v6685 = vsub.s32 %v6682, %v6684
    %v6686 = vrot.slane %v6678, %v6685
    %v6688 = vunpack.c.l.s4 1983009808
    %v6689 = vunpack.c.0.s8 %v6688
    %v6690 = vlaneseq
    %v6691 = vshrl.u32 %v6690, 7
    %v6692 = vsub.s32 %v6689, %v6691
    %v6693 = vrot.slane %v6679, %v6692
    %v6694 = vcombine.low %v6686, %v6693
    %v6695 = vcombine.low %v2339, %v2342
    %v6696 = vcombine.low %v2345, %v6280
    %v6698 = vunpack.c.l.s4 1983009808
    %v6699 = vunpack.c.0.s8 %v6698
    %v6700 = vlaneseq
    %v6701 = vshrl.u32 %v6700, 7
    %v6702 = vsub.s32 %v6699, %v6701
    %v6703 = vrot.slane %v6695, %v6702
    %v6705 = vunpack.c.l.s4 1983009808
    %v6706 = vunpack.c.0.s8 %v6705
    %v6707 = vlaneseq
    %v6708 = vshrl.u32 %v6707, 7
    %v6709 = vsub.s32 %v6706, %v6708
    %v6710 = vrot.slane %v6696, %v6709
    %v6711 = vcombine.low %v6703, %v6710
    %v6712 = vcombine.low %v6283, %v6286
    %v6713 = vcombine.low %v6289, %v6292
    %v6715 = vunpack.c.l.s4 1983009808
    %v6716 = vunpack.c.0.s8 %v6715
    %v6717 = vlaneseq
    %v6718 = vshrl.u32 %v6717, 7
    %v6719 = vsub.s32 %v6716, %v6718
    %v6720 = vrot.slane %v6712, %v6719
    %v6722 = vunpack.c.l.s4 1983009808
    %v6723 = vunpack.c.0.s8 %v6722
    %v6724 = vlaneseq
    %v6725 = vshrl.u32 %v6724, 7
    %v6726 = vsub.s32 %v6723, %v6725
    %v6727 = vrot.slane %v6713, %v6726
    %v6728 = vcombine.low %v6720, %v6727
    %v6729 = vcombine.low %v6295, %v6298
    %v6730 = vcombine.low %v2371, %v2374
    %v6732 = vunpack.c.l.s4 1983009808
    %v6733 = vunpack.c.0.s8 %v6732
    %v6734 = vlaneseq
    %v6735 = vshrl.u32 %v6734, 7
    %v6736 = vsub.s32 %v6733, %v6735
    %v6737 = vrot.slane %v6729, %v6736
    %v6739 = vunpack.c.l.s4 1983009808
    %v6740 = vunpack.c.0.s8 %v6739
    %v6741 = vlaneseq
    %v6742 = vshrl.u32 %v6741, 7
    %v6743 = vsub.s32 %v6740, %v6742
    %v6744 = vrot.slane %v6730, %v6743
    %v6745 = vcombine.low %v6737, %v6744
    %v6746 = vcombine.low %v2377, %v2380
    %v6747 = vcombine.low %v2383, %v2386
    %v6749 = vunpack.c.l.s4 1983009808
    %v6750 = vunpack.c.0.s8 %v6749
    %v6751 = vlaneseq
    %v6752 = vshrl.u32 %v6751, 7
    %v6753 = vsub.s32 %v6750, %v6752
    %v6754 = vrot.slane %v6746, %v6753
    %v6756 = vunpack.c.l.s4 1983009808
    %v6757 = vunpack.c.0.s8 %v6756
    %v6758 = vlaneseq
    %v6759 = vshrl.u32 %v6758, 7
    %v6760 = vsub.s32 %v6757, %v6759
    %v6761 = vrot.slane %v6747, %v6760
    %v6762 = vcombine.low %v6754, %v6761
    %v6763 = vcombine.low %v2389, %v2393
    %v6764 = vcombine.low %v2396, %v2399
    %v6766 = vunpack.c.l.s4 1983009808
    %v6767 = vunpack.c.0.s8 %v6766
    %v6768 = vlaneseq
    %v6769 = vshrl.u32 %v6768, 7
    %v6770 = vsub.s32 %v6767, %v6769
    %v6771 = vrot.slane %v6763, %v6770
    %v6773 = vunpack.c.l.s4 1983009808
    %v6774 = vunpack.c.0.s8 %v6773
    %v6775 = vlaneseq
    %v6776 = vshrl.u32 %v6775, 7
    %v6777 = vsub.s32 %v6774, %v6776
    %v6778 = vrot.slane %v6764, %v6777
    %v6779 = vcombine.low %v6771, %v6778
    %v6780 = vcombine.low %v2402, %v2405
    %v6781 = vcombine.low %v2408, %v2411
    %v6783 = vunpack.c.l.s4 1983009808
    %v6784 = vunpack.c.0.s8 %v6783
    %v6785 = vlaneseq
    %v6786 = vshrl.u32 %v6785, 7
    %v6787 = vsub.s32 %v6784, %v6786
    %v6788 = vrot.slane %v6780, %v6787
    %v6790 = vunpack.c.l.s4 1983009808
    %v6791 = vunpack.c.0.s8 %v6790
    %v6792 = vlaneseq
    %v6793 = vshrl.u32 %v6792, 7
    %v6794 = vsub.s32 %v6791, %v6793
    %v6795 = vrot.slane %v6781, %v6794
    %v6796 = vcombine.low %v6788, %v6795
    %v6797 = vcombine.low %v2415, %v2418
    %v6798 = vcombine.low %v2421, %v2424
    %v6800 = vunpack.c.l.s4 1983009808
    %v6801 = vunpack.c.0.s8 %v6800
    %v6802 = vlaneseq
    %v6803 = vshrl.u32 %v6802, 7
    %v6804 = vsub.s32 %v6801, %v6803
    %v6805 = vrot.slane %v6797, %v6804
    %v6807 = vunpack.c.l.s4 1983009808
    %v6808 = vunpack.c.0.s8 %v6807
    %v6809 = vlaneseq
    %v6810 = vshrl.u32 %v6809, 7
    %v6811 = vsub.s32 %v6808, %v6810
    %v6812 = vrot.slane %v6798, %v6811
    %v6813 = vcombine.low %v6805, %v6812
    %v6814 = vcombine.low %v2427, %v2430
    %v6815 = vcombine.low %v2433, %v2437
    %v6817 = vunpack.c.l.s4 1983009808
    %v6818 = vunpack.c.0.s8 %v6817
    %v6819 = vlaneseq
    %v6820 = vshrl.u32 %v6819, 7
    %v6821 = vsub.s32 %v6818, %v6820
    %v6822 = vrot.slane %v6814, %v6821
    %v6824 = vunpack.c.l.s4 1983009808
    %v6825 = vunpack.c.0.s8 %v6824
    %v6826 = vlaneseq
    %v6827 = vshrl.u32 %v6826, 7
    %v6828 = vsub.s32 %v6825, %v6827
    %v6829 = vrot.slane %v6815, %v6828
    %v6830 = vcombine.low %v6822, %v6829
    %v6831 = vcombine.low %v2440, %v2443
    %v6832 = vcombine.low %v2446, %v2449
    %v6834 = vunpack.c.l.s4 1983009808
    %v6835 = vunpack.c.0.s8 %v6834
    %v6836 = vlaneseq
    %v6837 = vshrl.u32 %v6836, 7
    %v6838 = vsub.s32 %v6835, %v6837
    %v6839 = vrot.slane %v6831, %v6838
    %v6841 = vunpack.c.l.s4 1983009808
    %v6842 = vunpack.c.0.s8 %v6841
    %v6843 = vlaneseq
    %v6844 = vshrl.u32 %v6843, 7
    %v6845 = vsub.s32 %v6842, %v6844
    %v6846 = vrot.slane %v6832, %v6845
    %v6847 = vcombine.low %v6839, %v6846
    %v6848 = vcombine.low %v2452, %v2455
    %v6849 = vcombine.low %v2459, %v2462
    %v6851 = vunpack.c.l.s4 1983009808
    %v6852 = vunpack.c.0.s8 %v6851
    %v6853 = vlaneseq
    %v6854 = vshrl.u32 %v6853, 7
    %v6855 = vsub.s32 %v6852, %v6854
    %v6856 = vrot.slane %v6848, %v6855
    %v6858 = vunpack.c.l.s4 1983009808
    %v6859 = vunpack.c.0.s8 %v6858
    %v6860 = vlaneseq
    %v6861 = vshrl.u32 %v6860, 7
    %v6862 = vsub.s32 %v6859, %v6861
    %v6863 = vrot.slane %v6849, %v6862
    %v6864 = vcombine.low %v6856, %v6863
    %v6865 = vcombine.low %v2465, %v2468
    %v6866 = vcombine.low %v2471, %v2474
    %v6868 = vunpack.c.l.s4 1983009808
    %v6869 = vunpack.c.0.s8 %v6868
    %v6870 = vlaneseq
    %v6871 = vshrl.u32 %v6870, 7
    %v6872 = vsub.s32 %v6869, %v6871
    %v6873 = vrot.slane %v6865, %v6872
    %v6875 = vunpack.c.l.s4 1983009808
    %v6876 = vunpack.c.0.s8 %v6875
    %v6877 = vlaneseq
    %v6878 = vshrl.u32 %v6877, 7
    %v6879 = vsub.s32 %v6876, %v6878
    %v6880 = vrot.slane %v6866, %v6879
    %v6881 = vcombine.low %v6873, %v6880
    %v6882 = vcombine.low %v2477, %v2481
    %v6883 = vcombine.low %v2484, %v2487
    %v6885 = vunpack.c.l.s4 1983009808
    %v6886 = vunpack.c.0.s8 %v6885
    %v6887 = vlaneseq
    %v6888 = vshrl.u32 %v6887, 7
    %v6889 = vsub.s32 %v6886, %v6888
    %v6890 = vrot.slane %v6882, %v6889
    %v6892 = vunpack.c.l.s4 1983009808
    %v6893 = vunpack.c.0.s8 %v6892
    %v6894 = vlaneseq
    %v6895 = vshrl.u32 %v6894, 7
    %v6896 = vsub.s32 %v6893, %v6895
    %v6897 = vrot.slane %v6883, %v6896
    %v6898 = vcombine.low %v6890, %v6897
    %v6899 = vcombine.low %v2490, %v2493
    %v6900 = vcombine.low %v2496, %v2499
    %v6902 = vunpack.c.l.s4 1983009808
    %v6903 = vunpack.c.0.s8 %v6902
    %v6904 = vlaneseq
    %v6905 = vshrl.u32 %v6904, 7
    %v6906 = vsub.s32 %v6903, %v6905
    %v6907 = vrot.slane %v6899, %v6906
    %v6909 = vunpack.c.l.s4 1983009808
    %v6910 = vunpack.c.0.s8 %v6909
    %v6911 = vlaneseq
    %v6912 = vshrl.u32 %v6911, 7
    %v6913 = vsub.s32 %v6910, %v6912
    %v6914 = vrot.slane %v6900, %v6913
    %v6915 = vcombine.low %v6907, %v6914
    %v6916 = vcombine.low %v2503, %v2506
    %v6917 = vcombine.low %v2509, %v2512
    %v6919 = vunpack.c.l.s4 1983009808
    %v6920 = vunpack.c.0.s8 %v6919
    %v6921 = vlaneseq
    %v6922 = vshrl.u32 %v6921, 7
    %v6923 = vsub.s32 %v6920, %v6922
    %v6924 = vrot.slane %v6916, %v6923
    %v6926 = vunpack.c.l.s4 1983009808
    %v6927 = vunpack.c.0.s8 %v6926
    %v6928 = vlaneseq
    %v6929 = vshrl.u32 %v6928, 7
    %v6930 = vsub.s32 %v6927, %v6929
    %v6931 = vrot.slane %v6917, %v6930
    %v6932 = vcombine.low %v6924, %v6931
    %v6933 = vcombine.low %v2515, %v2518
    %v6934 = vcombine.low %v2521, %v2525
    %v6936 = vunpack.c.l.s4 1983009808
    %v6937 = vunpack.c.0.s8 %v6936
    %v6938 = vlaneseq
    %v6939 = vshrl.u32 %v6938, 7
    %v6940 = vsub.s32 %v6937, %v6939
    %v6941 = vrot.slane %v6933, %v6940
    %v6943 = vunpack.c.l.s4 1983009808
    %v6944 = vunpack.c.0.s8 %v6943
    %v6945 = vlaneseq
    %v6946 = vshrl.u32 %v6945, 7
    %v6947 = vsub.s32 %v6944, %v6946
    %v6948 = vrot.slane %v6934, %v6947
    %v6949 = vcombine.low %v6941, %v6948
    %v6950 = vcombine.low %v2528, %v2531
    %v6951 = vcombine.low %v2534, %v2537
    %v6953 = vunpack.c.l.s4 1983009808
    %v6954 = vunpack.c.0.s8 %v6953
    %v6955 = vlaneseq
    %v6956 = vshrl.u32 %v6955, 7
    %v6957 = vsub.s32 %v6954, %v6956
    %v6958 = vrot.slane %v6950, %v6957
    %v6960 = vunpack.c.l.s4 1983009808
    %v6961 = vunpack.c.0.s8 %v6960
    %v6962 = vlaneseq
    %v6963 = vshrl.u32 %v6962, 7
    %v6964 = vsub.s32 %v6961, %v6963
    %v6965 = vrot.slane %v6951, %v6964
    %v6966 = vcombine.low %v6958, %v6965
    %v6967 = vcombine.low %v2540, %v2543
    %v6968 = vcombine.low %v2547, %v2550
    %v6970 = vunpack.c.l.s4 1983009808
    %v6971 = vunpack.c.0.s8 %v6970
    %v6972 = vlaneseq
    %v6973 = vshrl.u32 %v6972, 7
    %v6974 = vsub.s32 %v6971, %v6973
    %v6975 = vrot.slane %v6967, %v6974
    %v6977 = vunpack.c.l.s4 1983009808
    %v6978 = vunpack.c.0.s8 %v6977
    %v6979 = vlaneseq
    %v6980 = vshrl.u32 %v6979, 7
    %v6981 = vsub.s32 %v6978, %v6980
    %v6982 = vrot.slane %v6968, %v6981
    %v6983 = vcombine.low %v6975, %v6982
    %v6984 = vcombine.low %v2553, %v2556
    %v6985 = vcombine.low %v2559, %v2562
    %v6987 = vunpack.c.l.s4 1983009808
    %v6988 = vunpack.c.0.s8 %v6987
    %v6989 = vlaneseq
    %v6990 = vshrl.u32 %v6989, 7
    %v6991 = vsub.s32 %v6988, %v6990
    %v6992 = vrot.slane %v6984, %v6991
    %v6994 = vunpack.c.l.s4 1983009808
    %v6995 = vunpack.c.0.s8 %v6994
    %v6996 = vlaneseq
    %v6997 = vshrl.u32 %v6996, 7
    %v6998 = vsub.s32 %v6995, %v6997
    %v6999 = vrot.slane %v6985, %v6998
    %v7000 = vcombine.low %v6992, %v6999
    %v7001 = vcombine.low %v2565, %v2569
    %v7002 = vcombine.low %v2572, %v2575
    %v7004 = vunpack.c.l.s4 1983009808
    %v7005 = vunpack.c.0.s8 %v7004
    %v7006 = vlaneseq
    %v7007 = vshrl.u32 %v7006, 7
    %v7008 = vsub.s32 %v7005, %v7007
    %v7009 = vrot.slane %v7001, %v7008
    %v7011 = vunpack.c.l.s4 1983009808
    %v7012 = vunpack.c.0.s8 %v7011
    %v7013 = vlaneseq
    %v7014 = vshrl.u32 %v7013, 7
    %v7015 = vsub.s32 %v7012, %v7014
    %v7016 = vrot.slane %v7002, %v7015
    %v7017 = vcombine.low %v7009, %v7016
    %v7018 = vcombine.low %v2578, %v2581
    %v7019 = vcombine.low %v2584, %v2587
    %v7021 = vunpack.c.l.s4 1983009808
    %v7022 = vunpack.c.0.s8 %v7021
    %v7023 = vlaneseq
    %v7024 = vshrl.u32 %v7023, 7
    %v7025 = vsub.s32 %v7022, %v7024
    %v7026 = vrot.slane %v7018, %v7025
    %v7028 = vunpack.c.l.s4 1983009808
    %v7029 = vunpack.c.0.s8 %v7028
    %v7030 = vlaneseq
    %v7031 = vshrl.u32 %v7030, 7
    %v7032 = vsub.s32 %v7029, %v7031
    %v7033 = vrot.slane %v7019, %v7032
    %v7034 = vcombine.low %v7026, %v7033
    %v7035 = vcombine.low %v2591, %v2594
    %v7036 = vcombine.low %v2597, %v2600
    %v7038 = vunpack.c.l.s4 1983009808
    %v7039 = vunpack.c.0.s8 %v7038
    %v7040 = vlaneseq
    %v7041 = vshrl.u32 %v7040, 7
    %v7042 = vsub.s32 %v7039, %v7041
    %v7043 = vrot.slane %v7035, %v7042
    %v7045 = vunpack.c.l.s4 1983009808
    %v7046 = vunpack.c.0.s8 %v7045
    %v7047 = vlaneseq
    %v7048 = vshrl.u32 %v7047, 7
    %v7049 = vsub.s32 %v7046, %v7048
    %v7050 = vrot.slane %v7036, %v7049
    %v7051 = vcombine.low %v7043, %v7050
    %v7052 = vcombine.low %v2603, %v2606
    %v7053 = vcombine.low %v2609, %v2613
    %v7055 = vunpack.c.l.s4 1983009808
    %v7056 = vunpack.c.0.s8 %v7055
    %v7057 = vlaneseq
    %v7058 = vshrl.u32 %v7057, 7
    %v7059 = vsub.s32 %v7056, %v7058
    %v7060 = vrot.slane %v7052, %v7059
    %v7062 = vunpack.c.l.s4 1983009808
    %v7063 = vunpack.c.0.s8 %v7062
    %v7064 = vlaneseq
    %v7065 = vshrl.u32 %v7064, 7
    %v7066 = vsub.s32 %v7063, %v7065
    %v7067 = vrot.slane %v7053, %v7066
    %v7068 = vcombine.low %v7060, %v7067
    %v7069 = vcombine.low %v2616, %v2619
    %v7070 = vcombine.low %v2622, %v2625
    %v7072 = vunpack.c.l.s4 1983009808
    %v7073 = vunpack.c.0.s8 %v7072
    %v7074 = vlaneseq
    %v7075 = vshrl.u32 %v7074, 7
    %v7076 = vsub.s32 %v7073, %v7075
    %v7077 = vrot.slane %v7069, %v7076
    %v7079 = vunpack.c.l.s4 1983009808
    %v7080 = vunpack.c.0.s8 %v7079
    %v7081 = vlaneseq
    %v7082 = vshrl.u32 %v7081, 7
    %v7083 = vsub.s32 %v7080, %v7082
    %v7084 = vrot.slane %v7070, %v7083
    %v7085 = vcombine.low %v7077, %v7084
    %v7086 = vcombine.low %v2628, %v2631
    %v7087 = vcombine.low %v2635, %v2638
    %v7089 = vunpack.c.l.s4 1983009808
    %v7090 = vunpack.c.0.s8 %v7089
    %v7091 = vlaneseq
    %v7092 = vshrl.u32 %v7091, 7
    %v7093 = vsub.s32 %v7090, %v7092
    %v7094 = vrot.slane %v7086, %v7093
    %v7096 = vunpack.c.l.s4 1983009808
    %v7097 = vunpack.c.0.s8 %v7096
    %v7098 = vlaneseq
    %v7099 = vshrl.u32 %v7098, 7
    %v7100 = vsub.s32 %v7097, %v7099
    %v7101 = vrot.slane %v7087, %v7100
    %v7102 = vcombine.low %v7094, %v7101
    %v7103 = vcombine.low %v2641, %v2644
    %v7104 = vcombine.low %v2647, %v2650
    %v7106 = vunpack.c.l.s4 1983009808
    %v7107 = vunpack.c.0.s8 %v7106
    %v7108 = vlaneseq
    %v7109 = vshrl.u32 %v7108, 7
    %v7110 = vsub.s32 %v7107, %v7109
    %v7111 = vrot.slane %v7103, %v7110
    %v7113 = vunpack.c.l.s4 1983009808
    %v7114 = vunpack.c.0.s8 %v7113
    %v7115 = vlaneseq
    %v7116 = vshrl.u32 %v7115, 7
    %v7117 = vsub.s32 %v7114, %v7116
    %v7118 = vrot.slane %v7104, %v7117
    %v7119 = vcombine.low %v7111, %v7118
    %v7120 = vcombine.low %v2653, %v6302
    %v7121 = vcombine.low %v6305, %v6308
    %v7123 = vunpack.c.l.s4 1983009808
    %v7124 = vunpack.c.0.s8 %v7123
    %v7125 = vlaneseq
    %v7126 = vshrl.u32 %v7125, 7
    %v7127 = vsub.s32 %v7124, %v7126
    %v7128 = vrot.slane %v7120, %v7127
    %v7130 = vunpack.c.l.s4 1983009808
    %v7131 = vunpack.c.0.s8 %v7130
    %v7132 = vlaneseq
    %v7133 = vshrl.u32 %v7132, 7
    %v7134 = vsub.s32 %v7131, %v7133
    %v7135 = vrot.slane %v7121, %v7134
    %v7136 = vcombine.low %v7128, %v7135
    %v7137 = vcombine.low %v6311, %v6314
    %v7138 = vcombine.low %v6317, %v6320
    %v7140 = vunpack.c.l.s4 1983009808
    %v7141 = vunpack.c.0.s8 %v7140
    %v7142 = vlaneseq
    %v7143 = vshrl.u32 %v7142, 7
    %v7144 = vsub.s32 %v7141, %v7143
    %v7145 = vrot.slane %v7137, %v7144
    %v7147 = vunpack.c.l.s4 1983009808
    %v7148 = vunpack.c.0.s8 %v7147
    %v7149 = vlaneseq
    %v7150 = vshrl.u32 %v7149, 7
    %v7151 = vsub.s32 %v7148, %v7150
    %v7152 = vrot.slane %v7138, %v7151
    %v7153 = vcombine.low %v7145, %v7152
    %v7203 = vpack.c.bf16 %v6354, %v6337
    %v7204 = vpack.c.bf16 %v6388, %v6371
    %v7205 = vpack.c.bf16 %v6422, %v6405
    %v7206 = vpack.c.bf16 %v6456, %v6439
    %v7207 = vpack.c.bf16 %v6490, %v6473
    %v7208 = vpack.c.bf16 %v6524, %v6507
    %v7209 = vpack.c.bf16 %v6558, %v6541
    %v7210 = vpack.c.bf16 %v6592, %v6575
    %v7211 = vpack.c.bf16 %v6626, %v6609
    %v7212 = vpack.c.bf16 %v6660, %v6643
    %v7213 = vpack.c.bf16 %v6694, %v6677
    %v7214 = vpack.c.bf16 %v6728, %v6711
    %v7215 = vpack.c.bf16 %v6762, %v6745
    %v7216 = vpack.c.bf16 %v6796, %v6779
    %v7217 = vpack.c.bf16 %v6830, %v6813
    %v7218 = vpack.c.bf16 %v6864, %v6847
    %v7219 = vpack.c.bf16 %v6898, %v6881
    %v7220 = vpack.c.bf16 %v6932, %v6915
    %v7221 = vpack.c.bf16 %v6966, %v6949
    %v7222 = vpack.c.bf16 %v7000, %v6983
    %v7223 = vpack.c.bf16 %v7034, %v7017
    %v7224 = vpack.c.bf16 %v7068, %v7051
    %v7225 = vpack.c.bf16 %v7102, %v7085
    %v7226 = vpack.c.bf16 %v7136, %v7119
    %v7227 = vpack.c.bf16 %v7153, %v7153
    %v7229 = vsel %vm3561, %v7203, 0
    %v7232 = vsel %vm3561, %v7204, 0
    %v7235 = vsel %vm3561, %v7205, 0
    %v7238 = vsel %vm3561, %v7206, 0
    %v7241 = vsel %vm3561, %v7207, 0
    %v7244 = vsel %vm3561, %v7208, 0
    %v7247 = vsel %vm3561, %v7209, 0
    %v7250 = vsel %vm3561, %v7210, 0
    %v7253 = vsel %vm3561, %v7211, 0
    %v7256 = vsel %vm3561, %v7212, 0
    %v7259 = vsel %vm3561, %v7213, 0
    %v7262 = vsel %vm3561, %v7214, 0
    %v7265 = vsel %vm3561, %v7215, 0
    %v7268 = vsel %vm3561, %v7216, 0
    %v7271 = vsel %vm3561, %v7217, 0
    %v7274 = vsel %vm3561, %v7218, 0
    %v7277 = vsel %vm3561, %v7219, 0
    %v7280 = vsel %vm3561, %v7220, 0
    %v7283 = vsel %vm3561, %v7221, 0
    %v7286 = vsel %vm3561, %v7222, 0
    %v7289 = vsel %vm3561, %v7223, 0
    %v7292 = vsel %vm3561, %v7224, 0
    %v7295 = vsel %vm3561, %v7225, 0
    %v7298 = vsel %vm3561, %v7226, 0
    %v7301 = vsel %vm3561, %v7227, 0
    %v7304 = vand.u32 %v111, %v3639
    %7306 = vmatprep.subr.bf16.mxu0 0
    %7307 = vmatpush1.bf16.msra.mxu0 %v7304
    %7308 = vmatprep.subr.bf16.mxu0 0
    %7309 = vmatpush1.bf16.msra.mxu0 0
    %7310 = vmatprep.subr.bf16.mxu0 0
    %7311 = vmatpush1.bf16.msra.mxu0 0
    %7312 = vmatprep.subr.bf16.mxu0 0
    %7313 = vmatpush1.bf16.msra.mxu0 0
    %7314 = vmatprep.subr.bf16.mxu0 0
    %7315 = vmatpush1.bf16.msra.mxu0 0
    %7316 = vmatprep.subr.bf16.mxu0 0
    %7317 = vmatpush1.bf16.msra.mxu0 0
    %7318 = vmatprep.subr.bf16.mxu0 0
    %7319 = vmatpush1.bf16.msra.mxu0 0
    %7320 = vmatprep.subr.bf16.mxu0 0
    %7321 = vmatpush1.bf16.msra.mxu0 0
    %7322 = vmatprep.subr.bf16.mxu0 0
    %7323 = vmatpush1.bf16.msra.mxu0 0
    %7324 = vmatprep.subr.bf16.mxu0 0
    %7325 = vmatpush1.bf16.msra.mxu0 0
    %7326 = vmatprep.subr.bf16.mxu0 0
    %7327 = vmatpush1.bf16.msra.mxu0 0
    %7328 = vmatprep.subr.bf16.mxu0 0
    %7329 = vmatpush1.bf16.msra.mxu0 0
    %7330 = vmatprep.subr.bf16.mxu0 0
    %7331 = vmatpush1.bf16.msra.mxu0 0
    %7332 = vmatprep.subr.bf16.mxu0 0
    %7333 = vmatpush1.bf16.msra.mxu0 0
    %7334 = vmatprep.subr.bf16.mxu0 0
    %7335 = vmatpush1.bf16.msra.mxu0 0
    %7336 = vmatprep.subr.bf16.mxu0 0
    %7337 = vmatpush1.bf16.msra.mxu0 0
    %7338 = vmatprep.mubr.bf16.mxu0 0
    %7339 = vmatmul.mubr.bf16.gmra.mrb[0].mxu0 %v7229
    %v7340 = vpop.f32.mrb[0].mxu0
    %v7341 = vadd.f32 0.0, %v7340
    %v7342 = vpop.f32.mrb[0].mxu0
    %v7343 = vpop.f32.mrb[0].mxu0
    %v7344 = vadd.f32 0.0, %v7343
    %v7345 = vpop.f32.mrb[0].mxu0
    %7346 = vmatprep.mubr.bf16.mxu0 0
    %7347 = vmatmul.mubr.bf16.gmra.mrb[0].mxu0 %v7232
    %v7348 = vpop.f32.mrb[0].mxu0
    %v7349 = vadd.f32 0.0, %v7348
    %v7350 = vpop.f32.mrb[0].mxu0
    %v7351 = vpop.f32.mrb[0].mxu0
    %v7352 = vadd.f32 0.0, %v7351
    %v7353 = vpop.f32.mrb[0].mxu0
    %7354 = vmatprep.mubr.bf16.mxu0 0
    %7355 = vmatmul.mubr.bf16.gmra.mrb[0].mxu0 %v7235
    %v7356 = vpop.f32.mrb[0].mxu0
    %v7357 = vadd.f32 0.0, %v7356
    %v7358 = vpop.f32.mrb[0].mxu0
    %v7359 = vpop.f32.mrb[0].mxu0
    %v7360 = vadd.f32 0.0, %v7359
    %v7361 = vpop.f32.mrb[0].mxu0
    %7362 = vmatprep.mubr.bf16.mxu0 0
    %7363 = vmatmul.mubr.bf16.gmra.mrb[0].mxu0 %v7238
    %v7364 = vpop.f32.mrb[0].mxu0
    %v7365 = vadd.f32 0.0, %v7364
    %v7366 = vpop.f32.mrb[0].mxu0
    %v7367 = vpop.f32.mrb[0].mxu0
    %v7368 = vadd.f32 0.0, %v7367
    %v7369 = vpop.f32.mrb[0].mxu0
    %7370 = vmatprep.mubr.bf16.mxu0 0
    %7371 = vmatmul.mubr.bf16.gmra.mrb[0].mxu0 %v7241
    %v7372 = vpop.f32.mrb[0].mxu0
    %v7373 = vadd.f32 0.0, %v7372
    %v7374 = vpop.f32.mrb[0].mxu0
    %v7375 = vpop.f32.mrb[0].mxu0
    %v7376 = vadd.f32 0.0, %v7375
    %v7377 = vpop.f32.mrb[0].mxu0
    %7378 = vmatprep.mubr.bf16.mxu0 0
    %7379 = vmatmul.mubr.bf16.gmra.mrb[0].mxu0 %v7244
    %v7380 = vpop.f32.mrb[0].mxu0
    %v7381 = vadd.f32 0.0, %v7380
    %v7382 = vpop.f32.mrb[0].mxu0
    %v7383 = vpop.f32.mrb[0].mxu0
    %v7384 = vadd.f32 0.0, %v7383
    %v7385 = vpop.f32.mrb[0].mxu0
    %7386 = vmatprep.mubr.bf16.mxu0 0
    %7387 = vmatmul.mubr.bf16.gmra.mrb[0].mxu0 %v7247
    %v7388 = vpop.f32.mrb[0].mxu0
    %v7389 = vadd.f32 0.0, %v7388
    %v7390 = vpop.f32.mrb[0].mxu0
    %v7391 = vpop.f32.mrb[0].mxu0
    %v7392 = vadd.f32 0.0, %v7391
    %v7393 = vpop.f32.mrb[0].mxu0
    %7394 = vmatprep.mubr.bf16.mxu0 0
    %7395 = vmatmul.mubr.bf16.gmra.mrb[0].mxu0 %v7250
    %v7396 = vpop.f32.mrb[0].mxu0
    %v7397 = vadd.f32 0.0, %v7396
    %v7398 = vpop.f32.mrb[0].mxu0
    %v7399 = vpop.f32.mrb[0].mxu0
    %v7400 = vadd.f32 0.0, %v7399
    %v7401 = vpop.f32.mrb[0].mxu0
    %7402 = vmatprep.mubr.bf16.mxu0 0
    %7403 = vmatmul.mubr.bf16.gmra.mrb[0].mxu0 %v7253
    %v7404 = vpop.f32.mrb[0].mxu0
    %v7405 = vadd.f32 0.0, %v7404
    %v7406 = vpop.f32.mrb[0].mxu0
    %v7407 = vpop.f32.mrb[0].mxu0
    %v7408 = vadd.f32 0.0, %v7407
    %v7409 = vpop.f32.mrb[0].mxu0
    %7410 = vmatprep.mubr.bf16.mxu0 0
    %7411 = vmatmul.mubr.bf16.gmra.mrb[0].mxu0 %v7256
    %v7412 = vpop.f32.mrb[0].mxu0
    %v7413 = vadd.f32 0.0, %v7412
    %v7414 = vpop.f32.mrb[0].mxu0
    %v7415 = vpop.f32.mrb[0].mxu0
    %v7416 = vadd.f32 0.0, %v7415
    %v7417 = vpop.f32.mrb[0].mxu0
    %7418 = vmatprep.mubr.bf16.mxu0 0
    %7419 = vmatmul.mubr.bf16.gmra.mrb[0].mxu0 %v7259
    %v7420 = vpop.f32.mrb[0].mxu0
    %v7421 = vadd.f32 0.0, %v7420
    %v7422 = vpop.f32.mrb[0].mxu0
    %v7423 = vpop.f32.mrb[0].mxu0
    %v7424 = vadd.f32 0.0, %v7423
    %v7425 = vpop.f32.mrb[0].mxu0
    %7426 = vmatprep.mubr.bf16.mxu0 0
    %7427 = vmatmul.mubr.bf16.gmra.mrb[0].mxu0 %v7262
    %v7428 = vpop.f32.mrb[0].mxu0
    %v7429 = vadd.f32 0.0, %v7428
    %v7430 = vpop.f32.mrb[0].mxu0
    %v7431 = vpop.f32.mrb[0].mxu0
    %v7432 = vadd.f32 0.0, %v7431
    %v7433 = vpop.f32.mrb[0].mxu0
    %7434 = vmatprep.mubr.bf16.mxu0 0
    %7435 = vmatmul.mubr.bf16.gmra.mrb[0].mxu0 %v7265
    %v7436 = vpop.f32.mrb[0].mxu0
    %v7437 = vadd.f32 0.0, %v7436
    %v7438 = vpop.f32.mrb[0].mxu0
    %v7439 = vpop.f32.mrb[0].mxu0
    %v7440 = vadd.f32 0.0, %v7439
    %v7441 = vpop.f32.mrb[0].mxu0
    %7442 = vmatprep.mubr.bf16.mxu0 0
    %7443 = vmatmul.mubr.bf16.gmra.mrb[0].mxu0 %v7268
    %v7444 = vpop.f32.mrb[0].mxu0
    %v7445 = vadd.f32 0.0, %v7444
    %v7446 = vpop.f32.mrb[0].mxu0
    %v7447 = vpop.f32.mrb[0].mxu0
    %v7448 = vadd.f32 0.0, %v7447
    %v7449 = vpop.f32.mrb[0].mxu0
    %7450 = vmatprep.mubr.bf16.mxu0 0
    %7451 = vmatmul.mubr.bf16.gmra.mrb[0].mxu0 %v7271
    %v7452 = vpop.f32.mrb[0].mxu0
    %v7453 = vadd.f32 0.0, %v7452
    %v7454 = vpop.f32.mrb[0].mxu0
    %v7455 = vpop.f32.mrb[0].mxu0
    %v7456 = vadd.f32 0.0, %v7455
    %v7457 = vpop.f32.mrb[0].mxu0
    %7458 = vmatprep.mubr.bf16.mxu0 0
    %7459 = vmatmul.mubr.bf16.gmra.mrb[0].mxu0 %v7274
    %v7460 = vpop.f32.mrb[0].mxu0
    %v7461 = vadd.f32 0.0, %v7460
    %v7462 = vpop.f32.mrb[0].mxu0
    %v7463 = vpop.f32.mrb[0].mxu0
    %v7464 = vadd.f32 0.0, %v7463
    %v7465 = vpop.f32.mrb[0].mxu0
    %7466 = vmatprep.mubr.bf16.mxu0 0
    %7467 = vmatmul.mubr.bf16.gmra.mrb[0].mxu0 %v7277
    %v7468 = vpop.f32.mrb[0].mxu0
    %v7469 = vadd.f32 0.0, %v7468
    %v7470 = vpop.f32.mrb[0].mxu0
    %v7471 = vpop.f32.mrb[0].mxu0
    %v7472 = vadd.f32 0.0, %v7471
    %v7473 = vpop.f32.mrb[0].mxu0
    %7474 = vmatprep.mubr.bf16.mxu0 0
    %7475 = vmatmul.mubr.bf16.gmra.mrb[0].mxu0 %v7280
    %v7476 = vpop.f32.mrb[0].mxu0
    %v7477 = vadd.f32 0.0, %v7476
    %v7478 = vpop.f32.mrb[0].mxu0
    %v7479 = vpop.f32.mrb[0].mxu0
    %v7480 = vadd.f32 0.0, %v7479
    %v7481 = vpop.f32.mrb[0].mxu0
    %7482 = vmatprep.mubr.bf16.mxu0 0
    %7483 = vmatmul.mubr.bf16.gmra.mrb[0].mxu0 %v7283
    %v7484 = vpop.f32.mrb[0].mxu0
    %v7485 = vadd.f32 0.0, %v7484
    %v7486 = vpop.f32.mrb[0].mxu0
    %v7487 = vpop.f32.mrb[0].mxu0
    %v7488 = vadd.f32 0.0, %v7487
    %v7489 = vpop.f32.mrb[0].mxu0
    %7490 = vmatprep.mubr.bf16.mxu0 0
    %7491 = vmatmul.mubr.bf16.gmra.mrb[0].mxu0 %v7286
    %v7492 = vpop.f32.mrb[0].mxu0
    %v7493 = vadd.f32 0.0, %v7492
    %v7494 = vpop.f32.mrb[0].mxu0
    %v7495 = vpop.f32.mrb[0].mxu0
    %v7496 = vadd.f32 0.0, %v7495
    %v7497 = vpop.f32.mrb[0].mxu0
    %7498 = vmatprep.mubr.bf16.mxu0 0
    %7499 = vmatmul.mubr.bf16.gmra.mrb[0].mxu0 %v7289
    %v7500 = vpop.f32.mrb[0].mxu0
    %v7501 = vadd.f32 0.0, %v7500
    %v7502 = vpop.f32.mrb[0].mxu0
    %v7503 = vpop.f32.mrb[0].mxu0
    %v7504 = vadd.f32 0.0, %v7503
    %v7505 = vpop.f32.mrb[0].mxu0
    %7506 = vmatprep.mubr.bf16.mxu0 0
    %7507 = vmatmul.mubr.bf16.gmra.mrb[0].mxu0 %v7292
    %v7508 = vpop.f32.mrb[0].mxu0
    %v7509 = vadd.f32 0.0, %v7508
    %v7510 = vpop.f32.mrb[0].mxu0
    %v7511 = vpop.f32.mrb[0].mxu0
    %v7512 = vadd.f32 0.0, %v7511
    %v7513 = vpop.f32.mrb[0].mxu0
    %7514 = vmatprep.mubr.bf16.mxu0 0
    %7515 = vmatmul.mubr.bf16.gmra.mrb[0].mxu0 %v7295
    %v7516 = vpop.f32.mrb[0].mxu0
    %v7517 = vadd.f32 0.0, %v7516
    %v7518 = vpop.f32.mrb[0].mxu0
    %v7519 = vpop.f32.mrb[0].mxu0
    %v7520 = vadd.f32 0.0, %v7519
    %v7521 = vpop.f32.mrb[0].mxu0
    %7522 = vmatprep.mubr.bf16.mxu0 0
    %7523 = vmatmul.mubr.bf16.gmra.mrb[0].mxu0 %v7298
    %v7524 = vpop.f32.mrb[0].mxu0
    %v7525 = vadd.f32 0.0, %v7524
    %v7526 = vpop.f32.mrb[0].mxu0
    %v7527 = vpop.f32.mrb[0].mxu0
    %v7528 = vadd.f32 0.0, %v7527
    %v7529 = vpop.f32.mrb[0].mxu0
    %7530 = vmatprep.mubr.bf16.mxu0 0
    %7531 = vmatmul.mubr.bf16.gmra.mrb[0].mxu0 %v7301
    %v7532 = vpop.f32.mrb[0].mxu0
    %v7533 = vadd.f32 0.0, %v7532
    %v7534 = vpop.f32.mrb[0].mxu0
    %v7535 = vpop.f32.mrb[0].mxu0
    %v7536 = vpop.f32.mrb[0].mxu0
    %7537 = vdwg.mxu0
    %v7538 = vadd.f32 %v6226, %v7341
    %v7539 = vadd.f32 %v6227, %v7344
    %v7540 = vadd.f32 %v6228, %v7349
    %v7541 = vadd.f32 %v6229, %v7352
    %v7542 = vadd.f32 %v6230, %v7357
    %v7543 = vadd.f32 %v6231, %v7360
    %v7544 = vadd.f32 %v6232, %v7365
    %v7545 = vadd.f32 %v6233, %v7368
    %v7546 = vadd.f32 %v6234, %v7373
    %v7547 = vadd.f32 %v6235, %v7376
    %v7548 = vadd.f32 %v6236, %v7381
    %v7549 = vadd.f32 %v6237, %v7384
    %v7550 = vadd.f32 %v6238, %v7389
    %v7551 = vadd.f32 %v6239, %v7392
    %v7552 = vadd.f32 %v6240, %v7397
    %v7553 = vadd.f32 %v6241, %v7400
    %v7554 = vadd.f32 %v6242, %v7405
    %v7555 = vadd.f32 %v6243, %v7408
    %v7556 = vadd.f32 %v6244, %v7413
    %v7557 = vadd.f32 %v6245, %v7416
    %v7558 = vadd.f32 %v6246, %v7421
    %v7559 = vadd.f32 %v6247, %v7424
    %v7560 = vadd.f32 %v6248, %v7429
    %v7561 = vadd.f32 %v6249, %v7432
    %v7562 = vadd.f32 %v6250, %v7437
    %v7563 = vadd.f32 %v6251, %v7440
    %v7564 = vadd.f32 %v6252, %v7445
    %v7565 = vadd.f32 %v6253, %v7448
    %v7566 = vadd.f32 %v6254, %v7453
    %v7567 = vadd.f32 %v6255, %v7456
    %v7568 = vadd.f32 %v6256, %v7461
    %v7569 = vadd.f32 %v6257, %v7464
    %v7570 = vadd.f32 %v6258, %v7469
    %v7571 = vadd.f32 %v6259, %v7472
    %v7572 = vadd.f32 %v6260, %v7477
    %v7573 = vadd.f32 %v6261, %v7480
    %v7574 = vadd.f32 %v6262, %v7485
    %v7575 = vadd.f32 %v6263, %v7488
    %v7576 = vadd.f32 %v6264, %v7493
    %v7577 = vadd.f32 %v6265, %v7496
    %v7578 = vadd.f32 %v6266, %v7501
    %v7579 = vadd.f32 %v6267, %v7504
    %v7580 = vadd.f32 %v6268, %v7509
    %v7581 = vadd.f32 %v6269, %v7512
    %v7582 = vadd.f32 %v6270, %v7517
    %v7583 = vadd.f32 %v6271, %v7520
    %v7584 = vadd.f32 %v6272, %v7525
    %v7585 = vadd.f32 %v6273, %v7528
    %v7586 = vadd.f32 %v6274, %v7533
    %v7587 = vcombine.low %v2004, %v253
    %v7589 = vunpack.c.l.s4 1983009808
    %v7590 = vunpack.c.0.s8 %v7589
    %v7591 = vlaneseq
    %v7592 = vshrl.u32 %v7591, 7
    %v7593 = vsub.s32 %v7590, %v7592
    %v7594 = vrot.slane %v7587, %v7593
    %v7595 = vcombine.low %v1155, %v7594
    %v7596 = vcombine.low %v269, %v2005
    %v7598 = vunpack.c.l.s4 1983009808
    %v7599 = vunpack.c.0.s8 %v7598
    %v7600 = vlaneseq
    %v7601 = vshrl.u32 %v7600, 7
    %v7602 = vsub.s32 %v7599, %v7601
    %v7603 = vrot.slane %v7596, %v7602
    %v7604 = vcombine.low %v7603, %v1196
    %v7605 = vcombine.low %v2006, %v319
    %v7607 = vunpack.c.l.s4 1983009808
    %v7608 = vunpack.c.0.s8 %v7607
    %v7609 = vlaneseq
    %v7610 = vshrl.u32 %v7609, 7
    %v7611 = vsub.s32 %v7608, %v7610
    %v7612 = vrot.slane %v7605, %v7611
    %v7613 = vcombine.low %v7612, %v1230
    %v7614 = vcombine.low %v335, %v2007
    %v7616 = vunpack.c.l.s4 1983009808
    %v7617 = vunpack.c.0.s8 %v7616
    %v7618 = vlaneseq
    %v7619 = vshrl.u32 %v7618, 7
    %v7620 = vsub.s32 %v7617, %v7619
    %v7621 = vrot.slane %v7614, %v7620
    %v7622 = vcombine.low %v1240, %v7621
    %v7623 = vcombine.low %v2008, %v385
    %v7625 = vunpack.c.l.s4 1983009808
    %v7626 = vunpack.c.0.s8 %v7625
    %v7627 = vlaneseq
    %v7628 = vshrl.u32 %v7627, 7
    %v7629 = vsub.s32 %v7626, %v7628
    %v7630 = vrot.slane %v7623, %v7629
    %v7631 = vcombine.low %v1274, %v7630
    %v7632 = vcombine.low %v401, %v2009
    %v7634 = vunpack.c.l.s4 1983009808
    %v7635 = vunpack.c.0.s8 %v7634
    %v7636 = vlaneseq
    %v7637 = vshrl.u32 %v7636, 7
    %v7638 = vsub.s32 %v7635, %v7637
    %v7639 = vrot.slane %v7632, %v7638
    %v7640 = vcombine.low %v7639, %v1315
    %v7641 = vcombine.low %v2010, %v451
    %v7643 = vunpack.c.l.s4 1983009808
    %v7644 = vunpack.c.0.s8 %v7643
    %v7645 = vlaneseq
    %v7646 = vshrl.u32 %v7645, 7
    %v7647 = vsub.s32 %v7644, %v7646
    %v7648 = vrot.slane %v7641, %v7647
    %v7649 = vcombine.low %v7648, %v1349
    %v7650 = vcombine.low %v467, %v2011
    %v7652 = vunpack.c.l.s4 1983009808
    %v7653 = vunpack.c.0.s8 %v7652
    %v7654 = vlaneseq
    %v7655 = vshrl.u32 %v7654, 7
    %v7656 = vsub.s32 %v7653, %v7655
    %v7657 = vrot.slane %v7650, %v7656
    %v7658 = vcombine.low %v1359, %v7657
    %v7659 = vcombine.low %v2012, %v517
    %v7661 = vunpack.c.l.s4 1983009808
    %v7662 = vunpack.c.0.s8 %v7661
    %v7663 = vlaneseq
    %v7664 = vshrl.u32 %v7663, 7
    %v7665 = vsub.s32 %v7662, %v7664
    %v7666 = vrot.slane %v7659, %v7665
    %v7667 = vcombine.low %v1393, %v7666
    %v7668 = vcombine.low %v533, %v2013
    %v7670 = vunpack.c.l.s4 1983009808
    %v7671 = vunpack.c.0.s8 %v7670
    %v7672 = vlaneseq
    %v7673 = vshrl.u32 %v7672, 7
    %v7674 = vsub.s32 %v7671, %v7673
    %v7675 = vrot.slane %v7668, %v7674
    %v7676 = vcombine.low %v7675, %v1434
    %v7677 = vcombine.low %v2014, %v583
    %v7679 = vunpack.c.l.s4 1983009808
    %v7680 = vunpack.c.0.s8 %v7679
    %v7681 = vlaneseq
    %v7682 = vshrl.u32 %v7681, 7
    %v7683 = vsub.s32 %v7680, %v7682
    %v7684 = vrot.slane %v7677, %v7683
    %v7685 = vcombine.low %v7684, %v1468
    %v7686 = vcombine.low %v599, %v2015
    %v7688 = vunpack.c.l.s4 1983009808
    %v7689 = vunpack.c.0.s8 %v7688
    %v7690 = vlaneseq
    %v7691 = vshrl.u32 %v7690, 7
    %v7692 = vsub.s32 %v7689, %v7691
    %v7693 = vrot.slane %v7686, %v7692
    %v7694 = vcombine.low %v1478, %v7693
    %v7695 = vcombine.low %v2016, %v5470
    %v7697 = vunpack.c.l.s4 1983009808
    %v7698 = vunpack.c.0.s8 %v7697
    %v7699 = vlaneseq
    %v7700 = vshrl.u32 %v7699, 7
    %v7701 = vsub.s32 %v7698, %v7700
    %v7702 = vrot.slane %v7695, %v7701
    %v7703 = vcombine.low %v1512, %v7702
    %v7704 = vcombine.low %v5469, %v5471
    %v7705 = vcombine.low %v5479, %v5487
    %v7707 = vunpack.c.l.s4 1983009808
    %v7708 = vunpack.c.0.s8 %v7707
    %v7709 = vlaneseq
    %v7710 = vshrl.u32 %v7709, 7
    %v7711 = vsub.s32 %v7708, %v7710
    %v7712 = vrot.slane %v7704, %v7711
    %v7714 = vunpack.c.l.s4 1983009808
    %v7715 = vunpack.c.0.s8 %v7714
    %v7716 = vlaneseq
    %v7717 = vshrl.u32 %v7716, 7
    %v7718 = vsub.s32 %v7715, %v7717
    %v7719 = vrot.slane %v7705, %v7718
    %v7720 = vcombine.low %v7712, %v7719
    %v7721 = vcombine.low %v5486, %v6275
    %v7723 = vunpack.c.l.s4 1983009808
    %v7724 = vunpack.c.0.s8 %v7723
    %v7725 = vlaneseq
    %v7726 = vshrl.u32 %v7725, 7
    %v7727 = vsub.s32 %v7724, %v7726
    %v7728 = vrot.slane %v7721, %v7727
    %v7729 = vcombine.low %v7728, %v1553
    %v7730 = vcombine.low %v2018, %v715
    %v7732 = vunpack.c.l.s4 1983009808
    %v7733 = vunpack.c.0.s8 %v7732
    %v7734 = vlaneseq
    %v7735 = vshrl.u32 %v7734, 7
    %v7736 = vsub.s32 %v7733, %v7735
    %v7737 = vrot.slane %v7730, %v7736
    %v7738 = vcombine.low %v7737, %v1587
    %v7739 = vcombine.low %v731, %v2019
    %v7741 = vunpack.c.l.s4 1983009808
    %v7742 = vunpack.c.0.s8 %v7741
    %v7743 = vlaneseq
    %v7744 = vshrl.u32 %v7743, 7
    %v7745 = vsub.s32 %v7742, %v7744
    %v7746 = vrot.slane %v7739, %v7745
    %v7747 = vcombine.low %v1597, %v7746
    %v7748 = vcombine.low %v2020, %v781
    %v7750 = vunpack.c.l.s4 1983009808
    %v7751 = vunpack.c.0.s8 %v7750
    %v7752 = vlaneseq
    %v7753 = vshrl.u32 %v7752, 7
    %v7754 = vsub.s32 %v7751, %v7753
    %v7755 = vrot.slane %v7748, %v7754
    %v7756 = vcombine.low %v1631, %v7755
    %v7757 = vcombine.low %v797, %v2021
    %v7759 = vunpack.c.l.s4 1983009808
    %v7760 = vunpack.c.0.s8 %v7759
    %v7761 = vlaneseq
    %v7762 = vshrl.u32 %v7761, 7
    %v7763 = vsub.s32 %v7760, %v7762
    %v7764 = vrot.slane %v7757, %v7763
    %v7765 = vcombine.low %v7764, %v1672
    %v7766 = vcombine.low %v2022, %v847
    %v7768 = vunpack.c.l.s4 1983009808
    %v7769 = vunpack.c.0.s8 %v7768
    %v7770 = vlaneseq
    %v7771 = vshrl.u32 %v7770, 7
    %v7772 = vsub.s32 %v7769, %v7771
    %v7773 = vrot.slane %v7766, %v7772
    %v7774 = vcombine.low %v7773, %v1706
    %v7775 = vcombine.low %v863, %v2023
    %v7777 = vunpack.c.l.s4 1983009808
    %v7778 = vunpack.c.0.s8 %v7777
    %v7779 = vlaneseq
    %v7780 = vshrl.u32 %v7779, 7
    %v7781 = vsub.s32 %v7778, %v7780
    %v7782 = vrot.slane %v7775, %v7781
    %v7783 = vcombine.low %v1716, %v7782
    %v7784 = vcombine.low %v2024, %v913
    %v7786 = vunpack.c.l.s4 1983009808
    %v7787 = vunpack.c.0.s8 %v7786
    %v7788 = vlaneseq
    %v7789 = vshrl.u32 %v7788, 7
    %v7790 = vsub.s32 %v7787, %v7789
    %v7791 = vrot.slane %v7784, %v7790
    %v7792 = vcombine.low %v1750, %v7791
    %v7793 = vcombine.low %v929, %v2025
    %v7795 = vunpack.c.l.s4 1983009808
    %v7796 = vunpack.c.0.s8 %v7795
    %v7797 = vlaneseq
    %v7798 = vshrl.u32 %v7797, 7
    %v7799 = vsub.s32 %v7796, %v7798
    %v7800 = vrot.slane %v7793, %v7799
    %v7801 = vcombine.low %v7800, %v1791
    %v7802 = vcombine.low %v2026, %v979
    %v7804 = vunpack.c.l.s4 1983009808
    %v7805 = vunpack.c.0.s8 %v7804
    %v7806 = vlaneseq
    %v7807 = vshrl.u32 %v7806, 7
    %v7808 = vsub.s32 %v7805, %v7807
    %v7809 = vrot.slane %v7802, %v7808
    %v7810 = vcombine.low %v7809, %v1825
    %v7811 = vcombine.low %v995, %v2027
    %v7813 = vunpack.c.l.s4 1983009808
    %v7814 = vunpack.c.0.s8 %v7813
    %v7815 = vlaneseq
    %v7816 = vshrl.u32 %v7815, 7
    %v7817 = vsub.s32 %v7814, %v7816
    %v7818 = vrot.slane %v7811, %v7817
    %v7819 = vcombine.low %v1835, %v7818
    %v7820 = vcombine.low %v2028, %v1045
    %v7822 = vunpack.c.l.s4 1983009808
    %v7823 = vunpack.c.0.s8 %v7822
    %v7824 = vlaneseq
    %v7825 = vshrl.u32 %v7824, 7
    %v7826 = vsub.s32 %v7823, %v7825
    %v7827 = vrot.slane %v7820, %v7826
    %v7828 = vcombine.low %v1869, %v7827
    %v7829 = vcombine.low %v1061, %v2029
    %v7831 = vunpack.c.l.s4 1983009808
    %v7832 = vunpack.c.0.s8 %v7831
    %v7833 = vlaneseq
    %v7834 = vshrl.u32 %v7833, 7
    %v7835 = vsub.s32 %v7832, %v7834
    %v7836 = vrot.slane %v7829, %v7835
    %v7837 = vcombine.low %v7836, %v1910
    %v7838 = vcombine.low %v2030, %v5503
    %v7839 = vcombine.low %v5502, %v5504
    %v7841 = vunpack.c.l.s4 1983009808
    %v7842 = vunpack.c.0.s8 %v7841
    %v7843 = vlaneseq
    %v7844 = vshrl.u32 %v7843, 7
    %v7845 = vsub.s32 %v7842, %v7844
    %v7846 = vrot.slane %v7838, %v7845
    %v7848 = vunpack.c.l.s4 1983009808
    %v7849 = vunpack.c.0.s8 %v7848
    %v7850 = vlaneseq
    %v7851 = vshrl.u32 %v7850, 7
    %v7852 = vsub.s32 %v7849, %v7851
    %v7853 = vrot.slane %v7839, %v7852
    %v7854 = vcombine.low %v7846, %v7853
    %v7855 = vcombine.low %v5512, %v5520
    %v7856 = vcombine.low %v5519, %v6276
    %v7858 = vunpack.c.l.s4 1983009808
    %v7859 = vunpack.c.0.s8 %v7858
    %v7860 = vlaneseq
    %v7861 = vshrl.u32 %v7860, 7
    %v7862 = vsub.s32 %v7859, %v7861
    %v7863 = vrot.slane %v7855, %v7862
    %v7865 = vunpack.c.l.s4 1983009808
    %v7866 = vunpack.c.0.s8 %v7865
    %v7867 = vlaneseq
    %v7868 = vshrl.u32 %v7867, 7
    %v7869 = vsub.s32 %v7866, %v7868
    %v7870 = vrot.slane %v7856, %v7869
    %v7871 = vcombine.low %v7863, %v7870
    %v7901 = vpack.c.bf16 %v7595, %v1146
    %v7902 = vpack.c.bf16 %v7604, %v1180
    %v7903 = vpack.c.bf16 %v7613, %v1214
    %v7904 = vpack.c.bf16 %v1265, %v7622
    %v7905 = vpack.c.bf16 %v1299, %v7631
    %v7906 = vpack.c.bf16 %v1333, %v7640
    %v7907 = vpack.c.bf16 %v7658, %v7649
    %v7908 = vpack.c.bf16 %v7667, %v1384
    %v7909 = vpack.c.bf16 %v7676, %v1418
    %v7910 = vpack.c.bf16 %v7685, %v1452
    %v7911 = vpack.c.bf16 %v1503, %v7694
    %v7912 = vpack.c.bf16 %v7720, %v7703
    %v7913 = vpack.c.bf16 %v1571, %v7729
    %v7914 = vpack.c.bf16 %v7747, %v7738
    %v7915 = vpack.c.bf16 %v7756, %v1622
    %v7916 = vpack.c.bf16 %v7765, %v1656
    %v7917 = vpack.c.bf16 %v7774, %v1690
    %v7918 = vpack.c.bf16 %v1741, %v7783
    %v7919 = vpack.c.bf16 %v1775, %v7792
    %v7920 = vpack.c.bf16 %v1809, %v7801
    %v7921 = vpack.c.bf16 %v7819, %v7810
    %v7922 = vpack.c.bf16 %v7828, %v1860
    %v7923 = vpack.c.bf16 %v7837, %v1894
    %v7924 = vpack.c.bf16 %v7854, %v1928
    %v7925 = vpack.c.bf16 %v7871, %v7871
    %v7927 = vsel %vm3561, %v7901, 0
    %v7930 = vsel %vm3561, %v7902, 0
    %v7933 = vsel %vm3561, %v7903, 0
    %v7936 = vsel %vm3561, %v7904, 0
    %v7939 = vsel %vm3561, %v7905, 0
    %v7942 = vsel %vm3561, %v7906, 0
    %v7945 = vsel %vm3561, %v7907, 0
    %v7948 = vsel %vm3561, %v7908, 0
    %v7951 = vsel %vm3561, %v7909, 0
    %v7954 = vsel %vm3561, %v7910, 0
    %v7957 = vsel %vm3561, %v7911, 0
    %v7960 = vsel %vm3561, %v7912, 0
    %v7963 = vsel %vm3561, %v7913, 0
    %v7966 = vsel %vm3561, %v7914, 0
    %v7969 = vsel %vm3561, %v7915, 0
    %v7972 = vsel %vm3561, %v7916, 0
    %v7975 = vsel %vm3561, %v7917, 0
    %v7978 = vsel %vm3561, %v7918, 0
    %v7981 = vsel %vm3561, %v7919, 0
    %v7984 = vsel %vm3561, %v7920, 0
    %v7987 = vsel %vm3561, %v7921, 0
    %v7990 = vsel %vm3561, %v7922, 0
    %v7993 = vsel %vm3561, %v7923, 0
    %v7996 = vsel %vm3561, %v7924, 0
    %v7999 = vsel %vm3561, %v7925, 0
    %v8002 = vand.u32 %v112, %v3639
    %8004 = vmatprep.subr.bf16.mxu0 0
    %8005 = vmatpush1.bf16.msra.mxu0 %v8002
    %8006 = vmatprep.subr.bf16.mxu0 0
    %8007 = vmatpush1.bf16.msra.mxu0 0
    %8008 = vmatprep.subr.bf16.mxu0 0
    %8009 = vmatpush1.bf16.msra.mxu0 0
    %8010 = vmatprep.subr.bf16.mxu0 0
    %8011 = vmatpush1.bf16.msra.mxu0 0
    %8012 = vmatprep.subr.bf16.mxu0 0
    %8013 = vmatpush1.bf16.msra.mxu0 0
    %8014 = vmatprep.subr.bf16.mxu0 0
    %8015 = vmatpush1.bf16.msra.mxu0 0
    %8016 = vmatprep.subr.bf16.mxu0 0
    %8017 = vmatpush1.bf16.msra.mxu0 0
    %8018 = vmatprep.subr.bf16.mxu0 0
    %8019 = vmatpush1.bf16.msra.mxu0 0
    %8020 = vmatprep.subr.bf16.mxu0 0
    %8021 = vmatpush1.bf16.msra.mxu0 0
    %8022 = vmatprep.subr.bf16.mxu0 0
    %8023 = vmatpush1.bf16.msra.mxu0 0
    %8024 = vmatprep.subr.bf16.mxu0 0
    %8025 = vmatpush1.bf16.msra.mxu0 0
    %8026 = vmatprep.subr.bf16.mxu0 0
    %8027 = vmatpush1.bf16.msra.mxu0 0
    %8028 = vmatprep.subr.bf16.mxu0 0
    %8029 = vmatpush1.bf16.msra.mxu0 0
    %8030 = vmatprep.subr.bf16.mxu0 0
    %8031 = vmatpush1.bf16.msra.mxu0 0
    %8032 = vmatprep.subr.bf16.mxu0 0
    %8033 = vmatpush1.bf16.msra.mxu0 0
    %8034 = vmatprep.subr.bf16.mxu0 0
    %8035 = vmatpush1.bf16.msra.mxu0 0
    %8036 = vmatprep.mubr.bf16.mxu0 0
    %8037 = vmatmul.mubr.bf16.gmra.mrb[0].mxu0 %v7927
    %v8038 = vpop.f32.mrb[0].mxu0
    %v8039 = vadd.f32 0.0, %v8038
    %v8040 = vpop.f32.mrb[0].mxu0
    %v8041 = vpop.f32.mrb[0].mxu0
    %v8042 = vadd.f32 0.0, %v8041
    %v8043 = vpop.f32.mrb[0].mxu0
    %8044 = vmatprep.mubr.bf16.mxu0 0
    %8045 = vmatmul.mubr.bf16.gmra.mrb[0].mxu0 %v7930
    %v8046 = vpop.f32.mrb[0].mxu0
    %v8047 = vadd.f32 0.0, %v8046
    %v8048 = vpop.f32.mrb[0].mxu0
    %v8049 = vpop.f32.mrb[0].mxu0
    %v8050 = vadd.f32 0.0, %v8049
    %v8051 = vpop.f32.mrb[0].mxu0
    %8052 = vmatprep.mubr.bf16.mxu0 0
    %8053 = vmatmul.mubr.bf16.gmra.mrb[0].mxu0 %v7933
    %v8054 = vpop.f32.mrb[0].mxu0
    %v8055 = vadd.f32 0.0, %v8054
    %v8056 = vpop.f32.mrb[0].mxu0
    %v8057 = vpop.f32.mrb[0].mxu0
    %v8058 = vadd.f32 0.0, %v8057
    %v8059 = vpop.f32.mrb[0].mxu0
    %8060 = vmatprep.mubr.bf16.mxu0 0
    %8061 = vmatmul.mubr.bf16.gmra.mrb[0].mxu0 %v7936
    %v8062 = vpop.f32.mrb[0].mxu0
    %v8063 = vadd.f32 0.0, %v8062
    %v8064 = vpop.f32.mrb[0].mxu0
    %v8065 = vpop.f32.mrb[0].mxu0
    %v8066 = vadd.f32 0.0, %v8065
    %v8067 = vpop.f32.mrb[0].mxu0
    %8068 = vmatprep.mubr.bf16.mxu0 0
    %8069 = vmatmul.mubr.bf16.gmra.mrb[0].mxu0 %v7939
    %v8070 = vpop.f32.mrb[0].mxu0
    %v8071 = vadd.f32 0.0, %v8070
    %v8072 = vpop.f32.mrb[0].mxu0
    %v8073 = vpop.f32.mrb[0].mxu0
    %v8074 = vadd.f32 0.0, %v8073
    %v8075 = vpop.f32.mrb[0].mxu0
    %8076 = vmatprep.mubr.bf16.mxu0 0
    %8077 = vmatmul.mubr.bf16.gmra.mrb[0].mxu0 %v7942
    %v8078 = vpop.f32.mrb[0].mxu0
    %v8079 = vadd.f32 0.0, %v8078
    %v8080 = vpop.f32.mrb[0].mxu0
    %v8081 = vpop.f32.mrb[0].mxu0
    %v8082 = vadd.f32 0.0, %v8081
    %v8083 = vpop.f32.mrb[0].mxu0
    %8084 = vmatprep.mubr.bf16.mxu0 0
    %8085 = vmatmul.mubr.bf16.gmra.mrb[0].mxu0 %v7945
    %v8086 = vpop.f32.mrb[0].mxu0
    %v8087 = vadd.f32 0.0, %v8086
    %v8088 = vpop.f32.mrb[0].mxu0
    %v8089 = vpop.f32.mrb[0].mxu0
    %v8090 = vadd.f32 0.0, %v8089
    %v8091 = vpop.f32.mrb[0].mxu0
    %8092 = vmatprep.mubr.bf16.mxu0 0
    %8093 = vmatmul.mubr.bf16.gmra.mrb[0].mxu0 %v7948
    %v8094 = vpop.f32.mrb[0].mxu0
    %v8095 = vadd.f32 0.0, %v8094
    %v8096 = vpop.f32.mrb[0].mxu0
    %v8097 = vpop.f32.mrb[0].mxu0
    %v8098 = vadd.f32 0.0, %v8097
    %v8099 = vpop.f32.mrb[0].mxu0
    %8100 = vmatprep.mubr.bf16.mxu0 0
    %8101 = vmatmul.mubr.bf16.gmra.mrb[0].mxu0 %v7951
    %v8102 = vpop.f32.mrb[0].mxu0
    %v8103 = vadd.f32 0.0, %v8102
    %v8104 = vpop.f32.mrb[0].mxu0
    %v8105 = vpop.f32.mrb[0].mxu0
    %v8106 = vadd.f32 0.0, %v8105
    %v8107 = vpop.f32.mrb[0].mxu0
    %8108 = vmatprep.mubr.bf16.mxu0 0
    %8109 = vmatmul.mubr.bf16.gmra.mrb[0].mxu0 %v7954
    %v8110 = vpop.f32.mrb[0].mxu0
    %v8111 = vadd.f32 0.0, %v8110
    %v8112 = vpop.f32.mrb[0].mxu0
    %v8113 = vpop.f32.mrb[0].mxu0
    %v8114 = vadd.f32 0.0, %v8113
    %v8115 = vpop.f32.mrb[0].mxu0
    %8116 = vmatprep.mubr.bf16.mxu0 0
    %8117 = vmatmul.mubr.bf16.gmra.mrb[0].mxu0 %v7957
    %v8118 = vpop.f32.mrb[0].mxu0
    %v8119 = vadd.f32 0.0, %v8118
    %v8120 = vpop.f32.mrb[0].mxu0
    %v8121 = vpop.f32.mrb[0].mxu0
    %v8122 = vadd.f32 0.0, %v8121
    %v8123 = vpop.f32.mrb[0].mxu0
    %8124 = vmatprep.mubr.bf16.mxu0 0
    %8125 = vmatmul.mubr.bf16.gmra.mrb[0].mxu0 %v7960
    %v8126 = vpop.f32.mrb[0].mxu0
    %v8127 = vadd.f32 0.0, %v8126
    %v8128 = vpop.f32.mrb[0].mxu0
    %v8129 = vpop.f32.mrb[0].mxu0
    %v8130 = vadd.f32 0.0, %v8129
    %v8131 = vpop.f32.mrb[0].mxu0
    %8132 = vmatprep.mubr.bf16.mxu0 0
    %8133 = vmatmul.mubr.bf16.gmra.mrb[0].mxu0 %v7963
    %v8134 = vpop.f32.mrb[0].mxu0
    %v8135 = vadd.f32 0.0, %v8134
    %v8136 = vpop.f32.mrb[0].mxu0
    %v8137 = vpop.f32.mrb[0].mxu0
    %v8138 = vadd.f32 0.0, %v8137
    %v8139 = vpop.f32.mrb[0].mxu0
    %8140 = vmatprep.mubr.bf16.mxu0 0
    %8141 = vmatmul.mubr.bf16.gmra.mrb[0].mxu0 %v7966
    %v8142 = vpop.f32.mrb[0].mxu0
    %v8143 = vadd.f32 0.0, %v8142
    %v8144 = vpop.f32.mrb[0].mxu0
    %v8145 = vpop.f32.mrb[0].mxu0
    %v8146 = vadd.f32 0.0, %v8145
    %v8147 = vpop.f32.mrb[0].mxu0
    %8148 = vmatprep.mubr.bf16.mxu0 0
    %8149 = vmatmul.mubr.bf16.gmra.mrb[0].mxu0 %v7969
    %v8150 = vpop.f32.mrb[0].mxu0
    %v8151 = vadd.f32 0.0, %v8150
    %v8152 = vpop.f32.mrb[0].mxu0
    %v8153 = vpop.f32.mrb[0].mxu0
    %v8154 = vadd.f32 0.0, %v8153
    %v8155 = vpop.f32.mrb[0].mxu0
    %8156 = vmatprep.mubr.bf16.mxu0 0
    %8157 = vmatmul.mubr.bf16.gmra.mrb[0].mxu0 %v7972
    %v8158 = vpop.f32.mrb[0].mxu0
    %v8159 = vadd.f32 0.0, %v8158
    %v8160 = vpop.f32.mrb[0].mxu0
    %v8161 = vpop.f32.mrb[0].mxu0
    %v8162 = vadd.f32 0.0, %v8161
    %v8163 = vpop.f32.mrb[0].mxu0
    %8164 = vmatprep.mubr.bf16.mxu0 0
    %8165 = vmatmul.mubr.bf16.gmra.mrb[0].mxu0 %v7975
    %v8166 = vpop.f32.mrb[0].mxu0
    %v8167 = vadd.f32 0.0, %v8166
    %v8168 = vpop.f32.mrb[0].mxu0
    %v8169 = vpop.f32.mrb[0].mxu0
    %v8170 = vadd.f32 0.0, %v8169
    %v8171 = vpop.f32.mrb[0].mxu0
    %8172 = vmatprep.mubr.bf16.mxu0 0
    %8173 = vmatmul.mubr.bf16.gmra.mrb[0].mxu0 %v7978
    %v8174 = vpop.f32.mrb[0].mxu0
    %v8175 = vadd.f32 0.0, %v8174
    %v8176 = vpop.f32.mrb[0].mxu0
    %v8177 = vpop.f32.mrb[0].mxu0
    %v8178 = vadd.f32 0.0, %v8177
    %v8179 = vpop.f32.mrb[0].mxu0
    %8180 = vmatprep.mubr.bf16.mxu0 0
    %8181 = vmatmul.mubr.bf16.gmra.mrb[0].mxu0 %v7981
    %v8182 = vpop.f32.mrb[0].mxu0
    %v8183 = vadd.f32 0.0, %v8182
    %v8184 = vpop.f32.mrb[0].mxu0
    %v8185 = vpop.f32.mrb[0].mxu0
    %v8186 = vadd.f32 0.0, %v8185
    %v8187 = vpop.f32.mrb[0].mxu0
    %8188 = vmatprep.mubr.bf16.mxu0 0
    %8189 = vmatmul.mubr.bf16.gmra.mrb[0].mxu0 %v7984
    %v8190 = vpop.f32.mrb[0].mxu0
    %v8191 = vadd.f32 0.0, %v8190
    %v8192 = vpop.f32.mrb[0].mxu0
    %v8193 = vpop.f32.mrb[0].mxu0
    %v8194 = vadd.f32 0.0, %v8193
    %v8195 = vpop.f32.mrb[0].mxu0
    %8196 = vmatprep.mubr.bf16.mxu0 0
    %8197 = vmatmul.mubr.bf16.gmra.mrb[0].mxu0 %v7987
    %v8198 = vpop.f32.mrb[0].mxu0
    %v8199 = vadd.f32 0.0, %v8198
    %v8200 = vpop.f32.mrb[0].mxu0
    %v8201 = vpop.f32.mrb[0].mxu0
    %v8202 = vadd.f32 0.0, %v8201
    %v8203 = vpop.f32.mrb[0].mxu0
    %8204 = vmatprep.mubr.bf16.mxu0 0
    %8205 = vmatmul.mubr.bf16.gmra.mrb[0].mxu0 %v7990
    %v8206 = vpop.f32.mrb[0].mxu0
    %v8207 = vadd.f32 0.0, %v8206
    %v8208 = vpop.f32.mrb[0].mxu0
    %v8209 = vpop.f32.mrb[0].mxu0
    %v8210 = vadd.f32 0.0, %v8209
    %v8211 = vpop.f32.mrb[0].mxu0
    %8212 = vmatprep.mubr.bf16.mxu0 0
    %8213 = vmatmul.mubr.bf16.gmra.mrb[0].mxu0 %v7993
    %v8214 = vpop.f32.mrb[0].mxu0
    %v8215 = vadd.f32 0.0, %v8214
    %v8216 = vpop.f32.mrb[0].mxu0
    %v8217 = vpop.f32.mrb[0].mxu0
    %v8218 = vadd.f32 0.0, %v8217
    %v8219 = vpop.f32.mrb[0].mxu0
    %8220 = vmatprep.mubr.bf16.mxu0 0
    %8221 = vmatmul.mubr.bf16.gmra.mrb[0].mxu0 %v7996
    %v8222 = vpop.f32.mrb[0].mxu0
    %v8223 = vadd.f32 0.0, %v8222
    %v8224 = vpop.f32.mrb[0].mxu0
    %v8225 = vpop.f32.mrb[0].mxu0
    %v8226 = vadd.f32 0.0, %v8225
    %v8227 = vpop.f32.mrb[0].mxu0
    %8228 = vmatprep.mubr.bf16.mxu0 0
    %8229 = vmatmul.mubr.bf16.gmra.mrb[0].mxu0 %v7999
    %v8230 = vpop.f32.mrb[0].mxu0
    %v8231 = vadd.f32 0.0, %v8230
    %v8232 = vpop.f32.mrb[0].mxu0
    %v8233 = vpop.f32.mrb[0].mxu0
    %v8234 = vpop.f32.mrb[0].mxu0
    %8235 = vdwg.mxu0
    %v8236 = vadd.f32 %v7538, %v8039
    %v8237 = vadd.f32 %v7539, %v8042
    %v8238 = vadd.f32 %v7540, %v8047
    %v8239 = vadd.f32 %v7541, %v8050
    %v8240 = vadd.f32 %v7542, %v8055
    %v8241 = vadd.f32 %v7543, %v8058
    %v8242 = vadd.f32 %v7544, %v8063
    %v8243 = vadd.f32 %v7545, %v8066
    %v8244 = vadd.f32 %v7546, %v8071
    %v8245 = vadd.f32 %v7547, %v8074
    %v8246 = vadd.f32 %v7548, %v8079
    %v8247 = vadd.f32 %v7549, %v8082
    %v8248 = vadd.f32 %v7550, %v8087
    %v8249 = vadd.f32 %v7551, %v8090
    %v8250 = vadd.f32 %v7552, %v8095
    %v8251 = vadd.f32 %v7553, %v8098
    %v8252 = vadd.f32 %v7554, %v8103
    %v8253 = vadd.f32 %v7555, %v8106
    %v8254 = vadd.f32 %v7556, %v8111
    %v8255 = vadd.f32 %v7557, %v8114
    %v8256 = vadd.f32 %v7558, %v8119
    %v8257 = vadd.f32 %v7559, %v8122
    %v8258 = vadd.f32 %v7560, %v8127
    %v8259 = vadd.f32 %v7561, %v8130
    %v8260 = vadd.f32 %v7562, %v8135
    %v8261 = vadd.f32 %v7563, %v8138
    %v8262 = vadd.f32 %v7564, %v8143
    %v8263 = vadd.f32 %v7565, %v8146
    %v8264 = vadd.f32 %v7566, %v8151
    %v8265 = vadd.f32 %v7567, %v8154
    %v8266 = vadd.f32 %v7568, %v8159
    %v8267 = vadd.f32 %v7569, %v8162
    %v8268 = vadd.f32 %v7570, %v8167
    %v8269 = vadd.f32 %v7571, %v8170
    %v8270 = vadd.f32 %v7572, %v8175
    %v8271 = vadd.f32 %v7573, %v8178
    %v8272 = vadd.f32 %v7574, %v8183
    %v8273 = vadd.f32 %v7575, %v8186
    %v8274 = vadd.f32 %v7576, %v8191
    %v8275 = vadd.f32 %v7577, %v8194
    %v8276 = vadd.f32 %v7578, %v8199
    %v8277 = vadd.f32 %v7579, %v8202
    %v8278 = vadd.f32 %v7580, %v8207
    %v8279 = vadd.f32 %v7581, %v8210
    %v8280 = vadd.f32 %v7582, %v8215
    %v8281 = vadd.f32 %v7583, %v8218
    %v8282 = vadd.f32 %v7584, %v8223
    %v8283 = vadd.f32 %v7585, %v8226
    %v8284 = vadd.f32 %v7586, %v8231
    %v8289 = vcombine.high %v64, %v64
    %v8291 = vunpack.c.l.s4 1983009808
    %v8292 = vunpack.c.0.s8 %v8291
    %v8293 = vlaneseq
    %v8294 = vshrl.u32 %v8293, 7
    %v8295 = vsub.s32 %v8292, %v8294
    %v8296 = vrot.slane %v64, %v8295
    %v8298 = vunpack.c.l.s4 1983009808
    %v8299 = vunpack.c.0.s8 %v8298
    %v8300 = vlaneseq
    %v8301 = vshrl.u32 %v8300, 7
    %v8302 = vsub.s32 %v8299, %v8301
    %v8303 = vrot.slane %v8289, %v8302
    %v8304 = vcombine.high %v8296, %v8296
    %v8305 = vcombine.high %v8303, %v8303
    %v8306 = vcombine.high %v65, %v65
    %v8308 = vunpack.c.l.s4 1983009808
    %v8309 = vunpack.c.0.s8 %v8308
    %v8310 = vlaneseq
    %v8311 = vshrl.u32 %v8310, 7
    %v8312 = vsub.s32 %v8309, %v8311
    %v8313 = vrot.slane %v65, %v8312
    %v8315 = vunpack.c.l.s4 1983009808
    %v8316 = vunpack.c.0.s8 %v8315
    %v8317 = vlaneseq
    %v8318 = vshrl.u32 %v8317, 7
    %v8319 = vsub.s32 %v8316, %v8318
    %v8320 = vrot.slane %v8306, %v8319
    %v8321 = vcombine.high %v8313, %v8313
    %v8322 = vcombine.high %v96, %v96
    %v8324 = vunpack.c.l.s4 1983009808
    %v8325 = vunpack.c.0.s8 %v8324
    %v8326 = vlaneseq
    %v8327 = vshrl.u32 %v8326, 7
    %v8328 = vsub.s32 %v8325, %v8327
    %v8329 = vrot.slane %v96, %v8328
    %v8331 = vunpack.c.l.s4 1983009808
    %v8332 = vunpack.c.0.s8 %v8331
    %v8333 = vlaneseq
    %v8334 = vshrl.u32 %v8333, 7
    %v8335 = vsub.s32 %v8332, %v8334
    %v8336 = vrot.slane %v8322, %v8335
    %v8337 = vcombine.high %v8329, %v8329
    %v8338 = vcombine.high %v8336, %v8336
    %v8339 = vcombine.high %v97, %v97
    %v8341 = vunpack.c.l.s4 1983009808
    %v8342 = vunpack.c.0.s8 %v8341
    %v8343 = vlaneseq
    %v8344 = vshrl.u32 %v8343, 7
    %v8345 = vsub.s32 %v8342, %v8344
    %v8346 = vrot.slane %v97, %v8345
    %v8348 = vunpack.c.l.s4 1983009808
    %v8349 = vunpack.c.0.s8 %v8348
    %v8350 = vlaneseq
    %v8351 = vshrl.u32 %v8350, 7
    %v8352 = vsub.s32 %v8349, %v8351
    %v8353 = vrot.slane %v8339, %v8352
    %v8354 = vcombine.high %v8346, %v8346
    %v8355 = vcombine.low %v1162, %v1172
    %v8356 = vcombine.low %v1179, %v1189
    %v8357 = vcombine.low %v1196, %v1206
    %v8358 = vcombine.low %v1213, %v1223
    %v8359 = vcombine.low %v1230, %v1240
    %v8360 = vcombine.low %v1247, %v1257
    %v8361 = vcombine.low %v1264, %v1274
    %v8362 = vcombine.low %v1281, %v1291
    %v8363 = vcombine.low %v1298, %v1308
    %v8364 = vcombine.low %v1315, %v1325
    %v8365 = vcombine.low %v1332, %v1342
    %v8366 = vcombine.low %v1349, %v1359
    %v8367 = vcombine.low %v1366, %v1376
    %v8368 = vcombine.low %v1383, %v1393
    %v8369 = vcombine.low %v1400, %v1410
    %v8370 = vcombine.low %v1417, %v1427
    %v8371 = vcombine.low %v1434, %v1444
    %v8372 = vcombine.low %v1451, %v1461
    %v8373 = vcombine.low %v1468, %v1478
    %v8374 = vcombine.low %v1485, %v1495
    %v8375 = vcombine.low %v1502, %v1512
    %v8376 = vcombine.low %v5462, %v5470
    %v8378 = vunpack.c.l.s4 1983009808
    %v8379 = vunpack.c.0.s8 %v8378
    %v8380 = vlaneseq
    %v8381 = vshrl.u32 %v8380, 7
    %v8382 = vsub.s32 %v8379, %v8381
    %v8383 = vrot.slane %v8376, %v8382
    %v8384 = vcombine.low %v8383, %v7712
    %v8385 = vcombine.low %v5486, %v8296
    %v8387 = vunpack.c.l.s4 1983009808
    %v8388 = vunpack.c.0.s8 %v8387
    %v8389 = vlaneseq
    %v8390 = vshrl.u32 %v8389, 7
    %v8391 = vsub.s32 %v8388, %v8390
    %v8392 = vrot.slane %v8385, %v8391
    %v8393 = vcombine.low %v7719, %v8392
    %v8394 = vcombine.low %v8304, %v8303
    %v8395 = vcombine.low %v8305, %v8313
    %v8397 = vunpack.c.l.s4 1983009808
    %v8398 = vunpack.c.0.s8 %v8397
    %v8399 = vlaneseq
    %v8400 = vshrl.u32 %v8399, 7
    %v8401 = vsub.s32 %v8398, %v8400
    %v8402 = vrot.slane %v8394, %v8401
    %v8404 = vunpack.c.l.s4 1983009808
    %v8405 = vunpack.c.0.s8 %v8404
    %v8406 = vlaneseq
    %v8407 = vshrl.u32 %v8406, 7
    %v8408 = vsub.s32 %v8405, %v8407
    %v8409 = vrot.slane %v8395, %v8408
    %v8410 = vcombine.low %v8402, %v8409
    %v8411 = vcombine.low %v8321, %v8320
    %v8413 = vunpack.c.l.s4 1983009808
    %v8414 = vunpack.c.0.s8 %v8413
    %v8415 = vlaneseq
    %v8416 = vshrl.u32 %v8415, 7
    %v8417 = vsub.s32 %v8414, %v8416
    %v8418 = vrot.slane %v8411, %v8417
    %v8419 = vcombine.low %v8418, %v1580
    %v8420 = vcombine.low %v1587, %v1597
    %v8421 = vcombine.low %v1604, %v1614
    %v8422 = vcombine.low %v1621, %v1631
    %v8423 = vcombine.low %v1638, %v1648
    %v8424 = vcombine.low %v1655, %v1665
    %v8425 = vcombine.low %v1672, %v1682
    %v8426 = vcombine.low %v1689, %v1699
    %v8427 = vcombine.low %v1706, %v1716
    %v8428 = vcombine.low %v1723, %v1733
    %v8429 = vcombine.low %v1740, %v1750
    %v8430 = vcombine.low %v1757, %v1767
    %v8431 = vcombine.low %v1774, %v1784
    %v8432 = vcombine.low %v1791, %v1801
    %v8433 = vcombine.low %v1808, %v1818
    %v8434 = vcombine.low %v1825, %v1835
    %v8435 = vcombine.low %v1842, %v1852
    %v8436 = vcombine.low %v1859, %v1869
    %v8437 = vcombine.low %v1876, %v1886
    %v8438 = vcombine.low %v1893, %v1903
    %v8439 = vcombine.low %v1910, %v1920
    %v8440 = vcombine.low %v5495, %v5503
    %v8442 = vunpack.c.l.s4 1983009808
    %v8443 = vunpack.c.0.s8 %v8442
    %v8444 = vlaneseq
    %v8445 = vshrl.u32 %v8444, 7
    %v8446 = vsub.s32 %v8443, %v8445
    %v8447 = vrot.slane %v8440, %v8446
    %v8448 = vcombine.low %v1927, %v8447
    %v8449 = vcombine.low %v7853, %v7863
    %v8450 = vcombine.low %v5519, %v8329
    %v8451 = vcombine.low %v8337, %v8336
    %v8453 = vunpack.c.l.s4 1983009808
    %v8454 = vunpack.c.0.s8 %v8453
    %v8455 = vlaneseq
    %v8456 = vshrl.u32 %v8455, 7
    %v8457 = vsub.s32 %v8454, %v8456
    %v8458 = vrot.slane %v8450, %v8457
    %v8460 = vunpack.c.l.s4 1983009808
    %v8461 = vunpack.c.0.s8 %v8460
    %v8462 = vlaneseq
    %v8463 = vshrl.u32 %v8462, 7
    %v8464 = vsub.s32 %v8461, %v8463
    %v8465 = vrot.slane %v8451, %v8464
    %v8466 = vcombine.low %v8458, %v8465
    %v8467 = vcombine.low %v8338, %v8346
    %v8468 = vcombine.low %v8354, %v8353
    %v8470 = vunpack.c.l.s4 1983009808
    %v8471 = vunpack.c.0.s8 %v8470
    %v8472 = vlaneseq
    %v8473 = vshrl.u32 %v8472, 7
    %v8474 = vsub.s32 %v8471, %v8473
    %v8475 = vrot.slane %v8467, %v8474
    %v8477 = vunpack.c.l.s4 1983009808
    %v8478 = vunpack.c.0.s8 %v8477
    %v8479 = vlaneseq
    %v8480 = vshrl.u32 %v8479, 7
    %v8481 = vsub.s32 %v8478, %v8480
    %v8482 = vrot.slane %v8468, %v8481
    %v8483 = vcombine.low %v8475, %v8482
    %v8533 = vpack.c.bf16 %v8356, %v8355
    %v8534 = vpack.c.bf16 %v8358, %v8357
    %v8535 = vpack.c.bf16 %v8360, %v8359
    %v8536 = vpack.c.bf16 %v8362, %v8361
    %v8537 = vpack.c.bf16 %v8364, %v8363
    %v8538 = vpack.c.bf16 %v8366, %v8365
    %v8539 = vpack.c.bf16 %v8368, %v8367
    %v8540 = vpack.c.bf16 %v8370, %v8369
    %v8541 = vpack.c.bf16 %v8372, %v8371
    %v8542 = vpack.c.bf16 %v8374, %v8373
    %v8543 = vpack.c.bf16 %v8384, %v8375
    %v8544 = vpack.c.bf16 %v8410, %v8393
    %v8545 = vpack.c.bf16 %v8420, %v8419
    %v8546 = vpack.c.bf16 %v8422, %v8421
    %v8547 = vpack.c.bf16 %v8424, %v8423
    %v8548 = vpack.c.bf16 %v8426, %v8425
    %v8549 = vpack.c.bf16 %v8428, %v8427
    %v8550 = vpack.c.bf16 %v8430, %v8429
    %v8551 = vpack.c.bf16 %v8432, %v8431
    %v8552 = vpack.c.bf16 %v8434, %v8433
    %v8553 = vpack.c.bf16 %v8436, %v8435
    %v8554 = vpack.c.bf16 %v8438, %v8437
    %v8555 = vpack.c.bf16 %v8448, %v8439
    %v8556 = vpack.c.bf16 %v8466, %v8449
    %v8557 = vpack.c.bf16 %v8483, %v8483
    %v8559 = vsel %vm3561, %v8533, 0
    %v8562 = vsel %vm3561, %v8534, 0
    %v8565 = vsel %vm3561, %v8535, 0
    %v8568 = vsel %vm3561, %v8536, 0
    %v8571 = vsel %vm3561, %v8537, 0
    %v8574 = vsel %vm3561, %v8538, 0
    %v8577 = vsel %vm3561, %v8539, 0
    %v8580 = vsel %vm3561, %v8540, 0
    %v8583 = vsel %vm3561, %v8541, 0
    %v8586 = vsel %vm3561, %v8542, 0
    %v8589 = vsel %vm3561, %v8543, 0
    %v8592 = vsel %vm3561, %v8544, 0
    %v8595 = vsel %vm3561, %v8545, 0
    %v8598 = vsel %vm3561, %v8546, 0
    %v8601 = vsel %vm3561, %v8547, 0
    %v8604 = vsel %vm3561, %v8548, 0
    %v8607 = vsel %vm3561, %v8549, 0
    %v8610 = vsel %vm3561, %v8550, 0
    %v8613 = vsel %vm3561, %v8551, 0
    %v8616 = vsel %vm3561, %v8552, 0
    %v8619 = vsel %vm3561, %v8553, 0
    %v8622 = vsel %vm3561, %v8554, 0
    %v8625 = vsel %vm3561, %v8555, 0
    %v8628 = vsel %vm3561, %v8556, 0
    %v8631 = vsel %vm3561, %v8557, 0
    %v8634 = vand.u32 %v113, %v3639
    %8636 = vmatprep.subr.bf16.mxu0 0
    %8637 = vmatpush1.bf16.msra.mxu0 %v8634
    %8638 = vmatprep.subr.bf16.mxu0 0
    %8639 = vmatpush1.bf16.msra.mxu0 0
    %8640 = vmatprep.subr.bf16.mxu0 0
    %8641 = vmatpush1.bf16.msra.mxu0 0
    %8642 = vmatprep.subr.bf16.mxu0 0
    %8643 = vmatpush1.bf16.msra.mxu0 0
    %8644 = vmatprep.subr.bf16.mxu0 0
    %8645 = vmatpush1.bf16.msra.mxu0 0
    %8646 = vmatprep.subr.bf16.mxu0 0
    %8647 = vmatpush1.bf16.msra.mxu0 0
    %8648 = vmatprep.subr.bf16.mxu0 0
    %8649 = vmatpush1.bf16.msra.mxu0 0
    %8650 = vmatprep.subr.bf16.mxu0 0
    %8651 = vmatpush1.bf16.msra.mxu0 0
    %8652 = vmatprep.subr.bf16.mxu0 0
    %8653 = vmatpush1.bf16.msra.mxu0 0
    %8654 = vmatprep.subr.bf16.mxu0 0
    %8655 = vmatpush1.bf16.msra.mxu0 0
    %8656 = vmatprep.subr.bf16.mxu0 0
    %8657 = vmatpush1.bf16.msra.mxu0 0
    %8658 = vmatprep.subr.bf16.mxu0 0
    %8659 = vmatpush1.bf16.msra.mxu0 0
    %8660 = vmatprep.subr.bf16.mxu0 0
    %8661 = vmatpush1.bf16.msra.mxu0 0
    %8662 = vmatprep.subr.bf16.mxu0 0
    %8663 = vmatpush1.bf16.msra.mxu0 0
    %8664 = vmatprep.subr.bf16.mxu0 0
    %8665 = vmatpush1.bf16.msra.mxu0 0
    %8666 = vmatprep.subr.bf16.mxu0 0
    %8667 = vmatpush1.bf16.msra.mxu0 0
    %8668 = vmatprep.mubr.bf16.mxu0 0
    %8669 = vmatmul.mubr.bf16.gmra.mrb[0].mxu0 %v8559
    %v8670 = vpop.f32.mrb[0].mxu0
    %v8671 = vadd.f32 0.0, %v8670
    %v8672 = vpop.f32.mrb[0].mxu0
    %v8673 = vpop.f32.mrb[0].mxu0
    %v8674 = vadd.f32 0.0, %v8673
    %v8675 = vpop.f32.mrb[0].mxu0
    %8676 = vmatprep.mubr.bf16.mxu0 0
    %8677 = vmatmul.mubr.bf16.gmra.mrb[0].mxu0 %v8562
    %v8678 = vpop.f32.mrb[0].mxu0
    %v8679 = vadd.f32 0.0, %v8678
    %v8680 = vpop.f32.mrb[0].mxu0
    %v8681 = vpop.f32.mrb[0].mxu0
    %v8682 = vadd.f32 0.0, %v8681
    %v8683 = vpop.f32.mrb[0].mxu0
    %8684 = vmatprep.mubr.bf16.mxu0 0
    %8685 = vmatmul.mubr.bf16.gmra.mrb[0].mxu0 %v8565
    %v8686 = vpop.f32.mrb[0].mxu0
    %v8687 = vadd.f32 0.0, %v8686
    %v8688 = vpop.f32.mrb[0].mxu0
    %v8689 = vpop.f32.mrb[0].mxu0
    %v8690 = vadd.f32 0.0, %v8689
    %v8691 = vpop.f32.mrb[0].mxu0
    %8692 = vmatprep.mubr.bf16.mxu0 0
    %8693 = vmatmul.mubr.bf16.gmra.mrb[0].mxu0 %v8568
    %v8694 = vpop.f32.mrb[0].mxu0
    %v8695 = vadd.f32 0.0, %v8694
    %v8696 = vpop.f32.mrb[0].mxu0
    %v8697 = vpop.f32.mrb[0].mxu0
    %v8698 = vadd.f32 0.0, %v8697
    %v8699 = vpop.f32.mrb[0].mxu0
    %8700 = vmatprep.mubr.bf16.mxu0 0
    %8701 = vmatmul.mubr.bf16.gmra.mrb[0].mxu0 %v8571
    %v8702 = vpop.f32.mrb[0].mxu0
    %v8703 = vadd.f32 0.0, %v8702
    %v8704 = vpop.f32.mrb[0].mxu0
    %v8705 = vpop.f32.mrb[0].mxu0
    %v8706 = vadd.f32 0.0, %v8705
    %v8707 = vpop.f32.mrb[0].mxu0
    %8708 = vmatprep.mubr.bf16.mxu0 0
    %8709 = vmatmul.mubr.bf16.gmra.mrb[0].mxu0 %v8574
    %v8710 = vpop.f32.mrb[0].mxu0
    %v8711 = vadd.f32 0.0, %v8710
    %v8712 = vpop.f32.mrb[0].mxu0
    %v8713 = vpop.f32.mrb[0].mxu0
    %v8714 = vadd.f32 0.0, %v8713
    %v8715 = vpop.f32.mrb[0].mxu0
    %8716 = vmatprep.mubr.bf16.mxu0 0
    %8717 = vmatmul.mubr.bf16.gmra.mrb[0].mxu0 %v8577
    %v8718 = vpop.f32.mrb[0].mxu0
    %v8719 = vadd.f32 0.0, %v8718
    %v8720 = vpop.f32.mrb[0].mxu0
    %v8721 = vpop.f32.mrb[0].mxu0
    %v8722 = vadd.f32 0.0, %v8721
    %v8723 = vpop.f32.mrb[0].mxu0
    %8724 = vmatprep.mubr.bf16.mxu0 0
    %8725 = vmatmul.mubr.bf16.gmra.mrb[0].mxu0 %v8580
    %v8726 = vpop.f32.mrb[0].mxu0
    %v8727 = vadd.f32 0.0, %v8726
    %v8728 = vpop.f32.mrb[0].mxu0
    %v8729 = vpop.f32.mrb[0].mxu0
    %v8730 = vadd.f32 0.0, %v8729
    %v8731 = vpop.f32.mrb[0].mxu0
    %8732 = vmatprep.mubr.bf16.mxu0 0
    %8733 = vmatmul.mubr.bf16.gmra.mrb[0].mxu0 %v8583
    %v8734 = vpop.f32.mrb[0].mxu0
    %v8735 = vadd.f32 0.0, %v8734
    %v8736 = vpop.f32.mrb[0].mxu0
    %v8737 = vpop.f32.mrb[0].mxu0
    %v8738 = vadd.f32 0.0, %v8737
    %v8739 = vpop.f32.mrb[0].mxu0
    %8740 = vmatprep.mubr.bf16.mxu0 0
    %8741 = vmatmul.mubr.bf16.gmra.mrb[0].mxu0 %v8586
    %v8742 = vpop.f32.mrb[0].mxu0
    %v8743 = vadd.f32 0.0, %v8742
    %v8744 = vpop.f32.mrb[0].mxu0
    %v8745 = vpop.f32.mrb[0].mxu0
    %v8746 = vadd.f32 0.0, %v8745
    %v8747 = vpop.f32.mrb[0].mxu0
    %8748 = vmatprep.mubr.bf16.mxu0 0
    %8749 = vmatmul.mubr.bf16.gmra.mrb[0].mxu0 %v8589
    %v8750 = vpop.f32.mrb[0].mxu0
    %v8751 = vadd.f32 0.0, %v8750
    %v8752 = vpop.f32.mrb[0].mxu0
    %v8753 = vpop.f32.mrb[0].mxu0
    %v8754 = vadd.f32 0.0, %v8753
    %v8755 = vpop.f32.mrb[0].mxu0
    %8756 = vmatprep.mubr.bf16.mxu0 0
    %8757 = vmatmul.mubr.bf16.gmra.mrb[0].mxu0 %v8592
    %v8758 = vpop.f32.mrb[0].mxu0
    %v8759 = vadd.f32 0.0, %v8758
    %v8760 = vpop.f32.mrb[0].mxu0
    %v8761 = vpop.f32.mrb[0].mxu0
    %v8762 = vadd.f32 0.0, %v8761
    %v8763 = vpop.f32.mrb[0].mxu0
    %8764 = vmatprep.mubr.bf16.mxu0 0
    %8765 = vmatmul.mubr.bf16.gmra.mrb[0].mxu0 %v8595
    %v8766 = vpop.f32.mrb[0].mxu0
    %v8767 = vadd.f32 0.0, %v8766
    %v8768 = vpop.f32.mrb[0].mxu0
    %v8769 = vpop.f32.mrb[0].mxu0
    %v8770 = vadd.f32 0.0, %v8769
    %v8771 = vpop.f32.mrb[0].mxu0
    %8772 = vmatprep.mubr.bf16.mxu0 0
    %8773 = vmatmul.mubr.bf16.gmra.mrb[0].mxu0 %v8598
    %v8774 = vpop.f32.mrb[0].mxu0
    %v8775 = vadd.f32 0.0, %v8774
    %v8776 = vpop.f32.mrb[0].mxu0
    %v8777 = vpop.f32.mrb[0].mxu0
    %v8778 = vadd.f32 0.0, %v8777
    %v8779 = vpop.f32.mrb[0].mxu0
    %8780 = vmatprep.mubr.bf16.mxu0 0
    %8781 = vmatmul.mubr.bf16.gmra.mrb[0].mxu0 %v8601
    %v8782 = vpop.f32.mrb[0].mxu0
    %v8783 = vadd.f32 0.0, %v8782
    %v8784 = vpop.f32.mrb[0].mxu0
    %v8785 = vpop.f32.mrb[0].mxu0
    %v8786 = vadd.f32 0.0, %v8785
    %v8787 = vpop.f32.mrb[0].mxu0
    %8788 = vmatprep.mubr.bf16.mxu0 0
    %8789 = vmatmul.mubr.bf16.gmra.mrb[0].mxu0 %v8604
    %v8790 = vpop.f32.mrb[0].mxu0
    %v8791 = vadd.f32 0.0, %v8790
    %v8792 = vpop.f32.mrb[0].mxu0
    %v8793 = vpop.f32.mrb[0].mxu0
    %v8794 = vadd.f32 0.0, %v8793
    %v8795 = vpop.f32.mrb[0].mxu0
    %8796 = vmatprep.mubr.bf16.mxu0 0
    %8797 = vmatmul.mubr.bf16.gmra.mrb[0].mxu0 %v8607
    %v8798 = vpop.f32.mrb[0].mxu0
    %v8799 = vadd.f32 0.0, %v8798
    %v8800 = vpop.f32.mrb[0].mxu0
    %v8801 = vpop.f32.mrb[0].mxu0
    %v8802 = vadd.f32 0.0, %v8801
    %v8803 = vpop.f32.mrb[0].mxu0
    %8804 = vmatprep.mubr.bf16.mxu0 0
    %8805 = vmatmul.mubr.bf16.gmra.mrb[0].mxu0 %v8610
    %v8806 = vpop.f32.mrb[0].mxu0
    %v8807 = vadd.f32 0.0, %v8806
    %v8808 = vpop.f32.mrb[0].mxu0
    %v8809 = vpop.f32.mrb[0].mxu0
    %v8810 = vadd.f32 0.0, %v8809
    %v8811 = vpop.f32.mrb[0].mxu0
    %8812 = vmatprep.mubr.bf16.mxu0 0
    %8813 = vmatmul.mubr.bf16.gmra.mrb[0].mxu0 %v8613
    %v8814 = vpop.f32.mrb[0].mxu0
    %v8815 = vadd.f32 0.0, %v8814
    %v8816 = vpop.f32.mrb[0].mxu0
    %v8817 = vpop.f32.mrb[0].mxu0
    %v8818 = vadd.f32 0.0, %v8817
    %v8819 = vpop.f32.mrb[0].mxu0
    %8820 = vmatprep.mubr.bf16.mxu0 0
    %8821 = vmatmul.mubr.bf16.gmra.mrb[0].mxu0 %v8616
    %v8822 = vpop.f32.mrb[0].mxu0
    %v8823 = vadd.f32 0.0, %v8822
    %v8824 = vpop.f32.mrb[0].mxu0
    %v8825 = vpop.f32.mrb[0].mxu0
    %v8826 = vadd.f32 0.0, %v8825
    %v8827 = vpop.f32.mrb[0].mxu0
    %8828 = vmatprep.mubr.bf16.mxu0 0
    %8829 = vmatmul.mubr.bf16.gmra.mrb[0].mxu0 %v8619
    %v8830 = vpop.f32.mrb[0].mxu0
    %v8831 = vadd.f32 0.0, %v8830
    %v8832 = vpop.f32.mrb[0].mxu0
    %v8833 = vpop.f32.mrb[0].mxu0
    %v8834 = vadd.f32 0.0, %v8833
    %v8835 = vpop.f32.mrb[0].mxu0
    %8836 = vmatprep.mubr.bf16.mxu0 0
    %8837 = vmatmul.mubr.bf16.gmra.mrb[0].mxu0 %v8622
    %v8838 = vpop.f32.mrb[0].mxu0
    %v8839 = vadd.f32 0.0, %v8838
    %v8840 = vpop.f32.mrb[0].mxu0
    %v8841 = vpop.f32.mrb[0].mxu0
    %v8842 = vadd.f32 0.0, %v8841
    %v8843 = vpop.f32.mrb[0].mxu0
    %8844 = vmatprep.mubr.bf16.mxu0 0
    %8845 = vmatmul.mubr.bf16.gmra.mrb[0].mxu0 %v8625
    %v8846 = vpop.f32.mrb[0].mxu0
    %v8847 = vadd.f32 0.0, %v8846
    %v8848 = vpop.f32.mrb[0].mxu0
    %v8849 = vpop.f32.mrb[0].mxu0
    %v8850 = vadd.f32 0.0, %v8849
    %v8851 = vpop.f32.mrb[0].mxu0
    %8852 = vmatprep.mubr.bf16.mxu0 0
    %8853 = vmatmul.mubr.bf16.gmra.mrb[0].mxu0 %v8628
    %v8854 = vpop.f32.mrb[0].mxu0
    %v8855 = vadd.f32 0.0, %v8854
    %v8856 = vpop.f32.mrb[0].mxu0
    %v8857 = vpop.f32.mrb[0].mxu0
    %v8858 = vadd.f32 0.0, %v8857
    %v8859 = vpop.f32.mrb[0].mxu0
    %8860 = vmatprep.mubr.bf16.mxu0 0
    %8861 = vmatmul.mubr.bf16.gmra.mrb[0].mxu0 %v8631
    %v8862 = vpop.f32.mrb[0].mxu0
    %v8863 = vadd.f32 0.0, %v8862
    %v8864 = vpop.f32.mrb[0].mxu0
    %v8865 = vpop.f32.mrb[0].mxu0
    %v8866 = vpop.f32.mrb[0].mxu0
    %8867 = vdwg.mxu0
    %v8868 = vadd.f32 %v8236, %v8671
    %v8869 = vadd.f32 %v8237, %v8674
    %v8870 = vadd.f32 %v8238, %v8679
    %v8871 = vadd.f32 %v8239, %v8682
    %v8872 = vadd.f32 %v8240, %v8687
    %v8873 = vadd.f32 %v8241, %v8690
    %v8874 = vadd.f32 %v8242, %v8695
    %v8875 = vadd.f32 %v8243, %v8698
    %v8876 = vadd.f32 %v8244, %v8703
    %v8877 = vadd.f32 %v8245, %v8706
    %v8878 = vadd.f32 %v8246, %v8711
    %v8879 = vadd.f32 %v8247, %v8714
    %v8880 = vadd.f32 %v8248, %v8719
    %v8881 = vadd.f32 %v8249, %v8722
    %v8882 = vadd.f32 %v8250, %v8727
    %v8883 = vadd.f32 %v8251, %v8730
    %v8884 = vadd.f32 %v8252, %v8735
    %v8885 = vadd.f32 %v8253, %v8738
    %v8886 = vadd.f32 %v8254, %v8743
    %v8887 = vadd.f32 %v8255, %v8746
    %v8888 = vadd.f32 %v8256, %v8751
    %v8889 = vadd.f32 %v8257, %v8754
    %v8890 = vadd.f32 %v8258, %v8759
    %v8891 = vadd.f32 %v8259, %v8762
    %v8892 = vadd.f32 %v8260, %v8767
    %v8893 = vadd.f32 %v8261, %v8770
    %v8894 = vadd.f32 %v8262, %v8775
    %v8895 = vadd.f32 %v8263, %v8778
    %v8896 = vadd.f32 %v8264, %v8783
    %v8897 = vadd.f32 %v8265, %v8786
    %v8898 = vadd.f32 %v8266, %v8791
    %v8899 = vadd.f32 %v8267, %v8794
    %v8900 = vadd.f32 %v8268, %v8799
    %v8901 = vadd.f32 %v8269, %v8802
    %v8902 = vadd.f32 %v8270, %v8807
    %v8903 = vadd.f32 %v8271, %v8810
    %v8904 = vadd.f32 %v8272, %v8815
    %v8905 = vadd.f32 %v8273, %v8818
    %v8906 = vadd.f32 %v8274, %v8823
    %v8907 = vadd.f32 %v8275, %v8826
    %v8908 = vadd.f32 %v8276, %v8831
    %v8909 = vadd.f32 %v8277, %v8834
    %v8910 = vadd.f32 %v8278, %v8839
    %v8911 = vadd.f32 %v8279, %v8842
    %v8912 = vadd.f32 %v8280, %v8847
    %v8913 = vadd.f32 %v8281, %v8850
    %v8914 = vadd.f32 %v8282, %v8855
    %v8915 = vadd.f32 %v8283, %v8858
    %v8916 = vadd.f32 %v8284, %v8863
    %v8917 = vcombine.high %v8320, %v8320
    %v8918 = vcombine.high %v8353, %v8353
    %v8919 = vrot.slane %v8296, 7
    %v8920 = vrot.slane %v8919, 2
    %v8921 = vrot.slane %v8304, 7
    %v8922 = vsel %vm2037, %v8920, %v8921
    %v8923 = vrot.slane %v8921, 2
    %v8924 = vrot.slane %v8303, 7
    %v8925 = vsel %vm2037, %v8923, %v8924
    %v8926 = vrot.slane %v8924, 2
    %v8927 = vrot.slane %v8305, 7
    %v8928 = vsel %vm2037, %v8926, %v8927
    %v8929 = vrot.slane %v8927, 2
    %v8930 = vrot.slane %v8313, 7
    %v8931 = vsel %vm2037, %v8929, %v8930
    %v8932 = vrot.slane %v8930, 2
    %v8933 = vrot.slane %v8321, 7
    %v8934 = vsel %vm2037, %v8932, %v8933
    %v8935 = vrot.slane %v8933, 2
    %v8936 = vrot.slane %v8320, 7
    %v8937 = vsel %vm2037, %v8935, %v8936
    %v8938 = vrot.slane %v8936, 2
    %v8939 = vrot.slane %v8917, 7
    %v8940 = vsel %vm2037, %v8938, %v8939
    %v8941 = vrot.slane %v8329, 7
    %v8942 = vrot.slane %v8941, 2
    %v8943 = vrot.slane %v8337, 7
    %v8944 = vsel %vm2037, %v8942, %v8943
    %v8945 = vrot.slane %v8943, 2
    %v8946 = vrot.slane %v8336, 7
    %v8947 = vsel %vm2037, %v8945, %v8946
    %v8948 = vrot.slane %v8946, 2
    %v8949 = vrot.slane %v8338, 7
    %v8950 = vsel %vm2037, %v8948, %v8949
    %v8951 = vrot.slane %v8949, 2
    %v8952 = vrot.slane %v8346, 7
    %v8953 = vsel %vm2037, %v8951, %v8952
    %v8954 = vrot.slane %v8952, 2
    %v8955 = vrot.slane %v8354, 7
    %v8956 = vsel %vm2037, %v8954, %v8955
    %v8957 = vrot.slane %v8955, 2
    %v8958 = vrot.slane %v8353, 7
    %v8959 = vsel %vm2037, %v8957, %v8958
    %v8960 = vrot.slane %v8958, 2
    %v8961 = vrot.slane %v8918, 7
    %v8962 = vsel %vm2037, %v8960, %v8961
    %v8963 = vcombine.low %v2720, %v2730
    %v8964 = vcombine.low %v2737, %v2747
    %v8965 = vcombine.low %v2754, %v2764
    %v8966 = vcombine.low %v2771, %v2781
    %v8967 = vcombine.low %v2788, %v2798
    %v8968 = vcombine.low %v2805, %v2815
    %v8969 = vcombine.low %v2822, %v2832
    %v8970 = vcombine.low %v2839, %v2849
    %v8971 = vcombine.low %v2856, %v2866
    %v8972 = vcombine.low %v2873, %v2883
    %v8973 = vcombine.low %v2890, %v2900
    %v8974 = vcombine.low %v2907, %v2917
    %v8975 = vcombine.low %v2924, %v2934
    %v8976 = vcombine.low %v2941, %v2951
    %v8977 = vcombine.low %v2958, %v2968
    %v8978 = vcombine.low %v2975, %v2985
    %v8979 = vcombine.low %v2992, %v3002
    %v8980 = vcombine.low %v3009, %v3019
    %v8981 = vcombine.low %v3026, %v3036
    %v8982 = vcombine.low %v3043, %v3053
    %v8983 = vcombine.low %v3060, %v3070
    %v8984 = vcombine.low %v6280, %v6283
    %v8985 = vcombine.low %v6286, %v6289
    %v8987 = vunpack.c.l.s4 1983009808
    %v8988 = vunpack.c.0.s8 %v8987
    %v8989 = vlaneseq
    %v8990 = vshrl.u32 %v8989, 7
    %v8991 = vsub.s32 %v8988, %v8990
    %v8992 = vrot.slane %v8984, %v8991
    %v8994 = vunpack.c.l.s4 1983009808
    %v8995 = vunpack.c.0.s8 %v8994
    %v8996 = vlaneseq
    %v8997 = vshrl.u32 %v8996, 7
    %v8998 = vsub.s32 %v8995, %v8997
    %v8999 = vrot.slane %v8985, %v8998
    %v9000 = vcombine.low %v8992, %v8999
    %v9001 = vcombine.low %v6292, %v6295
    %v9002 = vcombine.low %v6298, %v8922
    %v9004 = vunpack.c.l.s4 1983009808
    %v9005 = vunpack.c.0.s8 %v9004
    %v9006 = vlaneseq
    %v9007 = vshrl.u32 %v9006, 7
    %v9008 = vsub.s32 %v9005, %v9007
    %v9009 = vrot.slane %v9001, %v9008
    %v9011 = vunpack.c.l.s4 1983009808
    %v9012 = vunpack.c.0.s8 %v9011
    %v9013 = vlaneseq
    %v9014 = vshrl.u32 %v9013, 7
    %v9015 = vsub.s32 %v9012, %v9014
    %v9016 = vrot.slane %v9002, %v9015
    %v9017 = vcombine.low %v9009, %v9016
    %v9018 = vcombine.low %v8925, %v8928
    %v9019 = vcombine.low %v8931, %v8934
    %v9021 = vunpack.c.l.s4 1983009808
    %v9022 = vunpack.c.0.s8 %v9021
    %v9023 = vlaneseq
    %v9024 = vshrl.u32 %v9023, 7
    %v9025 = vsub.s32 %v9022, %v9024
    %v9026 = vrot.slane %v9018, %v9025
    %v9028 = vunpack.c.l.s4 1983009808
    %v9029 = vunpack.c.0.s8 %v9028
    %v9030 = vlaneseq
    %v9031 = vshrl.u32 %v9030, 7
    %v9032 = vsub.s32 %v9029, %v9031
    %v9033 = vrot.slane %v9019, %v9032
    %v9034 = vcombine.low %v9026, %v9033
    %v9035 = vcombine.low %v8937, %v8940
    %v9037 = vunpack.c.l.s4 1983009808
    %v9038 = vunpack.c.0.s8 %v9037
    %v9039 = vlaneseq
    %v9040 = vshrl.u32 %v9039, 7
    %v9041 = vsub.s32 %v9038, %v9040
    %v9042 = vrot.slane %v9035, %v9041
    %v9043 = vcombine.low %v9042, %v3138
    %v9044 = vcombine.low %v3145, %v3155
    %v9045 = vcombine.low %v3162, %v3172
    %v9046 = vcombine.low %v3179, %v3189
    %v9047 = vcombine.low %v3196, %v3206
    %v9048 = vcombine.low %v3213, %v3223
    %v9049 = vcombine.low %v3230, %v3240
    %v9050 = vcombine.low %v3247, %v3257
    %v9051 = vcombine.low %v3264, %v3274
    %v9052 = vcombine.low %v3281, %v3291
    %v9053 = vcombine.low %v3298, %v3308
    %v9054 = vcombine.low %v3315, %v3325
    %v9055 = vcombine.low %v3332, %v3342
    %v9056 = vcombine.low %v3349, %v3359
    %v9057 = vcombine.low %v3366, %v3376
    %v9058 = vcombine.low %v3383, %v3393
    %v9059 = vcombine.low %v3400, %v3410
    %v9060 = vcombine.low %v3417, %v3427
    %v9061 = vcombine.low %v3434, %v3444
    %v9062 = vcombine.low %v3451, %v3461
    %v9063 = vcombine.low %v3468, %v3478
    %v9064 = vcombine.low %v6302, %v6305
    %v9066 = vunpack.c.l.s4 1983009808
    %v9067 = vunpack.c.0.s8 %v9066
    %v9068 = vlaneseq
    %v9069 = vshrl.u32 %v9068, 7
    %v9070 = vsub.s32 %v9067, %v9069
    %v9071 = vrot.slane %v9064, %v9070
    %v9072 = vcombine.low %v3485, %v9071
    %v9073 = vcombine.low %v6308, %v6311
    %v9074 = vcombine.low %v6314, %v6317
    %v9076 = vunpack.c.l.s4 1983009808
    %v9077 = vunpack.c.0.s8 %v9076
    %v9078 = vlaneseq
    %v9079 = vshrl.u32 %v9078, 7
    %v9080 = vsub.s32 %v9077, %v9079
    %v9081 = vrot.slane %v9073, %v9080
    %v9083 = vunpack.c.l.s4 1983009808
    %v9084 = vunpack.c.0.s8 %v9083
    %v9085 = vlaneseq
    %v9086 = vshrl.u32 %v9085, 7
    %v9087 = vsub.s32 %v9084, %v9086
    %v9088 = vrot.slane %v9074, %v9087
    %v9089 = vcombine.low %v9081, %v9088
    %v9090 = vcombine.low %v6320, %v8944
    %v9091 = vcombine.low %v8947, %v8950
    %v9093 = vunpack.c.l.s4 1983009808
    %v9094 = vunpack.c.0.s8 %v9093
    %v9095 = vlaneseq
    %v9096 = vshrl.u32 %v9095, 7
    %v9097 = vsub.s32 %v9094, %v9096
    %v9098 = vrot.slane %v9090, %v9097
    %v9100 = vunpack.c.l.s4 1983009808
    %v9101 = vunpack.c.0.s8 %v9100
    %v9102 = vlaneseq
    %v9103 = vshrl.u32 %v9102, 7
    %v9104 = vsub.s32 %v9101, %v9103
    %v9105 = vrot.slane %v9091, %v9104
    %v9106 = vcombine.low %v9098, %v9105
    %v9107 = vcombine.low %v8953, %v8956
    %v9108 = vcombine.low %v8959, %v8962
    %v9110 = vunpack.c.l.s4 1983009808
    %v9111 = vunpack.c.0.s8 %v9110
    %v9112 = vlaneseq
    %v9113 = vshrl.u32 %v9112, 7
    %v9114 = vsub.s32 %v9111, %v9113
    %v9115 = vrot.slane %v9107, %v9114
    %v9117 = vunpack.c.l.s4 1983009808
    %v9118 = vunpack.c.0.s8 %v9117
    %v9119 = vlaneseq
    %v9120 = vshrl.u32 %v9119, 7
    %v9121 = vsub.s32 %v9118, %v9120
    %v9122 = vrot.slane %v9108, %v9121
    %v9123 = vcombine.low %v9115, %v9122
    %v9173 = vpack.c.bf16 %v8964, %v8963
    %v9174 = vpack.c.bf16 %v8966, %v8965
    %v9175 = vpack.c.bf16 %v8968, %v8967
    %v9176 = vpack.c.bf16 %v8970, %v8969
    %v9177 = vpack.c.bf16 %v8972, %v8971
    %v9178 = vpack.c.bf16 %v8974, %v8973
    %v9179 = vpack.c.bf16 %v8976, %v8975
    %v9180 = vpack.c.bf16 %v8978, %v8977
    %v9181 = vpack.c.bf16 %v8980, %v8979
    %v9182 = vpack.c.bf16 %v8982, %v8981
    %v9183 = vpack.c.bf16 %v9000, %v8983
    %v9184 = vpack.c.bf16 %v9034, %v9017
    %v9185 = vpack.c.bf16 %v9044, %v9043
    %v9186 = vpack.c.bf16 %v9046, %v9045
    %v9187 = vpack.c.bf16 %v9048, %v9047
    %v9188 = vpack.c.bf16 %v9050, %v9049
    %v9189 = vpack.c.bf16 %v9052, %v9051
    %v9190 = vpack.c.bf16 %v9054, %v9053
    %v9191 = vpack.c.bf16 %v9056, %v9055
    %v9192 = vpack.c.bf16 %v9058, %v9057
    %v9193 = vpack.c.bf16 %v9060, %v9059
    %v9194 = vpack.c.bf16 %v9062, %v9061
    %v9195 = vpack.c.bf16 %v9072, %v9063
    %v9196 = vpack.c.bf16 %v9106, %v9089
    %v9197 = vpack.c.bf16 %v9123, %v9123
    %v9199 = vsel %vm3561, %v9173, 0
    %v9202 = vsel %vm3561, %v9174, 0
    %v9205 = vsel %vm3561, %v9175, 0
    %v9208 = vsel %vm3561, %v9176, 0
    %v9211 = vsel %vm3561, %v9177, 0
    %v9214 = vsel %vm3561, %v9178, 0
    %v9217 = vsel %vm3561, %v9179, 0
    %v9220 = vsel %vm3561, %v9180, 0
    %v9223 = vsel %vm3561, %v9181, 0
    %v9226 = vsel %vm3561, %v9182, 0
    %v9229 = vsel %vm3561, %v9183, 0
    %v9232 = vsel %vm3561, %v9184, 0
    %v9235 = vsel %vm3561, %v9185, 0
    %v9238 = vsel %vm3561, %v9186, 0
    %v9241 = vsel %vm3561, %v9187, 0
    %v9244 = vsel %vm3561, %v9188, 0
    %v9247 = vsel %vm3561, %v9189, 0
    %v9250 = vsel %vm3561, %v9190, 0
    %v9253 = vsel %vm3561, %v9191, 0
    %v9256 = vsel %vm3561, %v9192, 0
    %v9259 = vsel %vm3561, %v9193, 0
    %v9262 = vsel %vm3561, %v9194, 0
    %v9265 = vsel %vm3561, %v9195, 0
    %v9268 = vsel %vm3561, %v9196, 0
    %v9271 = vsel %vm3561, %v9197, 0
    %v9274 = vand.u32 %v114, %v3639
    %9276 = vmatprep.subr.bf16.mxu0 0
    %9277 = vmatpush1.bf16.msra.mxu0 %v9274
    %9278 = vmatprep.subr.bf16.mxu0 0
    %9279 = vmatpush1.bf16.msra.mxu0 0
    %9280 = vmatprep.subr.bf16.mxu0 0
    %9281 = vmatpush1.bf16.msra.mxu0 0
    %9282 = vmatprep.subr.bf16.mxu0 0
    %9283 = vmatpush1.bf16.msra.mxu0 0
    %9284 = vmatprep.subr.bf16.mxu0 0
    %9285 = vmatpush1.bf16.msra.mxu0 0
    %9286 = vmatprep.subr.bf16.mxu0 0
    %9287 = vmatpush1.bf16.msra.mxu0 0
    %9288 = vmatprep.subr.bf16.mxu0 0
    %9289 = vmatpush1.bf16.msra.mxu0 0
    %9290 = vmatprep.subr.bf16.mxu0 0
    %9291 = vmatpush1.bf16.msra.mxu0 0
    %9292 = vmatprep.subr.bf16.mxu0 0
    %9293 = vmatpush1.bf16.msra.mxu0 0
    %9294 = vmatprep.subr.bf16.mxu0 0
    %9295 = vmatpush1.bf16.msra.mxu0 0
    %9296 = vmatprep.subr.bf16.mxu0 0
    %9297 = vmatpush1.bf16.msra.mxu0 0
    %9298 = vmatprep.subr.bf16.mxu0 0
    %9299 = vmatpush1.bf16.msra.mxu0 0
    %9300 = vmatprep.subr.bf16.mxu0 0
    %9301 = vmatpush1.bf16.msra.mxu0 0
    %9302 = vmatprep.subr.bf16.mxu0 0
    %9303 = vmatpush1.bf16.msra.mxu0 0
    %9304 = vmatprep.subr.bf16.mxu0 0
    %9305 = vmatpush1.bf16.msra.mxu0 0
    %9306 = vmatprep.subr.bf16.mxu0 0
    %9307 = vmatpush1.bf16.msra.mxu0 0
    %9308 = vmatprep.mubr.bf16.mxu0 0
    %9309 = vmatmul.mubr.bf16.gmra.mrb[0].mxu0 %v9199
    %v9310 = vpop.f32.mrb[0].mxu0
    %v9311 = vadd.f32 0.0, %v9310
    %v9312 = vpop.f32.mrb[0].mxu0
    %v9313 = vpop.f32.mrb[0].mxu0
    %v9314 = vadd.f32 0.0, %v9313
    %v9315 = vpop.f32.mrb[0].mxu0
    %9316 = vmatprep.mubr.bf16.mxu0 0
    %9317 = vmatmul.mubr.bf16.gmra.mrb[0].mxu0 %v9202
    %v9318 = vpop.f32.mrb[0].mxu0
    %v9319 = vadd.f32 0.0, %v9318
    %v9320 = vpop.f32.mrb[0].mxu0
    %v9321 = vpop.f32.mrb[0].mxu0
    %v9322 = vadd.f32 0.0, %v9321
    %v9323 = vpop.f32.mrb[0].mxu0
    %9324 = vmatprep.mubr.bf16.mxu0 0
    %9325 = vmatmul.mubr.bf16.gmra.mrb[0].mxu0 %v9205
    %v9326 = vpop.f32.mrb[0].mxu0
    %v9327 = vadd.f32 0.0, %v9326
    %v9328 = vpop.f32.mrb[0].mxu0
    %v9329 = vpop.f32.mrb[0].mxu0
    %v9330 = vadd.f32 0.0, %v9329
    %v9331 = vpop.f32.mrb[0].mxu0
    %9332 = vmatprep.mubr.bf16.mxu0 0
    %9333 = vmatmul.mubr.bf16.gmra.mrb[0].mxu0 %v9208
    %v9334 = vpop.f32.mrb[0].mxu0
    %v9335 = vadd.f32 0.0, %v9334
    %v9336 = vpop.f32.mrb[0].mxu0
    %v9337 = vpop.f32.mrb[0].mxu0
    %v9338 = vadd.f32 0.0, %v9337
    %v9339 = vpop.f32.mrb[0].mxu0
    %9340 = vmatprep.mubr.bf16.mxu0 0
    %9341 = vmatmul.mubr.bf16.gmra.mrb[0].mxu0 %v9211
    %v9342 = vpop.f32.mrb[0].mxu0
    %v9343 = vadd.f32 0.0, %v9342
    %v9344 = vpop.f32.mrb[0].mxu0
    %v9345 = vpop.f32.mrb[0].mxu0
    %v9346 = vadd.f32 0.0, %v9345
    %v9347 = vpop.f32.mrb[0].mxu0
    %9348 = vmatprep.mubr.bf16.mxu0 0
    %9349 = vmatmul.mubr.bf16.gmra.mrb[0].mxu0 %v9214
    %v9350 = vpop.f32.mrb[0].mxu0
    %v9351 = vadd.f32 0.0, %v9350
    %v9352 = vpop.f32.mrb[0].mxu0
    %v9353 = vpop.f32.mrb[0].mxu0
    %v9354 = vadd.f32 0.0, %v9353
    %v9355 = vpop.f32.mrb[0].mxu0
    %9356 = vmatprep.mubr.bf16.mxu0 0
    %9357 = vmatmul.mubr.bf16.gmra.mrb[0].mxu0 %v9217
    %v9358 = vpop.f32.mrb[0].mxu0
    %v9359 = vadd.f32 0.0, %v9358
    %v9360 = vpop.f32.mrb[0].mxu0
    %v9361 = vpop.f32.mrb[0].mxu0
    %v9362 = vadd.f32 0.0, %v9361
    %v9363 = vpop.f32.mrb[0].mxu0
    %9364 = vmatprep.mubr.bf16.mxu0 0
    %9365 = vmatmul.mubr.bf16.gmra.mrb[0].mxu0 %v9220
    %v9366 = vpop.f32.mrb[0].mxu0
    %v9367 = vadd.f32 0.0, %v9366
    %v9368 = vpop.f32.mrb[0].mxu0
    %v9369 = vpop.f32.mrb[0].mxu0
    %v9370 = vadd.f32 0.0, %v9369
    %v9371 = vpop.f32.mrb[0].mxu0
    %9372 = vmatprep.mubr.bf16.mxu0 0
    %9373 = vmatmul.mubr.bf16.gmra.mrb[0].mxu0 %v9223
    %v9374 = vpop.f32.mrb[0].mxu0
    %v9375 = vadd.f32 0.0, %v9374
    %v9376 = vpop.f32.mrb[0].mxu0
    %v9377 = vpop.f32.mrb[0].mxu0
    %v9378 = vadd.f32 0.0, %v9377
    %v9379 = vpop.f32.mrb[0].mxu0
    %9380 = vmatprep.mubr.bf16.mxu0 0
    %9381 = vmatmul.mubr.bf16.gmra.mrb[0].mxu0 %v9226
    %v9382 = vpop.f32.mrb[0].mxu0
    %v9383 = vadd.f32 0.0, %v9382
    %v9384 = vpop.f32.mrb[0].mxu0
    %v9385 = vpop.f32.mrb[0].mxu0
    %v9386 = vadd.f32 0.0, %v9385
    %v9387 = vpop.f32.mrb[0].mxu0
    %9388 = vmatprep.mubr.bf16.mxu0 0
    %9389 = vmatmul.mubr.bf16.gmra.mrb[0].mxu0 %v9229
    %v9390 = vpop.f32.mrb[0].mxu0
    %v9391 = vadd.f32 0.0, %v9390
    %v9392 = vpop.f32.mrb[0].mxu0
    %v9393 = vpop.f32.mrb[0].mxu0
    %v9394 = vadd.f32 0.0, %v9393
    %v9395 = vpop.f32.mrb[0].mxu0
    %9396 = vmatprep.mubr.bf16.mxu0 0
    %9397 = vmatmul.mubr.bf16.gmra.mrb[0].mxu0 %v9232
    %v9398 = vpop.f32.mrb[0].mxu0
    %v9399 = vadd.f32 0.0, %v9398
    %v9400 = vpop.f32.mrb[0].mxu0
    %v9401 = vpop.f32.mrb[0].mxu0
    %v9402 = vadd.f32 0.0, %v9401
    %v9403 = vpop.f32.mrb[0].mxu0
    %9404 = vmatprep.mubr.bf16.mxu0 0
    %9405 = vmatmul.mubr.bf16.gmra.mrb[0].mxu0 %v9235
    %v9406 = vpop.f32.mrb[0].mxu0
    %v9407 = vadd.f32 0.0, %v9406
    %v9408 = vpop.f32.mrb[0].mxu0
    %v9409 = vpop.f32.mrb[0].mxu0
    %v9410 = vadd.f32 0.0, %v9409
    %v9411 = vpop.f32.mrb[0].mxu0
    %9412 = vmatprep.mubr.bf16.mxu0 0
    %9413 = vmatmul.mubr.bf16.gmra.mrb[0].mxu0 %v9238
    %v9414 = vpop.f32.mrb[0].mxu0
    %v9415 = vadd.f32 0.0, %v9414
    %v9416 = vpop.f32.mrb[0].mxu0
    %v9417 = vpop.f32.mrb[0].mxu0
    %v9418 = vadd.f32 0.0, %v9417
    %v9419 = vpop.f32.mrb[0].mxu0
    %9420 = vmatprep.mubr.bf16.mxu0 0
    %9421 = vmatmul.mubr.bf16.gmra.mrb[0].mxu0 %v9241
    %v9422 = vpop.f32.mrb[0].mxu0
    %v9423 = vadd.f32 0.0, %v9422
    %v9424 = vpop.f32.mrb[0].mxu0
    %v9425 = vpop.f32.mrb[0].mxu0
    %v9426 = vadd.f32 0.0, %v9425
    %v9427 = vpop.f32.mrb[0].mxu0
    %9428 = vmatprep.mubr.bf16.mxu0 0
    %9429 = vmatmul.mubr.bf16.gmra.mrb[0].mxu0 %v9244
    %v9430 = vpop.f32.mrb[0].mxu0
    %v9431 = vadd.f32 0.0, %v9430
    %v9432 = vpop.f32.mrb[0].mxu0
    %v9433 = vpop.f32.mrb[0].mxu0
    %v9434 = vadd.f32 0.0, %v9433
    %v9435 = vpop.f32.mrb[0].mxu0
    %9436 = vmatprep.mubr.bf16.mxu0 0
    %9437 = vmatmul.mubr.bf16.gmra.mrb[0].mxu0 %v9247
    %v9438 = vpop.f32.mrb[0].mxu0
    %v9439 = vadd.f32 0.0, %v9438
    %v9440 = vpop.f32.mrb[0].mxu0
    %v9441 = vpop.f32.mrb[0].mxu0
    %v9442 = vadd.f32 0.0, %v9441
    %v9443 = vpop.f32.mrb[0].mxu0
    %9444 = vmatprep.mubr.bf16.mxu0 0
    %9445 = vmatmul.mubr.bf16.gmra.mrb[0].mxu0 %v9250
    %v9446 = vpop.f32.mrb[0].mxu0
    %v9447 = vadd.f32 0.0, %v9446
    %v9448 = vpop.f32.mrb[0].mxu0
    %v9449 = vpop.f32.mrb[0].mxu0
    %v9450 = vadd.f32 0.0, %v9449
    %v9451 = vpop.f32.mrb[0].mxu0
    %9452 = vmatprep.mubr.bf16.mxu0 0
    %9453 = vmatmul.mubr.bf16.gmra.mrb[0].mxu0 %v9253
    %v9454 = vpop.f32.mrb[0].mxu0
    %v9455 = vadd.f32 0.0, %v9454
    %v9456 = vpop.f32.mrb[0].mxu0
    %v9457 = vpop.f32.mrb[0].mxu0
    %v9458 = vadd.f32 0.0, %v9457
    %v9459 = vpop.f32.mrb[0].mxu0
    %9460 = vmatprep.mubr.bf16.mxu0 0
    %9461 = vmatmul.mubr.bf16.gmra.mrb[0].mxu0 %v9256
    %v9462 = vpop.f32.mrb[0].mxu0
    %v9463 = vadd.f32 0.0, %v9462
    %v9464 = vpop.f32.mrb[0].mxu0
    %v9465 = vpop.f32.mrb[0].mxu0
    %v9466 = vadd.f32 0.0, %v9465
    %v9467 = vpop.f32.mrb[0].mxu0
    %9468 = vmatprep.mubr.bf16.mxu0 0
    %9469 = vmatmul.mubr.bf16.gmra.mrb[0].mxu0 %v9259
    %v9470 = vpop.f32.mrb[0].mxu0
    %v9471 = vadd.f32 0.0, %v9470
    %v9472 = vpop.f32.mrb[0].mxu0
    %v9473 = vpop.f32.mrb[0].mxu0
    %v9474 = vadd.f32 0.0, %v9473
    %v9475 = vpop.f32.mrb[0].mxu0
    %9476 = vmatprep.mubr.bf16.mxu0 0
    %9477 = vmatmul.mubr.bf16.gmra.mrb[0].mxu0 %v9262
    %v9478 = vpop.f32.mrb[0].mxu0
    %v9479 = vadd.f32 0.0, %v9478
    %v9480 = vpop.f32.mrb[0].mxu0
    %v9481 = vpop.f32.mrb[0].mxu0
    %v9482 = vadd.f32 0.0, %v9481
    %v9483 = vpop.f32.mrb[0].mxu0
    %9484 = vmatprep.mubr.bf16.mxu0 0
    %9485 = vmatmul.mubr.bf16.gmra.mrb[0].mxu0 %v9265
    %v9486 = vpop.f32.mrb[0].mxu0
    %v9487 = vadd.f32 0.0, %v9486
    %v9488 = vpop.f32.mrb[0].mxu0
    %v9489 = vpop.f32.mrb[0].mxu0
    %v9490 = vadd.f32 0.0, %v9489
    %v9491 = vpop.f32.mrb[0].mxu0
    %9492 = vmatprep.mubr.bf16.mxu0 0
    %9493 = vmatmul.mubr.bf16.gmra.mrb[0].mxu0 %v9268
    %v9494 = vpop.f32.mrb[0].mxu0
    %v9495 = vadd.f32 0.0, %v9494
    %v9496 = vpop.f32.mrb[0].mxu0
    %v9497 = vpop.f32.mrb[0].mxu0
    %v9498 = vadd.f32 0.0, %v9497
    %v9499 = vpop.f32.mrb[0].mxu0
    %9500 = vmatprep.mubr.bf16.mxu0 0
    %9501 = vmatmul.mubr.bf16.gmra.mrb[0].mxu0 %v9271
    %v9502 = vpop.f32.mrb[0].mxu0
    %v9503 = vadd.f32 0.0, %v9502
    %v9504 = vpop.f32.mrb[0].mxu0
    %v9505 = vpop.f32.mrb[0].mxu0
    %v9506 = vpop.f32.mrb[0].mxu0
    %9507 = vdwg.mxu0
    %v9508 = vadd.f32 %v8868, %v9311
    %v9509 = vadd.f32 %v8869, %v9314
    %v9510 = vadd.f32 %v8870, %v9319
    %v9511 = vadd.f32 %v8871, %v9322
    %v9512 = vadd.f32 %v8872, %v9327
    %v9513 = vadd.f32 %v8873, %v9330
    %v9514 = vadd.f32 %v8874, %v9335
    %v9515 = vadd.f32 %v8875, %v9338
    %v9516 = vadd.f32 %v8876, %v9343
    %v9517 = vadd.f32 %v8877, %v9346
    %v9518 = vadd.f32 %v8878, %v9351
    %v9519 = vadd.f32 %v8879, %v9354
    %v9520 = vadd.f32 %v8880, %v9359
    %v9521 = vadd.f32 %v8881, %v9362
    %v9522 = vadd.f32 %v8882, %v9367
    %v9523 = vadd.f32 %v8883, %v9370
    %v9524 = vadd.f32 %v8884, %v9375
    %v9525 = vadd.f32 %v8885, %v9378
    %v9526 = vadd.f32 %v8886, %v9383
    %v9527 = vadd.f32 %v8887, %v9386
    %v9528 = vadd.f32 %v8888, %v9391
    %v9529 = vadd.f32 %v8889, %v9394
    %v9530 = vadd.f32 %v8890, %v9399
    %v9531 = vadd.f32 %v8891, %v9402
    %v9532 = vadd.f32 %v8892, %v9407
    %v9533 = vadd.f32 %v8893, %v9410
    %v9534 = vadd.f32 %v8894, %v9415
    %v9535 = vadd.f32 %v8895, %v9418
    %v9536 = vadd.f32 %v8896, %v9423
    %v9537 = vadd.f32 %v8897, %v9426
    %v9538 = vadd.f32 %v8898, %v9431
    %v9539 = vadd.f32 %v8899, %v9434
    %v9540 = vadd.f32 %v8900, %v9439
    %v9541 = vadd.f32 %v8901, %v9442
    %v9542 = vadd.f32 %v8902, %v9447
    %v9543 = vadd.f32 %v8903, %v9450
    %v9544 = vadd.f32 %v8904, %v9455
    %v9545 = vadd.f32 %v8905, %v9458
    %v9546 = vadd.f32 %v8906, %v9463
    %v9547 = vadd.f32 %v8907, %v9466
    %v9548 = vadd.f32 %v8908, %v9471
    %v9549 = vadd.f32 %v8909, %v9474
    %v9550 = vadd.f32 %v8910, %v9479
    %v9551 = vadd.f32 %v8911, %v9482
    %v9552 = vadd.f32 %v8912, %v9487
    %v9553 = vadd.f32 %v8913, %v9490
    %v9554 = vadd.f32 %v8914, %v9495
    %v9555 = vadd.f32 %v8915, %v9498
    %v9556 = vadd.f32 %v8916, %v9503
    %v9557 = vcombine.low %v4268, %v4278
    %v9558 = vcombine.low %v4302, %v4312
    %v9559 = vcombine.low %v4336, %v4346
    %v9560 = vcombine.low %v4353, %v4363
    %v9561 = vcombine.low %v4387, %v4397
    %v9562 = vcombine.low %v4421, %v4431
    %v9563 = vcombine.low %v4455, %v4465
    %v9564 = vcombine.low %v4472, %v4482
    %v9565 = vcombine.low %v4506, %v4516
    %v9566 = vcombine.low %v4540, %v4550
    %v9567 = vcombine.low %v4574, %v4584
    %v9568 = vcombine.low %v4591, %v4601
    %v9569 = vcombine.low %v6275, %v8304
    %v9571 = vunpack.c.l.s4 1983009808
    %v9572 = vunpack.c.0.s8 %v9571
    %v9573 = vlaneseq
    %v9574 = vshrl.u32 %v9573, 7
    %v9575 = vsub.s32 %v9572, %v9574
    %v9576 = vrot.slane %v9569, %v9575
    %v9577 = vcombine.low %v5681, %v9576
    %v9578 = vcombine.low %v8303, %v8305
    %v9579 = vcombine.low %v8313, %v8321
    %v9581 = vunpack.c.l.s4 1983009808
    %v9582 = vunpack.c.0.s8 %v9581
    %v9583 = vlaneseq
    %v9584 = vshrl.u32 %v9583, 7
    %v9585 = vsub.s32 %v9582, %v9584
    %v9586 = vrot.slane %v9578, %v9585
    %v9588 = vunpack.c.l.s4 1983009808
    %v9589 = vunpack.c.0.s8 %v9588
    %v9590 = vlaneseq
    %v9591 = vshrl.u32 %v9590, 7
    %v9592 = vsub.s32 %v9589, %v9591
    %v9593 = vrot.slane %v9579, %v9592
    %v9594 = vcombine.low %v9586, %v9593
    %v9595 = vcombine.low %v8320, %v8917
    %v9597 = vunpack.c.l.s4 1983009808
    %v9598 = vunpack.c.0.s8 %v9597
    %v9599 = vlaneseq
    %v9600 = vshrl.u32 %v9599, 7
    %v9601 = vsub.s32 %v9598, %v9600
    %v9602 = vrot.slane %v9595, %v9601
    %v9603 = vcombine.low %v9602, %v4669
    %v9604 = vcombine.low %v4693, %v4703
    %v9605 = vcombine.low %v4710, %v4720
    %v9606 = vcombine.low %v4744, %v4754
    %v9607 = vcombine.low %v4778, %v4788
    %v9608 = vcombine.low %v4812, %v4822
    %v9609 = vcombine.low %v4829, %v4839
    %v9610 = vcombine.low %v4863, %v4873
    %v9611 = vcombine.low %v4897, %v4907
    %v9612 = vcombine.low %v4931, %v4941
    %v9613 = vcombine.low %v4948, %v4958
    %v9614 = vcombine.low %v4982, %v4992
    %v9615 = vcombine.low %v5016, %v5823
    %v9616 = vcombine.low %v6276, %v8337
    %v9617 = vcombine.low %v8336, %v8338
    %v9619 = vunpack.c.l.s4 1983009808
    %v9620 = vunpack.c.0.s8 %v9619
    %v9621 = vlaneseq
    %v9622 = vshrl.u32 %v9621, 7
    %v9623 = vsub.s32 %v9620, %v9622
    %v9624 = vrot.slane %v9616, %v9623
    %v9626 = vunpack.c.l.s4 1983009808
    %v9627 = vunpack.c.0.s8 %v9626
    %v9628 = vlaneseq
    %v9629 = vshrl.u32 %v9628, 7
    %v9630 = vsub.s32 %v9627, %v9629
    %v9631 = vrot.slane %v9617, %v9630
    %v9632 = vcombine.low %v9624, %v9631
    %v9633 = vcombine.low %v8346, %v8354
    %v9634 = vcombine.low %v8353, %v8918
    %v9636 = vunpack.c.l.s4 1983009808
    %v9637 = vunpack.c.0.s8 %v9636
    %v9638 = vlaneseq
    %v9639 = vshrl.u32 %v9638, 7
    %v9640 = vsub.s32 %v9637, %v9639
    %v9641 = vrot.slane %v9633, %v9640
    %v9643 = vunpack.c.l.s4 1983009808
    %v9644 = vunpack.c.0.s8 %v9643
    %v9645 = vlaneseq
    %v9646 = vshrl.u32 %v9645, 7
    %v9647 = vsub.s32 %v9644, %v9646
    %v9648 = vrot.slane %v9634, %v9647
    %v9649 = vcombine.low %v9641, %v9648
    %v9679 = vpack.c.bf16 %v9557, %v5539
    %v9680 = vpack.c.bf16 %v9558, %v5549
    %v9681 = vpack.c.bf16 %v9559, %v5559
    %v9682 = vpack.c.bf16 %v5578, %v9560
    %v9683 = vpack.c.bf16 %v5588, %v9561
    %v9684 = vpack.c.bf16 %v5598, %v9562
    %v9685 = vpack.c.bf16 %v9564, %v9563
    %v9686 = vpack.c.bf16 %v9565, %v5617
    %v9687 = vpack.c.bf16 %v9566, %v5627
    %v9688 = vpack.c.bf16 %v9567, %v5637
    %v9689 = vpack.c.bf16 %v5672, %v9568
    %v9690 = vpack.c.bf16 %v9594, %v9577
    %v9691 = vpack.c.bf16 %v5700, %v9603
    %v9692 = vpack.c.bf16 %v9605, %v9604
    %v9693 = vpack.c.bf16 %v9606, %v5719
    %v9694 = vpack.c.bf16 %v9607, %v5729
    %v9695 = vpack.c.bf16 %v9608, %v5739
    %v9696 = vpack.c.bf16 %v5758, %v9609
    %v9697 = vpack.c.bf16 %v5768, %v9610
    %v9698 = vpack.c.bf16 %v5778, %v9611
    %v9699 = vpack.c.bf16 %v9613, %v9612
    %v9700 = vpack.c.bf16 %v9614, %v5797
    %v9701 = vpack.c.bf16 %v9615, %v5807
    %v9702 = vpack.c.bf16 %v9632, %v5841
    %v9703 = vpack.c.bf16 %v9649, %v9649
    %v9705 = vsel %vm3561, %v9679, 0
    %v9708 = vsel %vm3561, %v9680, 0
    %v9711 = vsel %vm3561, %v9681, 0
    %v9714 = vsel %vm3561, %v9682, 0
    %v9717 = vsel %vm3561, %v9683, 0
    %v9720 = vsel %vm3561, %v9684, 0
    %v9723 = vsel %vm3561, %v9685, 0
    %v9726 = vsel %vm3561, %v9686, 0
    %v9729 = vsel %vm3561, %v9687, 0
    %v9732 = vsel %vm3561, %v9688, 0
    %v9735 = vsel %vm3561, %v9689, 0
    %v9738 = vsel %vm3561, %v9690, 0
    %v9741 = vsel %vm3561, %v9691, 0
    %v9744 = vsel %vm3561, %v9692, 0
    %v9747 = vsel %vm3561, %v9693, 0
    %v9750 = vsel %vm3561, %v9694, 0
    %v9753 = vsel %vm3561, %v9695, 0
    %v9756 = vsel %vm3561, %v9696, 0
    %v9759 = vsel %vm3561, %v9697, 0
    %v9762 = vsel %vm3561, %v9698, 0
    %v9765 = vsel %vm3561, %v9699, 0
    %v9768 = vsel %vm3561, %v9700, 0
    %v9771 = vsel %vm3561, %v9701, 0
    %v9774 = vsel %vm3561, %v9702, 0
    %v9777 = vsel %vm3561, %v9703, 0
    %v9780 = vand.u32 %v115, %v3639
    %9782 = vmatprep.subr.bf16.mxu0 0
    %9783 = vmatpush1.bf16.msra.mxu0 %v9780
    %9784 = vmatprep.subr.bf16.mxu0 0
    %9785 = vmatpush1.bf16.msra.mxu0 0
    %9786 = vmatprep.subr.bf16.mxu0 0
    %9787 = vmatpush1.bf16.msra.mxu0 0
    %9788 = vmatprep.subr.bf16.mxu0 0
    %9789 = vmatpush1.bf16.msra.mxu0 0
    %9790 = vmatprep.subr.bf16.mxu0 0
    %9791 = vmatpush1.bf16.msra.mxu0 0
    %9792 = vmatprep.subr.bf16.mxu0 0
    %9793 = vmatpush1.bf16.msra.mxu0 0
    %9794 = vmatprep.subr.bf16.mxu0 0
    %9795 = vmatpush1.bf16.msra.mxu0 0
    %9796 = vmatprep.subr.bf16.mxu0 0
    %9797 = vmatpush1.bf16.msra.mxu0 0
    %9798 = vmatprep.subr.bf16.mxu0 0
    %9799 = vmatpush1.bf16.msra.mxu0 0
    %9800 = vmatprep.subr.bf16.mxu0 0
    %9801 = vmatpush1.bf16.msra.mxu0 0
    %9802 = vmatprep.subr.bf16.mxu0 0
    %9803 = vmatpush1.bf16.msra.mxu0 0
    %9804 = vmatprep.subr.bf16.mxu0 0
    %9805 = vmatpush1.bf16.msra.mxu0 0
    %9806 = vmatprep.subr.bf16.mxu0 0
    %9807 = vmatpush1.bf16.msra.mxu0 0
    %9808 = vmatprep.subr.bf16.mxu0 0
    %9809 = vmatpush1.bf16.msra.mxu0 0
    %9810 = vmatprep.subr.bf16.mxu0 0
    %9811 = vmatpush1.bf16.msra.mxu0 0
    %9812 = vmatprep.subr.bf16.mxu0 0
    %9813 = vmatpush1.bf16.msra.mxu0 0
    %9814 = vmatprep.mubr.bf16.mxu0 0
    %9815 = vmatmul.mubr.bf16.gmra.mrb[0].mxu0 %v9705
    %v9816 = vpop.f32.mrb[0].mxu0
    %v9817 = vadd.f32 0.0, %v9816
    %v9818 = vpop.f32.mrb[0].mxu0
    %v9819 = vpop.f32.mrb[0].mxu0
    %v9820 = vadd.f32 0.0, %v9819
    %v9821 = vpop.f32.mrb[0].mxu0
    %9822 = vmatprep.mubr.bf16.mxu0 0
    %9823 = vmatmul.mubr.bf16.gmra.mrb[0].mxu0 %v9708
    %v9824 = vpop.f32.mrb[0].mxu0
    %v9825 = vadd.f32 0.0, %v9824
    %v9826 = vpop.f32.mrb[0].mxu0
    %v9827 = vpop.f32.mrb[0].mxu0
    %v9828 = vadd.f32 0.0, %v9827
    %v9829 = vpop.f32.mrb[0].mxu0
    %9830 = vmatprep.mubr.bf16.mxu0 0
    %9831 = vmatmul.mubr.bf16.gmra.mrb[0].mxu0 %v9711
    %v9832 = vpop.f32.mrb[0].mxu0
    %v9833 = vadd.f32 0.0, %v9832
    %v9834 = vpop.f32.mrb[0].mxu0
    %v9835 = vpop.f32.mrb[0].mxu0
    %v9836 = vadd.f32 0.0, %v9835
    %v9837 = vpop.f32.mrb[0].mxu0
    %9838 = vmatprep.mubr.bf16.mxu0 0
    %9839 = vmatmul.mubr.bf16.gmra.mrb[0].mxu0 %v9714
    %v9840 = vpop.f32.mrb[0].mxu0
    %v9841 = vadd.f32 0.0, %v9840
    %v9842 = vpop.f32.mrb[0].mxu0
    %v9843 = vpop.f32.mrb[0].mxu0
    %v9844 = vadd.f32 0.0, %v9843
    %v9845 = vpop.f32.mrb[0].mxu0
    %9846 = vmatprep.mubr.bf16.mxu0 0
    %9847 = vmatmul.mubr.bf16.gmra.mrb[0].mxu0 %v9717
    %v9848 = vpop.f32.mrb[0].mxu0
    %v9849 = vadd.f32 0.0, %v9848
    %v9850 = vpop.f32.mrb[0].mxu0
    %v9851 = vpop.f32.mrb[0].mxu0
    %v9852 = vadd.f32 0.0, %v9851
    %v9853 = vpop.f32.mrb[0].mxu0
    %9854 = vmatprep.mubr.bf16.mxu0 0
    %9855 = vmatmul.mubr.bf16.gmra.mrb[0].mxu0 %v9720
    %v9856 = vpop.f32.mrb[0].mxu0
    %v9857 = vadd.f32 0.0, %v9856
    %v9858 = vpop.f32.mrb[0].mxu0
    %v9859 = vpop.f32.mrb[0].mxu0
    %v9860 = vadd.f32 0.0, %v9859
    %v9861 = vpop.f32.mrb[0].mxu0
    %9862 = vmatprep.mubr.bf16.mxu0 0
    %9863 = vmatmul.mubr.bf16.gmra.mrb[0].mxu0 %v9723
    %v9864 = vpop.f32.mrb[0].mxu0
    %v9865 = vadd.f32 0.0, %v9864
    %v9866 = vpop.f32.mrb[0].mxu0
    %v9867 = vpop.f32.mrb[0].mxu0
    %v9868 = vadd.f32 0.0, %v9867
    %v9869 = vpop.f32.mrb[0].mxu0
    %9870 = vmatprep.mubr.bf16.mxu0 0
    %9871 = vmatmul.mubr.bf16.gmra.mrb[0].mxu0 %v9726
    %v9872 = vpop.f32.mrb[0].mxu0
    %v9873 = vadd.f32 0.0, %v9872
    %v9874 = vpop.f32.mrb[0].mxu0
    %v9875 = vpop.f32.mrb[0].mxu0
    %v9876 = vadd.f32 0.0, %v9875
    %v9877 = vpop.f32.mrb[0].mxu0
    %9878 = vmatprep.mubr.bf16.mxu0 0
    %9879 = vmatmul.mubr.bf16.gmra.mrb[0].mxu0 %v9729
    %v9880 = vpop.f32.mrb[0].mxu0
    %v9881 = vadd.f32 0.0, %v9880
    %v9882 = vpop.f32.mrb[0].mxu0
    %v9883 = vpop.f32.mrb[0].mxu0
    %v9884 = vadd.f32 0.0, %v9883
    %v9885 = vpop.f32.mrb[0].mxu0
    %9886 = vmatprep.mubr.bf16.mxu0 0
    %9887 = vmatmul.mubr.bf16.gmra.mrb[0].mxu0 %v9732
    %v9888 = vpop.f32.mrb[0].mxu0
    %v9889 = vadd.f32 0.0, %v9888
    %v9890 = vpop.f32.mrb[0].mxu0
    %v9891 = vpop.f32.mrb[0].mxu0
    %v9892 = vadd.f32 0.0, %v9891
    %v9893 = vpop.f32.mrb[0].mxu0
    %9894 = vmatprep.mubr.bf16.mxu0 0
    %9895 = vmatmul.mubr.bf16.gmra.mrb[0].mxu0 %v9735
    %v9896 = vpop.f32.mrb[0].mxu0
    %v9897 = vadd.f32 0.0, %v9896
    %v9898 = vpop.f32.mrb[0].mxu0
    %v9899 = vpop.f32.mrb[0].mxu0
    %v9900 = vadd.f32 0.0, %v9899
    %v9901 = vpop.f32.mrb[0].mxu0
    %9902 = vmatprep.mubr.bf16.mxu0 0
    %9903 = vmatmul.mubr.bf16.gmra.mrb[0].mxu0 %v9738
    %v9904 = vpop.f32.mrb[0].mxu0
    %v9905 = vadd.f32 0.0, %v9904
    %v9906 = vpop.f32.mrb[0].mxu0
    %v9907 = vpop.f32.mrb[0].mxu0
    %v9908 = vadd.f32 0.0, %v9907
    %v9909 = vpop.f32.mrb[0].mxu0
    %9910 = vmatprep.mubr.bf16.mxu0 0
    %9911 = vmatmul.mubr.bf16.gmra.mrb[0].mxu0 %v9741
    %v9912 = vpop.f32.mrb[0].mxu0
    %v9913 = vadd.f32 0.0, %v9912
    %v9914 = vpop.f32.mrb[0].mxu0
    %v9915 = vpop.f32.mrb[0].mxu0
    %v9916 = vadd.f32 0.0, %v9915
    %v9917 = vpop.f32.mrb[0].mxu0
    %9918 = vmatprep.mubr.bf16.mxu0 0
    %9919 = vmatmul.mubr.bf16.gmra.mrb[0].mxu0 %v9744
    %v9920 = vpop.f32.mrb[0].mxu0
    %v9921 = vadd.f32 0.0, %v9920
    %v9922 = vpop.f32.mrb[0].mxu0
    %v9923 = vpop.f32.mrb[0].mxu0
    %v9924 = vadd.f32 0.0, %v9923
    %v9925 = vpop.f32.mrb[0].mxu0
    %9926 = vmatprep.mubr.bf16.mxu0 0
    %9927 = vmatmul.mubr.bf16.gmra.mrb[0].mxu0 %v9747
    %v9928 = vpop.f32.mrb[0].mxu0
    %v9929 = vadd.f32 0.0, %v9928
    %v9930 = vpop.f32.mrb[0].mxu0
    %v9931 = vpop.f32.mrb[0].mxu0
    %v9932 = vadd.f32 0.0, %v9931
    %v9933 = vpop.f32.mrb[0].mxu0
    %9934 = vmatprep.mubr.bf16.mxu0 0
    %9935 = vmatmul.mubr.bf16.gmra.mrb[0].mxu0 %v9750
    %v9936 = vpop.f32.mrb[0].mxu0
    %v9937 = vadd.f32 0.0, %v9936
    %v9938 = vpop.f32.mrb[0].mxu0
    %v9939 = vpop.f32.mrb[0].mxu0
    %v9940 = vadd.f32 0.0, %v9939
    %v9941 = vpop.f32.mrb[0].mxu0
    %9942 = vmatprep.mubr.bf16.mxu0 0
    %9943 = vmatmul.mubr.bf16.gmra.mrb[0].mxu0 %v9753
    %v9944 = vpop.f32.mrb[0].mxu0
    %v9945 = vadd.f32 0.0, %v9944
    %v9946 = vpop.f32.mrb[0].mxu0
    %v9947 = vpop.f32.mrb[0].mxu0
    %v9948 = vadd.f32 0.0, %v9947
    %v9949 = vpop.f32.mrb[0].mxu0
    %9950 = vmatprep.mubr.bf16.mxu0 0
    %9951 = vmatmul.mubr.bf16.gmra.mrb[0].mxu0 %v9756
    %v9952 = vpop.f32.mrb[0].mxu0
    %v9953 = vadd.f32 0.0, %v9952
    %v9954 = vpop.f32.mrb[0].mxu0
    %v9955 = vpop.f32.mrb[0].mxu0
    %v9956 = vadd.f32 0.0, %v9955
    %v9957 = vpop.f32.mrb[0].mxu0
    %9958 = vmatprep.mubr.bf16.mxu0 0
    %9959 = vmatmul.mubr.bf16.gmra.mrb[0].mxu0 %v9759
    %v9960 = vpop.f32.mrb[0].mxu0
    %v9961 = vadd.f32 0.0, %v9960
    %v9962 = vpop.f32.mrb[0].mxu0
    %v9963 = vpop.f32.mrb[0].mxu0
    %v9964 = vadd.f32 0.0, %v9963
    %v9965 = vpop.f32.mrb[0].mxu0
    %9966 = vmatprep.mubr.bf16.mxu0 0
    %9967 = vmatmul.mubr.bf16.gmra.mrb[0].mxu0 %v9762
    %v9968 = vpop.f32.mrb[0].mxu0
    %v9969 = vadd.f32 0.0, %v9968
    %v9970 = vpop.f32.mrb[0].mxu0
    %v9971 = vpop.f32.mrb[0].mxu0
    %v9972 = vadd.f32 0.0, %v9971
    %v9973 = vpop.f32.mrb[0].mxu0
    %9974 = vmatprep.mubr.bf16.mxu0 0
    %9975 = vmatmul.mubr.bf16.gmra.mrb[0].mxu0 %v9765
    %v9976 = vpop.f32.mrb[0].mxu0
    %v9977 = vadd.f32 0.0, %v9976
    %v9978 = vpop.f32.mrb[0].mxu0
    %v9979 = vpop.f32.mrb[0].mxu0
    %v9980 = vadd.f32 0.0, %v9979
    %v9981 = vpop.f32.mrb[0].mxu0
    %9982 = vmatprep.mubr.bf16.mxu0 0
    %9983 = vmatmul.mubr.bf16.gmra.mrb[0].mxu0 %v9768
    %v9984 = vpop.f32.mrb[0].mxu0
    %v9985 = vadd.f32 0.0, %v9984
    %v9986 = vpop.f32.mrb[0].mxu0
    %v9987 = vpop.f32.mrb[0].mxu0
    %v9988 = vadd.f32 0.0, %v9987
    %v9989 = vpop.f32.mrb[0].mxu0
    %9990 = vmatprep.mubr.bf16.mxu0 0
    %9991 = vmatmul.mubr.bf16.gmra.mrb[0].mxu0 %v9771
    %v9992 = vpop.f32.mrb[0].mxu0
    %v9993 = vadd.f32 0.0, %v9992
    %v9994 = vpop.f32.mrb[0].mxu0
    %v9995 = vpop.f32.mrb[0].mxu0
    %v9996 = vadd.f32 0.0, %v9995
    %v9997 = vpop.f32.mrb[0].mxu0
    %9998 = vmatprep.mubr.bf16.mxu0 0
    %9999 = vmatmul.mubr.bf16.gmra.mrb[0].mxu0 %v9774
    %v10000 = vpop.f32.mrb[0].mxu0
    %v10001 = vadd.f32 0.0, %v10000
    %v10002 = vpop.f32.mrb[0].mxu0
    %v10003 = vpop.f32.mrb[0].mxu0
    %v10004 = vadd.f32 0.0, %v10003
    %v10005 = vpop.f32.mrb[0].mxu0
    %10006 = vmatprep.mubr.bf16.mxu0 0
    %10007 = vmatmul.mubr.bf16.gmra.mrb[0].mxu0 %v9777
    %v10008 = vpop.f32.mrb[0].mxu0
    %v10009 = vadd.f32 0.0, %v10008
    %v10010 = vpop.f32.mrb[0].mxu0
    %v10011 = vpop.f32.mrb[0].mxu0
    %v10012 = vpop.f32.mrb[0].mxu0
    %10013 = vdwg.mxu0
    %v10014 = vadd.f32 %v9508, %v9817
    %v10015 = vadd.f32 %v9509, %v9820
    %v10016 = vadd.f32 %v9510, %v9825
    %v10017 = vadd.f32 %v9511, %v9828
    %v10018 = vadd.f32 %v9512, %v9833
    %v10019 = vadd.f32 %v9513, %v9836
    %v10020 = vadd.f32 %v9514, %v9841
    %v10021 = vadd.f32 %v9515, %v9844
    %v10022 = vadd.f32 %v9516, %v9849
    %v10023 = vadd.f32 %v9517, %v9852
    %v10024 = vadd.f32 %v9518, %v9857
    %v10025 = vadd.f32 %v9519, %v9860
    %v10026 = vadd.f32 %v9520, %v9865
    %v10027 = vadd.f32 %v9521, %v9868
    %v10028 = vadd.f32 %v9522, %v9873
    %v10029 = vadd.f32 %v9523, %v9876
    %v10030 = vadd.f32 %v9524, %v9881
    %v10031 = vadd.f32 %v9525, %v9884
    %v10032 = vadd.f32 %v9526, %v9889
    %v10033 = vadd.f32 %v9527, %v9892
    %v10034 = vadd.f32 %v9528, %v9897
    %v10035 = vadd.f32 %v9529, %v9900
    %v10036 = vadd.f32 %v9530, %v9905
    %v10037 = vadd.f32 %v9531, %v9908
    %v10038 = vadd.f32 %v9532, %v9913
    %v10039 = vadd.f32 %v9533, %v9916
    %v10040 = vadd.f32 %v9534, %v9921
    %v10041 = vadd.f32 %v9535, %v9924
    %v10042 = vadd.f32 %v9536, %v9929
    %v10043 = vadd.f32 %v9537, %v9932
    %v10044 = vadd.f32 %v9538, %v9937
    %v10045 = vadd.f32 %v9539, %v9940
    %v10046 = vadd.f32 %v9540, %v9945
    %v10047 = vadd.f32 %v9541, %v9948
    %v10048 = vadd.f32 %v9542, %v9953
    %v10049 = vadd.f32 %v9543, %v9956
    %v10050 = vadd.f32 %v9544, %v9961
    %v10051 = vadd.f32 %v9545, %v9964
    %v10052 = vadd.f32 %v9546, %v9969
    %v10053 = vadd.f32 %v9547, %v9972
    %v10054 = vadd.f32 %v9548, %v9977
    %v10055 = vadd.f32 %v9549, %v9980
    %v10056 = vadd.f32 %v9550, %v9985
    %v10057 = vadd.f32 %v9551, %v9988
    %v10058 = vadd.f32 %v9552, %v9993
    %v10059 = vadd.f32 %v9553, %v9996
    %v10060 = vadd.f32 %v9554, %v10001
    %v10061 = vadd.f32 %v9555, %v10004
    %v10062 = vadd.f32 %v9556, %v10009
    %v10063 = vld [vmem:[%s2] sm:$0x1]
    %v10065 = vlaneseq
    %v10066 = vshrl.u32 %v10065, 7
    %v10067 = vsub.s32 0, %v10066
    %v10068 = vrot.slane %v10063, %v10067
    %v10070 = vadd.f32 %v10014, %v10068
    %v10071 = vadd.f32 %v10015, %v10068
    %v10072 = vadd.f32 %v10016, %v10068
    %v10073 = vadd.f32 %v10017, %v10068
    %v10074 = vadd.f32 %v10018, %v10068
    %v10075 = vadd.f32 %v10019, %v10068
    %v10076 = vadd.f32 %v10020, %v10068
    %v10077 = vadd.f32 %v10021, %v10068
    %v10078 = vadd.f32 %v10022, %v10068
    %v10079 = vadd.f32 %v10023, %v10068
    %v10080 = vadd.f32 %v10024, %v10068
    %v10081 = vadd.f32 %v10025, %v10068
    %v10082 = vadd.f32 %v10026, %v10068
    %v10083 = vadd.f32 %v10027, %v10068
    %v10084 = vadd.f32 %v10028, %v10068
    %v10085 = vadd.f32 %v10029, %v10068
    %v10086 = vadd.f32 %v10030, %v10068
    %v10087 = vadd.f32 %v10031, %v10068
    %v10088 = vadd.f32 %v10032, %v10068
    %v10089 = vadd.f32 %v10033, %v10068
    %v10090 = vadd.f32 %v10034, %v10068
    %v10091 = vadd.f32 %v10035, %v10068
    %v10092 = vadd.f32 %v10036, %v10068
    %v10093 = vadd.f32 %v10037, %v10068
    %v10094 = vadd.f32 %v10038, %v10068
    %v10095 = vadd.f32 %v10039, %v10068
    %v10096 = vadd.f32 %v10040, %v10068
    %v10097 = vadd.f32 %v10041, %v10068
    %v10098 = vadd.f32 %v10042, %v10068
    %v10099 = vadd.f32 %v10043, %v10068
    %v10100 = vadd.f32 %v10044, %v10068
    %v10101 = vadd.f32 %v10045, %v10068
    %v10102 = vadd.f32 %v10046, %v10068
    %v10103 = vadd.f32 %v10047, %v10068
    %v10104 = vadd.f32 %v10048, %v10068
    %v10105 = vadd.f32 %v10049, %v10068
    %v10106 = vadd.f32 %v10050, %v10068
    %v10107 = vadd.f32 %v10051, %v10068
    %v10108 = vadd.f32 %v10052, %v10068
    %v10109 = vadd.f32 %v10053, %v10068
    %v10110 = vadd.f32 %v10054, %v10068
    %v10111 = vadd.f32 %v10055, %v10068
    %v10112 = vadd.f32 %v10056, %v10068
    %v10113 = vadd.f32 %v10057, %v10068
    %v10114 = vadd.f32 %v10058, %v10068
    %v10115 = vadd.f32 %v10059, %v10068
    %v10116 = vadd.f32 %v10060, %v10068
    %v10117 = vadd.f32 %v10061, %v10068
    %v10118 = vadd.f32 %v10062, %v10068
    %v10119 = vmax.f32 %v10070, 0.0
    %v10120 = vmax.f32 %v10071, 0.0
    %v10121 = vmax.f32 %v10072, 0.0
    %v10122 = vmax.f32 %v10073, 0.0
    %v10123 = vmax.f32 %v10074, 0.0
    %v10124 = vmax.f32 %v10075, 0.0
    %v10125 = vmax.f32 %v10076, 0.0
    %v10126 = vmax.f32 %v10077, 0.0
    %v10127 = vmax.f32 %v10078, 0.0
    %v10128 = vmax.f32 %v10079, 0.0
    %v10129 = vmax.f32 %v10080, 0.0
    %v10130 = vmax.f32 %v10081, 0.0
    %v10131 = vmax.f32 %v10082, 0.0
    %v10132 = vmax.f32 %v10083, 0.0
    %v10133 = vmax.f32 %v10084, 0.0
    %v10134 = vmax.f32 %v10085, 0.0
    %v10135 = vmax.f32 %v10086, 0.0
    %v10136 = vmax.f32 %v10087, 0.0
    %v10137 = vmax.f32 %v10088, 0.0
    %v10138 = vmax.f32 %v10089, 0.0
    %v10139 = vmax.f32 %v10090, 0.0
    %v10140 = vmax.f32 %v10091, 0.0
    %v10141 = vmax.f32 %v10092, 0.0
    %v10142 = vmax.f32 %v10093, 0.0
    %v10143 = vmax.f32 %v10094, 0.0
    %v10144 = vmax.f32 %v10095, 0.0
    %v10145 = vmax.f32 %v10096, 0.0
    %v10146 = vmax.f32 %v10097, 0.0
    %v10147 = vmax.f32 %v10098, 0.0
    %v10148 = vmax.f32 %v10099, 0.0
    %v10149 = vmax.f32 %v10100, 0.0
    %v10150 = vmax.f32 %v10101, 0.0
    %v10151 = vmax.f32 %v10102, 0.0
    %v10152 = vmax.f32 %v10103, 0.0
    %v10153 = vmax.f32 %v10104, 0.0
    %v10154 = vmax.f32 %v10105, 0.0
    %v10155 = vmax.f32 %v10106, 0.0
    %v10156 = vmax.f32 %v10107, 0.0
    %v10157 = vmax.f32 %v10108, 0.0
    %v10158 = vmax.f32 %v10109, 0.0
    %v10159 = vmax.f32 %v10110, 0.0
    %v10160 = vmax.f32 %v10111, 0.0
    %v10161 = vmax.f32 %v10112, 0.0
    %v10162 = vmax.f32 %v10113, 0.0
    %v10163 = vmax.f32 %v10114, 0.0
    %v10164 = vmax.f32 %v10115, 0.0
    %v10165 = vmax.f32 %v10116, 0.0
    %v10166 = vmax.f32 %v10117, 0.0
    %v10167 = vmax.f32 %v10118, 0.0
    %v10217 = vcombine.high %v10119, %v10119
    %v10219 = vunpack.c.l.s4 1983009808
    %v10220 = vunpack.c.0.s8 %v10219
    %v10221 = vlaneseq
    %v10222 = vshrl.u32 %v10221, 7
    %v10223 = vsub.s32 %v10220, %v10222
    %v10224 = vrot.slane %v10119, %v10223
    %v10226 = vunpack.c.l.s4 1983009808
    %v10227 = vunpack.c.0.s8 %v10226
    %v10228 = vlaneseq
    %v10229 = vshrl.u32 %v10228, 7
    %v10230 = vsub.s32 %v10227, %v10229
    %v10231 = vrot.slane %v10217, %v10230
    %v10232 = vcombine.high %v10224, %v10224
    %v10233 = vcombine.high %v10231, %v10231
    %v10234 = vcombine.high %v10120, %v10120
    %v10236 = vunpack.c.l.s4 1983009808
    %v10237 = vunpack.c.0.s8 %v10236
    %v10238 = vlaneseq
    %v10239 = vshrl.u32 %v10238, 7
    %v10240 = vsub.s32 %v10237, %v10239
    %v10241 = vrot.slane %v10120, %v10240
    %v10243 = vunpack.c.l.s4 1983009808
    %v10244 = vunpack.c.0.s8 %v10243
    %v10245 = vlaneseq
    %v10246 = vshrl.u32 %v10245, 7
    %v10247 = vsub.s32 %v10244, %v10246
    %v10248 = vrot.slane %v10234, %v10247
    %v10249 = vcombine.high %v10241, %v10241
    %v10250 = vcombine.high %v10248, %v10248
    %v10251 = vcombine.high %v10121, %v10121
    %v10253 = vunpack.c.l.s4 1983009808
    %v10254 = vunpack.c.0.s8 %v10253
    %v10255 = vlaneseq
    %v10256 = vshrl.u32 %v10255, 7
    %v10257 = vsub.s32 %v10254, %v10256
    %v10258 = vrot.slane %v10121, %v10257
    %v10260 = vunpack.c.l.s4 1983009808
    %v10261 = vunpack.c.0.s8 %v10260
    %v10262 = vlaneseq
    %v10263 = vshrl.u32 %v10262, 7
    %v10264 = vsub.s32 %v10261, %v10263
    %v10265 = vrot.slane %v10251, %v10264
    %v10266 = vcombine.high %v10258, %v10258
    %v10267 = vcombine.high %v10265, %v10265
    %v10268 = vcombine.high %v10122, %v10122
    %v10270 = vunpack.c.l.s4 1983009808
    %v10271 = vunpack.c.0.s8 %v10270
    %v10272 = vlaneseq
    %v10273 = vshrl.u32 %v10272, 7
    %v10274 = vsub.s32 %v10271, %v10273
    %v10275 = vrot.slane %v10122, %v10274
    %v10277 = vunpack.c.l.s4 1983009808
    %v10278 = vunpack.c.0.s8 %v10277
    %v10279 = vlaneseq
    %v10280 = vshrl.u32 %v10279, 7
    %v10281 = vsub.s32 %v10278, %v10280
    %v10282 = vrot.slane %v10268, %v10281
    %v10283 = vcombine.high %v10275, %v10275
    %v10284 = vcombine.high %v10282, %v10282
    %v10285 = vcombine.high %v10123, %v10123
    %v10287 = vunpack.c.l.s4 1983009808
    %v10288 = vunpack.c.0.s8 %v10287
    %v10289 = vlaneseq
    %v10290 = vshrl.u32 %v10289, 7
    %v10291 = vsub.s32 %v10288, %v10290
    %v10292 = vrot.slane %v10123, %v10291
    %v10294 = vunpack.c.l.s4 1983009808
    %v10295 = vunpack.c.0.s8 %v10294
    %v10296 = vlaneseq
    %v10297 = vshrl.u32 %v10296, 7
    %v10298 = vsub.s32 %v10295, %v10297
    %v10299 = vrot.slane %v10285, %v10298
    %v10300 = vcombine.high %v10292, %v10292
    %v10301 = vcombine.high %v10299, %v10299
    %v10302 = vcombine.high %v10124, %v10124
    %v10304 = vunpack.c.l.s4 1983009808
    %v10305 = vunpack.c.0.s8 %v10304
    %v10306 = vlaneseq
    %v10307 = vshrl.u32 %v10306, 7
    %v10308 = vsub.s32 %v10305, %v10307
    %v10309 = vrot.slane %v10124, %v10308
    %v10311 = vunpack.c.l.s4 1983009808
    %v10312 = vunpack.c.0.s8 %v10311
    %v10313 = vlaneseq
    %v10314 = vshrl.u32 %v10313, 7
    %v10315 = vsub.s32 %v10312, %v10314
    %v10316 = vrot.slane %v10302, %v10315
    %v10317 = vcombine.high %v10309, %v10309
    %v10318 = vcombine.high %v10316, %v10316
    %v10319 = vcombine.high %v10125, %v10125
    %v10321 = vunpack.c.l.s4 1983009808
    %v10322 = vunpack.c.0.s8 %v10321
    %v10323 = vlaneseq
    %v10324 = vshrl.u32 %v10323, 7
    %v10325 = vsub.s32 %v10322, %v10324
    %v10326 = vrot.slane %v10125, %v10325
    %v10328 = vunpack.c.l.s4 1983009808
    %v10329 = vunpack.c.0.s8 %v10328
    %v10330 = vlaneseq
    %v10331 = vshrl.u32 %v10330, 7
    %v10332 = vsub.s32 %v10329, %v10331
    %v10333 = vrot.slane %v10319, %v10332
    %v10334 = vcombine.high %v10326, %v10326
    %v10335 = vcombine.high %v10333, %v10333
    %v10336 = vcombine.high %v10126, %v10126
    %v10338 = vunpack.c.l.s4 1983009808
    %v10339 = vunpack.c.0.s8 %v10338
    %v10340 = vlaneseq
    %v10341 = vshrl.u32 %v10340, 7
    %v10342 = vsub.s32 %v10339, %v10341
    %v10343 = vrot.slane %v10126, %v10342
    %v10345 = vunpack.c.l.s4 1983009808
    %v10346 = vunpack.c.0.s8 %v10345
    %v10347 = vlaneseq
    %v10348 = vshrl.u32 %v10347, 7
    %v10349 = vsub.s32 %v10346, %v10348
    %v10350 = vrot.slane %v10336, %v10349
    %v10351 = vcombine.high %v10343, %v10343
    %v10352 = vcombine.high %v10350, %v10350
    %v10353 = vcombine.high %v10127, %v10127
    %v10355 = vunpack.c.l.s4 1983009808
    %v10356 = vunpack.c.0.s8 %v10355
    %v10357 = vlaneseq
    %v10358 = vshrl.u32 %v10357, 7
    %v10359 = vsub.s32 %v10356, %v10358
    %v10360 = vrot.slane %v10127, %v10359
    %v10362 = vunpack.c.l.s4 1983009808
    %v10363 = vunpack.c.0.s8 %v10362
    %v10364 = vlaneseq
    %v10365 = vshrl.u32 %v10364, 7
    %v10366 = vsub.s32 %v10363, %v10365
    %v10367 = vrot.slane %v10353, %v10366
    %v10368 = vcombine.high %v10360, %v10360
    %v10369 = vcombine.high %v10367, %v10367
    %v10370 = vcombine.high %v10128, %v10128
    %v10372 = vunpack.c.l.s4 1983009808
    %v10373 = vunpack.c.0.s8 %v10372
    %v10374 = vlaneseq
    %v10375 = vshrl.u32 %v10374, 7
    %v10376 = vsub.s32 %v10373, %v10375
    %v10377 = vrot.slane %v10128, %v10376
    %v10379 = vunpack.c.l.s4 1983009808
    %v10380 = vunpack.c.0.s8 %v10379
    %v10381 = vlaneseq
    %v10382 = vshrl.u32 %v10381, 7
    %v10383 = vsub.s32 %v10380, %v10382
    %v10384 = vrot.slane %v10370, %v10383
    %v10385 = vcombine.high %v10377, %v10377
    %v10386 = vcombine.high %v10384, %v10384
    %v10387 = vcombine.high %v10129, %v10129
    %v10389 = vunpack.c.l.s4 1983009808
    %v10390 = vunpack.c.0.s8 %v10389
    %v10391 = vlaneseq
    %v10392 = vshrl.u32 %v10391, 7
    %v10393 = vsub.s32 %v10390, %v10392
    %v10394 = vrot.slane %v10129, %v10393
    %v10396 = vunpack.c.l.s4 1983009808
    %v10397 = vunpack.c.0.s8 %v10396
    %v10398 = vlaneseq
    %v10399 = vshrl.u32 %v10398, 7
    %v10400 = vsub.s32 %v10397, %v10399
    %v10401 = vrot.slane %v10387, %v10400
    %v10402 = vcombine.high %v10394, %v10394
    %v10403 = vcombine.high %v10401, %v10401
    %v10404 = vcombine.high %v10130, %v10130
    %v10406 = vunpack.c.l.s4 1983009808
    %v10407 = vunpack.c.0.s8 %v10406
    %v10408 = vlaneseq
    %v10409 = vshrl.u32 %v10408, 7
    %v10410 = vsub.s32 %v10407, %v10409
    %v10411 = vrot.slane %v10130, %v10410
    %v10413 = vunpack.c.l.s4 1983009808
    %v10414 = vunpack.c.0.s8 %v10413
    %v10415 = vlaneseq
    %v10416 = vshrl.u32 %v10415, 7
    %v10417 = vsub.s32 %v10414, %v10416
    %v10418 = vrot.slane %v10404, %v10417
    %v10419 = vcombine.high %v10411, %v10411
    %v10420 = vcombine.high %v10418, %v10418
    %v10421 = vcombine.high %v10131, %v10131
    %v10423 = vunpack.c.l.s4 1983009808
    %v10424 = vunpack.c.0.s8 %v10423
    %v10425 = vlaneseq
    %v10426 = vshrl.u32 %v10425, 7
    %v10427 = vsub.s32 %v10424, %v10426
    %v10428 = vrot.slane %v10131, %v10427
    %v10430 = vunpack.c.l.s4 1983009808
    %v10431 = vunpack.c.0.s8 %v10430
    %v10432 = vlaneseq
    %v10433 = vshrl.u32 %v10432, 7
    %v10434 = vsub.s32 %v10431, %v10433
    %v10435 = vrot.slane %v10421, %v10434
    %v10436 = vcombine.high %v10428, %v10428
    %v10437 = vcombine.high %v10435, %v10435
    %v10438 = vcombine.high %v10132, %v10132
    %v10440 = vunpack.c.l.s4 1983009808
    %v10441 = vunpack.c.0.s8 %v10440
    %v10442 = vlaneseq
    %v10443 = vshrl.u32 %v10442, 7
    %v10444 = vsub.s32 %v10441, %v10443
    %v10445 = vrot.slane %v10132, %v10444
    %v10447 = vunpack.c.l.s4 1983009808
    %v10448 = vunpack.c.0.s8 %v10447
    %v10449 = vlaneseq
    %v10450 = vshrl.u32 %v10449, 7
    %v10451 = vsub.s32 %v10448, %v10450
    %v10452 = vrot.slane %v10438, %v10451
    %v10453 = vcombine.high %v10445, %v10445
    %v10454 = vcombine.high %v10452, %v10452
    %v10455 = vcombine.high %v10133, %v10133
    %v10457 = vunpack.c.l.s4 1983009808
    %v10458 = vunpack.c.0.s8 %v10457
    %v10459 = vlaneseq
    %v10460 = vshrl.u32 %v10459, 7
    %v10461 = vsub.s32 %v10458, %v10460
    %v10462 = vrot.slane %v10133, %v10461
    %v10464 = vunpack.c.l.s4 1983009808
    %v10465 = vunpack.c.0.s8 %v10464
    %v10466 = vlaneseq
    %v10467 = vshrl.u32 %v10466, 7
    %v10468 = vsub.s32 %v10465, %v10467
    %v10469 = vrot.slane %v10455, %v10468
    %v10470 = vcombine.high %v10462, %v10462
    %v10471 = vcombine.high %v10469, %v10469
    %v10472 = vcombine.high %v10134, %v10134
    %v10474 = vunpack.c.l.s4 1983009808
    %v10475 = vunpack.c.0.s8 %v10474
    %v10476 = vlaneseq
    %v10477 = vshrl.u32 %v10476, 7
    %v10478 = vsub.s32 %v10475, %v10477
    %v10479 = vrot.slane %v10134, %v10478
    %v10481 = vunpack.c.l.s4 1983009808
    %v10482 = vunpack.c.0.s8 %v10481
    %v10483 = vlaneseq
    %v10484 = vshrl.u32 %v10483, 7
    %v10485 = vsub.s32 %v10482, %v10484
    %v10486 = vrot.slane %v10472, %v10485
    %v10487 = vcombine.high %v10479, %v10479
    %v10488 = vcombine.high %v10486, %v10486
    %v10489 = vcombine.high %v10135, %v10135
    %v10491 = vunpack.c.l.s4 1983009808
    %v10492 = vunpack.c.0.s8 %v10491
    %v10493 = vlaneseq
    %v10494 = vshrl.u32 %v10493, 7
    %v10495 = vsub.s32 %v10492, %v10494
    %v10496 = vrot.slane %v10135, %v10495
    %v10498 = vunpack.c.l.s4 1983009808
    %v10499 = vunpack.c.0.s8 %v10498
    %v10500 = vlaneseq
    %v10501 = vshrl.u32 %v10500, 7
    %v10502 = vsub.s32 %v10499, %v10501
    %v10503 = vrot.slane %v10489, %v10502
    %v10504 = vcombine.high %v10496, %v10496
    %v10505 = vcombine.high %v10503, %v10503
    %v10506 = vcombine.high %v10136, %v10136
    %v10508 = vunpack.c.l.s4 1983009808
    %v10509 = vunpack.c.0.s8 %v10508
    %v10510 = vlaneseq
    %v10511 = vshrl.u32 %v10510, 7
    %v10512 = vsub.s32 %v10509, %v10511
    %v10513 = vrot.slane %v10136, %v10512
    %v10515 = vunpack.c.l.s4 1983009808
    %v10516 = vunpack.c.0.s8 %v10515
    %v10517 = vlaneseq
    %v10518 = vshrl.u32 %v10517, 7
    %v10519 = vsub.s32 %v10516, %v10518
    %v10520 = vrot.slane %v10506, %v10519
    %v10521 = vcombine.high %v10513, %v10513
    %v10522 = vcombine.high %v10520, %v10520
    %v10523 = vcombine.high %v10137, %v10137
    %v10525 = vunpack.c.l.s4 1983009808
    %v10526 = vunpack.c.0.s8 %v10525
    %v10527 = vlaneseq
    %v10528 = vshrl.u32 %v10527, 7
    %v10529 = vsub.s32 %v10526, %v10528
    %v10530 = vrot.slane %v10137, %v10529
    %v10532 = vunpack.c.l.s4 1983009808
    %v10533 = vunpack.c.0.s8 %v10532
    %v10534 = vlaneseq
    %v10535 = vshrl.u32 %v10534, 7
    %v10536 = vsub.s32 %v10533, %v10535
    %v10537 = vrot.slane %v10523, %v10536
    %v10538 = vcombine.high %v10530, %v10530
    %v10539 = vcombine.high %v10537, %v10537
    %v10540 = vcombine.high %v10138, %v10138
    %v10542 = vunpack.c.l.s4 1983009808
    %v10543 = vunpack.c.0.s8 %v10542
    %v10544 = vlaneseq
    %v10545 = vshrl.u32 %v10544, 7
    %v10546 = vsub.s32 %v10543, %v10545
    %v10547 = vrot.slane %v10138, %v10546
    %v10549 = vunpack.c.l.s4 1983009808
    %v10550 = vunpack.c.0.s8 %v10549
    %v10551 = vlaneseq
    %v10552 = vshrl.u32 %v10551, 7
    %v10553 = vsub.s32 %v10550, %v10552
    %v10554 = vrot.slane %v10540, %v10553
    %v10555 = vcombine.high %v10547, %v10547
    %v10556 = vcombine.high %v10554, %v10554
    %v10557 = vcombine.high %v10139, %v10139
    %v10559 = vunpack.c.l.s4 1983009808
    %v10560 = vunpack.c.0.s8 %v10559
    %v10561 = vlaneseq
    %v10562 = vshrl.u32 %v10561, 7
    %v10563 = vsub.s32 %v10560, %v10562
    %v10564 = vrot.slane %v10139, %v10563
    %v10566 = vunpack.c.l.s4 1983009808
    %v10567 = vunpack.c.0.s8 %v10566
    %v10568 = vlaneseq
    %v10569 = vshrl.u32 %v10568, 7
    %v10570 = vsub.s32 %v10567, %v10569
    %v10571 = vrot.slane %v10557, %v10570
    %v10572 = vcombine.high %v10564, %v10564
    %v10573 = vcombine.high %v10571, %v10571
    %v10574 = vcombine.high %v10140, %v10140
    %v10576 = vunpack.c.l.s4 1983009808
    %v10577 = vunpack.c.0.s8 %v10576
    %v10578 = vlaneseq
    %v10579 = vshrl.u32 %v10578, 7
    %v10580 = vsub.s32 %v10577, %v10579
    %v10581 = vrot.slane %v10140, %v10580
    %v10583 = vunpack.c.l.s4 1983009808
    %v10584 = vunpack.c.0.s8 %v10583
    %v10585 = vlaneseq
    %v10586 = vshrl.u32 %v10585, 7
    %v10587 = vsub.s32 %v10584, %v10586
    %v10588 = vrot.slane %v10574, %v10587
    %v10589 = vcombine.high %v10581, %v10581
    %v10590 = vcombine.high %v10588, %v10588
    %v10591 = vcombine.high %v10141, %v10141
    %v10593 = vunpack.c.l.s4 1983009808
    %v10594 = vunpack.c.0.s8 %v10593
    %v10595 = vlaneseq
    %v10596 = vshrl.u32 %v10595, 7
    %v10597 = vsub.s32 %v10594, %v10596
    %v10598 = vrot.slane %v10141, %v10597
    %v10600 = vunpack.c.l.s4 1983009808
    %v10601 = vunpack.c.0.s8 %v10600
    %v10602 = vlaneseq
    %v10603 = vshrl.u32 %v10602, 7
    %v10604 = vsub.s32 %v10601, %v10603
    %v10605 = vrot.slane %v10591, %v10604
    %v10606 = vcombine.high %v10598, %v10598
    %v10607 = vcombine.high %v10605, %v10605
    %v10608 = vcombine.high %v10142, %v10142
    %v10610 = vunpack.c.l.s4 1983009808
    %v10611 = vunpack.c.0.s8 %v10610
    %v10612 = vlaneseq
    %v10613 = vshrl.u32 %v10612, 7
    %v10614 = vsub.s32 %v10611, %v10613
    %v10615 = vrot.slane %v10142, %v10614
    %v10617 = vunpack.c.l.s4 1983009808
    %v10618 = vunpack.c.0.s8 %v10617
    %v10619 = vlaneseq
    %v10620 = vshrl.u32 %v10619, 7
    %v10621 = vsub.s32 %v10618, %v10620
    %v10622 = vrot.slane %v10608, %v10621
    %v10623 = vcombine.high %v10615, %v10615
    %v10624 = vcombine.high %v10622, %v10622
    %v10625 = vcombine.high %v10143, %v10143
    %v10627 = vunpack.c.l.s4 1983009808
    %v10628 = vunpack.c.0.s8 %v10627
    %v10629 = vlaneseq
    %v10630 = vshrl.u32 %v10629, 7
    %v10631 = vsub.s32 %v10628, %v10630
    %v10632 = vrot.slane %v10143, %v10631
    %v10634 = vunpack.c.l.s4 1983009808
    %v10635 = vunpack.c.0.s8 %v10634
    %v10636 = vlaneseq
    %v10637 = vshrl.u32 %v10636, 7
    %v10638 = vsub.s32 %v10635, %v10637
    %v10639 = vrot.slane %v10625, %v10638
    %v10640 = vcombine.high %v10632, %v10632
    %v10641 = vcombine.high %v10639, %v10639
    %v10642 = vcombine.high %v10144, %v10144
    %v10644 = vunpack.c.l.s4 1983009808
    %v10645 = vunpack.c.0.s8 %v10644
    %v10646 = vlaneseq
    %v10647 = vshrl.u32 %v10646, 7
    %v10648 = vsub.s32 %v10645, %v10647
    %v10649 = vrot.slane %v10144, %v10648
    %v10651 = vunpack.c.l.s4 1983009808
    %v10652 = vunpack.c.0.s8 %v10651
    %v10653 = vlaneseq
    %v10654 = vshrl.u32 %v10653, 7
    %v10655 = vsub.s32 %v10652, %v10654
    %v10656 = vrot.slane %v10642, %v10655
    %v10657 = vcombine.high %v10649, %v10649
    %v10658 = vcombine.high %v10656, %v10656
    %v10659 = vcombine.high %v10145, %v10145
    %v10661 = vunpack.c.l.s4 1983009808
    %v10662 = vunpack.c.0.s8 %v10661
    %v10663 = vlaneseq
    %v10664 = vshrl.u32 %v10663, 7
    %v10665 = vsub.s32 %v10662, %v10664
    %v10666 = vrot.slane %v10145, %v10665
    %v10668 = vunpack.c.l.s4 1983009808
    %v10669 = vunpack.c.0.s8 %v10668
    %v10670 = vlaneseq
    %v10671 = vshrl.u32 %v10670, 7
    %v10672 = vsub.s32 %v10669, %v10671
    %v10673 = vrot.slane %v10659, %v10672
    %v10674 = vcombine.high %v10666, %v10666
    %v10675 = vcombine.high %v10673, %v10673
    %v10676 = vcombine.high %v10146, %v10146
    %v10678 = vunpack.c.l.s4 1983009808
    %v10679 = vunpack.c.0.s8 %v10678
    %v10680 = vlaneseq
    %v10681 = vshrl.u32 %v10680, 7
    %v10682 = vsub.s32 %v10679, %v10681
    %v10683 = vrot.slane %v10146, %v10682
    %v10685 = vunpack.c.l.s4 1983009808
    %v10686 = vunpack.c.0.s8 %v10685
    %v10687 = vlaneseq
    %v10688 = vshrl.u32 %v10687, 7
    %v10689 = vsub.s32 %v10686, %v10688
    %v10690 = vrot.slane %v10676, %v10689
    %v10691 = vcombine.high %v10683, %v10683
    %v10692 = vcombine.high %v10690, %v10690
    %v10693 = vcombine.high %v10147, %v10147
    %v10695 = vunpack.c.l.s4 1983009808
    %v10696 = vunpack.c.0.s8 %v10695
    %v10697 = vlaneseq
    %v10698 = vshrl.u32 %v10697, 7
    %v10699 = vsub.s32 %v10696, %v10698
    %v10700 = vrot.slane %v10147, %v10699
    %v10702 = vunpack.c.l.s4 1983009808
    %v10703 = vunpack.c.0.s8 %v10702
    %v10704 = vlaneseq
    %v10705 = vshrl.u32 %v10704, 7
    %v10706 = vsub.s32 %v10703, %v10705
    %v10707 = vrot.slane %v10693, %v10706
    %v10708 = vcombine.high %v10700, %v10700
    %v10709 = vcombine.high %v10707, %v10707
    %v10710 = vcombine.high %v10148, %v10148
    %v10712 = vunpack.c.l.s4 1983009808
    %v10713 = vunpack.c.0.s8 %v10712
    %v10714 = vlaneseq
    %v10715 = vshrl.u32 %v10714, 7
    %v10716 = vsub.s32 %v10713, %v10715
    %v10717 = vrot.slane %v10148, %v10716
    %v10719 = vunpack.c.l.s4 1983009808
    %v10720 = vunpack.c.0.s8 %v10719
    %v10721 = vlaneseq
    %v10722 = vshrl.u32 %v10721, 7
    %v10723 = vsub.s32 %v10720, %v10722
    %v10724 = vrot.slane %v10710, %v10723
    %v10725 = vcombine.high %v10717, %v10717
    %v10726 = vcombine.high %v10724, %v10724
    %v10727 = vcombine.high %v10149, %v10149
    %v10729 = vunpack.c.l.s4 1983009808
    %v10730 = vunpack.c.0.s8 %v10729
    %v10731 = vlaneseq
    %v10732 = vshrl.u32 %v10731, 7
    %v10733 = vsub.s32 %v10730, %v10732
    %v10734 = vrot.slane %v10149, %v10733
    %v10736 = vunpack.c.l.s4 1983009808
    %v10737 = vunpack.c.0.s8 %v10736
    %v10738 = vlaneseq
    %v10739 = vshrl.u32 %v10738, 7
    %v10740 = vsub.s32 %v10737, %v10739
    %v10741 = vrot.slane %v10727, %v10740
    %v10742 = vcombine.high %v10734, %v10734
    %v10743 = vcombine.high %v10741, %v10741
    %v10744 = vcombine.high %v10150, %v10150
    %v10746 = vunpack.c.l.s4 1983009808
    %v10747 = vunpack.c.0.s8 %v10746
    %v10748 = vlaneseq
    %v10749 = vshrl.u32 %v10748, 7
    %v10750 = vsub.s32 %v10747, %v10749
    %v10751 = vrot.slane %v10150, %v10750
    %v10753 = vunpack.c.l.s4 1983009808
    %v10754 = vunpack.c.0.s8 %v10753
    %v10755 = vlaneseq
    %v10756 = vshrl.u32 %v10755, 7
    %v10757 = vsub.s32 %v10754, %v10756
    %v10758 = vrot.slane %v10744, %v10757
    %v10759 = vcombine.high %v10751, %v10751
    %v10760 = vcombine.high %v10758, %v10758
    %v10761 = vcombine.high %v10151, %v10151
    %v10763 = vunpack.c.l.s4 1983009808
    %v10764 = vunpack.c.0.s8 %v10763
    %v10765 = vlaneseq
    %v10766 = vshrl.u32 %v10765, 7
    %v10767 = vsub.s32 %v10764, %v10766
    %v10768 = vrot.slane %v10151, %v10767
    %v10770 = vunpack.c.l.s4 1983009808
    %v10771 = vunpack.c.0.s8 %v10770
    %v10772 = vlaneseq
    %v10773 = vshrl.u32 %v10772, 7
    %v10774 = vsub.s32 %v10771, %v10773
    %v10775 = vrot.slane %v10761, %v10774
    %v10776 = vcombine.high %v10768, %v10768
    %v10777 = vcombine.high %v10775, %v10775
    %v10778 = vcombine.high %v10152, %v10152
    %v10780 = vunpack.c.l.s4 1983009808
    %v10781 = vunpack.c.0.s8 %v10780
    %v10782 = vlaneseq
    %v10783 = vshrl.u32 %v10782, 7
    %v10784 = vsub.s32 %v10781, %v10783
    %v10785 = vrot.slane %v10152, %v10784
    %v10787 = vunpack.c.l.s4 1983009808
    %v10788 = vunpack.c.0.s8 %v10787
    %v10789 = vlaneseq
    %v10790 = vshrl.u32 %v10789, 7
    %v10791 = vsub.s32 %v10788, %v10790
    %v10792 = vrot.slane %v10778, %v10791
    %v10793 = vcombine.high %v10785, %v10785
    %v10794 = vcombine.high %v10792, %v10792
    %v10795 = vcombine.high %v10153, %v10153
    %v10797 = vunpack.c.l.s4 1983009808
    %v10798 = vunpack.c.0.s8 %v10797
    %v10799 = vlaneseq
    %v10800 = vshrl.u32 %v10799, 7
    %v10801 = vsub.s32 %v10798, %v10800
    %v10802 = vrot.slane %v10153, %v10801
    %v10804 = vunpack.c.l.s4 1983009808
    %v10805 = vunpack.c.0.s8 %v10804
    %v10806 = vlaneseq
    %v10807 = vshrl.u32 %v10806, 7
    %v10808 = vsub.s32 %v10805, %v10807
    %v10809 = vrot.slane %v10795, %v10808
    %v10810 = vcombine.high %v10802, %v10802
    %v10811 = vcombine.high %v10809, %v10809
    %v10812 = vcombine.high %v10154, %v10154
    %v10814 = vunpack.c.l.s4 1983009808
    %v10815 = vunpack.c.0.s8 %v10814
    %v10816 = vlaneseq
    %v10817 = vshrl.u32 %v10816, 7
    %v10818 = vsub.s32 %v10815, %v10817
    %v10819 = vrot.slane %v10154, %v10818
    %v10821 = vunpack.c.l.s4 1983009808
    %v10822 = vunpack.c.0.s8 %v10821
    %v10823 = vlaneseq
    %v10824 = vshrl.u32 %v10823, 7
    %v10825 = vsub.s32 %v10822, %v10824
    %v10826 = vrot.slane %v10812, %v10825
    %v10827 = vcombine.high %v10819, %v10819
    %v10828 = vcombine.high %v10826, %v10826
    %v10829 = vcombine.high %v10155, %v10155
    %v10831 = vunpack.c.l.s4 1983009808
    %v10832 = vunpack.c.0.s8 %v10831
    %v10833 = vlaneseq
    %v10834 = vshrl.u32 %v10833, 7
    %v10835 = vsub.s32 %v10832, %v10834
    %v10836 = vrot.slane %v10155, %v10835
    %v10838 = vunpack.c.l.s4 1983009808
    %v10839 = vunpack.c.0.s8 %v10838
    %v10840 = vlaneseq
    %v10841 = vshrl.u32 %v10840, 7
    %v10842 = vsub.s32 %v10839, %v10841
    %v10843 = vrot.slane %v10829, %v10842
    %v10844 = vcombine.high %v10836, %v10836
    %v10845 = vcombine.high %v10843, %v10843
    %v10846 = vcombine.high %v10156, %v10156
    %v10848 = vunpack.c.l.s4 1983009808
    %v10849 = vunpack.c.0.s8 %v10848
    %v10850 = vlaneseq
    %v10851 = vshrl.u32 %v10850, 7
    %v10852 = vsub.s32 %v10849, %v10851
    %v10853 = vrot.slane %v10156, %v10852
    %v10855 = vunpack.c.l.s4 1983009808
    %v10856 = vunpack.c.0.s8 %v10855
    %v10857 = vlaneseq
    %v10858 = vshrl.u32 %v10857, 7
    %v10859 = vsub.s32 %v10856, %v10858
    %v10860 = vrot.slane %v10846, %v10859
    %v10861 = vcombine.high %v10853, %v10853
    %v10862 = vcombine.high %v10860, %v10860
    %v10863 = vcombine.high %v10157, %v10157
    %v10865 = vunpack.c.l.s4 1983009808
    %v10866 = vunpack.c.0.s8 %v10865
    %v10867 = vlaneseq
    %v10868 = vshrl.u32 %v10867, 7
    %v10869 = vsub.s32 %v10866, %v10868
    %v10870 = vrot.slane %v10157, %v10869
    %v10872 = vunpack.c.l.s4 1983009808
    %v10873 = vunpack.c.0.s8 %v10872
    %v10874 = vlaneseq
    %v10875 = vshrl.u32 %v10874, 7
    %v10876 = vsub.s32 %v10873, %v10875
    %v10877 = vrot.slane %v10863, %v10876
    %v10878 = vcombine.high %v10870, %v10870
    %v10879 = vcombine.high %v10877, %v10877
    %v10880 = vcombine.high %v10158, %v10158
    %v10882 = vunpack.c.l.s4 1983009808
    %v10883 = vunpack.c.0.s8 %v10882
    %v10884 = vlaneseq
    %v10885 = vshrl.u32 %v10884, 7
    %v10886 = vsub.s32 %v10883, %v10885
    %v10887 = vrot.slane %v10158, %v10886
    %v10889 = vunpack.c.l.s4 1983009808
    %v10890 = vunpack.c.0.s8 %v10889
    %v10891 = vlaneseq
    %v10892 = vshrl.u32 %v10891, 7
    %v10893 = vsub.s32 %v10890, %v10892
    %v10894 = vrot.slane %v10880, %v10893
    %v10895 = vcombine.high %v10887, %v10887
    %v10896 = vcombine.high %v10894, %v10894
    %v10897 = vcombine.high %v10159, %v10159
    %v10899 = vunpack.c.l.s4 1983009808
    %v10900 = vunpack.c.0.s8 %v10899
    %v10901 = vlaneseq
    %v10902 = vshrl.u32 %v10901, 7
    %v10903 = vsub.s32 %v10900, %v10902
    %v10904 = vrot.slane %v10159, %v10903
    %v10906 = vunpack.c.l.s4 1983009808
    %v10907 = vunpack.c.0.s8 %v10906
    %v10908 = vlaneseq
    %v10909 = vshrl.u32 %v10908, 7
    %v10910 = vsub.s32 %v10907, %v10909
    %v10911 = vrot.slane %v10897, %v10910
    %v10912 = vcombine.high %v10904, %v10904
    %v10913 = vcombine.high %v10911, %v10911
    %v10914 = vcombine.high %v10160, %v10160
    %v10916 = vunpack.c.l.s4 1983009808
    %v10917 = vunpack.c.0.s8 %v10916
    %v10918 = vlaneseq
    %v10919 = vshrl.u32 %v10918, 7
    %v10920 = vsub.s32 %v10917, %v10919
    %v10921 = vrot.slane %v10160, %v10920
    %v10923 = vunpack.c.l.s4 1983009808
    %v10924 = vunpack.c.0.s8 %v10923
    %v10925 = vlaneseq
    %v10926 = vshrl.u32 %v10925, 7
    %v10927 = vsub.s32 %v10924, %v10926
    %v10928 = vrot.slane %v10914, %v10927
    %v10929 = vcombine.high %v10921, %v10921
    %v10930 = vcombine.high %v10928, %v10928
    %v10931 = vcombine.high %v10161, %v10161
    %v10933 = vunpack.c.l.s4 1983009808
    %v10934 = vunpack.c.0.s8 %v10933
    %v10935 = vlaneseq
    %v10936 = vshrl.u32 %v10935, 7
    %v10937 = vsub.s32 %v10934, %v10936
    %v10938 = vrot.slane %v10161, %v10937
    %v10940 = vunpack.c.l.s4 1983009808
    %v10941 = vunpack.c.0.s8 %v10940
    %v10942 = vlaneseq
    %v10943 = vshrl.u32 %v10942, 7
    %v10944 = vsub.s32 %v10941, %v10943
    %v10945 = vrot.slane %v10931, %v10944
    %v10946 = vcombine.high %v10938, %v10938
    %v10947 = vcombine.high %v10945, %v10945
    %v10948 = vcombine.high %v10162, %v10162
    %v10950 = vunpack.c.l.s4 1983009808
    %v10951 = vunpack.c.0.s8 %v10950
    %v10952 = vlaneseq
    %v10953 = vshrl.u32 %v10952, 7
    %v10954 = vsub.s32 %v10951, %v10953
    %v10955 = vrot.slane %v10162, %v10954
    %v10957 = vunpack.c.l.s4 1983009808
    %v10958 = vunpack.c.0.s8 %v10957
    %v10959 = vlaneseq
    %v10960 = vshrl.u32 %v10959, 7
    %v10961 = vsub.s32 %v10958, %v10960
    %v10962 = vrot.slane %v10948, %v10961
    %v10963 = vcombine.high %v10955, %v10955
    %v10964 = vcombine.high %v10962, %v10962
    %v10965 = vcombine.high %v10163, %v10163
    %v10967 = vunpack.c.l.s4 1983009808
    %v10968 = vunpack.c.0.s8 %v10967
    %v10969 = vlaneseq
    %v10970 = vshrl.u32 %v10969, 7
    %v10971 = vsub.s32 %v10968, %v10970
    %v10972 = vrot.slane %v10163, %v10971
    %v10974 = vunpack.c.l.s4 1983009808
    %v10975 = vunpack.c.0.s8 %v10974
    %v10976 = vlaneseq
    %v10977 = vshrl.u32 %v10976, 7
    %v10978 = vsub.s32 %v10975, %v10977
    %v10979 = vrot.slane %v10965, %v10978
    %v10980 = vcombine.high %v10972, %v10972
    %v10981 = vcombine.high %v10979, %v10979
    %v10982 = vcombine.high %v10164, %v10164
    %v10984 = vunpack.c.l.s4 1983009808
    %v10985 = vunpack.c.0.s8 %v10984
    %v10986 = vlaneseq
    %v10987 = vshrl.u32 %v10986, 7
    %v10988 = vsub.s32 %v10985, %v10987
    %v10989 = vrot.slane %v10164, %v10988
    %v10991 = vunpack.c.l.s4 1983009808
    %v10992 = vunpack.c.0.s8 %v10991
    %v10993 = vlaneseq
    %v10994 = vshrl.u32 %v10993, 7
    %v10995 = vsub.s32 %v10992, %v10994
    %v10996 = vrot.slane %v10982, %v10995
    %v10997 = vcombine.high %v10989, %v10989
    %v10998 = vcombine.high %v10996, %v10996
    %v10999 = vcombine.high %v10165, %v10165
    %v11001 = vunpack.c.l.s4 1983009808
    %v11002 = vunpack.c.0.s8 %v11001
    %v11003 = vlaneseq
    %v11004 = vshrl.u32 %v11003, 7
    %v11005 = vsub.s32 %v11002, %v11004
    %v11006 = vrot.slane %v10165, %v11005
    %v11008 = vunpack.c.l.s4 1983009808
    %v11009 = vunpack.c.0.s8 %v11008
    %v11010 = vlaneseq
    %v11011 = vshrl.u32 %v11010, 7
    %v11012 = vsub.s32 %v11009, %v11011
    %v11013 = vrot.slane %v10999, %v11012
    %v11014 = vcombine.high %v11006, %v11006
    %v11015 = vcombine.high %v11013, %v11013
    %v11016 = vcombine.high %v10166, %v10166
    %v11018 = vunpack.c.l.s4 1983009808
    %v11019 = vunpack.c.0.s8 %v11018
    %v11020 = vlaneseq
    %v11021 = vshrl.u32 %v11020, 7
    %v11022 = vsub.s32 %v11019, %v11021
    %v11023 = vrot.slane %v10166, %v11022
    %v11025 = vunpack.c.l.s4 1983009808
    %v11026 = vunpack.c.0.s8 %v11025
    %v11027 = vlaneseq
    %v11028 = vshrl.u32 %v11027, 7
    %v11029 = vsub.s32 %v11026, %v11028
    %v11030 = vrot.slane %v11016, %v11029
    %v11031 = vcombine.high %v11023, %v11023
    %v11032 = vcombine.high %v11030, %v11030
    %v11033 = vcombine.high %v10167, %v10167
    %v11035 = vunpack.c.l.s4 1983009808
    %v11036 = vunpack.c.0.s8 %v11035
    %v11037 = vlaneseq
    %v11038 = vshrl.u32 %v11037, 7
    %v11039 = vsub.s32 %v11036, %v11038
    %v11040 = vrot.slane %v10167, %v11039
    %v11042 = vunpack.c.l.s4 1983009808
    %v11043 = vunpack.c.0.s8 %v11042
    %v11044 = vlaneseq
    %v11045 = vshrl.u32 %v11044, 7
    %v11046 = vsub.s32 %v11043, %v11045
    %v11047 = vrot.slane %v11033, %v11046
    %v11048 = vcombine.high %v11040, %v11040
    %v11049 = vcombine.high %v11047, %v11047
    %v11246 = vmax.f32 %v10224, %v10250
    %v11247 = vmax.f32 %v10232, %v10258
    %v11248 = vmax.f32 %v10231, %v10266
    %v11249 = vmax.f32 %v10233, %v10265
    %v11250 = vmax.f32 %v10241, %v10267
    %v11251 = vmax.f32 %v10249, %v10275
    %v11252 = vmax.f32 %v10248, %v10283
    %v11253 = vmax.f32 %v10282, %v10317
    %v11254 = vmax.f32 %v10284, %v10316
    %v11255 = vmax.f32 %v10292, %v10318
    %v11256 = vmax.f32 %v10300, %v10326
    %v11257 = vmax.f32 %v10299, %v10334
    %v11258 = vmax.f32 %v10301, %v10333
    %v11259 = vmax.f32 %v10309, %v10335
    %v11260 = vmax.f32 %v10343, %v10369
    %v11261 = vmax.f32 %v10351, %v10377
    %v11262 = vmax.f32 %v10350, %v10385
    %v11263 = vmax.f32 %v10352, %v10384
    %v11264 = vmax.f32 %v10360, %v10386
    %v11265 = vmax.f32 %v10368, %v10394
    %v11266 = vmax.f32 %v10367, %v10402
    %v11267 = vmax.f32 %v10401, %v10436
    %v11268 = vmax.f32 %v10403, %v10435
    %v11269 = vmax.f32 %v10411, %v10437
    %v11270 = vmax.f32 %v10419, %v10445
    %v11271 = vmax.f32 %v10418, %v10453
    %v11272 = vmax.f32 %v10420, %v10452
    %v11273 = vmax.f32 %v10428, %v10454
    %v11274 = vmax.f32 %v10462, %v10488
    %v11275 = vmax.f32 %v10470, %v10496
    %v11276 = vmax.f32 %v10469, %v10504
    %v11277 = vmax.f32 %v10471, %v10503
    %v11278 = vmax.f32 %v10479, %v10505
    %v11279 = vmax.f32 %v10487, %v10513
    %v11280 = vmax.f32 %v10486, %v10521
    %v11281 = vmax.f32 %v10520, %v10555
    %v11282 = vmax.f32 %v10522, %v10554
    %v11283 = vmax.f32 %v10530, %v10556
    %v11284 = vmax.f32 %v10538, %v10564
    %v11285 = vmax.f32 %v10537, %v10572
    %v11286 = vmax.f32 %v10539, %v10571
    %v11287 = vmax.f32 %v10547, %v10573
    %v11288 = vmax.f32 %v10581, %v10607
    %v11289 = vmax.f32 %v10589, %v10615
    %v11290 = vmax.f32 %v10588, %v10623
    %v11291 = vmax.f32 %v10590, %v10622
    %v11292 = vmax.f32 %v10598, %v10624
    %v11293 = vmax.f32 %v10606, %v10632
    %v11294 = vmax.f32 %v10605, %v10640
    %v11295 = vmax.f32 %v10639, %v10674
    %v11296 = vmax.f32 %v10641, %v10673
    %v11297 = vmax.f32 %v10649, %v10675
    %v11298 = vmax.f32 %v10657, %v10683
    %v11299 = vmax.f32 %v10656, %v10691
    %v11300 = vmax.f32 %v10658, %v10690
    %v11301 = vmax.f32 %v10666, %v10692
    %v11302 = vmax.f32 %v10700, %v10726
    %v11303 = vmax.f32 %v10708, %v10734
    %v11304 = vmax.f32 %v10707, %v10742
    %v11305 = vmax.f32 %v10709, %v10741
    %v11306 = vmax.f32 %v10717, %v10743
    %v11307 = vmax.f32 %v10725, %v10751
    %v11308 = vmax.f32 %v10724, %v10759
    %v11309 = vmax.f32 %v10758, %v10793
    %v11310 = vmax.f32 %v10760, %v10792
    %v11311 = vmax.f32 %v10768, %v10794
    %v11312 = vmax.f32 %v10776, %v10802
    %v11313 = vmax.f32 %v10775, %v10810
    %v11314 = vmax.f32 %v10777, %v10809
    %v11315 = vmax.f32 %v10785, %v10811
    %v11316 = vmax.f32 %v10819, %v10845
    %v11317 = vmax.f32 %v10827, %v10853
    %v11318 = vmax.f32 %v10826, %v10861
    %v11319 = vmax.f32 %v10828, %v10860
    %v11320 = vmax.f32 %v10836, %v10862
    %v11321 = vmax.f32 %v10844, %v10870
    %v11322 = vmax.f32 %v10843, %v10878
    %v11323 = vmax.f32 %v10877, %v10912
    %v11324 = vmax.f32 %v10879, %v10911
    %v11325 = vmax.f32 %v10887, %v10913
    %v11326 = vmax.f32 %v10895, %v10921
    %v11327 = vmax.f32 %v10894, %v10929
    %v11328 = vmax.f32 %v10896, %v10928
    %v11329 = vmax.f32 %v10904, %v10930
    %v11330 = vmax.f32 %v10938, %v10964
    %v11331 = vmax.f32 %v10946, %v10972
    %v11332 = vmax.f32 %v10945, %v10980
    %v11333 = vmax.f32 %v10947, %v10979
    %v11334 = vmax.f32 %v10955, %v10981
    %v11335 = vmax.f32 %v10963, %v10989
    %v11336 = vmax.f32 %v10962, %v10997
    %v11337 = vmax.f32 %v10996, %v11031
    %v11338 = vmax.f32 %v10998, %v11030
    %v11339 = vmax.f32 %v11006, %v11032
    %v11340 = vmax.f32 %v11014, %v11040
    %v11341 = vmax.f32 %v11013, %v11048
    %v11342 = vmax.f32 %v11015, %v11047
    %v11343 = vmax.f32 %v11023, %v11049
    %v11442 = vrot.slane %v11246, 7
    %v11443 = vrot.slane %v11442, 2
    %v11444 = vrot.slane %v11247, 7
    %v11445 = vrot.slane %v11444, 2
    %v11446 = vrot.slane %v11248, 7
    %v11447 = vrot.slane %v11446, 2
    %v11448 = vrot.slane %v11249, 7
    %v11449 = vrot.slane %v11448, 2
    %v11450 = vrot.slane %v11250, 7
    %v11451 = vrot.slane %v11450, 2
    %v11452 = vrot.slane %v11251, 7
    %v11453 = vrot.slane %v11452, 2
    %v11454 = vrot.slane %v11252, 7
    %v11455 = vrot.slane %v11454, 2
    %v11456 = vrot.slane %v11253, 7
    %v11457 = vrot.slane %v11456, 2
    %v11458 = vrot.slane %v11254, 7
    %v11459 = vrot.slane %v11458, 2
    %v11460 = vrot.slane %v11255, 7
    %v11461 = vrot.slane %v11460, 2
    %v11462 = vrot.slane %v11256, 7
    %v11463 = vrot.slane %v11462, 2
    %v11464 = vrot.slane %v11257, 7
    %v11465 = vrot.slane %v11464, 2
    %v11466 = vrot.slane %v11258, 7
    %v11467 = vrot.slane %v11466, 2
    %v11468 = vrot.slane %v11259, 7
    %v11469 = vrot.slane %v11468, 2
    %v11470 = vrot.slane %v11260, 7
    %v11471 = vrot.slane %v11470, 2
    %v11472 = vrot.slane %v11261, 7
    %v11473 = vrot.slane %v11472, 2
    %v11474 = vrot.slane %v11262, 7
    %v11475 = vrot.slane %v11474, 2
    %v11476 = vrot.slane %v11263, 7
    %v11477 = vrot.slane %v11476, 2
    %v11478 = vrot.slane %v11264, 7
    %v11479 = vrot.slane %v11478, 2
    %v11480 = vrot.slane %v11265, 7
    %v11481 = vrot.slane %v11480, 2
    %v11482 = vrot.slane %v11266, 7
    %v11483 = vrot.slane %v11482, 2
    %v11484 = vrot.slane %v11267, 7
    %v11485 = vrot.slane %v11484, 2
    %v11486 = vrot.slane %v11268, 7
    %v11487 = vrot.slane %v11486, 2
    %v11488 = vrot.slane %v11269, 7
    %v11489 = vrot.slane %v11488, 2
    %v11490 = vrot.slane %v11270, 7
    %v11491 = vrot.slane %v11490, 2
    %v11492 = vrot.slane %v11271, 7
    %v11493 = vrot.slane %v11492, 2
    %v11494 = vrot.slane %v11272, 7
    %v11495 = vrot.slane %v11494, 2
    %v11496 = vrot.slane %v11273, 7
    %v11497 = vrot.slane %v11496, 2
    %v11498 = vrot.slane %v11274, 7
    %v11499 = vrot.slane %v11498, 2
    %v11500 = vrot.slane %v11275, 7
    %v11501 = vrot.slane %v11500, 2
    %v11502 = vrot.slane %v11276, 7
    %v11503 = vrot.slane %v11502, 2
    %v11504 = vrot.slane %v11277, 7
    %v11505 = vrot.slane %v11504, 2
    %v11506 = vrot.slane %v11278, 7
    %v11507 = vrot.slane %v11506, 2
    %v11508 = vrot.slane %v11279, 7
    %v11509 = vrot.slane %v11508, 2
    %v11510 = vrot.slane %v11280, 7
    %v11511 = vrot.slane %v11510, 2
    %v11512 = vrot.slane %v11281, 7
    %v11513 = vrot.slane %v11512, 2
    %v11514 = vrot.slane %v11282, 7
    %v11515 = vrot.slane %v11514, 2
    %v11516 = vrot.slane %v11283, 7
    %v11517 = vrot.slane %v11516, 2
    %v11518 = vrot.slane %v11284, 7
    %v11519 = vrot.slane %v11518, 2
    %v11520 = vrot.slane %v11285, 7
    %v11521 = vrot.slane %v11520, 2
    %v11522 = vrot.slane %v11286, 7
    %v11523 = vrot.slane %v11522, 2
    %v11524 = vrot.slane %v11287, 7
    %v11525 = vrot.slane %v11524, 2
    %v11526 = vrot.slane %v11288, 7
    %v11527 = vrot.slane %v11526, 2
    %v11528 = vrot.slane %v11289, 7
    %v11529 = vrot.slane %v11528, 2
    %v11530 = vrot.slane %v11290, 7
    %v11531 = vrot.slane %v11530, 2
    %v11532 = vrot.slane %v11291, 7
    %v11533 = vrot.slane %v11532, 2
    %v11534 = vrot.slane %v11292, 7
    %v11535 = vrot.slane %v11534, 2
    %v11536 = vrot.slane %v11293, 7
    %v11537 = vrot.slane %v11536, 2
    %v11538 = vrot.slane %v11294, 7
    %v11539 = vrot.slane %v11538, 2
    %v11540 = vrot.slane %v11295, 7
    %v11541 = vrot.slane %v11540, 2
    %v11542 = vrot.slane %v11296, 7
    %v11543 = vrot.slane %v11542, 2
    %v11544 = vrot.slane %v11297, 7
    %v11545 = vrot.slane %v11544, 2
    %v11546 = vrot.slane %v11298, 7
    %v11547 = vrot.slane %v11546, 2
    %v11548 = vrot.slane %v11299, 7
    %v11549 = vrot.slane %v11548, 2
    %v11550 = vrot.slane %v11300, 7
    %v11551 = vrot.slane %v11550, 2
    %v11552 = vrot.slane %v11301, 7
    %v11553 = vrot.slane %v11552, 2
    %v11554 = vrot.slane %v11302, 7
    %v11555 = vrot.slane %v11554, 2
    %v11556 = vrot.slane %v11303, 7
    %v11557 = vrot.slane %v11556, 2
    %v11558 = vrot.slane %v11304, 7
    %v11559 = vrot.slane %v11558, 2
    %v11560 = vrot.slane %v11305, 7
    %v11561 = vrot.slane %v11560, 2
    %v11562 = vrot.slane %v11306, 7
    %v11563 = vrot.slane %v11562, 2
    %v11564 = vrot.slane %v11307, 7
    %v11565 = vrot.slane %v11564, 2
    %v11566 = vrot.slane %v11308, 7
    %v11567 = vrot.slane %v11566, 2
    %v11568 = vrot.slane %v11309, 7
    %v11569 = vrot.slane %v11568, 2
    %v11570 = vrot.slane %v11310, 7
    %v11571 = vrot.slane %v11570, 2
    %v11572 = vrot.slane %v11311, 7
    %v11573 = vrot.slane %v11572, 2
    %v11574 = vrot.slane %v11312, 7
    %v11575 = vrot.slane %v11574, 2
    %v11576 = vrot.slane %v11313, 7
    %v11577 = vrot.slane %v11576, 2
    %v11578 = vrot.slane %v11314, 7
    %v11579 = vrot.slane %v11578, 2
    %v11580 = vrot.slane %v11315, 7
    %v11581 = vrot.slane %v11580, 2
    %v11582 = vrot.slane %v11316, 7
    %v11583 = vrot.slane %v11582, 2
    %v11584 = vrot.slane %v11317, 7
    %v11585 = vrot.slane %v11584, 2
    %v11586 = vrot.slane %v11318, 7
    %v11587 = vrot.slane %v11586, 2
    %v11588 = vrot.slane %v11319, 7
    %v11589 = vrot.slane %v11588, 2
    %v11590 = vrot.slane %v11320, 7
    %v11591 = vrot.slane %v11590, 2
    %v11592 = vrot.slane %v11321, 7
    %v11593 = vrot.slane %v11592, 2
    %v11594 = vrot.slane %v11322, 7
    %v11595 = vrot.slane %v11594, 2
    %v11596 = vrot.slane %v11323, 7
    %v11597 = vrot.slane %v11596, 2
    %v11598 = vrot.slane %v11324, 7
    %v11599 = vrot.slane %v11598, 2
    %v11600 = vrot.slane %v11325, 7
    %v11601 = vrot.slane %v11600, 2
    %v11602 = vrot.slane %v11326, 7
    %v11603 = vrot.slane %v11602, 2
    %v11604 = vrot.slane %v11327, 7
    %v11605 = vrot.slane %v11604, 2
    %v11606 = vrot.slane %v11328, 7
    %v11607 = vrot.slane %v11606, 2
    %v11608 = vrot.slane %v11329, 7
    %v11609 = vrot.slane %v11608, 2
    %v11610 = vrot.slane %v11330, 7
    %v11611 = vrot.slane %v11610, 2
    %v11612 = vrot.slane %v11331, 7
    %v11613 = vrot.slane %v11612, 2
    %v11614 = vrot.slane %v11332, 7
    %v11615 = vrot.slane %v11614, 2
    %v11616 = vrot.slane %v11333, 7
    %v11617 = vrot.slane %v11616, 2
    %v11618 = vrot.slane %v11334, 7
    %v11619 = vrot.slane %v11618, 2
    %v11620 = vrot.slane %v11335, 7
    %v11621 = vrot.slane %v11620, 2
    %v11622 = vrot.slane %v11336, 7
    %v11623 = vrot.slane %v11622, 2
    %v11624 = vrot.slane %v11337, 7
    %v11625 = vrot.slane %v11624, 2
    %v11626 = vrot.slane %v11338, 7
    %v11627 = vrot.slane %v11626, 2
    %v11628 = vrot.slane %v11339, 7
    %v11629 = vrot.slane %v11628, 2
    %v11630 = vrot.slane %v11340, 7
    %v11631 = vrot.slane %v11630, 2
    %v11632 = vrot.slane %v11341, 7
    %v11633 = vrot.slane %v11632, 2
    %v11634 = vrot.slane %v11342, 7
    %v11635 = vrot.slane %v11634, 2
    %v11636 = vrot.slane %v11343, 7
    %v11637 = vrot.slane %v11636, 2
    %v11736 = vmax.f32 %v11246, %v11443
    %v11737 = vmax.f32 %v11247, %v11445
    %v11738 = vmax.f32 %v11248, %v11447
    %v11739 = vmax.f32 %v11249, %v11449
    %v11740 = vmax.f32 %v11250, %v11451
    %v11741 = vmax.f32 %v11251, %v11453
    %v11742 = vmax.f32 %v11252, %v11455
    %v11743 = vmax.f32 %v11253, %v11457
    %v11744 = vmax.f32 %v11254, %v11459
    %v11745 = vmax.f32 %v11255, %v11461
    %v11746 = vmax.f32 %v11256, %v11463
    %v11747 = vmax.f32 %v11257, %v11465
    %v11748 = vmax.f32 %v11258, %v11467
    %v11749 = vmax.f32 %v11259, %v11469
    %v11750 = vmax.f32 %v11260, %v11471
    %v11751 = vmax.f32 %v11261, %v11473
    %v11752 = vmax.f32 %v11262, %v11475
    %v11753 = vmax.f32 %v11263, %v11477
    %v11754 = vmax.f32 %v11264, %v11479
    %v11755 = vmax.f32 %v11265, %v11481
    %v11756 = vmax.f32 %v11266, %v11483
    %v11757 = vmax.f32 %v11267, %v11485
    %v11758 = vmax.f32 %v11268, %v11487
    %v11759 = vmax.f32 %v11269, %v11489
    %v11760 = vmax.f32 %v11270, %v11491
    %v11761 = vmax.f32 %v11271, %v11493
    %v11762 = vmax.f32 %v11272, %v11495
    %v11763 = vmax.f32 %v11273, %v11497
    %v11764 = vmax.f32 %v11274, %v11499
    %v11765 = vmax.f32 %v11275, %v11501
    %v11766 = vmax.f32 %v11276, %v11503
    %v11767 = vmax.f32 %v11277, %v11505
    %v11768 = vmax.f32 %v11278, %v11507
    %v11769 = vmax.f32 %v11279, %v11509
    %v11770 = vmax.f32 %v11280, %v11511
    %v11771 = vmax.f32 %v11281, %v11513
    %v11772 = vmax.f32 %v11282, %v11515
    %v11773 = vmax.f32 %v11283, %v11517
    %v11774 = vmax.f32 %v11284, %v11519
    %v11775 = vmax.f32 %v11285, %v11521
    %v11776 = vmax.f32 %v11286, %v11523
    %v11777 = vmax.f32 %v11287, %v11525
    %v11778 = vmax.f32 %v11288, %v11527
    %v11779 = vmax.f32 %v11289, %v11529
    %v11780 = vmax.f32 %v11290, %v11531
    %v11781 = vmax.f32 %v11291, %v11533
    %v11782 = vmax.f32 %v11292, %v11535
    %v11783 = vmax.f32 %v11293, %v11537
    %v11784 = vmax.f32 %v11294, %v11539
    %v11785 = vmax.f32 %v11295, %v11541
    %v11786 = vmax.f32 %v11296, %v11543
    %v11787 = vmax.f32 %v11297, %v11545
    %v11788 = vmax.f32 %v11298, %v11547
    %v11789 = vmax.f32 %v11299, %v11549
    %v11790 = vmax.f32 %v11300, %v11551
    %v11791 = vmax.f32 %v11301, %v11553
    %v11792 = vmax.f32 %v11302, %v11555
    %v11793 = vmax.f32 %v11303, %v11557
    %v11794 = vmax.f32 %v11304, %v11559
    %v11795 = vmax.f32 %v11305, %v11561
    %v11796 = vmax.f32 %v11306, %v11563
    %v11797 = vmax.f32 %v11307, %v11565
    %v11798 = vmax.f32 %v11308, %v11567
    %v11799 = vmax.f32 %v11309, %v11569
    %v11800 = vmax.f32 %v11310, %v11571
    %v11801 = vmax.f32 %v11311, %v11573
    %v11802 = vmax.f32 %v11312, %v11575
    %v11803 = vmax.f32 %v11313, %v11577
    %v11804 = vmax.f32 %v11314, %v11579
    %v11805 = vmax.f32 %v11315, %v11581
    %v11806 = vmax.f32 %v11316, %v11583
    %v11807 = vmax.f32 %v11317, %v11585
    %v11808 = vmax.f32 %v11318, %v11587
    %v11809 = vmax.f32 %v11319, %v11589
    %v11810 = vmax.f32 %v11320, %v11591
    %v11811 = vmax.f32 %v11321, %v11593
    %v11812 = vmax.f32 %v11322, %v11595
    %v11813 = vmax.f32 %v11323, %v11597
    %v11814 = vmax.f32 %v11324, %v11599
    %v11815 = vmax.f32 %v11325, %v11601
    %v11816 = vmax.f32 %v11326, %v11603
    %v11817 = vmax.f32 %v11327, %v11605
    %v11818 = vmax.f32 %v11328, %v11607
    %v11819 = vmax.f32 %v11329, %v11609
    %v11820 = vmax.f32 %v11330, %v11611
    %v11821 = vmax.f32 %v11331, %v11613
    %v11822 = vmax.f32 %v11332, %v11615
    %v11823 = vmax.f32 %v11333, %v11617
    %v11824 = vmax.f32 %v11334, %v11619
    %v11825 = vmax.f32 %v11335, %v11621
    %v11826 = vmax.f32 %v11336, %v11623
    %v11827 = vmax.f32 %v11337, %v11625
    %v11828 = vmax.f32 %v11338, %v11627
    %v11829 = vmax.f32 %v11339, %v11629
    %v11830 = vmax.f32 %v11340, %v11631
    %v11831 = vmax.f32 %v11341, %v11633
    %v11832 = vmax.f32 %v11342, %v11635
    %v11833 = vmax.f32 %v11343, %v11637
    %v11834 = vld [vmem:[%s3] sm:$0xff]
    %v11835 = vld [vmem:[%s3 + $0x8] sm:$0xff]
    %v11836 = vld [vmem:[%s3 + $0x10] sm:$0xff]
    %v11837 = vld [vmem:[%s3 + $0x18] sm:$0xff]
    %v11838 = vld [vmem:[%s3 + $0x20] sm:$0xff]
    %v11839 = vld [vmem:[%s3 + $0x28] sm:$0xff]
    %v11840 = vld [vmem:[%s3 + $0x30] sm:$0xff]
    %v11841 = vld [vmem:[%s3 + $0x38] sm:$0xff]
    %v11842 = vld [vmem:[%s3 + $0x40] sm:$0xff]
    %v11843 = vld [vmem:[%s3 + $0x48] sm:$0xff]
    %v11844 = vld [vmem:[%s3 + $0x50] sm:$0xff]
    %v11845 = vld [vmem:[%s3 + $0x58] sm:$0xff]
    %v11846 = vld [vmem:[%s3 + $0x60] sm:$0xff]
    %v11847 = vld [vmem:[%s3 + $0x68] sm:$0xff]
    %v11848 = vld [vmem:[%s3 + $0x70] sm:$0xff]
    %v11849 = vld [vmem:[%s3 + $0x78] sm:$0xff]
    %v11850 = vld [vmem:[%s3 + $0x80] sm:$0xff]
    %v11851 = vld [vmem:[%s3 + $0x88] sm:$0xff]
    %v11852 = vld [vmem:[%s3 + $0x90] sm:$0xff]
    %v11853 = vld [vmem:[%s3 + $0x98] sm:$0xff]
    %v11854 = vld [vmem:[%s3 + $0xa0] sm:$0xff]
    %v11855 = vld [vmem:[%s3 + $0xa8] sm:$0xff]
    %v11856 = vld [vmem:[%s3 + $0xb0] sm:$0xff]
    %v11857 = vld [vmem:[%s3 + $0xb8] sm:$0xff]
    %v11858 = vld [vmem:[%s3 + $0xc0] sm:$0xff]
    %v11859 = vld [vmem:[%s3 + $0xc8] sm:$0xff]
    %v11860 = vld [vmem:[%s3 + $0xd0] sm:$0xff]
    %v11861 = vld [vmem:[%s3 + $0xd8] sm:$0xff]
    %v11862 = vld [vmem:[%s3 + $0xe0] sm:$0xff]
    %v11863 = vld [vmem:[%s3 + $0xe8] sm:$0xff]
    %v11864 = vld [vmem:[%s3 + $0xf0] sm:$0xff]
    %v11865 = vld [vmem:[%s3 + $0xf8] sm:$0xff]
    %v11866 = vld [vmem:[%s3 + $0x100] sm:$0xff]
    %v11867 = vld [vmem:[%s3 + $0x108] sm:$0xff]
    %v11868 = vld [vmem:[%s3 + $0x110] sm:$0xff]
    %v11869 = vld [vmem:[%s3 + $0x118] sm:$0xff]
    %v11870 = vpack.c.bf16 %v11835, %v11834
    %v11871 = vpack.c.bf16 %v11837, %v11836
    %v11872 = vpack.c.bf16 %v11839, %v11838
    %v11873 = vpack.c.bf16 %v11841, %v11840
    %v11874 = vpack.c.bf16 %v11843, %v11842
    %v11875 = vpack.c.bf16 %v11845, %v11844
    %v11876 = vpack.c.bf16 %v11847, %v11846
    %v11877 = vpack.c.bf16 %v11849, %v11848
    %v11878 = vpack.c.bf16 %v11851, %v11850
    %v11879 = vpack.c.bf16 %v11853, %v11852
    %v11880 = vpack.c.bf16 %v11855, %v11854
    %v11881 = vpack.c.bf16 %v11857, %v11856
    %v11882 = vpack.c.bf16 %v11859, %v11858
    %v11883 = vpack.c.bf16 %v11861, %v11860
    %v11884 = vpack.c.bf16 %v11863, %v11862
    %v11885 = vpack.c.bf16 %v11865, %v11864
    %v11886 = vpack.c.bf16 %v11867, %v11866
    %v11887 = vpack.c.bf16 %v11869, %v11868
    %v11888 = vpack.c.bf16 %v11736, %v11736
    %v11889 = vpack.c.bf16 %v11737, %v11737
    %v11890 = vpack.c.bf16 %v11738, %v11738
    %v11891 = vpack.c.bf16 %v11739, %v11739
    %v11892 = vpack.c.bf16 %v11740, %v11740
    %v11893 = vpack.c.bf16 %v11743, %v11743
    %v11894 = vpack.c.bf16 %v11744, %v11744
    %v11895 = vpack.c.bf16 %v11745, %v11745
    %v11896 = vpack.c.bf16 %v11746, %v11746
    %v11897 = vpack.c.bf16 %v11747, %v11747
    %v11898 = vpack.c.bf16 %v11750, %v11750
    %v11899 = vpack.c.bf16 %v11751, %v11751
    %v11900 = vpack.c.bf16 %v11752, %v11752
    %v11901 = vpack.c.bf16 %v11753, %v11753
    %v11902 = vpack.c.bf16 %v11754, %v11754
    %v11903 = vpack.c.bf16 %v11757, %v11757
    %v11904 = vpack.c.bf16 %v11758, %v11758
    %v11905 = vpack.c.bf16 %v11759, %v11759
    %v11906 = vpack.c.bf16 %v11760, %v11760
    %v11907 = vpack.c.bf16 %v11761, %v11761
    %v11908 = vpack.c.bf16 %v11764, %v11764
    %v11909 = vpack.c.bf16 %v11765, %v11765
    %v11910 = vpack.c.bf16 %v11766, %v11766
    %v11911 = vpack.c.bf16 %v11767, %v11767
    %v11912 = vpack.c.bf16 %v11768, %v11768
    %v11913 = vpack.c.bf16 %v11785, %v11785
    %v11914 = vpack.c.bf16 %v11786, %v11786
    %v11915 = vpack.c.bf16 %v11787, %v11787
    %v11916 = vpack.c.bf16 %v11788, %v11788
    %v11917 = vpack.c.bf16 %v11789, %v11789
    %v11918 = vpack.c.bf16 %v11792, %v11792
    %v11919 = vpack.c.bf16 %v11793, %v11793
    %v11920 = vpack.c.bf16 %v11794, %v11794
    %v11921 = vpack.c.bf16 %v11795, %v11795
    %v11922 = vpack.c.bf16 %v11796, %v11796
    %v11923 = vpack.c.bf16 %v11799, %v11799
    %v11924 = vpack.c.bf16 %v11800, %v11800
    %v11925 = vpack.c.bf16 %v11801, %v11801
    %v11926 = vpack.c.bf16 %v11802, %v11802
    %v11927 = vpack.c.bf16 %v11803, %v11803
    %v11928 = vpack.c.bf16 %v11806, %v11806
    %v11929 = vpack.c.bf16 %v11807, %v11807
    %v11930 = vpack.c.bf16 %v11808, %v11808
    %v11931 = vpack.c.bf16 %v11809, %v11809
    %v11932 = vpack.c.bf16 %v11810, %v11810
    %v11933 = vpack.c.bf16 %v11813, %v11813
    %v11934 = vpack.c.bf16 %v11814, %v11814
    %v11935 = vpack.c.bf16 %v11815, %v11815
    %v11936 = vpack.c.bf16 %v11816, %v11816
    %v11937 = vpack.c.bf16 %v11817, %v11817
    %v11938 = vpack.c.bf16 %v11741, %v11741
    %v11939 = vpack.c.bf16 %v11748, %v11748
    %v11940 = vpack.c.bf16 %v11755, %v11755
    %v11941 = vpack.c.bf16 %v11762, %v11762
    %v11942 = vpack.c.bf16 %v11769, %v11769
    %v11943 = vpack.c.bf16 %v11790, %v11790
    %v11944 = vpack.c.bf16 %v11797, %v11797
    %v11945 = vpack.c.bf16 %v11804, %v11804
    %v11946 = vpack.c.bf16 %v11811, %v11811
    %v11947 = vpack.c.bf16 %v11818, %v11818
    %v11998 = vunpack.c.l.b16 %v11889
    %v11999 = vunpack.c.l.b16 %v11890
    %v12000 = vunpack.c.l.b16 %v11891
    %v12001 = vunpack.c.l.b16 %v11892
    %v12002 = vunpack.c.l.b16 %v11938
    %v12003 = vunpack.c.l.b16 %v11894
    %v12004 = vunpack.c.l.b16 %v11895
    %v12005 = vunpack.c.l.b16 %v11896
    %v12006 = vunpack.c.l.b16 %v11897
    %v12007 = vunpack.c.l.b16 %v11939
    %v12008 = vunpack.c.l.b16 %v11899
    %v12009 = vunpack.c.l.b16 %v11900
    %v12010 = vunpack.c.l.b16 %v11901
    %v12011 = vunpack.c.l.b16 %v11902
    %v12012 = vunpack.c.l.b16 %v11940
    %v12013 = vunpack.c.l.b16 %v11904
    %v12014 = vunpack.c.l.b16 %v11905
    %v12015 = vunpack.c.l.b16 %v11906
    %v12016 = vunpack.c.l.b16 %v11907
    %v12017 = vunpack.c.l.b16 %v11941
    %v12018 = vunpack.c.l.b16 %v11909
    %v12019 = vunpack.c.l.b16 %v11910
    %v12020 = vunpack.c.l.b16 %v11911
    %v12021 = vunpack.c.l.b16 %v11912
    %v12022 = vunpack.c.l.b16 %v11942
    %v12023 = vunpack.c.l.b16 %v11914
    %v12024 = vunpack.c.l.b16 %v11915
    %v12025 = vunpack.c.l.b16 %v11916
    %v12026 = vunpack.c.l.b16 %v11917
    %v12027 = vunpack.c.l.b16 %v11943
    %v12028 = vunpack.c.l.b16 %v11919
    %v12029 = vunpack.c.l.b16 %v11920
    %v12030 = vunpack.c.l.b16 %v11921
    %v12031 = vunpack.c.l.b16 %v11922
    %v12032 = vunpack.c.l.b16 %v11944
    %v12033 = vunpack.c.l.b16 %v11924
    %v12034 = vunpack.c.l.b16 %v11925
    %v12035 = vunpack.c.l.b16 %v11926
    %v12036 = vunpack.c.l.b16 %v11927
    %v12037 = vunpack.c.l.b16 %v11945
    %v12038 = vunpack.c.l.b16 %v11929
    %v12039 = vunpack.c.l.b16 %v11930
    %v12040 = vunpack.c.l.b16 %v11931
    %v12041 = vunpack.c.l.b16 %v11932
    %v12042 = vunpack.c.l.b16 %v11946
    %v12043 = vunpack.c.l.b16 %v11934
    %v12044 = vunpack.c.l.b16 %v11935
    %v12045 = vunpack.c.l.b16 %v11936
    %v12046 = vunpack.c.l.b16 %v11937
    %v12047 = vunpack.c.l.b16 %v11947
    %v12048 = vrot.slane %v11999, 7
    %vm12049 = vcmask 1041409
    %v12050 = vsel %vm12049, %v12048, %v11998
    %v12051 = vrot.slane %v12000, 6
    %v12052 = vsel %vm2032, %v12051, %v12050
    %v12053 = vrot.slane %v12001, 5
    %vm12054 = vcmask 1043459
    %v12055 = vsel %vm12054, %v12053, %v12052
    %v12056 = vrot.slane %v12002, 4
    %v12057 = vsel %vm2034, %v12056, %v12055
    %v12058 = vrot.slane %v12003, 3
    %vm12059 = vcmask 1045509
    %v12060 = vsel %vm12059, %v12058, %v12057
    %v12061 = vrot.slane %v12004, 2
    %v12062 = vsel %vm2036, %v12061, %v12060
    %v12063 = vrot.slane %v12005, 1
    %vm12064 = vcmask 1047559
    %v12065 = vsel %vm12064, %v12063, %v12062
    %v12066 = vrot.slane %v12007, 7
    %v12067 = vsel %vm12049, %v12066, %v12006
    %v12068 = vrot.slane %v12008, 6
    %v12069 = vsel %vm2032, %v12068, %v12067
    %v12070 = vrot.slane %v12009, 5
    %v12071 = vsel %vm12054, %v12070, %v12069
    %v12072 = vrot.slane %v12010, 4
    %v12073 = vsel %vm2034, %v12072, %v12071
    %v12074 = vrot.slane %v12011, 3
    %v12075 = vsel %vm12059, %v12074, %v12073
    %v12076 = vrot.slane %v12012, 2
    %v12077 = vsel %vm2036, %v12076, %v12075
    %v12078 = vrot.slane %v12013, 1
    %v12079 = vsel %vm12064, %v12078, %v12077
    %v12080 = vrot.slane %v12015, 7
    %v12081 = vsel %vm12049, %v12080, %v12014
    %v12082 = vrot.slane %v12016, 6
    %v12083 = vsel %vm2032, %v12082, %v12081
    %v12084 = vrot.slane %v12017, 5
    %v12085 = vsel %vm12054, %v12084, %v12083
    %v12086 = vrot.slane %v12018, 4
    %v12087 = vsel %vm2034, %v12086, %v12085
    %v12088 = vrot.slane %v12019, 3
    %v12089 = vsel %vm12059, %v12088, %v12087
    %v12090 = vrot.slane %v12020, 2
    %v12091 = vsel %vm2036, %v12090, %v12089
    %v12092 = vrot.slane %v12021, 1
    %v12093 = vsel %vm12064, %v12092, %v12091
    %v12094 = vrot.slane %v12023, 7
    %v12095 = vsel %vm12049, %v12094, %v12022
    %v12096 = vrot.slane %v12024, 6
    %v12097 = vsel %vm2032, %v12096, %v12095
    %v12098 = vrot.slane %v12025, 5
    %v12099 = vsel %vm12054, %v12098, %v12097
    %v12100 = vrot.slane %v12026, 4
    %v12101 = vsel %vm2034, %v12100, %v12099
    %v12102 = vrot.slane %v12027, 3
    %v12103 = vsel %vm12059, %v12102, %v12101
    %v12104 = vrot.slane %v12028, 2
    %v12105 = vsel %vm2036, %v12104, %v12103
    %v12106 = vrot.slane %v12029, 1
    %v12107 = vsel %vm12064, %v12106, %v12105
    %v12108 = vrot.slane %v12031, 7
    %v12109 = vsel %vm12049, %v12108, %v12030
    %v12110 = vrot.slane %v12032, 6
    %v12111 = vsel %vm2032, %v12110, %v12109
    %v12112 = vrot.slane %v12033, 5
    %v12113 = vsel %vm12054, %v12112, %v12111
    %v12114 = vrot.slane %v12034, 4
    %v12115 = vsel %vm2034, %v12114, %v12113
    %v12116 = vrot.slane %v12035, 3
    %v12117 = vsel %vm12059, %v12116, %v12115
    %v12118 = vrot.slane %v12036, 2
    %v12119 = vsel %vm2036, %v12118, %v12117
    %v12120 = vrot.slane %v12037, 1
    %v12121 = vsel %vm12064, %v12120, %v12119
    %v12122 = vrot.slane %v12039, 7
    %v12123 = vsel %vm12049, %v12122, %v12038
    %v12124 = vrot.slane %v12040, 6
    %v12125 = vsel %vm2032, %v12124, %v12123
    %v12126 = vrot.slane %v12041, 5
    %v12127 = vsel %vm12054, %v12126, %v12125
    %v12128 = vrot.slane %v12042, 4
    %v12129 = vsel %vm2034, %v12128, %v12127
    %v12130 = vrot.slane %v12043, 3
    %v12131 = vsel %vm12059, %v12130, %v12129
    %v12132 = vrot.slane %v12044, 2
    %v12133 = vsel %vm2036, %v12132, %v12131
    %v12134 = vrot.slane %v12045, 1
    %v12135 = vsel %vm12064, %v12134, %v12133
    %v12136 = vrot.slane %v12047, 7
    %v12137 = vsel %vm12049, %v12136, %v12046
    %v12138 = vpack.c.b16 %v12079, %v12065
    %v12139 = vpack.c.b16 %v12107, %v12093
    %v12140 = vpack.c.b16 %v12135, %v12121
    %v12141 = vpack.c.b16 %v12137, %v12137
    %vm12142 = vcmask 261120
    %v12144 = vsel %vm12142, %v12138, 0
    %v12147 = vsel %vm12142, %v12139, 0
    %v12150 = vsel %vm12142, %v12140, 0
    %v12153 = vsel %vm12142, %v12141, 0
    %12155 = vmatprep.subr.bf16.mxu0 0
    %12156 = vmatpush1.bf16.msra.mxu0 %v11872
    %12157 = vmatprep.subr.bf16.mxu0 0
    %12158 = vmatpush1.bf16.msra.mxu0 %v11873
    %12159 = vmatprep.subr.bf16.mxu0 0
    %12160 = vmatpush1.bf16.msra.mxu0 0
    %12161 = vmatprep.subr.bf16.mxu0 0
    %12162 = vmatpush1.bf16.msra.mxu0 0
    %12163 = vmatprep.subr.bf16.mxu0 0
    %12164 = vmatpush1.bf16.msra.mxu0 0
    %12165 = vmatprep.subr.bf16.mxu0 0
    %12166 = vmatpush1.bf16.msra.mxu0 0
    %12167 = vmatprep.subr.bf16.mxu0 0
    %12168 = vmatpush1.bf16.msra.mxu0 0
    %12169 = vmatprep.subr.bf16.mxu0 0
    %12170 = vmatpush1.bf16.msra.mxu0 0
    %12171 = vmatprep.subr.bf16.mxu0 0
    %12172 = vmatpush1.bf16.msra.mxu0 0
    %12173 = vmatprep.subr.bf16.mxu0 0
    %12174 = vmatpush1.bf16.msra.mxu0 0
    %12175 = vmatprep.subr.bf16.mxu0 0
    %12176 = vmatpush1.bf16.msra.mxu0 0
    %12177 = vmatprep.subr.bf16.mxu0 0
    %12178 = vmatpush1.bf16.msra.mxu0 0
    %12179 = vmatprep.subr.bf16.mxu0 0
    %12180 = vmatpush1.bf16.msra.mxu0 0
    %12181 = vmatprep.subr.bf16.mxu0 0
    %12182 = vmatpush1.bf16.msra.mxu0 0
    %12183 = vmatprep.subr.bf16.mxu0 0
    %12184 = vmatpush1.bf16.msra.mxu0 0
    %12185 = vmatprep.subr.bf16.mxu0 0
    %12186 = vmatpush1.bf16.msra.mxu0 0
    %12187 = vmatprep.mubr.bf16.mxu0 0
    %12188 = vmatmul.mubr.bf16.gmra.mrb[0].mxu0 %v12144
    %v12189 = vpop.f32.mrb[0].mxu0
    %v12190 = vadd.f32 0.0, %v12189
    %v12191 = vpop.f32.mrb[0].mxu0
    %v12192 = vpop.f32.mrb[0].mxu0
    %v12193 = vadd.f32 0.0, %v12192
    %v12194 = vpop.f32.mrb[0].mxu0
    %12195 = vmatprep.mubr.bf16.mxu0 0
    %12196 = vmatmul.mubr.bf16.gmra.mrb[0].mxu0 %v12147
    %v12197 = vpop.f32.mrb[0].mxu0
    %v12198 = vadd.f32 0.0, %v12197
    %v12199 = vpop.f32.mrb[0].mxu0
    %v12200 = vpop.f32.mrb[0].mxu0
    %v12201 = vadd.f32 0.0, %v12200
    %v12202 = vpop.f32.mrb[0].mxu0
    %12203 = vmatprep.mubr.bf16.mxu0 0
    %12204 = vmatmul.mubr.bf16.gmra.mrb[0].mxu0 %v12150
    %v12205 = vpop.f32.mrb[0].mxu0
    %v12206 = vadd.f32 0.0, %v12205
    %v12207 = vpop.f32.mrb[0].mxu0
    %v12208 = vpop.f32.mrb[0].mxu0
    %v12209 = vadd.f32 0.0, %v12208
    %v12210 = vpop.f32.mrb[0].mxu0
    %12211 = vmatprep.mubr.bf16.mxu0 0
    %12212 = vmatmul.mubr.bf16.gmra.mrb[0].mxu0 %v12153
    %v12213 = vpop.f32.mrb[0].mxu0
    %v12214 = vpop.f32.mrb[0].mxu0
    %v12215 = vpop.f32.mrb[0].mxu0
    %v12216 = vpop.f32.mrb[0].mxu0
    %12217 = vdwg.mxu0
    %v12228 = vunpack.c.l.b16 %v11888
    %v12229 = vunpack.c.l.b16 %v11893
    %v12230 = vunpack.c.l.b16 %v11898
    %v12231 = vunpack.c.l.b16 %v11903
    %v12232 = vunpack.c.l.b16 %v11908
    %v12233 = vunpack.c.l.b16 %v11913
    %v12234 = vunpack.c.l.b16 %v11918
    %v12235 = vunpack.c.l.b16 %v11923
    %v12236 = vunpack.c.l.b16 %v11928
    %v12237 = vunpack.c.l.b16 %v11933
    %v12238 = vrot.slane %v11998, 7
    %v12239 = vsel %vm12049, %v12238, %v12228
    %v12240 = vrot.slane %v11999, 6
    %v12241 = vsel %vm2032, %v12240, %v12239
    %v12242 = vrot.slane %v12000, 5
    %v12243 = vsel %vm12054, %v12242, %v12241
    %v12244 = vrot.slane %v12001, 4
    %v12245 = vsel %vm2034, %v12244, %v12243
    %v12246 = vrot.slane %v12229, 3
    %v12247 = vsel %vm12059, %v12246, %v12245
    %v12248 = vrot.slane %v12003, 2
    %v12249 = vsel %vm2036, %v12248, %v12247
    %v12250 = vrot.slane %v12004, 1
    %v12251 = vsel %vm12064, %v12250, %v12249
    %v12252 = vrot.slane %v12006, 7
    %v12253 = vsel %vm12049, %v12252, %v12005
    %v12254 = vrot.slane %v12230, 6
    %v12255 = vsel %vm2032, %v12254, %v12253
    %v12256 = vrot.slane %v12008, 5
    %v12257 = vsel %vm12054, %v12256, %v12255
    %v12258 = vrot.slane %v12009, 4
    %v12259 = vsel %vm2034, %v12258, %v12257
    %v12260 = vrot.slane %v12010, 3
    %v12261 = vsel %vm12059, %v12260, %v12259
    %v12262 = vrot.slane %v12011, 2
    %v12263 = vsel %vm2036, %v12262, %v12261
    %v12264 = vrot.slane %v12231, 1
    %v12265 = vsel %vm12064, %v12264, %v12263
    %v12266 = vrot.slane %v12014, 7
    %v12267 = vsel %vm12049, %v12266, %v12013
    %v12268 = vrot.slane %v12015, 6
    %v12269 = vsel %vm2032, %v12268, %v12267
    %v12270 = vrot.slane %v12016, 5
    %v12271 = vsel %vm12054, %v12270, %v12269
    %v12272 = vrot.slane %v12232, 4
    %v12273 = vsel %vm2034, %v12272, %v12271
    %v12274 = vrot.slane %v12018, 3
    %v12275 = vsel %vm12059, %v12274, %v12273
    %v12276 = vrot.slane %v12019, 2
    %v12277 = vsel %vm2036, %v12276, %v12275
    %v12278 = vrot.slane %v12020, 1
    %v12279 = vsel %vm12064, %v12278, %v12277
    %v12280 = vrot.slane %v12233, 7
    %v12281 = vsel %vm12049, %v12280, %v12021
    %v12282 = vrot.slane %v12023, 6
    %v12283 = vsel %vm2032, %v12282, %v12281
    %v12284 = vrot.slane %v12024, 5
    %v12285 = vsel %vm12054, %v12284, %v12283
    %v12286 = vrot.slane %v12025, 4
    %v12287 = vsel %vm2034, %v12286, %v12285
    %v12288 = vrot.slane %v12026, 3
    %v12289 = vsel %vm12059, %v12288, %v12287
    %v12290 = vrot.slane %v12234, 2
    %v12291 = vsel %vm2036, %v12290, %v12289
    %v12292 = vrot.slane %v12028, 1
    %v12293 = vsel %vm12064, %v12292, %v12291
    %v12294 = vrot.slane %v12030, 7
    %v12295 = vsel %vm12049, %v12294, %v12029
    %v12296 = vrot.slane %v12031, 6
    %v12297 = vsel %vm2032, %v12296, %v12295
    %v12298 = vrot.slane %v12235, 5
    %v12299 = vsel %vm12054, %v12298, %v12297
    %v12300 = vrot.slane %v12033, 4
    %v12301 = vsel %vm2034, %v12300, %v12299
    %v12302 = vrot.slane %v12034, 3
    %v12303 = vsel %vm12059, %v12302, %v12301
    %v12304 = vrot.slane %v12035, 2
    %v12305 = vsel %vm2036, %v12304, %v12303
    %v12306 = vrot.slane %v12036, 1
    %v12307 = vsel %vm12064, %v12306, %v12305
    %v12308 = vrot.slane %v12038, 7
    %v12309 = vsel %vm12049, %v12308, %v12236
    %v12310 = vrot.slane %v12039, 6
    %v12311 = vsel %vm2032, %v12310, %v12309
    %v12312 = vrot.slane %v12040, 5
    %v12313 = vsel %vm12054, %v12312, %v12311
    %v12314 = vrot.slane %v12041, 4
    %v12315 = vsel %vm2034, %v12314, %v12313
    %v12316 = vrot.slane %v12237, 3
    %v12317 = vsel %vm12059, %v12316, %v12315
    %v12318 = vrot.slane %v12043, 2
    %v12319 = vsel %vm2036, %v12318, %v12317
    %v12320 = vrot.slane %v12044, 1
    %v12321 = vsel %vm12064, %v12320, %v12319
    %v12322 = vrot.slane %v12046, 7
    %v12323 = vsel %vm12049, %v12322, %v12045
    %v12324 = vpack.c.b16 %v12265, %v12251
    %v12325 = vpack.c.b16 %v12293, %v12279
    %v12326 = vpack.c.b16 %v12321, %v12307
    %v12327 = vpack.c.b16 %v12323, %v12323
    %v12329 = vsel %vm12142, %v12324, 0
    %v12332 = vsel %vm12142, %v12325, 0
    %v12335 = vsel %vm12142, %v12326, 0
    %v12338 = vsel %vm12142, %v12327, 0
    %12340 = vmatprep.subr.bf16.mxu0 0
    %12341 = vmatpush1.bf16.msra.mxu0 %v11870
    %12342 = vmatprep.subr.bf16.mxu0 0
    %12343 = vmatpush1.bf16.msra.mxu0 %v11871
    %12344 = vmatprep.subr.bf16.mxu0 0
    %12345 = vmatpush1.bf16.msra.mxu0 0
    %12346 = vmatprep.subr.bf16.mxu0 0
    %12347 = vmatpush1.bf16.msra.mxu0 0
    %12348 = vmatprep.subr.bf16.mxu0 0
    %12349 = vmatpush1.bf16.msra.mxu0 0
    %12350 = vmatprep.subr.bf16.mxu0 0
    %12351 = vmatpush1.bf16.msra.mxu0 0
    %12352 = vmatprep.subr.bf16.mxu0 0
    %12353 = vmatpush1.bf16.msra.mxu0 0
    %12354 = vmatprep.subr.bf16.mxu0 0
    %12355 = vmatpush1.bf16.msra.mxu0 0
    %12356 = vmatprep.subr.bf16.mxu0 0
    %12357 = vmatpush1.bf16.msra.mxu0 0
    %12358 = vmatprep.subr.bf16.mxu0 0
    %12359 = vmatpush1.bf16.msra.mxu0 0
    %12360 = vmatprep.subr.bf16.mxu0 0
    %12361 = vmatpush1.bf16.msra.mxu0 0
    %12362 = vmatprep.subr.bf16.mxu0 0
    %12363 = vmatpush1.bf16.msra.mxu0 0
    %12364 = vmatprep.subr.bf16.mxu0 0
    %12365 = vmatpush1.bf16.msra.mxu0 0
    %12366 = vmatprep.subr.bf16.mxu0 0
    %12367 = vmatpush1.bf16.msra.mxu0 0
    %12368 = vmatprep.subr.bf16.mxu0 0
    %12369 = vmatpush1.bf16.msra.mxu0 0
    %12370 = vmatprep.subr.bf16.mxu0 0
    %12371 = vmatpush1.bf16.msra.mxu0 0
    %12372 = vmatprep.mubr.bf16.mxu0 0
    %12373 = vmatmul.mubr.bf16.gmra.mrb[0].mxu0 %v12329
    %v12374 = vpop.f32.mrb[0].mxu0
    %v12375 = vadd.f32 %v12190, %v12374
    %v12376 = vpop.f32.mrb[0].mxu0
    %v12377 = vpop.f32.mrb[0].mxu0
    %v12378 = vadd.f32 %v12193, %v12377
    %v12379 = vpop.f32.mrb[0].mxu0
    %12380 = vmatprep.mubr.bf16.mxu0 0
    %12381 = vmatmul.mubr.bf16.gmra.mrb[0].mxu0 %v12332
    %v12382 = vpop.f32.mrb[0].mxu0
    %v12383 = vadd.f32 %v12198, %v12382
    %v12384 = vpop.f32.mrb[0].mxu0
    %v12385 = vpop.f32.mrb[0].mxu0
    %v12386 = vadd.f32 %v12201, %v12385
    %v12387 = vpop.f32.mrb[0].mxu0
    %12388 = vmatprep.mubr.bf16.mxu0 0
    %12389 = vmatmul.mubr.bf16.gmra.mrb[0].mxu0 %v12335
    %v12390 = vpop.f32.mrb[0].mxu0
    %v12391 = vadd.f32 %v12206, %v12390
    %v12392 = vpop.f32.mrb[0].mxu0
    %v12393 = vpop.f32.mrb[0].mxu0
    %v12394 = vadd.f32 %v12209, %v12393
    %v12395 = vpop.f32.mrb[0].mxu0
    %12396 = vmatprep.mubr.bf16.mxu0 0
    %12397 = vmatmul.mubr.bf16.gmra.mrb[0].mxu0 %v12338
    %v12398 = vpop.f32.mrb[0].mxu0
    %v12399 = vpop.f32.mrb[0].mxu0
    %v12400 = vpop.f32.mrb[0].mxu0
    %v12401 = vpop.f32.mrb[0].mxu0
    %12402 = vdwg.mxu0
    %v12403 = vpack.c.bf16 %v11742, %v11742
    %v12404 = vpack.c.bf16 %v11749, %v11749
    %v12405 = vpack.c.bf16 %v11756, %v11756
    %v12406 = vpack.c.bf16 %v11763, %v11763
    %v12407 = vpack.c.bf16 %v11770, %v11770
    %v12408 = vpack.c.bf16 %v11791, %v11791
    %v12409 = vpack.c.bf16 %v11798, %v11798
    %v12410 = vpack.c.bf16 %v11805, %v11805
    %v12411 = vpack.c.bf16 %v11812, %v11812
    %v12412 = vpack.c.bf16 %v11819, %v11819
    %v12423 = vunpack.c.l.b16 %v12403
    %v12424 = vunpack.c.l.b16 %v12404
    %v12425 = vunpack.c.l.b16 %v12405
    %v12426 = vunpack.c.l.b16 %v12406
    %v12427 = vunpack.c.l.b16 %v12407
    %v12428 = vunpack.c.l.b16 %v12408
    %v12429 = vunpack.c.l.b16 %v12409
    %v12430 = vunpack.c.l.b16 %v12410
    %v12431 = vunpack.c.l.b16 %v12411
    %v12432 = vunpack.c.l.b16 %v12412
    %v12433 = vrot.slane %v12000, 7
    %v12434 = vsel %vm12049, %v12433, %v11999
    %v12435 = vrot.slane %v12001, 6
    %v12436 = vsel %vm2032, %v12435, %v12434
    %v12437 = vrot.slane %v12002, 5
    %v12438 = vsel %vm12054, %v12437, %v12436
    %v12439 = vrot.slane %v12423, 4
    %v12440 = vsel %vm2034, %v12439, %v12438
    %v12441 = vrot.slane %v12004, 3
    %v12442 = vsel %vm12059, %v12441, %v12440
    %v12443 = vrot.slane %v12005, 2
    %v12444 = vsel %vm2036, %v12443, %v12442
    %v12445 = vrot.slane %v12006, 1
    %v12446 = vsel %vm12064, %v12445, %v12444
    %v12447 = vrot.slane %v12424, 7
    %v12448 = vsel %vm12049, %v12447, %v12007
    %v12449 = vrot.slane %v12009, 6
    %v12450 = vsel %vm2032, %v12449, %v12448
    %v12451 = vrot.slane %v12010, 5
    %v12452 = vsel %vm12054, %v12451, %v12450
    %v12453 = vrot.slane %v12011, 4
    %v12454 = vsel %vm2034, %v12453, %v12452
    %v12455 = vrot.slane %v12012, 3
    %v12456 = vsel %vm12059, %v12455, %v12454
    %v12457 = vrot.slane %v12425, 2
    %v12458 = vsel %vm2036, %v12457, %v12456
    %v12459 = vrot.slane %v12014, 1
    %v12460 = vsel %vm12064, %v12459, %v12458
    %v12461 = vrot.slane %v12016, 7
    %v12462 = vsel %vm12049, %v12461, %v12015
    %v12463 = vrot.slane %v12017, 6
    %v12464 = vsel %vm2032, %v12463, %v12462
    %v12465 = vrot.slane %v12426, 5
    %v12466 = vsel %vm12054, %v12465, %v12464
    %v12467 = vrot.slane %v12019, 4
    %v12468 = vsel %vm2034, %v12467, %v12466
    %v12469 = vrot.slane %v12020, 3
    %v12470 = vsel %vm12059, %v12469, %v12468
    %v12471 = vrot.slane %v12021, 2
    %v12472 = vsel %vm2036, %v12471, %v12470
    %v12473 = vrot.slane %v12022, 1
    %v12474 = vsel %vm12064, %v12473, %v12472
    %v12475 = vrot.slane %v12024, 7
    %v12476 = vsel %vm12049, %v12475, %v12427
    %v12477 = vrot.slane %v12025, 6
    %v12478 = vsel %vm2032, %v12477, %v12476
    %v12479 = vrot.slane %v12026, 5
    %v12480 = vsel %vm12054, %v12479, %v12478
    %v12481 = vrot.slane %v12027, 4
    %v12482 = vsel %vm2034, %v12481, %v12480
    %v12483 = vrot.slane %v12428, 3
    %v12484 = vsel %vm12059, %v12483, %v12482
    %v12485 = vrot.slane %v12029, 2
    %v12486 = vsel %vm2036, %v12485, %v12484
    %v12487 = vrot.slane %v12030, 1
    %v12488 = vsel %vm12064, %v12487, %v12486
    %v12489 = vrot.slane %v12032, 7
    %v12490 = vsel %vm12049, %v12489, %v12031
    %v12491 = vrot.slane %v12429, 6
    %v12492 = vsel %vm2032, %v12491, %v12490
    %v12493 = vrot.slane %v12034, 5
    %v12494 = vsel %vm12054, %v12493, %v12492
    %v12495 = vrot.slane %v12035, 4
    %v12496 = vsel %vm2034, %v12495, %v12494
    %v12497 = vrot.slane %v12036, 3
    %v12498 = vsel %vm12059, %v12497, %v12496
    %v12499 = vrot.slane %v12037, 2
    %v12500 = vsel %vm2036, %v12499, %v12498
    %v12501 = vrot.slane %v12430, 1
    %v12502 = vsel %vm12064, %v12501, %v12500
    %v12503 = vrot.slane %v12040, 7
    %v12504 = vsel %vm12049, %v12503, %v12039
    %v12505 = vrot.slane %v12041, 6
    %v12506 = vsel %vm2032, %v12505, %v12504
    %v12507 = vrot.slane %v12042, 5
    %v12508 = vsel %vm12054, %v12507, %v12506
    %v12509 = vrot.slane %v12431, 4
    %v12510 = vsel %vm2034, %v12509, %v12508
    %v12511 = vrot.slane %v12044, 3
    %v12512 = vsel %vm12059, %v12511, %v12510
    %v12513 = vrot.slane %v12045, 2
    %v12514 = vsel %vm2036, %v12513, %v12512
    %v12515 = vrot.slane %v12046, 1
    %v12516 = vsel %vm12064, %v12515, %v12514
    %v12517 = vrot.slane %v12432, 7
    %v12518 = vsel %vm12049, %v12517, %v12047
    %v12519 = vpack.c.b16 %v12460, %v12446
    %v12520 = vpack.c.b16 %v12488, %v12474
    %v12521 = vpack.c.b16 %v12516, %v12502
    %v12522 = vpack.c.b16 %v12518, %v12518
    %v12524 = vsel %vm12142, %v12519, 0
    %v12527 = vsel %vm12142, %v12520, 0
    %v12530 = vsel %vm12142, %v12521, 0
    %v12533 = vsel %vm12142, %v12522, 0
    %12535 = vmatprep.subr.bf16.mxu0 0
    %12536 = vmatpush1.bf16.msra.mxu0 %v11874
    %12537 = vmatprep.subr.bf16.mxu0 0
    %12538 = vmatpush1.bf16.msra.mxu0 %v11875
    %12539 = vmatprep.subr.bf16.mxu0 0
    %12540 = vmatpush1.bf16.msra.mxu0 0
    %12541 = vmatprep.subr.bf16.mxu0 0
    %12542 = vmatpush1.bf16.msra.mxu0 0
    %12543 = vmatprep.subr.bf16.mxu0 0
    %12544 = vmatpush1.bf16.msra.mxu0 0
    %12545 = vmatprep.subr.bf16.mxu0 0
    %12546 = vmatpush1.bf16.msra.mxu0 0
    %12547 = vmatprep.subr.bf16.mxu0 0
    %12548 = vmatpush1.bf16.msra.mxu0 0
    %12549 = vmatprep.subr.bf16.mxu0 0
    %12550 = vmatpush1.bf16.msra.mxu0 0
    %12551 = vmatprep.subr.bf16.mxu0 0
    %12552 = vmatpush1.bf16.msra.mxu0 0
    %12553 = vmatprep.subr.bf16.mxu0 0
    %12554 = vmatpush1.bf16.msra.mxu0 0
    %12555 = vmatprep.subr.bf16.mxu0 0
    %12556 = vmatpush1.bf16.msra.mxu0 0
    %12557 = vmatprep.subr.bf16.mxu0 0
    %12558 = vmatpush1.bf16.msra.mxu0 0
    %12559 = vmatprep.subr.bf16.mxu0 0
    %12560 = vmatpush1.bf16.msra.mxu0 0
    %12561 = vmatprep.subr.bf16.mxu0 0
    %12562 = vmatpush1.bf16.msra.mxu0 0
    %12563 = vmatprep.subr.bf16.mxu0 0
    %12564 = vmatpush1.bf16.msra.mxu0 0
    %12565 = vmatprep.subr.bf16.mxu0 0
    %12566 = vmatpush1.bf16.msra.mxu0 0
    %12567 = vmatprep.mubr.bf16.mxu0 0
    %12568 = vmatmul.mubr.bf16.gmra.mrb[0].mxu0 %v12524
    %v12569 = vpop.f32.mrb[0].mxu0
    %v12570 = vadd.f32 0.0, %v12569
    %v12571 = vpop.f32.mrb[0].mxu0
    %v12572 = vpop.f32.mrb[0].mxu0
    %v12573 = vadd.f32 0.0, %v12572
    %v12574 = vpop.f32.mrb[0].mxu0
    %12575 = vmatprep.mubr.bf16.mxu0 0
    %12576 = vmatmul.mubr.bf16.gmra.mrb[0].mxu0 %v12527
    %v12577 = vpop.f32.mrb[0].mxu0
    %v12578 = vadd.f32 0.0, %v12577
    %v12579 = vpop.f32.mrb[0].mxu0
    %v12580 = vpop.f32.mrb[0].mxu0
    %v12581 = vadd.f32 0.0, %v12580
    %v12582 = vpop.f32.mrb[0].mxu0
    %12583 = vmatprep.mubr.bf16.mxu0 0
    %12584 = vmatmul.mubr.bf16.gmra.mrb[0].mxu0 %v12530
    %v12585 = vpop.f32.mrb[0].mxu0
    %v12586 = vadd.f32 0.0, %v12585
    %v12587 = vpop.f32.mrb[0].mxu0
    %v12588 = vpop.f32.mrb[0].mxu0
    %v12589 = vadd.f32 0.0, %v12588
    %v12590 = vpop.f32.mrb[0].mxu0
    %12591 = vmatprep.mubr.bf16.mxu0 0
    %12592 = vmatmul.mubr.bf16.gmra.mrb[0].mxu0 %v12533
    %v12593 = vpop.f32.mrb[0].mxu0
    %v12594 = vpop.f32.mrb[0].mxu0
    %v12595 = vpop.f32.mrb[0].mxu0
    %v12596 = vpop.f32.mrb[0].mxu0
    %12597 = vdwg.mxu0
    %v12598 = vadd.f32 %v12375, %v12570
    %v12599 = vadd.f32 %v12378, %v12573
    %v12600 = vadd.f32 %v12383, %v12578
    %v12601 = vadd.f32 %v12386, %v12581
    %v12602 = vadd.f32 %v12391, %v12586
    %v12603 = vadd.f32 %v12394, %v12589
    %v12604 = vpack.c.bf16 %v11771, %v11771
    %v12605 = vpack.c.bf16 %v11772, %v11772
    %v12606 = vpack.c.bf16 %v11773, %v11773
    %v12607 = vpack.c.bf16 %v11774, %v11774
    %v12608 = vpack.c.bf16 %v11775, %v11775
    %v12609 = vpack.c.bf16 %v11820, %v11820
    %v12610 = vpack.c.bf16 %v11821, %v11821
    %v12611 = vpack.c.bf16 %v11822, %v11822
    %v12612 = vpack.c.bf16 %v11823, %v11823
    %v12613 = vpack.c.bf16 %v11824, %v11824
    %v12624 = vunpack.c.l.b16 %v12604
    %v12625 = vunpack.c.l.b16 %v12605
    %v12626 = vunpack.c.l.b16 %v12606
    %v12627 = vunpack.c.l.b16 %v12607
    %v12628 = vunpack.c.l.b16 %v12608
    %v12629 = vunpack.c.l.b16 %v12609
    %v12630 = vunpack.c.l.b16 %v12610
    %v12631 = vunpack.c.l.b16 %v12611
    %v12632 = vunpack.c.l.b16 %v12612
    %v12633 = vunpack.c.l.b16 %v12613
    %v12634 = vrot.slane %v12003, 7
    %v12635 = vsel %vm12049, %v12634, %v12229
    %v12636 = vrot.slane %v12004, 6
    %v12637 = vsel %vm2032, %v12636, %v12635
    %v12638 = vrot.slane %v12005, 5
    %v12639 = vsel %vm12054, %v12638, %v12637
    %v12640 = vrot.slane %v12006, 4
    %v12641 = vsel %vm2034, %v12640, %v12639
    %v12642 = vrot.slane %v12230, 3
    %v12643 = vsel %vm12059, %v12642, %v12641
    %v12644 = vrot.slane %v12008, 2
    %v12645 = vsel %vm2036, %v12644, %v12643
    %v12646 = vrot.slane %v12009, 1
    %v12647 = vsel %vm12064, %v12646, %v12645
    %v12648 = vrot.slane %v12011, 7
    %v12649 = vsel %vm12049, %v12648, %v12010
    %v12650 = vrot.slane %v12231, 6
    %v12651 = vsel %vm2032, %v12650, %v12649
    %v12652 = vrot.slane %v12013, 5
    %v12653 = vsel %vm12054, %v12652, %v12651
    %v12654 = vrot.slane %v12014, 4
    %v12655 = vsel %vm2034, %v12654, %v12653
    %v12656 = vrot.slane %v12015, 3
    %v12657 = vsel %vm12059, %v12656, %v12655
    %v12658 = vrot.slane %v12016, 2
    %v12659 = vsel %vm2036, %v12658, %v12657
    %v12660 = vrot.slane %v12232, 1
    %v12661 = vsel %vm12064, %v12660, %v12659
    %v12662 = vrot.slane %v12019, 7
    %v12663 = vsel %vm12049, %v12662, %v12018
    %v12664 = vrot.slane %v12020, 6
    %v12665 = vsel %vm2032, %v12664, %v12663
    %v12666 = vrot.slane %v12021, 5
    %v12667 = vsel %vm12054, %v12666, %v12665
    %v12668 = vrot.slane %v12624, 4
    %v12669 = vsel %vm2034, %v12668, %v12667
    %v12670 = vrot.slane %v12625, 3
    %v12671 = vsel %vm12059, %v12670, %v12669
    %v12672 = vrot.slane %v12626, 2
    %v12673 = vsel %vm2036, %v12672, %v12671
    %v12674 = vrot.slane %v12627, 1
    %v12675 = vsel %vm12064, %v12674, %v12673
    %v12676 = vrot.slane %v12234, 7
    %v12677 = vsel %vm12049, %v12676, %v12628
    %v12678 = vrot.slane %v12028, 6
    %v12679 = vsel %vm2032, %v12678, %v12677
    %v12680 = vrot.slane %v12029, 5
    %v12681 = vsel %vm12054, %v12680, %v12679
    %v12682 = vrot.slane %v12030, 4
    %v12683 = vsel %vm2034, %v12682, %v12681
    %v12684 = vrot.slane %v12031, 3
    %v12685 = vsel %vm12059, %v12684, %v12683
    %v12686 = vrot.slane %v12235, 2
    %v12687 = vsel %vm2036, %v12686, %v12685
    %v12688 = vrot.slane %v12033, 1
    %v12689 = vsel %vm12064, %v12688, %v12687
    %v12690 = vrot.slane %v12035, 7
    %v12691 = vsel %vm12049, %v12690, %v12034
    %v12692 = vrot.slane %v12036, 6
    %v12693 = vsel %vm2032, %v12692, %v12691
    %v12694 = vrot.slane %v12236, 5
    %v12695 = vsel %vm12054, %v12694, %v12693
    %v12696 = vrot.slane %v12038, 4
    %v12697 = vsel %vm2034, %v12696, %v12695
    %v12698 = vrot.slane %v12039, 3
    %v12699 = vsel %vm12059, %v12698, %v12697
    %v12700 = vrot.slane %v12040, 2
    %v12701 = vsel %vm2036, %v12700, %v12699
    %v12702 = vrot.slane %v12041, 1
    %v12703 = vsel %vm12064, %v12702, %v12701
    %v12704 = vrot.slane %v12043, 7
    %v12705 = vsel %vm12049, %v12704, %v12237
    %v12706 = vrot.slane %v12044, 6
    %v12707 = vsel %vm2032, %v12706, %v12705
    %v12708 = vrot.slane %v12045, 5
    %v12709 = vsel %vm12054, %v12708, %v12707
    %v12710 = vrot.slane %v12046, 4
    %v12711 = vsel %vm2034, %v12710, %v12709
    %v12712 = vrot.slane %v12629, 3
    %v12713 = vsel %vm12059, %v12712, %v12711
    %v12714 = vrot.slane %v12630, 2
    %v12715 = vsel %vm2036, %v12714, %v12713
    %v12716 = vrot.slane %v12631, 1
    %v12717 = vsel %vm12064, %v12716, %v12715
    %v12718 = vrot.slane %v12633, 7
    %v12719 = vsel %vm12049, %v12718, %v12632
    %v12720 = vpack.c.b16 %v12661, %v12647
    %v12721 = vpack.c.b16 %v12689, %v12675
    %v12722 = vpack.c.b16 %v12717, %v12703
    %v12723 = vpack.c.b16 %v12719, %v12719
    %v12725 = vsel %vm12142, %v12720, 0
    %v12728 = vsel %vm12142, %v12721, 0
    %v12731 = vsel %vm12142, %v12722, 0
    %v12734 = vsel %vm12142, %v12723, 0
    %12736 = vmatprep.subr.bf16.mxu0 0
    %12737 = vmatpush1.bf16.msra.mxu0 %v11876
    %12738 = vmatprep.subr.bf16.mxu0 0
    %12739 = vmatpush1.bf16.msra.mxu0 %v11877
    %12740 = vmatprep.subr.bf16.mxu0 0
    %12741 = vmatpush1.bf16.msra.mxu0 0
    %12742 = vmatprep.subr.bf16.mxu0 0
    %12743 = vmatpush1.bf16.msra.mxu0 0
    %12744 = vmatprep.subr.bf16.mxu0 0
    %12745 = vmatpush1.bf16.msra.mxu0 0
    %12746 = vmatprep.subr.bf16.mxu0 0
    %12747 = vmatpush1.bf16.msra.mxu0 0
    %12748 = vmatprep.subr.bf16.mxu0 0
    %12749 = vmatpush1.bf16.msra.mxu0 0
    %12750 = vmatprep.subr.bf16.mxu0 0
    %12751 = vmatpush1.bf16.msra.mxu0 0
    %12752 = vmatprep.subr.bf16.mxu0 0
    %12753 = vmatpush1.bf16.msra.mxu0 0
    %12754 = vmatprep.subr.bf16.mxu0 0
    %12755 = vmatpush1.bf16.msra.mxu0 0
    %12756 = vmatprep.subr.bf16.mxu0 0
    %12757 = vmatpush1.bf16.msra.mxu0 0
    %12758 = vmatprep.subr.bf16.mxu0 0
    %12759 = vmatpush1.bf16.msra.mxu0 0
    %12760 = vmatprep.subr.bf16.mxu0 0
    %12761 = vmatpush1.bf16.msra.mxu0 0
    %12762 = vmatprep.subr.bf16.mxu0 0
    %12763 = vmatpush1.bf16.msra.mxu0 0
    %12764 = vmatprep.subr.bf16.mxu0 0
    %12765 = vmatpush1.bf16.msra.mxu0 0
    %12766 = vmatprep.subr.bf16.mxu0 0
    %12767 = vmatpush1.bf16.msra.mxu0 0
    %12768 = vmatprep.mubr.bf16.mxu0 0
    %12769 = vmatmul.mubr.bf16.gmra.mrb[0].mxu0 %v12725
    %v12770 = vpop.f32.mrb[0].mxu0
    %v12771 = vadd.f32 0.0, %v12770
    %v12772 = vpop.f32.mrb[0].mxu0
    %v12773 = vpop.f32.mrb[0].mxu0
    %v12774 = vadd.f32 0.0, %v12773
    %v12775 = vpop.f32.mrb[0].mxu0
    %12776 = vmatprep.mubr.bf16.mxu0 0
    %12777 = vmatmul.mubr.bf16.gmra.mrb[0].mxu0 %v12728
    %v12778 = vpop.f32.mrb[0].mxu0
    %v12779 = vadd.f32 0.0, %v12778
    %v12780 = vpop.f32.mrb[0].mxu0
    %v12781 = vpop.f32.mrb[0].mxu0
    %v12782 = vadd.f32 0.0, %v12781
    %v12783 = vpop.f32.mrb[0].mxu0
    %12784 = vmatprep.mubr.bf16.mxu0 0
    %12785 = vmatmul.mubr.bf16.gmra.mrb[0].mxu0 %v12731
    %v12786 = vpop.f32.mrb[0].mxu0
    %v12787 = vadd.f32 0.0, %v12786
    %v12788 = vpop.f32.mrb[0].mxu0
    %v12789 = vpop.f32.mrb[0].mxu0
    %v12790 = vadd.f32 0.0, %v12789
    %v12791 = vpop.f32.mrb[0].mxu0
    %12792 = vmatprep.mubr.bf16.mxu0 0
    %12793 = vmatmul.mubr.bf16.gmra.mrb[0].mxu0 %v12734
    %v12794 = vpop.f32.mrb[0].mxu0
    %v12795 = vpop.f32.mrb[0].mxu0
    %v12796 = vpop.f32.mrb[0].mxu0
    %v12797 = vpop.f32.mrb[0].mxu0
    %12798 = vdwg.mxu0
    %v12799 = vadd.f32 %v12598, %v12771
    %v12800 = vadd.f32 %v12599, %v12774
    %v12801 = vadd.f32 %v12600, %v12779
    %v12802 = vadd.f32 %v12601, %v12782
    %v12803 = vadd.f32 %v12602, %v12787
    %v12804 = vadd.f32 %v12603, %v12790
    %v12805 = vpack.c.bf16 %v11776, %v11776
    %v12806 = vpack.c.bf16 %v11825, %v11825
    %v12809 = vunpack.c.l.b16 %v12805
    %v12810 = vunpack.c.l.b16 %v12806
    %v12811 = vrot.slane %v12004, 7
    %v12812 = vsel %vm12049, %v12811, %v12003
    %v12813 = vrot.slane %v12005, 6
    %v12814 = vsel %vm2032, %v12813, %v12812
    %v12815 = vrot.slane %v12006, 5
    %v12816 = vsel %vm12054, %v12815, %v12814
    %v12817 = vrot.slane %v12007, 4
    %v12818 = vsel %vm2034, %v12817, %v12816
    %v12819 = vrot.slane %v12008, 3
    %v12820 = vsel %vm12059, %v12819, %v12818
    %v12821 = vrot.slane %v12009, 2
    %v12822 = vsel %vm2036, %v12821, %v12820
    %v12823 = vrot.slane %v12010, 1
    %v12824 = vsel %vm12064, %v12823, %v12822
    %v12825 = vrot.slane %v12012, 7
    %v12826 = vsel %vm12049, %v12825, %v12011
    %v12827 = vrot.slane %v12013, 6
    %v12828 = vsel %vm2032, %v12827, %v12826
    %v12829 = vrot.slane %v12014, 5
    %v12830 = vsel %vm12054, %v12829, %v12828
    %v12831 = vrot.slane %v12015, 4
    %v12832 = vsel %vm2034, %v12831, %v12830
    %v12833 = vrot.slane %v12016, 3
    %v12834 = vsel %vm12059, %v12833, %v12832
    %v12835 = vrot.slane %v12017, 2
    %v12836 = vsel %vm2036, %v12835, %v12834
    %v12837 = vrot.slane %v12018, 1
    %v12838 = vsel %vm12064, %v12837, %v12836
    %v12839 = vrot.slane %v12020, 7
    %v12840 = vsel %vm12049, %v12839, %v12019
    %v12841 = vrot.slane %v12021, 6
    %v12842 = vsel %vm2032, %v12841, %v12840
    %v12843 = vrot.slane %v12022, 5
    %v12844 = vsel %vm12054, %v12843, %v12842
    %v12845 = vrot.slane %v12625, 4
    %v12846 = vsel %vm2034, %v12845, %v12844
    %v12847 = vrot.slane %v12626, 3
    %v12848 = vsel %vm12059, %v12847, %v12846
    %v12849 = vrot.slane %v12627, 2
    %v12850 = vsel %vm2036, %v12849, %v12848
    %v12851 = vrot.slane %v12628, 1
    %v12852 = vsel %vm12064, %v12851, %v12850
    %v12853 = vrot.slane %v12028, 7
    %v12854 = vsel %vm12049, %v12853, %v12809
    %v12855 = vrot.slane %v12029, 6
    %v12856 = vsel %vm2032, %v12855, %v12854
    %v12857 = vrot.slane %v12030, 5
    %v12858 = vsel %vm12054, %v12857, %v12856
    %v12859 = vrot.slane %v12031, 4
    %v12860 = vsel %vm2034, %v12859, %v12858
    %v12861 = vrot.slane %v12032, 3
    %v12862 = vsel %vm12059, %v12861, %v12860
    %v12863 = vrot.slane %v12033, 2
    %v12864 = vsel %vm2036, %v12863, %v12862
    %v12865 = vrot.slane %v12034, 1
    %v12866 = vsel %vm12064, %v12865, %v12864
    %v12867 = vrot.slane %v12036, 7
    %v12868 = vsel %vm12049, %v12867, %v12035
    %v12869 = vrot.slane %v12037, 6
    %v12870 = vsel %vm2032, %v12869, %v12868
    %v12871 = vrot.slane %v12038, 5
    %v12872 = vsel %vm12054, %v12871, %v12870
    %v12873 = vrot.slane %v12039, 4
    %v12874 = vsel %vm2034, %v12873, %v12872
    %v12875 = vrot.slane %v12040, 3
    %v12876 = vsel %vm12059, %v12875, %v12874
    %v12877 = vrot.slane %v12041, 2
    %v12878 = vsel %vm2036, %v12877, %v12876
    %v12879 = vrot.slane %v12042, 1
    %v12880 = vsel %vm12064, %v12879, %v12878
    %v12881 = vrot.slane %v12044, 7
    %v12882 = vsel %vm12049, %v12881, %v12043
    %v12883 = vrot.slane %v12045, 6
    %v12884 = vsel %vm2032, %v12883, %v12882
    %v12885 = vrot.slane %v12046, 5
    %v12886 = vsel %vm12054, %v12885, %v12884
    %v12887 = vrot.slane %v12047, 4
    %v12888 = vsel %vm2034, %v12887, %v12886
    %v12889 = vrot.slane %v12630, 3
    %v12890 = vsel %vm12059, %v12889, %v12888
    %v12891 = vrot.slane %v12631, 2
    %v12892 = vsel %vm2036, %v12891, %v12890
    %v12893 = vrot.slane %v12632, 1
    %v12894 = vsel %vm12064, %v12893, %v12892
    %v12895 = vrot.slane %v12810, 7
    %v12896 = vsel %vm12049, %v12895, %v12633
    %v12897 = vpack.c.b16 %v12838, %v12824
    %v12898 = vpack.c.b16 %v12866, %v12852
    %v12899 = vpack.c.b16 %v12894, %v12880
    %v12900 = vpack.c.b16 %v12896, %v12896
    %v12902 = vsel %vm12142, %v12897, 0
    %v12905 = vsel %vm12142, %v12898, 0
    %v12908 = vsel %vm12142, %v12899, 0
    %v12911 = vsel %vm12142, %v12900, 0
    %12913 = vmatprep.subr.bf16.mxu0 0
    %12914 = vmatpush1.bf16.msra.mxu0 %v11878
    %12915 = vmatprep.subr.bf16.mxu0 0
    %12916 = vmatpush1.bf16.msra.mxu0 %v11879
    %12917 = vmatprep.subr.bf16.mxu0 0
    %12918 = vmatpush1.bf16.msra.mxu0 0
    %12919 = vmatprep.subr.bf16.mxu0 0
    %12920 = vmatpush1.bf16.msra.mxu0 0
    %12921 = vmatprep.subr.bf16.mxu0 0
    %12922 = vmatpush1.bf16.msra.mxu0 0
    %12923 = vmatprep.subr.bf16.mxu0 0
    %12924 = vmatpush1.bf16.msra.mxu0 0
    %12925 = vmatprep.subr.bf16.mxu0 0
    %12926 = vmatpush1.bf16.msra.mxu0 0
    %12927 = vmatprep.subr.bf16.mxu0 0
    %12928 = vmatpush1.bf16.msra.mxu0 0
    %12929 = vmatprep.subr.bf16.mxu0 0
    %12930 = vmatpush1.bf16.msra.mxu0 0
    %12931 = vmatprep.subr.bf16.mxu0 0
    %12932 = vmatpush1.bf16.msra.mxu0 0
    %12933 = vmatprep.subr.bf16.mxu0 0
    %12934 = vmatpush1.bf16.msra.mxu0 0
    %12935 = vmatprep.subr.bf16.mxu0 0
    %12936 = vmatpush1.bf16.msra.mxu0 0
    %12937 = vmatprep.subr.bf16.mxu0 0
    %12938 = vmatpush1.bf16.msra.mxu0 0
    %12939 = vmatprep.subr.bf16.mxu0 0
    %12940 = vmatpush1.bf16.msra.mxu0 0
    %12941 = vmatprep.subr.bf16.mxu0 0
    %12942 = vmatpush1.bf16.msra.mxu0 0
    %12943 = vmatprep.subr.bf16.mxu0 0
    %12944 = vmatpush1.bf16.msra.mxu0 0
    %12945 = vmatprep.mubr.bf16.mxu0 0
    %12946 = vmatmul.mubr.bf16.gmra.mrb[0].mxu0 %v12902
    %v12947 = vpop.f32.mrb[0].mxu0
    %v12948 = vadd.f32 0.0, %v12947
    %v12949 = vpop.f32.mrb[0].mxu0
    %v12950 = vpop.f32.mrb[0].mxu0
    %v12951 = vadd.f32 0.0, %v12950
    %v12952 = vpop.f32.mrb[0].mxu0
    %12953 = vmatprep.mubr.bf16.mxu0 0
    %12954 = vmatmul.mubr.bf16.gmra.mrb[0].mxu0 %v12905
    %v12955 = vpop.f32.mrb[0].mxu0
    %v12956 = vadd.f32 0.0, %v12955
    %v12957 = vpop.f32.mrb[0].mxu0
    %v12958 = vpop.f32.mrb[0].mxu0
    %v12959 = vadd.f32 0.0, %v12958
    %v12960 = vpop.f32.mrb[0].mxu0
    %12961 = vmatprep.mubr.bf16.mxu0 0
    %12962 = vmatmul.mubr.bf16.gmra.mrb[0].mxu0 %v12908
    %v12963 = vpop.f32.mrb[0].mxu0
    %v12964 = vadd.f32 0.0, %v12963
    %v12965 = vpop.f32.mrb[0].mxu0
    %v12966 = vpop.f32.mrb[0].mxu0
    %v12967 = vadd.f32 0.0, %v12966
    %v12968 = vpop.f32.mrb[0].mxu0
    %12969 = vmatprep.mubr.bf16.mxu0 0
    %12970 = vmatmul.mubr.bf16.gmra.mrb[0].mxu0 %v12911
    %v12971 = vpop.f32.mrb[0].mxu0
    %v12972 = vpop.f32.mrb[0].mxu0
    %v12973 = vpop.f32.mrb[0].mxu0
    %v12974 = vpop.f32.mrb[0].mxu0
    %12975 = vdwg.mxu0
    %v12976 = vadd.f32 %v12799, %v12948
    %v12977 = vadd.f32 %v12800, %v12951
    %v12978 = vadd.f32 %v12801, %v12956
    %v12979 = vadd.f32 %v12802, %v12959
    %v12980 = vadd.f32 %v12803, %v12964
    %v12981 = vadd.f32 %v12804, %v12967
    %v12982 = vpack.c.bf16 %v11777, %v11777
    %v12983 = vpack.c.bf16 %v11826, %v11826
    %v12986 = vunpack.c.l.b16 %v12982
    %v12987 = vunpack.c.l.b16 %v12983
    %v12988 = vrot.slane %v12005, 7
    %v12989 = vsel %vm12049, %v12988, %v12004
    %v12990 = vrot.slane %v12006, 6
    %v12991 = vsel %vm2032, %v12990, %v12989
    %v12992 = vrot.slane %v12007, 5
    %v12993 = vsel %vm12054, %v12992, %v12991
    %v12994 = vrot.slane %v12424, 4
    %v12995 = vsel %vm2034, %v12994, %v12993
    %v12996 = vrot.slane %v12009, 3
    %v12997 = vsel %vm12059, %v12996, %v12995
    %v12998 = vrot.slane %v12010, 2
    %v12999 = vsel %vm2036, %v12998, %v12997
    %v13000 = vrot.slane %v12011, 1
    %v13001 = vsel %vm12064, %v13000, %v12999
    %v13002 = vrot.slane %v12425, 7
    %v13003 = vsel %vm12049, %v13002, %v12012
    %v13004 = vrot.slane %v12014, 6
    %v13005 = vsel %vm2032, %v13004, %v13003
    %v13006 = vrot.slane %v12015, 5
    %v13007 = vsel %vm12054, %v13006, %v13005
    %v13008 = vrot.slane %v12016, 4
    %v13009 = vsel %vm2034, %v13008, %v13007
    %v13010 = vrot.slane %v12017, 3
    %v13011 = vsel %vm12059, %v13010, %v13009
    %v13012 = vrot.slane %v12426, 2
    %v13013 = vsel %vm2036, %v13012, %v13011
    %v13014 = vrot.slane %v12019, 1
    %v13015 = vsel %vm12064, %v13014, %v13013
    %v13016 = vrot.slane %v12021, 7
    %v13017 = vsel %vm12049, %v13016, %v12020
    %v13018 = vrot.slane %v12022, 6
    %v13019 = vsel %vm2032, %v13018, %v13017
    %v13020 = vrot.slane %v12427, 5
    %v13021 = vsel %vm12054, %v13020, %v13019
    %v13022 = vrot.slane %v12626, 4
    %v13023 = vsel %vm2034, %v13022, %v13021
    %v13024 = vrot.slane %v12627, 3
    %v13025 = vsel %vm12059, %v13024, %v13023
    %v13026 = vrot.slane %v12628, 2
    %v13027 = vsel %vm2036, %v13026, %v13025
    %v13028 = vrot.slane %v12809, 1
    %v13029 = vsel %vm12064, %v13028, %v13027
    %v13030 = vrot.slane %v12029, 7
    %v13031 = vsel %vm12049, %v13030, %v12986
    %v13032 = vrot.slane %v12030, 6
    %v13033 = vsel %vm2032, %v13032, %v13031
    %v13034 = vrot.slane %v12031, 5
    %v13035 = vsel %vm12054, %v13034, %v13033
    %v13036 = vrot.slane %v12032, 4
    %v13037 = vsel %vm2034, %v13036, %v13035
    %v13038 = vrot.slane %v12429, 3
    %v13039 = vsel %vm12059, %v13038, %v13037
    %v13040 = vrot.slane %v12034, 2
    %v13041 = vsel %vm2036, %v13040, %v13039
    %v13042 = vrot.slane %v12035, 1
    %v13043 = vsel %vm12064, %v13042, %v13041
    %v13044 = vrot.slane %v12037, 7
    %v13045 = vsel %vm12049, %v13044, %v12036
    %v13046 = vrot.slane %v12430, 6
    %v13047 = vsel %vm2032, %v13046, %v13045
    %v13048 = vrot.slane %v12039, 5
    %v13049 = vsel %vm12054, %v13048, %v13047
    %v13050 = vrot.slane %v12040, 4
    %v13051 = vsel %vm2034, %v13050, %v13049
    %v13052 = vrot.slane %v12041, 3
    %v13053 = vsel %vm12059, %v13052, %v13051
    %v13054 = vrot.slane %v12042, 2
    %v13055 = vsel %vm2036, %v13054, %v13053
    %v13056 = vrot.slane %v12431, 1
    %v13057 = vsel %vm12064, %v13056, %v13055
    %v13058 = vrot.slane %v12045, 7
    %v13059 = vsel %vm12049, %v13058, %v12044
    %v13060 = vrot.slane %v12046, 6
    %v13061 = vsel %vm2032, %v13060, %v13059
    %v13062 = vrot.slane %v12047, 5
    %v13063 = vsel %vm12054, %v13062, %v13061
    %v13064 = vrot.slane %v12432, 4
    %v13065 = vsel %vm2034, %v13064, %v13063
    %v13066 = vrot.slane %v12631, 3
    %v13067 = vsel %vm12059, %v13066, %v13065
    %v13068 = vrot.slane %v12632, 2
    %v13069 = vsel %vm2036, %v13068, %v13067
    %v13070 = vrot.slane %v12633, 1
    %v13071 = vsel %vm12064, %v13070, %v13069
    %v13072 = vrot.slane %v12987, 7
    %v13073 = vsel %vm12049, %v13072, %v12810
    %v13074 = vpack.c.b16 %v13015, %v13001
    %v13075 = vpack.c.b16 %v13043, %v13029
    %v13076 = vpack.c.b16 %v13071, %v13057
    %v13077 = vpack.c.b16 %v13073, %v13073
    %v13079 = vsel %vm12142, %v13074, 0
    %v13082 = vsel %vm12142, %v13075, 0
    %v13085 = vsel %vm12142, %v13076, 0
    %v13088 = vsel %vm12142, %v13077, 0
    %13090 = vmatprep.subr.bf16.mxu0 0
    %13091 = vmatpush1.bf16.msra.mxu0 %v11880
    %13092 = vmatprep.subr.bf16.mxu0 0
    %13093 = vmatpush1.bf16.msra.mxu0 %v11881
    %13094 = vmatprep.subr.bf16.mxu0 0
    %13095 = vmatpush1.bf16.msra.mxu0 0
    %13096 = vmatprep.subr.bf16.mxu0 0
    %13097 = vmatpush1.bf16.msra.mxu0 0
    %13098 = vmatprep.subr.bf16.mxu0 0
    %13099 = vmatpush1.bf16.msra.mxu0 0
    %13100 = vmatprep.subr.bf16.mxu0 0
    %13101 = vmatpush1.bf16.msra.mxu0 0
    %13102 = vmatprep.subr.bf16.mxu0 0
    %13103 = vmatpush1.bf16.msra.mxu0 0
    %13104 = vmatprep.subr.bf16.mxu0 0
    %13105 = vmatpush1.bf16.msra.mxu0 0
    %13106 = vmatprep.subr.bf16.mxu0 0
    %13107 = vmatpush1.bf16.msra.mxu0 0
    %13108 = vmatprep.subr.bf16.mxu0 0
    %13109 = vmatpush1.bf16.msra.mxu0 0
    %13110 = vmatprep.subr.bf16.mxu0 0
    %13111 = vmatpush1.bf16.msra.mxu0 0
    %13112 = vmatprep.subr.bf16.mxu0 0
    %13113 = vmatpush1.bf16.msra.mxu0 0
    %13114 = vmatprep.subr.bf16.mxu0 0
    %13115 = vmatpush1.bf16.msra.mxu0 0
    %13116 = vmatprep.subr.bf16.mxu0 0
    %13117 = vmatpush1.bf16.msra.mxu0 0
    %13118 = vmatprep.subr.bf16.mxu0 0
    %13119 = vmatpush1.bf16.msra.mxu0 0
    %13120 = vmatprep.subr.bf16.mxu0 0
    %13121 = vmatpush1.bf16.msra.mxu0 0
    %13122 = vmatprep.mubr.bf16.mxu0 0
    %13123 = vmatmul.mubr.bf16.gmra.mrb[0].mxu0 %v13079
    %v13124 = vpop.f32.mrb[0].mxu0
    %v13125 = vadd.f32 0.0, %v13124
    %v13126 = vpop.f32.mrb[0].mxu0
    %v13127 = vpop.f32.mrb[0].mxu0
    %v13128 = vadd.f32 0.0, %v13127
    %v13129 = vpop.f32.mrb[0].mxu0
    %13130 = vmatprep.mubr.bf16.mxu0 0
    %13131 = vmatmul.mubr.bf16.gmra.mrb[0].mxu0 %v13082
    %v13132 = vpop.f32.mrb[0].mxu0
    %v13133 = vadd.f32 0.0, %v13132
    %v13134 = vpop.f32.mrb[0].mxu0
    %v13135 = vpop.f32.mrb[0].mxu0
    %v13136 = vadd.f32 0.0, %v13135
    %v13137 = vpop.f32.mrb[0].mxu0
    %13138 = vmatprep.mubr.bf16.mxu0 0
    %13139 = vmatmul.mubr.bf16.gmra.mrb[0].mxu0 %v13085
    %v13140 = vpop.f32.mrb[0].mxu0
    %v13141 = vadd.f32 0.0, %v13140
    %v13142 = vpop.f32.mrb[0].mxu0
    %v13143 = vpop.f32.mrb[0].mxu0
    %v13144 = vadd.f32 0.0, %v13143
    %v13145 = vpop.f32.mrb[0].mxu0
    %13146 = vmatprep.mubr.bf16.mxu0 0
    %13147 = vmatmul.mubr.bf16.gmra.mrb[0].mxu0 %v13088
    %v13148 = vpop.f32.mrb[0].mxu0
    %v13149 = vpop.f32.mrb[0].mxu0
    %v13150 = vpop.f32.mrb[0].mxu0
    %v13151 = vpop.f32.mrb[0].mxu0
    %13152 = vdwg.mxu0
    %v13153 = vadd.f32 %v12976, %v13125
    %v13154 = vadd.f32 %v12977, %v13128
    %v13155 = vadd.f32 %v12978, %v13133
    %v13156 = vadd.f32 %v12979, %v13136
    %v13157 = vadd.f32 %v12980, %v13141
    %v13158 = vadd.f32 %v12981, %v13144
    %v13159 = vpack.c.bf16 %v11778, %v11778
    %v13160 = vpack.c.bf16 %v11779, %v11779
    %v13161 = vpack.c.bf16 %v11780, %v11780
    %v13162 = vpack.c.bf16 %v11781, %v11781
    %v13163 = vpack.c.bf16 %v11782, %v11782
    %v13164 = vpack.c.bf16 %v11827, %v11827
    %v13165 = vpack.c.bf16 %v11828, %v11828
    %v13166 = vpack.c.bf16 %v11829, %v11829
    %v13167 = vpack.c.bf16 %v11830, %v11830
    %v13168 = vpack.c.bf16 %v11831, %v11831
    %v13179 = vunpack.c.l.b16 %v13159
    %v13180 = vunpack.c.l.b16 %v13160
    %v13181 = vunpack.c.l.b16 %v13161
    %v13182 = vunpack.c.l.b16 %v13162
    %v13183 = vunpack.c.l.b16 %v13163
    %v13184 = vunpack.c.l.b16 %v13164
    %v13185 = vunpack.c.l.b16 %v13165
    %v13186 = vunpack.c.l.b16 %v13166
    %v13187 = vunpack.c.l.b16 %v13167
    %v13188 = vunpack.c.l.b16 %v13168
    %v13189 = vrot.slane %v12008, 7
    %v13190 = vsel %vm12049, %v13189, %v12230
    %v13191 = vsel %vm2032, %v12449, %v13190
    %v13192 = vsel %vm12054, %v12451, %v13191
    %v13193 = vsel %vm2034, %v12453, %v13192
    %v13194 = vrot.slane %v12231, 3
    %v13195 = vsel %vm12059, %v13194, %v13193
    %v13196 = vrot.slane %v12013, 2
    %v13197 = vsel %vm2036, %v13196, %v13195
    %v13198 = vsel %vm12064, %v12459, %v13197
    %v13199 = vrot.slane %v12232, 6
    %v13200 = vsel %vm2032, %v13199, %v12462
    %v13201 = vrot.slane %v12018, 5
    %v13202 = vsel %vm12054, %v13201, %v13200
    %v13203 = vsel %vm2034, %v12467, %v13202
    %v13204 = vsel %vm12059, %v12469, %v13203
    %v13205 = vsel %vm2036, %v12471, %v13204
    %v13206 = vrot.slane %v12624, 1
    %v13207 = vsel %vm12064, %v13206, %v13205
    %v13208 = vrot.slane %v12626, 7
    %v13209 = vsel %vm12049, %v13208, %v12625
    %v13210 = vrot.slane %v12627, 6
    %v13211 = vsel %vm2032, %v13210, %v13209
    %v13212 = vrot.slane %v12628, 5
    %v13213 = vsel %vm12054, %v13212, %v13211
    %v13214 = vrot.slane %v13179, 4
    %v13215 = vsel %vm2034, %v13214, %v13213
    %v13216 = vrot.slane %v13180, 3
    %v13217 = vsel %vm12059, %v13216, %v13215
    %v13218 = vrot.slane %v13181, 2
    %v13219 = vsel %vm2036, %v13218, %v13217
    %v13220 = vrot.slane %v13182, 1
    %v13221 = vsel %vm12064, %v13220, %v13219
    %v13222 = vrot.slane %v12235, 7
    %v13223 = vsel %vm12049, %v13222, %v13183
    %v13224 = vrot.slane %v12033, 6
    %v13225 = vsel %vm2032, %v13224, %v13223
    %v13226 = vsel %vm12054, %v12493, %v13225
    %v13227 = vsel %vm2034, %v12495, %v13226
    %v13228 = vsel %vm12059, %v12497, %v13227
    %v13229 = vrot.slane %v12236, 2
    %v13230 = vsel %vm2036, %v13229, %v13228
    %v13231 = vrot.slane %v12038, 1
    %v13232 = vsel %vm12064, %v13231, %v13230
    %v13233 = vrot.slane %v12237, 5
    %v13234 = vsel %vm12054, %v13233, %v12506
    %v13235 = vrot.slane %v12043, 4
    %v13236 = vsel %vm2034, %v13235, %v13234
    %v13237 = vsel %vm12059, %v12511, %v13236
    %v13238 = vsel %vm2036, %v12513, %v13237
    %v13239 = vsel %vm12064, %v12515, %v13238
    %v13240 = vrot.slane %v12630, 7
    %v13241 = vsel %vm12049, %v13240, %v12629
    %v13242 = vrot.slane %v12631, 6
    %v13243 = vsel %vm2032, %v13242, %v13241
    %v13244 = vrot.slane %v12632, 5
    %v13245 = vsel %vm12054, %v13244, %v13243
    %v13246 = vrot.slane %v12633, 4
    %v13247 = vsel %vm2034, %v13246, %v13245
    %v13248 = vrot.slane %v13184, 3
    %v13249 = vsel %vm12059, %v13248, %v13247
    %v13250 = vrot.slane %v13185, 2
    %v13251 = vsel %vm2036, %v13250, %v13249
    %v13252 = vrot.slane %v13186, 1
    %v13253 = vsel %vm12064, %v13252, %v13251
    %v13254 = vrot.slane %v13188, 7
    %v13255 = vsel %vm12049, %v13254, %v13187
    %v13256 = vpack.c.b16 %v13207, %v13198
    %v13257 = vpack.c.b16 %v13232, %v13221
    %v13258 = vpack.c.b16 %v13253, %v13239
    %v13259 = vpack.c.b16 %v13255, %v13255
    %v13261 = vsel %vm12142, %v13256, 0
    %v13264 = vsel %vm12142, %v13257, 0
    %v13267 = vsel %vm12142, %v13258, 0
    %v13270 = vsel %vm12142, %v13259, 0
    %13272 = vmatprep.subr.bf16.mxu0 0
    %13273 = vmatpush1.bf16.msra.mxu0 %v11882
    %13274 = vmatprep.subr.bf16.mxu0 0
    %13275 = vmatpush1.bf16.msra.mxu0 %v11883
    %13276 = vmatprep.subr.bf16.mxu0 0
    %13277 = vmatpush1.bf16.msra.mxu0 0
    %13278 = vmatprep.subr.bf16.mxu0 0
    %13279 = vmatpush1.bf16.msra.mxu0 0
    %13280 = vmatprep.subr.bf16.mxu0 0
    %13281 = vmatpush1.bf16.msra.mxu0 0
    %13282 = vmatprep.subr.bf16.mxu0 0
    %13283 = vmatpush1.bf16.msra.mxu0 0
    %13284 = vmatprep.subr.bf16.mxu0 0
    %13285 = vmatpush1.bf16.msra.mxu0 0
    %13286 = vmatprep.subr.bf16.mxu0 0
    %13287 = vmatpush1.bf16.msra.mxu0 0
    %13288 = vmatprep.subr.bf16.mxu0 0
    %13289 = vmatpush1.bf16.msra.mxu0 0
    %13290 = vmatprep.subr.bf16.mxu0 0
    %13291 = vmatpush1.bf16.msra.mxu0 0
    %13292 = vmatprep.subr.bf16.mxu0 0
    %13293 = vmatpush1.bf16.msra.mxu0 0
    %13294 = vmatprep.subr.bf16.mxu0 0
    %13295 = vmatpush1.bf16.msra.mxu0 0
    %13296 = vmatprep.subr.bf16.mxu0 0
    %13297 = vmatpush1.bf16.msra.mxu0 0
    %13298 = vmatprep.subr.bf16.mxu0 0
    %13299 = vmatpush1.bf16.msra.mxu0 0
    %13300 = vmatprep.subr.bf16.mxu0 0
    %13301 = vmatpush1.bf16.msra.mxu0 0
    %13302 = vmatprep.subr.bf16.mxu0 0
    %13303 = vmatpush1.bf16.msra.mxu0 0
    %13304 = vmatprep.mubr.bf16.mxu0 0
    %13305 = vmatmul.mubr.bf16.gmra.mrb[0].mxu0 %v13261
    %v13306 = vpop.f32.mrb[0].mxu0
    %v13307 = vadd.f32 0.0, %v13306
    %v13308 = vpop.f32.mrb[0].mxu0
    %v13309 = vpop.f32.mrb[0].mxu0
    %v13310 = vadd.f32 0.0, %v13309
    %v13311 = vpop.f32.mrb[0].mxu0
    %13312 = vmatprep.mubr.bf16.mxu0 0
    %13313 = vmatmul.mubr.bf16.gmra.mrb[0].mxu0 %v13264
    %v13314 = vpop.f32.mrb[0].mxu0
    %v13315 = vadd.f32 0.0, %v13314
    %v13316 = vpop.f32.mrb[0].mxu0
    %v13317 = vpop.f32.mrb[0].mxu0
    %v13318 = vadd.f32 0.0, %v13317
    %v13319 = vpop.f32.mrb[0].mxu0
    %13320 = vmatprep.mubr.bf16.mxu0 0
    %13321 = vmatmul.mubr.bf16.gmra.mrb[0].mxu0 %v13267
    %v13322 = vpop.f32.mrb[0].mxu0
    %v13323 = vadd.f32 0.0, %v13322
    %v13324 = vpop.f32.mrb[0].mxu0
    %v13325 = vpop.f32.mrb[0].mxu0
    %v13326 = vadd.f32 0.0, %v13325
    %v13327 = vpop.f32.mrb[0].mxu0
    %13328 = vmatprep.mubr.bf16.mxu0 0
    %13329 = vmatmul.mubr.bf16.gmra.mrb[0].mxu0 %v13270
    %v13330 = vpop.f32.mrb[0].mxu0
    %v13331 = vpop.f32.mrb[0].mxu0
    %v13332 = vpop.f32.mrb[0].mxu0
    %v13333 = vpop.f32.mrb[0].mxu0
    %13334 = vdwg.mxu0
    %v13335 = vadd.f32 %v13153, %v13307
    %v13336 = vadd.f32 %v13154, %v13310
    %v13337 = vadd.f32 %v13155, %v13315
    %v13338 = vadd.f32 %v13156, %v13318
    %v13339 = vadd.f32 %v13157, %v13323
    %v13340 = vadd.f32 %v13158, %v13326
    %v13341 = vpack.c.bf16 %v11783, %v11783
    %v13342 = vpack.c.bf16 %v11832, %v11832
    %v13345 = vunpack.c.l.b16 %v13341
    %v13346 = vunpack.c.l.b16 %v13342
    %v13347 = vrot.slane %v12009, 7
    %v13348 = vsel %vm12049, %v13347, %v12008
    %v13349 = vrot.slane %v12010, 6
    %v13350 = vsel %vm2032, %v13349, %v13348
    %v13351 = vrot.slane %v12011, 5
    %v13352 = vsel %vm12054, %v13351, %v13350
    %v13353 = vrot.slane %v12012, 4
    %v13354 = vsel %vm2034, %v13353, %v13352
    %v13355 = vrot.slane %v12013, 3
    %v13356 = vsel %vm12059, %v13355, %v13354
    %v13357 = vrot.slane %v12014, 2
    %v13358 = vsel %vm2036, %v13357, %v13356
    %v13359 = vrot.slane %v12015, 1
    %v13360 = vsel %vm12064, %v13359, %v13358
    %v13361 = vrot.slane %v12017, 7
    %v13362 = vsel %vm12049, %v13361, %v12016
    %v13363 = vrot.slane %v12018, 6
    %v13364 = vsel %vm2032, %v13363, %v13362
    %v13365 = vrot.slane %v12019, 5
    %v13366 = vsel %vm12054, %v13365, %v13364
    %v13367 = vrot.slane %v12020, 4
    %v13368 = vsel %vm2034, %v13367, %v13366
    %v13369 = vrot.slane %v12021, 3
    %v13370 = vsel %vm12059, %v13369, %v13368
    %v13371 = vrot.slane %v12022, 2
    %v13372 = vsel %vm2036, %v13371, %v13370
    %v13373 = vrot.slane %v12625, 1
    %v13374 = vsel %vm12064, %v13373, %v13372
    %v13375 = vrot.slane %v12627, 7
    %v13376 = vsel %vm12049, %v13375, %v12626
    %v13377 = vrot.slane %v12628, 6
    %v13378 = vsel %vm2032, %v13377, %v13376
    %v13379 = vrot.slane %v12809, 5
    %v13380 = vsel %vm12054, %v13379, %v13378
    %v13381 = vrot.slane %v13180, 4
    %v13382 = vsel %vm2034, %v13381, %v13380
    %v13383 = vrot.slane %v13181, 3
    %v13384 = vsel %vm12059, %v13383, %v13382
    %v13385 = vrot.slane %v13182, 2
    %v13386 = vsel %vm2036, %v13385, %v13384
    %v13387 = vrot.slane %v13183, 1
    %v13388 = vsel %vm12064, %v13387, %v13386
    %v13389 = vrot.slane %v12033, 7
    %v13390 = vsel %vm12049, %v13389, %v13345
    %v13391 = vrot.slane %v12034, 6
    %v13392 = vsel %vm2032, %v13391, %v13390
    %v13393 = vrot.slane %v12035, 5
    %v13394 = vsel %vm12054, %v13393, %v13392
    %v13395 = vrot.slane %v12036, 4
    %v13396 = vsel %vm2034, %v13395, %v13394
    %v13397 = vrot.slane %v12037, 3
    %v13398 = vsel %vm12059, %v13397, %v13396
    %v13399 = vrot.slane %v12038, 2
    %v13400 = vsel %vm2036, %v13399, %v13398
    %v13401 = vrot.slane %v12039, 1
    %v13402 = vsel %vm12064, %v13401, %v13400
    %v13403 = vrot.slane %v12041, 7
    %v13404 = vsel %vm12049, %v13403, %v12040
    %v13405 = vrot.slane %v12042, 6
    %v13406 = vsel %vm2032, %v13405, %v13404
    %v13407 = vrot.slane %v12043, 5
    %v13408 = vsel %vm12054, %v13407, %v13406
    %v13409 = vrot.slane %v12044, 4
    %v13410 = vsel %vm2034, %v13409, %v13408
    %v13411 = vrot.slane %v12045, 3
    %v13412 = vsel %vm12059, %v13411, %v13410
    %v13413 = vrot.slane %v12046, 2
    %v13414 = vsel %vm2036, %v13413, %v13412
    %v13415 = vrot.slane %v12047, 1
    %v13416 = vsel %vm12064, %v13415, %v13414
    %v13417 = vrot.slane %v12631, 7
    %v13418 = vsel %vm12049, %v13417, %v12630
    %v13419 = vrot.slane %v12632, 6
    %v13420 = vsel %vm2032, %v13419, %v13418
    %v13421 = vrot.slane %v12633, 5
    %v13422 = vsel %vm12054, %v13421, %v13420
    %v13423 = vrot.slane %v12810, 4
    %v13424 = vsel %vm2034, %v13423, %v13422
    %v13425 = vrot.slane %v13185, 3
    %v13426 = vsel %vm12059, %v13425, %v13424
    %v13427 = vrot.slane %v13186, 2
    %v13428 = vsel %vm2036, %v13427, %v13426
    %v13429 = vrot.slane %v13187, 1
    %v13430 = vsel %vm12064, %v13429, %v13428
    %v13431 = vrot.slane %v13346, 7
    %v13432 = vsel %vm12049, %v13431, %v13188
    %v13433 = vpack.c.b16 %v13374, %v13360
    %v13434 = vpack.c.b16 %v13402, %v13388
    %v13435 = vpack.c.b16 %v13430, %v13416
    %v13436 = vpack.c.b16 %v13432, %v13432
    %v13438 = vsel %vm12142, %v13433, 0
    %v13441 = vsel %vm12142, %v13434, 0
    %v13444 = vsel %vm12142, %v13435, 0
    %v13447 = vsel %vm12142, %v13436, 0
    %13449 = vmatprep.subr.bf16.mxu0 0
    %13450 = vmatpush1.bf16.msra.mxu0 %v11884
    %13451 = vmatprep.subr.bf16.mxu0 0
    %13452 = vmatpush1.bf16.msra.mxu0 %v11885
    %13453 = vmatprep.subr.bf16.mxu0 0
    %13454 = vmatpush1.bf16.msra.mxu0 0
    %13455 = vmatprep.subr.bf16.mxu0 0
    %13456 = vmatpush1.bf16.msra.mxu0 0
    %13457 = vmatprep.subr.bf16.mxu0 0
    %13458 = vmatpush1.bf16.msra.mxu0 0
    %13459 = vmatprep.subr.bf16.mxu0 0
    %13460 = vmatpush1.bf16.msra.mxu0 0
    %13461 = vmatprep.subr.bf16.mxu0 0
    %13462 = vmatpush1.bf16.msra.mxu0 0
    %13463 = vmatprep.subr.bf16.mxu0 0
    %13464 = vmatpush1.bf16.msra.mxu0 0
    %13465 = vmatprep.subr.bf16.mxu0 0
    %13466 = vmatpush1.bf16.msra.mxu0 0
    %13467 = vmatprep.subr.bf16.mxu0 0
    %13468 = vmatpush1.bf16.msra.mxu0 0
    %13469 = vmatprep.subr.bf16.mxu0 0
    %13470 = vmatpush1.bf16.msra.mxu0 0
    %13471 = vmatprep.subr.bf16.mxu0 0
    %13472 = vmatpush1.bf16.msra.mxu0 0
    %13473 = vmatprep.subr.bf16.mxu0 0
    %13474 = vmatpush1.bf16.msra.mxu0 0
    %13475 = vmatprep.subr.bf16.mxu0 0
    %13476 = vmatpush1.bf16.msra.mxu0 0
    %13477 = vmatprep.subr.bf16.mxu0 0
    %13478 = vmatpush1.bf16.msra.mxu0 0
    %13479 = vmatprep.subr.bf16.mxu0 0
    %13480 = vmatpush1.bf16.msra.mxu0 0
    %13481 = vmatprep.mubr.bf16.mxu0 0
    %13482 = vmatmul.mubr.bf16.gmra.mrb[0].mxu0 %v13438
    %v13483 = vpop.f32.mrb[0].mxu0
    %v13484 = vadd.f32 0.0, %v13483
    %v13485 = vpop.f32.mrb[0].mxu0
    %v13486 = vpop.f32.mrb[0].mxu0
    %v13487 = vadd.f32 0.0, %v13486
    %v13488 = vpop.f32.mrb[0].mxu0
    %13489 = vmatprep.mubr.bf16.mxu0 0
    %13490 = vmatmul.mubr.bf16.gmra.mrb[0].mxu0 %v13441
    %v13491 = vpop.f32.mrb[0].mxu0
    %v13492 = vadd.f32 0.0, %v13491
    %v13493 = vpop.f32.mrb[0].mxu0
    %v13494 = vpop.f32.mrb[0].mxu0
    %v13495 = vadd.f32 0.0, %v13494
    %v13496 = vpop.f32.mrb[0].mxu0
    %13497 = vmatprep.mubr.bf16.mxu0 0
    %13498 = vmatmul.mubr.bf16.gmra.mrb[0].mxu0 %v13444
    %v13499 = vpop.f32.mrb[0].mxu0
    %v13500 = vadd.f32 0.0, %v13499
    %v13501 = vpop.f32.mrb[0].mxu0
    %v13502 = vpop.f32.mrb[0].mxu0
    %v13503 = vadd.f32 0.0, %v13502
    %v13504 = vpop.f32.mrb[0].mxu0
    %13505 = vmatprep.mubr.bf16.mxu0 0
    %13506 = vmatmul.mubr.bf16.gmra.mrb[0].mxu0 %v13447
    %v13507 = vpop.f32.mrb[0].mxu0
    %v13508 = vpop.f32.mrb[0].mxu0
    %v13509 = vpop.f32.mrb[0].mxu0
    %v13510 = vpop.f32.mrb[0].mxu0
    %13511 = vdwg.mxu0
    %v13512 = vadd.f32 %v13335, %v13484
    %v13513 = vadd.f32 %v13336, %v13487
    %v13514 = vadd.f32 %v13337, %v13492
    %v13515 = vadd.f32 %v13338, %v13495
    %v13516 = vadd.f32 %v13339, %v13500
    %v13517 = vadd.f32 %v13340, %v13503
    %v13518 = vpack.c.bf16 %v11784, %v11784
    %v13519 = vpack.c.bf16 %v11833, %v11833
    %v13522 = vunpack.c.l.b16 %v13518
    %v13523 = vunpack.c.l.b16 %v13519
    %v13524 = vrot.slane %v12010, 7
    %v13525 = vsel %vm12049, %v13524, %v12009
    %v13526 = vrot.slane %v12011, 6
    %v13527 = vsel %vm2032, %v13526, %v13525
    %v13528 = vrot.slane %v12012, 5
    %v13529 = vsel %vm12054, %v13528, %v13527
    %v13530 = vrot.slane %v12425, 4
    %v13531 = vsel %vm2034, %v13530, %v13529
    %v13532 = vrot.slane %v12014, 3
    %v13533 = vsel %vm12059, %v13532, %v13531
    %v13534 = vrot.slane %v12015, 2
    %v13535 = vsel %vm2036, %v13534, %v13533
    %v13536 = vrot.slane %v12016, 1
    %v13537 = vsel %vm12064, %v13536, %v13535
    %v13538 = vrot.slane %v12426, 7
    %v13539 = vsel %vm12049, %v13538, %v12017
    %v13540 = vrot.slane %v12019, 6
    %v13541 = vsel %vm2032, %v13540, %v13539
    %v13542 = vrot.slane %v12020, 5
    %v13543 = vsel %vm12054, %v13542, %v13541
    %v13544 = vrot.slane %v12021, 4
    %v13545 = vsel %vm2034, %v13544, %v13543
    %v13546 = vrot.slane %v12022, 3
    %v13547 = vsel %vm12059, %v13546, %v13545
    %v13548 = vrot.slane %v12427, 2
    %v13549 = vsel %vm2036, %v13548, %v13547
    %v13550 = vrot.slane %v12626, 1
    %v13551 = vsel %vm12064, %v13550, %v13549
    %v13552 = vrot.slane %v12628, 7
    %v13553 = vsel %vm12049, %v13552, %v12627
    %v13554 = vrot.slane %v12809, 6
    %v13555 = vsel %vm2032, %v13554, %v13553
    %v13556 = vrot.slane %v12986, 5
    %v13557 = vsel %vm12054, %v13556, %v13555
    %v13558 = vrot.slane %v13181, 4
    %v13559 = vsel %vm2034, %v13558, %v13557
    %v13560 = vrot.slane %v13182, 3
    %v13561 = vsel %vm12059, %v13560, %v13559
    %v13562 = vrot.slane %v13183, 2
    %v13563 = vsel %vm2036, %v13562, %v13561
    %v13564 = vrot.slane %v13345, 1
    %v13565 = vsel %vm12064, %v13564, %v13563
    %v13566 = vrot.slane %v12034, 7
    %v13567 = vsel %vm12049, %v13566, %v13522
    %v13568 = vrot.slane %v12035, 6
    %v13569 = vsel %vm2032, %v13568, %v13567
    %v13570 = vrot.slane %v12036, 5
    %v13571 = vsel %vm12054, %v13570, %v13569
    %v13572 = vrot.slane %v12037, 4
    %v13573 = vsel %vm2034, %v13572, %v13571
    %v13574 = vrot.slane %v12430, 3
    %v13575 = vsel %vm12059, %v13574, %v13573
    %v13576 = vrot.slane %v12039, 2
    %v13577 = vsel %vm2036, %v13576, %v13575
    %v13578 = vrot.slane %v12040, 1
    %v13579 = vsel %vm12064, %v13578, %v13577
    %v13580 = vrot.slane %v12042, 7
    %v13581 = vsel %vm12049, %v13580, %v12041
    %v13582 = vrot.slane %v12431, 6
    %v13583 = vsel %vm2032, %v13582, %v13581
    %v13584 = vrot.slane %v12044, 5
    %v13585 = vsel %vm12054, %v13584, %v13583
    %v13586 = vrot.slane %v12045, 4
    %v13587 = vsel %vm2034, %v13586, %v13585
    %v13588 = vrot.slane %v12046, 3
    %v13589 = vsel %vm12059, %v13588, %v13587
    %v13590 = vrot.slane %v12047, 2
    %v13591 = vsel %vm2036, %v13590, %v13589
    %v13592 = vrot.slane %v12432, 1
    %v13593 = vsel %vm12064, %v13592, %v13591
    %v13594 = vrot.slane %v12632, 7
    %v13595 = vsel %vm12049, %v13594, %v12631
    %v13596 = vrot.slane %v12633, 6
    %v13597 = vsel %vm2032, %v13596, %v13595
    %v13598 = vrot.slane %v12810, 5
    %v13599 = vsel %vm12054, %v13598, %v13597
    %v13600 = vrot.slane %v12987, 4
    %v13601 = vsel %vm2034, %v13600, %v13599
    %v13602 = vrot.slane %v13186, 3
    %v13603 = vsel %vm12059, %v13602, %v13601
    %v13604 = vrot.slane %v13187, 2
    %v13605 = vsel %vm2036, %v13604, %v13603
    %v13606 = vrot.slane %v13188, 1
    %v13607 = vsel %vm12064, %v13606, %v13605
    %v13608 = vrot.slane %v13523, 7
    %v13609 = vsel %vm12049, %v13608, %v13346
    %v13610 = vpack.c.b16 %v13551, %v13537
    %v13611 = vpack.c.b16 %v13579, %v13565
    %v13612 = vpack.c.b16 %v13607, %v13593
    %v13613 = vpack.c.b16 %v13609, %v13609
    %v13615 = vsel %vm12142, %v13610, 0
    %v13618 = vsel %vm12142, %v13611, 0
    %v13621 = vsel %vm12142, %v13612, 0
    %v13624 = vsel %vm12142, %v13613, 0
    %13626 = vmatprep.subr.bf16.mxu0 0
    %13627 = vmatpush1.bf16.msra.mxu0 %v11886
    %13628 = vmatprep.subr.bf16.mxu0 0
    %13629 = vmatpush1.bf16.msra.mxu0 %v11887
    %13630 = vmatprep.subr.bf16.mxu0 0
    %13631 = vmatpush1.bf16.msra.mxu0 0
    %13632 = vmatprep.subr.bf16.mxu0 0
    %13633 = vmatpush1.bf16.msra.mxu0 0
    %13634 = vmatprep.subr.bf16.mxu0 0
    %13635 = vmatpush1.bf16.msra.mxu0 0
    %13636 = vmatprep.subr.bf16.mxu0 0
    %13637 = vmatpush1.bf16.msra.mxu0 0
    %13638 = vmatprep.subr.bf16.mxu0 0
    %13639 = vmatpush1.bf16.msra.mxu0 0
    %13640 = vmatprep.subr.bf16.mxu0 0
    %13641 = vmatpush1.bf16.msra.mxu0 0
    %13642 = vmatprep.subr.bf16.mxu0 0
    %13643 = vmatpush1.bf16.msra.mxu0 0
    %13644 = vmatprep.subr.bf16.mxu0 0
    %13645 = vmatpush1.bf16.msra.mxu0 0
    %13646 = vmatprep.subr.bf16.mxu0 0
    %13647 = vmatpush1.bf16.msra.mxu0 0
    %13648 = vmatprep.subr.bf16.mxu0 0
    %13649 = vmatpush1.bf16.msra.mxu0 0
    %13650 = vmatprep.subr.bf16.mxu0 0
    %13651 = vmatpush1.bf16.msra.mxu0 0
    %13652 = vmatprep.subr.bf16.mxu0 0
    %13653 = vmatpush1.bf16.msra.mxu0 0
    %13654 = vmatprep.subr.bf16.mxu0 0
    %13655 = vmatpush1.bf16.msra.mxu0 0
    %13656 = vmatprep.subr.bf16.mxu0 0
    %13657 = vmatpush1.bf16.msra.mxu0 0
    %13658 = vmatprep.mubr.bf16.mxu0 0
    %13659 = vmatmul.mubr.bf16.gmra.mrb[0].mxu0 %v13615
    %v13660 = vpop.f32.mrb[0].mxu0
    %v13661 = vadd.f32 0.0, %v13660
    %v13662 = vpop.f32.mrb[0].mxu0
    %v13663 = vpop.f32.mrb[0].mxu0
    %v13664 = vadd.f32 0.0, %v13663
    %v13665 = vpop.f32.mrb[0].mxu0
    %13666 = vmatprep.mubr.bf16.mxu0 0
    %13667 = vmatmul.mubr.bf16.gmra.mrb[0].mxu0 %v13618
    %v13668 = vpop.f32.mrb[0].mxu0
    %v13669 = vadd.f32 0.0, %v13668
    %v13670 = vpop.f32.mrb[0].mxu0
    %v13671 = vpop.f32.mrb[0].mxu0
    %v13672 = vadd.f32 0.0, %v13671
    %v13673 = vpop.f32.mrb[0].mxu0
    %13674 = vmatprep.mubr.bf16.mxu0 0
    %13675 = vmatmul.mubr.bf16.gmra.mrb[0].mxu0 %v13621
    %v13676 = vpop.f32.mrb[0].mxu0
    %v13677 = vadd.f32 0.0, %v13676
    %v13678 = vpop.f32.mrb[0].mxu0
    %v13679 = vpop.f32.mrb[0].mxu0
    %v13680 = vadd.f32 0.0, %v13679
    %v13681 = vpop.f32.mrb[0].mxu0
    %13682 = vmatprep.mubr.bf16.mxu0 0
    %13683 = vmatmul.mubr.bf16.gmra.mrb[0].mxu0 %v13624
    %v13684 = vpop.f32.mrb[0].mxu0
    %v13685 = vpop.f32.mrb[0].mxu0
    %v13686 = vpop.f32.mrb[0].mxu0
    %v13687 = vpop.f32.mrb[0].mxu0
    %13688 = vdwg.mxu0
    %v13689 = vadd.f32 %v13512, %v13661
    %v13690 = vadd.f32 %v13513, %v13664
    %v13691 = vadd.f32 %v13514, %v13669
    %v13692 = vadd.f32 %v13515, %v13672
    %v13693 = vadd.f32 %v13516, %v13677
    %v13694 = vadd.f32 %v13517, %v13680
    %v13695 = vld [vmem:[%s4] sm:$0x1]
    %v13697 = vlaneseq
    %v13698 = vshrl.u32 %v13697, 7
    %v13699 = vsub.s32 0, %v13698
    %v13700 = vrot.slane %v13695, %v13699
    %v13702 = vadd.f32 %v13689, %v13700
    %v13703 = vadd.f32 %v13690, %v13700
    %v13704 = vadd.f32 %v13691, %v13700
    %v13705 = vadd.f32 %v13692, %v13700
    %v13706 = vadd.f32 %v13693, %v13700
    %v13707 = vadd.f32 %v13694, %v13700
    %v13708 = vmax.f32 %v13702, 0.0
    %v13709 = vmax.f32 %v13703, 0.0
    %v13710 = vmax.f32 %v13704, 0.0
    %v13711 = vmax.f32 %v13705, 0.0
    %v13712 = vmax.f32 %v13706, 0.0
    %v13713 = vmax.f32 %v13707, 0.0
    %v13720 = vcombine.high %v13708, %v13708
    %v13722 = vunpack.c.l.s4 1966171168
    %v13723 = vunpack.c.0.s8 %v13722
    %v13724 = vlaneseq
    %v13725 = vshrl.u32 %v13724, 7
    %v13726 = vsub.s32 %v13723, %v13725
    %v13727 = vrot.slane %v13708, %v13726
    %v13729 = vunpack.c.l.s4 1966171168
    %v13730 = vunpack.c.0.s8 %v13729
    %v13731 = vlaneseq
    %v13732 = vshrl.u32 %v13731, 7
    %v13733 = vsub.s32 %v13730, %v13732
    %v13734 = vrot.slane %v13720, %v13733
    %v13735 = vcombine.high %v13727, %v13727
    %v13736 = vcombine.high %v13734, %v13734
    %v13738 = vunpack.c.l.s4 1966171168
    %v13739 = vunpack.c.0.s8 %v13738
    %v13740 = vlaneseq
    %v13741 = vshrl.u32 %v13740, 7
    %v13742 = vsub.s32 %v13739, %v13741
    %v13743 = vrot.slane %v13727, %v13742
    %v13745 = vunpack.c.l.s4 1966171168
    %v13746 = vunpack.c.0.s8 %v13745
    %v13747 = vlaneseq
    %v13748 = vshrl.u32 %v13747, 7
    %v13749 = vsub.s32 %v13746, %v13748
    %v13750 = vrot.slane %v13734, %v13749
    %v13752 = vunpack.c.l.s4 1966171168
    %v13753 = vunpack.c.0.s8 %v13752
    %v13754 = vlaneseq
    %v13755 = vshrl.u32 %v13754, 7
    %v13756 = vsub.s32 %v13753, %v13755
    %v13757 = vrot.slane %v13735, %v13756
    %v13759 = vunpack.c.l.s4 1966171168
    %v13760 = vunpack.c.0.s8 %v13759
    %v13761 = vlaneseq
    %v13762 = vshrl.u32 %v13761, 7
    %v13763 = vsub.s32 %v13760, %v13762
    %v13764 = vrot.slane %v13736, %v13763
    %v13765 = vcombine.high %v13743, %v13743
    %v13766 = vcombine.high %v13750, %v13750
    %v13767 = vcombine.high %v13757, %v13757
    %v13768 = vcombine.high %v13764, %v13764
    %v13769 = vcombine.high %v13709, %v13709
    %v13771 = vunpack.c.l.s4 1966171168
    %v13772 = vunpack.c.0.s8 %v13771
    %v13773 = vlaneseq
    %v13774 = vshrl.u32 %v13773, 7
    %v13775 = vsub.s32 %v13772, %v13774
    %v13776 = vrot.slane %v13709, %v13775
    %v13778 = vunpack.c.l.s4 1966171168
    %v13779 = vunpack.c.0.s8 %v13778
    %v13780 = vlaneseq
    %v13781 = vshrl.u32 %v13780, 7
    %v13782 = vsub.s32 %v13779, %v13781
    %v13783 = vrot.slane %v13769, %v13782
    %v13784 = vcombine.high %v13776, %v13776
    %v13785 = vcombine.high %v13783, %v13783
    %v13787 = vunpack.c.l.s4 1966171168
    %v13788 = vunpack.c.0.s8 %v13787
    %v13789 = vlaneseq
    %v13790 = vshrl.u32 %v13789, 7
    %v13791 = vsub.s32 %v13788, %v13790
    %v13792 = vrot.slane %v13776, %v13791
    %v13794 = vunpack.c.l.s4 1966171168
    %v13795 = vunpack.c.0.s8 %v13794
    %v13796 = vlaneseq
    %v13797 = vshrl.u32 %v13796, 7
    %v13798 = vsub.s32 %v13795, %v13797
    %v13799 = vrot.slane %v13783, %v13798
    %v13801 = vunpack.c.l.s4 1966171168
    %v13802 = vunpack.c.0.s8 %v13801
    %v13803 = vlaneseq
    %v13804 = vshrl.u32 %v13803, 7
    %v13805 = vsub.s32 %v13802, %v13804
    %v13806 = vrot.slane %v13784, %v13805
    %v13808 = vunpack.c.l.s4 1966171168
    %v13809 = vunpack.c.0.s8 %v13808
    %v13810 = vlaneseq
    %v13811 = vshrl.u32 %v13810, 7
    %v13812 = vsub.s32 %v13809, %v13811
    %v13813 = vrot.slane %v13785, %v13812
    %v13814 = vcombine.high %v13792, %v13792
    %v13815 = vcombine.high %v13806, %v13806
    %v13816 = vcombine.high %v13813, %v13813
    %v13818 = vunpack.c.l.s4 1966171168
    %v13819 = vunpack.c.0.s8 %v13818
    %v13820 = vlaneseq
    %v13821 = vshrl.u32 %v13820, 7
    %v13822 = vsub.s32 %v13819, %v13821
    %v13823 = vrot.slane %v13710, %v13822
    %v13824 = vcombine.high %v13823, %v13823
    %v13826 = vunpack.c.l.s4 1966171168
    %v13827 = vunpack.c.0.s8 %v13826
    %v13828 = vlaneseq
    %v13829 = vshrl.u32 %v13828, 7
    %v13830 = vsub.s32 %v13827, %v13829
    %v13831 = vrot.slane %v13823, %v13830
    %v13833 = vunpack.c.l.s4 1966171168
    %v13834 = vunpack.c.0.s8 %v13833
    %v13835 = vlaneseq
    %v13836 = vshrl.u32 %v13835, 7
    %v13837 = vsub.s32 %v13834, %v13836
    %v13838 = vrot.slane %v13824, %v13837
    %v13839 = vcombine.high %v13831, %v13831
    %v13840 = vcombine.high %v13711, %v13711
    %v13842 = vunpack.c.l.s4 1966171168
    %v13843 = vunpack.c.0.s8 %v13842
    %v13844 = vlaneseq
    %v13845 = vshrl.u32 %v13844, 7
    %v13846 = vsub.s32 %v13843, %v13845
    %v13847 = vrot.slane %v13711, %v13846
    %v13849 = vunpack.c.l.s4 1966171168
    %v13850 = vunpack.c.0.s8 %v13849
    %v13851 = vlaneseq
    %v13852 = vshrl.u32 %v13851, 7
    %v13853 = vsub.s32 %v13850, %v13852
    %v13854 = vrot.slane %v13840, %v13853
    %v13855 = vcombine.high %v13847, %v13847
    %v13856 = vcombine.high %v13854, %v13854
    %v13858 = vunpack.c.l.s4 1966171168
    %v13859 = vunpack.c.0.s8 %v13858
    %v13860 = vlaneseq
    %v13861 = vshrl.u32 %v13860, 7
    %v13862 = vsub.s32 %v13859, %v13861
    %v13863 = vrot.slane %v13847, %v13862
    %v13865 = vunpack.c.l.s4 1966171168
    %v13866 = vunpack.c.0.s8 %v13865
    %v13867 = vlaneseq
    %v13868 = vshrl.u32 %v13867, 7
    %v13869 = vsub.s32 %v13866, %v13868
    %v13870 = vrot.slane %v13854, %v13869
    %v13872 = vunpack.c.l.s4 1966171168
    %v13873 = vunpack.c.0.s8 %v13872
    %v13874 = vlaneseq
    %v13875 = vshrl.u32 %v13874, 7
    %v13876 = vsub.s32 %v13873, %v13875
    %v13877 = vrot.slane %v13855, %v13876
    %v13879 = vunpack.c.l.s4 1966171168
    %v13880 = vunpack.c.0.s8 %v13879
    %v13881 = vlaneseq
    %v13882 = vshrl.u32 %v13881, 7
    %v13883 = vsub.s32 %v13880, %v13882
    %v13884 = vrot.slane %v13856, %v13883
    %v13885 = vcombine.high %v13863, %v13863
    %v13886 = vcombine.high %v13870, %v13870
    %v13887 = vcombine.high %v13877, %v13877
    %v13888 = vcombine.high %v13884, %v13884
    %v13889 = vcombine.high %v13712, %v13712
    %v13891 = vunpack.c.l.s4 1966171168
    %v13892 = vunpack.c.0.s8 %v13891
    %v13893 = vlaneseq
    %v13894 = vshrl.u32 %v13893, 7
    %v13895 = vsub.s32 %v13892, %v13894
    %v13896 = vrot.slane %v13712, %v13895
    %v13898 = vunpack.c.l.s4 1966171168
    %v13899 = vunpack.c.0.s8 %v13898
    %v13900 = vlaneseq
    %v13901 = vshrl.u32 %v13900, 7
    %v13902 = vsub.s32 %v13899, %v13901
    %v13903 = vrot.slane %v13889, %v13902
    %v13904 = vcombine.high %v13896, %v13896
    %v13905 = vcombine.high %v13903, %v13903
    %v13907 = vunpack.c.l.s4 1966171168
    %v13908 = vunpack.c.0.s8 %v13907
    %v13909 = vlaneseq
    %v13910 = vshrl.u32 %v13909, 7
    %v13911 = vsub.s32 %v13908, %v13910
    %v13912 = vrot.slane %v13896, %v13911
    %v13914 = vunpack.c.l.s4 1966171168
    %v13915 = vunpack.c.0.s8 %v13914
    %v13916 = vlaneseq
    %v13917 = vshrl.u32 %v13916, 7
    %v13918 = vsub.s32 %v13915, %v13917
    %v13919 = vrot.slane %v13903, %v13918
    %v13921 = vunpack.c.l.s4 1966171168
    %v13922 = vunpack.c.0.s8 %v13921
    %v13923 = vlaneseq
    %v13924 = vshrl.u32 %v13923, 7
    %v13925 = vsub.s32 %v13922, %v13924
    %v13926 = vrot.slane %v13904, %v13925
    %v13928 = vunpack.c.l.s4 1966171168
    %v13929 = vunpack.c.0.s8 %v13928
    %v13930 = vlaneseq
    %v13931 = vshrl.u32 %v13930, 7
    %v13932 = vsub.s32 %v13929, %v13931
    %v13933 = vrot.slane %v13905, %v13932
    %v13934 = vcombine.high %v13919, %v13919
    %v13935 = vcombine.high %v13926, %v13926
    %v13937 = vunpack.c.l.s4 1966171168
    %v13938 = vunpack.c.0.s8 %v13937
    %v13939 = vlaneseq
    %v13940 = vshrl.u32 %v13939, 7
    %v13941 = vsub.s32 %v13938, %v13940
    %v13942 = vrot.slane %v13713, %v13941
    %v13943 = vcombine.high %v13942, %v13942
    %v13945 = vunpack.c.l.s4 1966171168
    %v13946 = vunpack.c.0.s8 %v13945
    %v13947 = vlaneseq
    %v13948 = vshrl.u32 %v13947, 7
    %v13949 = vsub.s32 %v13946, %v13948
    %v13950 = vrot.slane %v13942, %v13949
    %v13952 = vunpack.c.l.s4 1966171168
    %v13953 = vunpack.c.0.s8 %v13952
    %v13954 = vlaneseq
    %v13955 = vshrl.u32 %v13954, 7
    %v13956 = vsub.s32 %v13953, %v13955
    %v13957 = vrot.slane %v13943, %v13956
    %v13958 = vcombine.high %v13950, %v13950
    %v13959 = vcombine.high %v13957, %v13957
    %v13992 = vmax.f32 %v13743, %v13764
    %v13993 = vmax.f32 %v13757, %v13766
    %v13994 = vmax.f32 %v13765, %v13768
    %v13995 = vmax.f32 %v13767, %v13792
    %v13996 = vmax.f32 %v13814, %v13816
    %v13997 = vmax.f32 %v13815, %v13831
    %v13998 = vmax.f32 %v13799, %v13838
    %v13999 = vmax.f32 %v13813, %v13839
    %v14000 = vmax.f32 %v13877, %v13886
    %v14001 = vmax.f32 %v13885, %v13888
    %v14002 = vmax.f32 %v13887, %v13912
    %v14003 = vmax.f32 %v13870, %v13926
    %v14004 = vmax.f32 %v13935, %v13950
    %v14005 = vmax.f32 %v13919, %v13957
    %v14006 = vmax.f32 %v13933, %v13958
    %v14007 = vmax.f32 %v13934, %v13959
    %v14008 = vmax.f32 %v13992, %v13993
    %v14009 = vmax.f32 %v13994, %v13995
    %v14010 = vmax.f32 %v13996, %v13997
    %v14011 = vmax.f32 %v13998, %v13999
    %v14012 = vmax.f32 %v14000, %v14001
    %v14013 = vmax.f32 %v14002, %v14003
    %v14014 = vmax.f32 %v14004, %v14005
    %v14015 = vmax.f32 %v14006, %v14007
    %v14016 = vld [vmem:[%s5] sm:$0xff]
    %v14017 = vld [vmem:[%s5 + $0x8] sm:$0xff]
    %v14018 = vld [vmem:[%s5 + $0x10] sm:$0xff]
    %v14019 = vld [vmem:[%s5 + $0x18] sm:$0xff]
    %v14020 = vld [vmem:[%s5 + $0x20] sm:$0xff]
    %v14021 = vld [vmem:[%s5 + $0x28] sm:$0xff]
    %v14022 = vld [vmem:[%s5 + $0x30] sm:$0xff]
    %v14023 = vld [vmem:[%s5 + $0x38] sm:$0xff]
    %v14024 = vld [vmem:[%s5 + $0x40] sm:$0xff]
    %v14025 = vld [vmem:[%s5 + $0x48] sm:$0xff]
    %v14026 = vld [vmem:[%s5 + $0x50] sm:$0xff]
    %v14027 = vld [vmem:[%s5 + $0x58] sm:$0xff]
    %v14028 = vld [vmem:[%s5 + $0x60] sm:$0xff]
    %v14029 = vld [vmem:[%s5 + $0x68] sm:$0xff]
    %v14030 = vld [vmem:[%s5 + $0x70] sm:$0xff]
    %v14031 = vld [vmem:[%s5 + $0x78] sm:$0xff]
    %v14032 = vld [vmem:[%s5 + $0x80] sm:$0xff]
    %v14033 = vld [vmem:[%s5 + $0x88] sm:$0xff]
    %v14034 = vld [vmem:[%s5 + $0x90] sm:$0xff]
    %v14035 = vld [vmem:[%s5 + $0x98] sm:$0xff]
    %v14036 = vld [vmem:[%s5 + $0xa0] sm:$0xff]
    %v14037 = vld [vmem:[%s5 + $0xa8] sm:$0xff]
    %v14038 = vld [vmem:[%s5 + $0xb0] sm:$0xff]
    %v14039 = vld [vmem:[%s5 + $0xb8] sm:$0xff]
    %v14040 = vld [vmem:[%s5 + $0xc0] sm:$0xff]
    %v14041 = vld [vmem:[%s5 + $0xc8] sm:$0xff]
    %v14042 = vld [vmem:[%s5 + $0xd0] sm:$0xff]
    %v14043 = vld [vmem:[%s5 + $0xd8] sm:$0xff]
    %v14044 = vld [vmem:[%s5 + $0xe0] sm:$0xff]
    %v14045 = vld [vmem:[%s5 + $0xe8] sm:$0xff]
    %v14046 = vld [vmem:[%s5 + $0xf0] sm:$0xff]
    %v14047 = vld [vmem:[%s5 + $0xf8] sm:$0xff]
    %v14048 = vpack.c.bf16 %v14017, %v14016
    %v14049 = vpack.c.bf16 %v14019, %v14018
    %v14050 = vpack.c.bf16 %v14021, %v14020
    %v14051 = vpack.c.bf16 %v14023, %v14022
    %v14052 = vpack.c.bf16 %v14025, %v14024
    %v14053 = vpack.c.bf16 %v14027, %v14026
    %v14054 = vpack.c.bf16 %v14029, %v14028
    %v14055 = vpack.c.bf16 %v14031, %v14030
    %v14056 = vpack.c.bf16 %v14033, %v14032
    %v14057 = vpack.c.bf16 %v14035, %v14034
    %v14058 = vpack.c.bf16 %v14037, %v14036
    %v14059 = vpack.c.bf16 %v14039, %v14038
    %v14060 = vpack.c.bf16 %v14041, %v14040
    %v14061 = vpack.c.bf16 %v14043, %v14042
    %v14062 = vpack.c.bf16 %v14045, %v14044
    %v14063 = vpack.c.bf16 %v14047, %v14046
    %v14064 = vpack.c.bf16 %v14008, %v14008
    %v14065 = vpack.c.bf16 %v14012, %v14012
    %v14066 = vpack.c.bf16 %v14009, %v14009
    %v14067 = vpack.c.bf16 %v14013, %v14013
    %v14070 = vunpack.c.l.b16 %v14066
    %v14071 = vunpack.c.l.b16 %v14067
    %v14072 = vrot.slane %v14071, 7
    %v14073 = vsel %vm12049, %v14072, %v14070
    %v14074 = vpack.c.b16 %v14073, %v14073
    %vm14075 = vcmask 523264
    %v14077 = vsel %vm14075, %v14074, 0
    %14079 = vmatprep.subr.bf16.mxu0 0
    %14080 = vmatpush1.bf16.msra.mxu0 %v14052
    %14081 = vmatprep.subr.bf16.mxu0 0
    %14082 = vmatpush1.bf16.msra.mxu0 %v14053
    %14083 = vmatprep.subr.bf16.mxu0 0
    %14084 = vmatpush1.bf16.msra.mxu0 %v14054
    %14085 = vmatprep.subr.bf16.mxu0 0
    %14086 = vmatpush1.bf16.msra.mxu0 %v14055
    %14087 = vmatprep.subr.bf16.mxu0 0
    %14088 = vmatpush1.bf16.msra.mxu0 0
    %14089 = vmatprep.subr.bf16.mxu0 0
    %14090 = vmatpush1.bf16.msra.mxu0 0
    %14091 = vmatprep.subr.bf16.mxu0 0
    %14092 = vmatpush1.bf16.msra.mxu0 0
    %14093 = vmatprep.subr.bf16.mxu0 0
    %14094 = vmatpush1.bf16.msra.mxu0 0
    %14095 = vmatprep.subr.bf16.mxu0 0
    %14096 = vmatpush1.bf16.msra.mxu0 0
    %14097 = vmatprep.subr.bf16.mxu0 0
    %14098 = vmatpush1.bf16.msra.mxu0 0
    %14099 = vmatprep.subr.bf16.mxu0 0
    %14100 = vmatpush1.bf16.msra.mxu0 0
    %14101 = vmatprep.subr.bf16.mxu0 0
    %14102 = vmatpush1.bf16.msra.mxu0 0
    %14103 = vmatprep.subr.bf16.mxu0 0
    %14104 = vmatpush1.bf16.msra.mxu0 0
    %14105 = vmatprep.subr.bf16.mxu0 0
    %14106 = vmatpush1.bf16.msra.mxu0 0
    %14107 = vmatprep.subr.bf16.mxu0 0
    %14108 = vmatpush1.bf16.msra.mxu0 0
    %14109 = vmatprep.subr.bf16.mxu0 0
    %14110 = vmatpush1.bf16.msra.mxu0 0
    %14111 = vmatprep.mubr.bf16.mxu0 0
    %14112 = vmatmul.mubr.bf16.gmra.mrb[0].mxu0 %v14077
    %v14113 = vpop.f32.mrb[0].mxu0
    %v14114 = vadd.f32 0.0, %v14113
    %v14115 = vpop.f32.mrb[0].mxu0
    %v14116 = vpop.f32.mrb[0].mxu0
    %v14117 = vpop.f32.mrb[0].mxu0
    %14118 = vdwg.mxu0
    %v14121 = vunpack.c.l.b16 %v14064
    %v14122 = vunpack.c.l.b16 %v14065
    %v14123 = vrot.slane %v14122, 7
    %v14124 = vsel %vm12049, %v14123, %v14121
    %v14125 = vpack.c.b16 %v14124, %v14124
    %v14127 = vsel %vm14075, %v14125, 0
    %14129 = vmatprep.subr.bf16.mxu0 0
    %14130 = vmatpush1.bf16.msra.mxu0 %v14048
    %14131 = vmatprep.subr.bf16.mxu0 0
    %14132 = vmatpush1.bf16.msra.mxu0 %v14049
    %14133 = vmatprep.subr.bf16.mxu0 0
    %14134 = vmatpush1.bf16.msra.mxu0 %v14050
    %14135 = vmatprep.subr.bf16.mxu0 0
    %14136 = vmatpush1.bf16.msra.mxu0 %v14051
    %14137 = vmatprep.subr.bf16.mxu0 0
    %14138 = vmatpush1.bf16.msra.mxu0 0
    %14139 = vmatprep.subr.bf16.mxu0 0
    %14140 = vmatpush1.bf16.msra.mxu0 0
    %14141 = vmatprep.subr.bf16.mxu0 0
    %14142 = vmatpush1.bf16.msra.mxu0 0
    %14143 = vmatprep.subr.bf16.mxu0 0
    %14144 = vmatpush1.bf16.msra.mxu0 0
    %14145 = vmatprep.subr.bf16.mxu0 0
    %14146 = vmatpush1.bf16.msra.mxu0 0
    %14147 = vmatprep.subr.bf16.mxu0 0
    %14148 = vmatpush1.bf16.msra.mxu0 0
    %14149 = vmatprep.subr.bf16.mxu0 0
    %14150 = vmatpush1.bf16.msra.mxu0 0
    %14151 = vmatprep.subr.bf16.mxu0 0
    %14152 = vmatpush1.bf16.msra.mxu0 0
    %14153 = vmatprep.subr.bf16.mxu0 0
    %14154 = vmatpush1.bf16.msra.mxu0 0
    %14155 = vmatprep.subr.bf16.mxu0 0
    %14156 = vmatpush1.bf16.msra.mxu0 0
    %14157 = vmatprep.subr.bf16.mxu0 0
    %14158 = vmatpush1.bf16.msra.mxu0 0
    %14159 = vmatprep.subr.bf16.mxu0 0
    %14160 = vmatpush1.bf16.msra.mxu0 0
    %14161 = vmatprep.mubr.bf16.mxu0 0
    %14162 = vmatmul.mubr.bf16.gmra.mrb[0].mxu0 %v14127
    %v14163 = vpop.f32.mrb[0].mxu0
    %v14164 = vadd.f32 %v14114, %v14163
    %v14165 = vpop.f32.mrb[0].mxu0
    %v14166 = vpop.f32.mrb[0].mxu0
    %v14167 = vpop.f32.mrb[0].mxu0
    %14168 = vdwg.mxu0
    %v14169 = vpack.c.bf16 %v14010, %v14010
    %v14170 = vpack.c.bf16 %v14014, %v14014
    %v14173 = vunpack.c.l.b16 %v14169
    %v14174 = vunpack.c.l.b16 %v14170
    %v14175 = vrot.slane %v14174, 7
    %v14176 = vsel %vm12049, %v14175, %v14173
    %v14177 = vpack.c.b16 %v14176, %v14176
    %v14179 = vsel %vm14075, %v14177, 0
    %14181 = vmatprep.subr.bf16.mxu0 0
    %14182 = vmatpush1.bf16.msra.mxu0 %v14056
    %14183 = vmatprep.subr.bf16.mxu0 0
    %14184 = vmatpush1.bf16.msra.mxu0 %v14057
    %14185 = vmatprep.subr.bf16.mxu0 0
    %14186 = vmatpush1.bf16.msra.mxu0 %v14058
    %14187 = vmatprep.subr.bf16.mxu0 0
    %14188 = vmatpush1.bf16.msra.mxu0 %v14059
    %14189 = vmatprep.subr.bf16.mxu0 0
    %14190 = vmatpush1.bf16.msra.mxu0 0
    %14191 = vmatprep.subr.bf16.mxu0 0
    %14192 = vmatpush1.bf16.msra.mxu0 0
    %14193 = vmatprep.subr.bf16.mxu0 0
    %14194 = vmatpush1.bf16.msra.mxu0 0
    %14195 = vmatprep.subr.bf16.mxu0 0
    %14196 = vmatpush1.bf16.msra.mxu0 0
    %14197 = vmatprep.subr.bf16.mxu0 0
    %14198 = vmatpush1.bf16.msra.mxu0 0
    %14199 = vmatprep.subr.bf16.mxu0 0
    %14200 = vmatpush1.bf16.msra.mxu0 0
    %14201 = vmatprep.subr.bf16.mxu0 0
    %14202 = vmatpush1.bf16.msra.mxu0 0
    %14203 = vmatprep.subr.bf16.mxu0 0
    %14204 = vmatpush1.bf16.msra.mxu0 0
    %14205 = vmatprep.subr.bf16.mxu0 0
    %14206 = vmatpush1.bf16.msra.mxu0 0
    %14207 = vmatprep.subr.bf16.mxu0 0
    %14208 = vmatpush1.bf16.msra.mxu0 0
    %14209 = vmatprep.subr.bf16.mxu0 0
    %14210 = vmatpush1.bf16.msra.mxu0 0
    %14211 = vmatprep.subr.bf16.mxu0 0
    %14212 = vmatpush1.bf16.msra.mxu0 0
    %14213 = vmatprep.mubr.bf16.mxu0 0
    %14214 = vmatmul.mubr.bf16.gmra.mrb[0].mxu0 %v14179
    %v14215 = vpop.f32.mrb[0].mxu0
    %v14216 = vadd.f32 0.0, %v14215
    %v14217 = vpop.f32.mrb[0].mxu0
    %v14218 = vpop.f32.mrb[0].mxu0
    %v14219 = vpop.f32.mrb[0].mxu0
    %14220 = vdwg.mxu0
    %v14221 = vadd.f32 %v14164, %v14216
    %v14222 = vpack.c.bf16 %v14011, %v14011
    %v14223 = vpack.c.bf16 %v14015, %v14015
    %v14226 = vunpack.c.l.b16 %v14222
    %v14227 = vunpack.c.l.b16 %v14223
    %v14228 = vrot.slane %v14227, 7
    %v14229 = vsel %vm12049, %v14228, %v14226
    %v14230 = vpack.c.b16 %v14229, %v14229
    %v14232 = vsel %vm14075, %v14230, 0
    %14234 = vmatprep.subr.bf16.mxu0 0
    %14235 = vmatpush1.bf16.msra.mxu0 %v14060
    %14236 = vmatprep.subr.bf16.mxu0 0
    %14237 = vmatpush1.bf16.msra.mxu0 %v14061
    %14238 = vmatprep.subr.bf16.mxu0 0
    %14239 = vmatpush1.bf16.msra.mxu0 %v14062
    %14240 = vmatprep.subr.bf16.mxu0 0
    %14241 = vmatpush1.bf16.msra.mxu0 %v14063
    %14242 = vmatprep.subr.bf16.mxu0 0
    %14243 = vmatpush1.bf16.msra.mxu0 0
    %14244 = vmatprep.subr.bf16.mxu0 0
    %14245 = vmatpush1.bf16.msra.mxu0 0
    %14246 = vmatprep.subr.bf16.mxu0 0
    %14247 = vmatpush1.bf16.msra.mxu0 0
    %14248 = vmatprep.subr.bf16.mxu0 0
    %14249 = vmatpush1.bf16.msra.mxu0 0
    %14250 = vmatprep.subr.bf16.mxu0 0
    %14251 = vmatpush1.bf16.msra.mxu0 0
    %14252 = vmatprep.subr.bf16.mxu0 0
    %14253 = vmatpush1.bf16.msra.mxu0 0
    %14254 = vmatprep.subr.bf16.mxu0 0
    %14255 = vmatpush1.bf16.msra.mxu0 0
    %14256 = vmatprep.subr.bf16.mxu0 0
    %14257 = vmatpush1.bf16.msra.mxu0 0
    %14258 = vmatprep.subr.bf16.mxu0 0
    %14259 = vmatpush1.bf16.msra.mxu0 0
    %14260 = vmatprep.subr.bf16.mxu0 0
    %14261 = vmatpush1.bf16.msra.mxu0 0
    %14262 = vmatprep.subr.bf16.mxu0 0
    %14263 = vmatpush1.bf16.msra.mxu0 0
    %14264 = vmatprep.subr.bf16.mxu0 0
    %14265 = vmatpush1.bf16.msra.mxu0 0
    %14266 = vmatprep.mubr.bf16.mxu0 0
    %14267 = vmatmul.mubr.bf16.gmra.mrb[0].mxu0 %v14232
    %v14268 = vpop.f32.mrb[0].mxu0
    %v14269 = vadd.f32 0.0, %v14268
    %v14270 = vpop.f32.mrb[0].mxu0
    %v14271 = vpop.f32.mrb[0].mxu0
    %v14272 = vpop.f32.mrb[0].mxu0
    %14273 = vdwg.mxu0
    %v14274 = vadd.f32 %v14221, %v14269
    %v14275 = vld [vmem:[%s6] sm:$0x1]
    %v14277 = vlaneseq
    %v14278 = vshrl.u32 %v14277, 7
    %v14279 = vsub.s32 0, %v14278
    %v14280 = vrot.slane %v14275, %v14279
    %v14282 = vadd.f32 %v14274, %v14280
    %v14283 = vmax.f32 %v14282, 0.0
    %v14284 = vpack.c.bf16 %v14283, %v14283
    %v14285 = vld [vmem:[%s7] sm:$0xff]
    %v14286 = vld [vmem:[%s7 + $0x8] sm:$0xff]
    %v14287 = vld [vmem:[%s7 + $0x10] sm:$0xff]
    %v14288 = vld [vmem:[%s7 + $0x18] sm:$0xff]
    %v14289 = vld [vmem:[%s7 + $0x20] sm:$0xff]
    %v14290 = vld [vmem:[%s7 + $0x28] sm:$0xff]
    %v14291 = vld [vmem:[%s7 + $0x30] sm:$0xff]
    %v14292 = vld [vmem:[%s7 + $0x38] sm:$0xff]
    %v14293 = vld [vmem:[%s7 + $0x40] sm:$0xff]
    %v14294 = vld [vmem:[%s7 + $0x48] sm:$0xff]
    %v14295 = vld [vmem:[%s7 + $0x50] sm:$0xff]
    %v14296 = vld [vmem:[%s7 + $0x58] sm:$0xff]
    %v14297 = vld [vmem:[%s7 + $0x60] sm:$0xff]
    %v14298 = vld [vmem:[%s7 + $0x68] sm:$0xff]
    %v14299 = vld [vmem:[%s7 + $0x70] sm:$0xff]
    %v14300 = vld [vmem:[%s7 + $0x78] sm:$0xff]
    %v14301 = vpack.c.bf16 %v14286, %v14285
    %v14302 = vpack.c.bf16 %v14288, %v14287
    %v14303 = vpack.c.bf16 %v14290, %v14289
    %v14304 = vpack.c.bf16 %v14292, %v14291
    %v14305 = vpack.c.bf16 %v14294, %v14293
    %v14306 = vpack.c.bf16 %v14296, %v14295
    %v14307 = vpack.c.bf16 %v14298, %v14297
    %v14308 = vpack.c.bf16 %v14300, %v14299
    %v14309 = vld [vmem:[%s8] sm:$0x1]
    %v14311 = vlaneseq
    %v14312 = vshrl.u32 %v14311, 7
    %v14313 = vsub.s32 0, %v14312
    %v14314 = vrot.slane %v14309, %v14313
    %14316 = vmatprep.subr.bf16.mxu0 0
    %14317 = vmatpush1.bf16.msra.mxu0 %v14301
    %14318 = vmatprep.subr.bf16.mxu0 0
    %14319 = vmatpush1.bf16.msra.mxu0 %v14302
    %14320 = vmatprep.subr.bf16.mxu0 0
    %14321 = vmatpush1.bf16.msra.mxu0 %v14303
    %14322 = vmatprep.subr.bf16.mxu0 0
    %14323 = vmatpush1.bf16.msra.mxu0 %v14304
    %14324 = vmatprep.subr.bf16.mxu0 0
    %14325 = vmatpush1.bf16.msra.mxu0 %v14305
    %14326 = vmatprep.subr.bf16.mxu0 0
    %14327 = vmatpush1.bf16.msra.mxu0 %v14306
    %14328 = vmatprep.subr.bf16.mxu0 0
    %14329 = vmatpush1.bf16.msra.mxu0 %v14307
    %14330 = vmatprep.subr.bf16.mxu0 0
    %14331 = vmatpush1.bf16.msra.mxu0 %v14308
    %14332 = vmatprep.subr.bf16.mxu0 0
    %14333 = vmatpush1.bf16.msra.mxu0 0
    %14334 = vmatprep.subr.bf16.mxu0 0
    %14335 = vmatpush1.bf16.msra.mxu0 0
    %14336 = vmatprep.subr.bf16.mxu0 0
    %14337 = vmatpush1.bf16.msra.mxu0 0
    %14338 = vmatprep.subr.bf16.mxu0 0
    %14339 = vmatpush1.bf16.msra.mxu0 0
    %14340 = vmatprep.subr.bf16.mxu0 0
    %14341 = vmatpush1.bf16.msra.mxu0 0
    %14342 = vmatprep.subr.bf16.mxu0 0
    %14343 = vmatpush1.bf16.msra.mxu0 0
    %14344 = vmatprep.subr.bf16.mxu0 0
    %14345 = vmatpush1.bf16.msra.mxu0 0
    %14346 = vmatprep.subr.bf16.mxu0 0
    %14347 = vmatpush1.bf16.msra.mxu0 0
    %14348 = vmatprep.mubr.bf16.mxu0 0
    %14349 = vmatmul.mubr.bf16.gmra.mrb[0].mxu0 %v14284
    %v14350 = vpop.f32.mrb[0].mxu0
    %v14351 = vadd.f32 %v14314, %v14350
    %v14352 = vpop.f32.mrb[0].mxu0
    %v14353 = vpop.f32.mrb[0].mxu0
    %v14354 = vpop.f32.mrb[0].mxu0
    %14355 = vdwg.mxu0
    %14356 = vst [vmem:[#allocation2] sm:$0x3] %v14351
    // Predicated region
    $region38: #{rnn_forward.1} parent=1 // pred_check
      _
    $region39: #{rnn_forward.1} parent=1 // pred_check_branch
      %14358 = sbr.rel (0) target = $region41
    $region40: #{rnn_forward.1} parent=1 // pred_region
      %s14360 = ssub.s32 32, 32
      %14361 = vsyncadd [#allocation3], %s14360
      %s14363 = sshll.u32 [#allocation2], 4
      %s14364 = int_to_ptr.vmem [resolvable:$true] %s14363
      %14366 = dma.vmem_to_hbm [thread:$0]  %s14364, 32, %s9, [#allocation3]
    $region41: #{rnn_forward.1} parent=1 // pred_fallthru
      _
    // Predicated region
    $region42: #{rnn_forward.1} parent=1 // pred_check
      _
    $region43: #{rnn_forward.1} parent=1 // pred_check_branch
      %14368 = sbr.rel (0) target = $region45
    $region44: #{rnn_forward.1} parent=1 // pred_region
      %14369 = dma.done [#allocation3], 32
    $region45: #{rnn_forward.1} parent=1 // pred_fallthru
      _
    %14370 = vsyncpa [#allocation3], 1

</llo_original>
